<compile_context>
chip_gen: v5e
topology: v5e:2x2
jax: 0.10.0
libtpu: 0.0.40
codegen_flags: <defaults>
</compile_context>

<pallas_src>
import functools
import math

import jax
import jax.numpy as jnp
from jax.experimental import pallas as pl
from jax.experimental.pallas import tpu as pltpu

LN_EPS = 1e-5

PACKED_PARAM_ORDER = ("ln1_g", "ln1_b", "w_qkv", "b_qkv", "wo", "bo",
                      "ln2_g", "ln2_b", "w1", "b1", "w2", "b2")
N_PACKED = len(PACKED_PARAM_ORDER)


# ----------------------------- in-kernel helpers -----------------------------
def _layer_norm(x, g, b):
    m = jnp.mean(x, axis=-1, keepdims=True)
    v = jnp.mean((x - m) ** 2, axis=-1, keepdims=True)
    return (x - m) * jax.lax.rsqrt(v + LN_EPS) * g + b


def _encoder_layer(x2d, params, rows, seq, n_heads, head_mask):
    """One pre-LN transformer encoder layer on a (rows*seq, D) f32 slab."""
    (ln1_g, ln1_b, w_qkv, b_qkv, wo, bo, ln2_g, ln2_b, w1, b1, w2, b2) = params
    D = x2d.shape[-1]
    dk = D // n_heads
    scale = 1.0 / math.sqrt(dk)

    # ---- pre-LN 1 + fused QKV projection (single MXU pass) ----
    xn = _layer_norm(x2d, ln1_g, ln1_b)
    qkv = jnp.dot(xn.astype(jnp.bfloat16), w_qkv,
                  preferred_element_type=jnp.float32) + b_qkv            # (RS, 3D)
    q = qkv[:, :D] * scale
    k = qkv[:, D:2 * D]
    v = qkv[:, 2 * D:]

    # ---- multi-head self-attention, heads batched into one einsum ----
    q3 = q.reshape(rows, seq, D)
    k3 = k.reshape(rows, seq, D)
    v3 = v.reshape(rows, seq, D)
    RH = rows * n_heads
    # mask q and v with the per-head 0/1 selector; k is plainly broadcast.
    qh = (q3[:, None, :, :] * head_mask).astype(jnp.bfloat16).reshape(RH, seq, D)
    kh = jnp.broadcast_to(k3.astype(jnp.bfloat16)[:, None, :, :],
                          (rows, n_heads, seq, D)).reshape(RH, seq, D)
    vh = (v3[:, None, :, :] * head_mask).astype(jnp.bfloat16).reshape(RH, seq, D)

    s = jnp.einsum("bqd,bkd->bqk", qh, kh,
                   preferred_element_type=jnp.float32)                   # (RH, S, S)
    s = s - jnp.max(s, axis=-1, keepdims=True)
    p = jnp.exp(s)
    denom = jnp.sum(p, axis=-1, keepdims=True)
    ctx = jnp.einsum("bqk,bkd->bqd", p.astype(jnp.bfloat16), vh,
                     preferred_element_type=jnp.float32)                 # (RH, S, D)
    ctx = ctx * pl.reciprocal(denom, approx=True)
    # heads occupy disjoint D slices, so summing over the head axis == concat.
    attn = jnp.sum(ctx.reshape(rows, n_heads, seq, D), axis=1).reshape(rows * seq, D)
    attn = jnp.dot(attn.astype(jnp.bfloat16), wo,
                   preferred_element_type=jnp.float32) + bo
    x2d = x2d + attn                      # residual (dropout = identity)

    # ---- pre-LN 2 + feed-forward ----
    xn2 = _layer_norm(x2d, ln2_g, ln2_b)
    hid = jnp.maximum(jnp.dot(xn2.astype(jnp.bfloat16), w1,
                              preferred_element_type=jnp.float32) + b1, 0.0)
    ff = jnp.dot(hid.astype(jnp.bfloat16), w2,
                 preferred_element_type=jnp.float32) + b2
    return x2d + ff


# ------------------------------- Pallas kernel --------------------------------
def encoder_kernel(x_ref, *rest, n_heads, n_layers):
    o_ref = rest[-1]
    param_refs = rest[:-1]
    rows, seq, D = x_ref.shape
    dk = D // n_heads

    # (1, H, 1, D) one-hot head selector, built once for all layers.
    head_ids = jax.lax.broadcasted_iota(jnp.int32, (1, n_heads, 1, D), 1)
    dim_ids = jax.lax.broadcasted_iota(jnp.int32, (1, n_heads, 1, D), 3)
    lo = head_ids * dk
    head_mask = ((dim_ids >= lo) & (dim_ids < lo + dk)).astype(jnp.float32)

    x2d = x_ref[...].reshape(rows * seq, D)
    for li in range(n_layers):            # layers fused: x never leaves VMEM
        p = tuple(param_refs[li * N_PACKED + j][...] for j in range(N_PACKED))
        x2d = _encoder_layer(x2d, p, rows, seq, n_heads, head_mask)
    o_ref[...] = x2d.reshape(rows, seq, D)


# --------------------------------- wrappers -----------------------------------
def _const_index_map(nd, i):
    return (0,) * nd


def _choose_row_block(rows, seq, d_model, n_heads, d_ff):
    # crude per-row VMEM estimate (f32 activations + head-broadcast operands)
    per_row = 4 * (8 * seq * d_model
                   + 3 * n_heads * seq * d_model
                   + 2 * n_heads * seq * seq
                   + seq * d_ff)
    budget = 8 * 1024 * 1024              # stay well inside scoped-VMEM defaults
    max_rb = max(1, budget // max(per_row, 1))
    if rows > 1:                          # >= 2 grid steps so both v7x TCs get work
        max_rb = min(max_rb, max(1, rows // 2))
    rb = 1
    for cand in range(1, min(max_rb, rows) + 1):
        if rows % cand == 0:
            rb = cand
    return rb


def apply_encoder(x, packed_layers, n_heads):
    rows, seq, d_model = x.shape
    d_ff = packed_layers[0]["w1"].shape[1]
    rb = _choose_row_block(rows, seq, d_model, n_heads, d_ff)
    flat = [lp[k] for lp in packed_layers for k in PACKED_PARAM_ORDER]

    in_specs = [pl.BlockSpec((rb, seq, d_model), lambda i: (i, 0, 0))]
    # constant index maps -> each weight is DMA'd once and stays resident in VMEM
    in_specs += [pl.BlockSpec(tuple(w.shape),
                              functools.partial(_const_index_map, w.ndim))
                 for w in flat]
    out_spec = pl.BlockSpec((rb, seq, d_model), lambda i: (i, 0, 0))

    kernel = functools.partial(encoder_kernel, n_heads=n_heads,
                               n_layers=len(packed_layers))
    return pl.pallas_call(
        kernel,
        out_shape=jax.ShapeDtypeStruct((rows, seq, d_model), jnp.float32),
        grid=(rows // rb,),
        in_specs=in_specs,
        out_specs=out_spec,
        compiler_params=pltpu.CompilerParams(dimension_semantics=("parallel",)),
    )(x, *flat)


def pack_layer_params(p):
    """Fuse QKV and cast matmul weights to bf16 (f32 accumulation in-kernel)."""
    bf16 = jnp.bfloat16
    return {
        "ln1_g": p["ln1_g"], "ln1_b": p["ln1_b"],
        "w_qkv": jnp.concatenate([p["wq"], p["wk"], p["wv"]], axis=1).astype(bf16),
        "b_qkv": jnp.concatenate([p["bq"], p["bk"], p["bv"]], axis=1),
        "wo": p["wo"].astype(bf16), "bo": p["bo"],
        "ln2_g": p["ln2_g"], "ln2_b": p["ln2_b"],
        "w1": p["w1"].astype(bf16), "b1": p["b1"],
        "w2": p["w2"].astype(bf16), "b2": p["b2"],
    }


def msa2msa_forward(x, enc1_layers, enc2_layers, n_heads):
    B, N, L, D = x.shape
    enc1_p = [pack_layer_params(p) for p in enc1_layers]
    enc2_p = [pack_layer_params(p) for p in enc2_layers]
    # encoder_1: attention over the N axis, one row per (b, l)
    x = jnp.transpose(x, (0, 2, 1, 3)).reshape(B * L, N, D)
    x = apply_encoder(x, enc1_p, n_heads)
    # encoder_2: attention over the L axis, one row per (b, n)
    x = jnp.transpose(x.reshape(B, L, N, D), (0, 2, 1, 3)).reshape(B * N, L, D)
    x = apply_encoder(x, enc2_p, n_heads)
    return x.reshape(B, N, L, D)


# --------------------------- parameter construction ---------------------------
def init_layer_params(key, d_model, d_ff):
    ks = jax.random.split(key, 12)

    def w(k, din, dout):
        return 0.02 * jax.random.normal(k, (din, dout), jnp.float32)

    def b(k, d):
        return 0.01 * jax.random.normal(k, (1, d), jnp.float32)

    return {
        "ln1_g": jnp.ones((1, d_model), jnp.float32),
        "ln1_b": jnp.zeros((1, d_model), jnp.float32),
        "wq": w(ks[0], d_model, d_model), "bq": b(ks[1], d_model),
        "wk": w(ks[2], d_model, d_model), "bk": b(ks[3], d_model),
        "wv": w(ks[4], d_model, d_model), "bv": b(ks[5], d_model),
        "wo": w(ks[6], d_model, d_model), "bo": b(ks[7], d_model),
        "ln2_g": jnp.ones((1, d_model), jnp.float32),
        "ln2_b": jnp.zeros((1, d_model), jnp.float32),
        "w1": w(ks[8], d_model, d_ff), "b1": b(ks[9], d_ff),
        "w2": w(ks[10], d_ff, d_model), "b2": b(ks[11], d_model),
    }


# ------------------------------ pure-JAX reference ----------------------------
def _ln_ref(x, g, bb):
    m = x.mean(-1, keepdims=True)
    v = ((x - m) ** 2).mean(-1, keepdims=True)
    return (x - m) / jnp.sqrt(v + LN_EPS) * g[0] + bb[0]


def encoder_layer_ref(x, p, n_heads):
    rows, S, D = x.shape
    dk = D // n_heads
    xn = _ln_ref(x, p["ln1_g"], p["ln1_b"])
    q = (xn @ p["wq"] + p["bq"][0]) / math.sqrt(dk)
    k = xn @ p["wk"] + p["bk"][0]
    v = xn @ p["wv"] + p["bv"][0]
    q = q.reshape(rows, S, n_heads, dk).transpose(0, 2, 1, 3)
    k = k.reshape(rows, S, n_heads, dk).transpose(0, 2, 1, 3)
    v = v.reshape(rows, S, n_heads, dk).transpose(0, 2, 1, 3)
    att = jax.nn.softmax(jnp.einsum("bhqd,bhkd->bhqk", q, k), axis=-1)
    o = jnp.einsum("bhqk,bhkd->bhqd", att, v).transpose(0, 2, 1, 3).reshape(rows, S, D)
    x = x + (o @ p["wo"] + p["bo"][0])
    xn2 = _ln_ref(x, p["ln2_g"], p["ln2_b"])
    ff = jnp.maximum(xn2 @ p["w1"] + p["b1"][0], 0.0) @ p["w2"] + p["b2"][0]
    return x + ff


def msa2msa_ref(x, enc1_layers, enc2_layers, n_heads):
    B, N, L, D = x.shape
    x = jnp.transpose(x, (0, 2, 1, 3)).reshape(B * L, N, D)
    for p in enc1_layers:
        x = encoder_layer_ref(x, p, n_heads)
    x = x.reshape(B, L, N, D).transpose(0, 2, 1, 3).reshape(B * N, L, D)
    for p in enc2_layers:
        x = encoder_layer_ref(x, p, n_heads)
    return x.reshape(B, N, L, D)


# ------------------------------------ main -------------------------------------
if __name__ == "__main__":
    # Small-but-consistent hyperparameters:
    #   n_layer=1, n_att_head=4, n_feat=32, r_ff=4 -> d_ff = 128
    B, N, L = 2, 8, 16
    n_feat, n_heads, r_ff, n_layer = 32, 4, 4, 1
    d_ff = n_feat * r_ff

    key = jax.random.PRNGKey(0)
    kx, k1, k2 = jax.random.split(key, 3)
    x = jax.random.normal(kx, (B, N, L, n_feat), jnp.float32)

    enc1_layers = [init_layer_params(k, n_feat, d_ff)
                   for k in jax.random.split(k1, n_layer)]
    enc2_layers = [init_layer_params(k, n_feat, d_ff)
                   for k in jax.random.split(k2, n_layer)]

    fwd = jax.jit(functools.partial(msa2msa_forward, n_heads=n_heads))
    out = jax.block_until_ready(fwd(x, enc1_layers, enc2_layers))

    ref = msa2msa_ref(x, enc1_layers, enc2_layers, n_heads)
    assert out.shape == (B, N, L, n_feat)
    assert jnp.allclose(out, ref, rtol=2e-2, atol=2e-2), "Pallas kernel mismatch vs reference"

    print("KERNEL_OK")
</pallas_src>

<mosaic_0001>
module attributes {stable_mosaic.version = 11 : i64} {
  func.func @encoder_kernel(%arg0: i32, %arg1: memref<16x8x32xf32, #tpu.memory_space<vmem>>, %arg2: memref<1x32xf32, #tpu.memory_space<vmem>>, %arg3: memref<1x32xf32, #tpu.memory_space<vmem>>, %arg4: memref<32x96xbf16, #tpu.memory_space<vmem>>, %arg5: memref<1x96xf32, #tpu.memory_space<vmem>>, %arg6: memref<32x32xbf16, #tpu.memory_space<vmem>>, %arg7: memref<1x32xf32, #tpu.memory_space<vmem>>, %arg8: memref<1x32xf32, #tpu.memory_space<vmem>>, %arg9: memref<1x32xf32, #tpu.memory_space<vmem>>, %arg10: memref<32x128xbf16, #tpu.memory_space<vmem>>, %arg11: memref<1x128xf32, #tpu.memory_space<vmem>>, %arg12: memref<128x32xbf16, #tpu.memory_space<vmem>>, %arg13: memref<1x32xf32, #tpu.memory_space<vmem>>, %arg14: memref<16x8x32xf32, #tpu.memory_space<vmem>>) attributes {dimension_semantics = [#tpu.dimension_semantics<parallel>], iteration_bounds = array<i64: 2>, scalar_prefetch = 0 : i64, scratch_operands = 0 : i64, tpu.core_type = #tpu.core_type<tc>, window_params = [{transform_indices = @transform_0, window_bounds = array<i64: 16, 8, 32>}, {pipeline_mode = #tpu.pipeline_mode<synchronous>, transform_indices = @transform_1, window_bounds = array<i64: 1, 32>}, {pipeline_mode = #tpu.pipeline_mode<synchronous>, transform_indices = @transform_2, window_bounds = array<i64: 1, 32>}, {pipeline_mode = #tpu.pipeline_mode<synchronous>, transform_indices = @transform_3, window_bounds = array<i64: 32, 96>}, {pipeline_mode = #tpu.pipeline_mode<synchronous>, transform_indices = @transform_4, window_bounds = array<i64: 1, 96>}, {pipeline_mode = #tpu.pipeline_mode<synchronous>, transform_indices = @transform_5, window_bounds = array<i64: 32, 32>}, {pipeline_mode = #tpu.pipeline_mode<synchronous>, transform_indices = @transform_6, window_bounds = array<i64: 1, 32>}, {pipeline_mode = #tpu.pipeline_mode<synchronous>, transform_indices = @transform_7, window_bounds = array<i64: 1, 32>}, {pipeline_mode = #tpu.pipeline_mode<synchronous>, transform_indices = @transform_8, window_bounds = array<i64: 1, 32>}, {pipeline_mode = #tpu.pipeline_mode<synchronous>, transform_indices = @transform_9, window_bounds = array<i64: 32, 128>}, {pipeline_mode = #tpu.pipeline_mode<synchronous>, transform_indices = @transform_10, window_bounds = array<i64: 1, 128>}, {pipeline_mode = #tpu.pipeline_mode<synchronous>, transform_indices = @transform_11, window_bounds = array<i64: 128, 32>}, {pipeline_mode = #tpu.pipeline_mode<synchronous>, transform_indices = @transform_12, window_bounds = array<i64: 1, 32>}, {transform_indices = @transform_13, window_bounds = array<i64: 16, 8, 32>}]} {
    %0 = tpu.iota {dimensions = array<i32: 1>} : vector<1x4x1x32xi32>
    %1 = tpu.iota {dimensions = array<i32: 3>} : vector<1x4x1x32xi32>
    %c8_i32 = arith.constant 8 : i32
    %2 = vector.broadcast %c8_i32 : i32 to vector<1x4x1x32xi32>
    %3 = arith.muli %0, %2 : vector<1x4x1x32xi32>
    %4 = arith.cmpi sge, %1, %3 : vector<1x4x1x32xi32>
    %c8_i32_0 = arith.constant 8 : i32
    %5 = vector.broadcast %c8_i32_0 : i32 to vector<1x4x1x32xi32>
    %6 = arith.addi %3, %5 : vector<1x4x1x32xi32>
    %7 = arith.cmpi slt, %1, %6 : vector<1x4x1x32xi32>
    %8 = arith.andi %4, %7 : vector<1x4x1x32xi1>
    %9 = arith.extui %8 : vector<1x4x1x32xi1> to vector<1x4x1x32xi32>
    %10 = arith.sitofp %9 : vector<1x4x1x32xi32> to vector<1x4x1x32xf32>
    %c0 = arith.constant 0 : index
    %c0_1 = arith.constant 0 : index
    %c0_2 = arith.constant 0 : index
    %11 = vector.load %arg1[%c0, %c0_1, %c0_2] : memref<16x8x32xf32, #tpu.memory_space<vmem>>, vector<16x8x32xf32>
    %12 = vector.shape_cast %11 : vector<16x8x32xf32> to vector<128x32xf32>
    %c0_3 = arith.constant 0 : index
    %c0_4 = arith.constant 0 : index
    %13 = vector.load %arg2[%c0_3, %c0_4] : memref<1x32xf32, #tpu.memory_space<vmem>>, vector<1x32xf32>
    %c0_5 = arith.constant 0 : index
    %c0_6 = arith.constant 0 : index
    %14 = vector.load %arg3[%c0_5, %c0_6] : memref<1x32xf32, #tpu.memory_space<vmem>>, vector<1x32xf32>
    %c0_7 = arith.constant 0 : index
    %c0_8 = arith.constant 0 : index
    %15 = vector.load %arg4[%c0_7, %c0_8] : memref<32x96xbf16, #tpu.memory_space<vmem>>, vector<32x96xbf16>
    %c0_9 = arith.constant 0 : index
    %c0_10 = arith.constant 0 : index
    %16 = vector.load %arg5[%c0_9, %c0_10] : memref<1x96xf32, #tpu.memory_space<vmem>>, vector<1x96xf32>
    %c0_11 = arith.constant 0 : index
    %c0_12 = arith.constant 0 : index
    %17 = vector.load %arg6[%c0_11, %c0_12] : memref<32x32xbf16, #tpu.memory_space<vmem>>, vector<32x32xbf16>
    %c0_13 = arith.constant 0 : index
    %c0_14 = arith.constant 0 : index
    %18 = vector.load %arg7[%c0_13, %c0_14] : memref<1x32xf32, #tpu.memory_space<vmem>>, vector<1x32xf32>
    %c0_15 = arith.constant 0 : index
    %c0_16 = arith.constant 0 : index
    %19 = vector.load %arg8[%c0_15, %c0_16] : memref<1x32xf32, #tpu.memory_space<vmem>>, vector<1x32xf32>
    %c0_17 = arith.constant 0 : index
    %c0_18 = arith.constant 0 : index
    %20 = vector.load %arg9[%c0_17, %c0_18] : memref<1x32xf32, #tpu.memory_space<vmem>>, vector<1x32xf32>
    %c0_19 = arith.constant 0 : index
    %c0_20 = arith.constant 0 : index
    %21 = vector.load %arg10[%c0_19, %c0_20] : memref<32x128xbf16, #tpu.memory_space<vmem>>, vector<32x128xbf16>
    %c0_21 = arith.constant 0 : index
    %c0_22 = arith.constant 0 : index
    %22 = vector.load %arg11[%c0_21, %c0_22] : memref<1x128xf32, #tpu.memory_space<vmem>>, vector<1x128xf32>
    %c0_23 = arith.constant 0 : index
    %c0_24 = arith.constant 0 : index
    %23 = vector.load %arg12[%c0_23, %c0_24] : memref<128x32xbf16, #tpu.memory_space<vmem>>, vector<128x32xbf16>
    %c0_25 = arith.constant 0 : index
    %c0_26 = arith.constant 0 : index
    %24 = vector.load %arg13[%c0_25, %c0_26] : memref<1x32xf32, #tpu.memory_space<vmem>>, vector<1x32xf32>
    %cst = arith.constant dense<0.000000e+00> : vector<128xf32>
    %25 = vector.multi_reduction <add>, %12, %cst [1] : vector<128x32xf32> to vector<128xf32>
    %26 = vector.shape_cast %25 : vector<128xf32> to vector<128x1xf32>
    %cst_27 = arith.constant 3.200000e+01 : f32
    %27 = vector.broadcast %cst_27 : f32 to vector<128x1xf32>
    %28 = arith.divf %26, %27 : vector<128x1xf32>
    %29 = vector.broadcast %28 : vector<128x1xf32> to vector<128x32xf32>
    %30 = arith.subf %12, %29 : vector<128x32xf32>
    %31 = arith.mulf %30, %30 : vector<128x32xf32>
    %cst_28 = arith.constant dense<0.000000e+00> : vector<128xf32>
    %32 = vector.multi_reduction <add>, %31, %cst_28 [1] : vector<128x32xf32> to vector<128xf32>
    %33 = vector.shape_cast %32 : vector<128xf32> to vector<128x1xf32>
    %cst_29 = arith.constant 3.200000e+01 : f32
    %34 = vector.broadcast %cst_29 : f32 to vector<128x1xf32>
    %35 = arith.divf %33, %34 : vector<128x1xf32>
    %36 = vector.broadcast %28 : vector<128x1xf32> to vector<128x32xf32>
    %37 = arith.subf %12, %36 : vector<128x32xf32>
    %cst_30 = arith.constant 9.99999974E-6 : f32
    %38 = vector.broadcast %cst_30 : f32 to vector<128x1xf32>
    %39 = arith.addf %35, %38 : vector<128x1xf32>
    %40 = math.rsqrt %39 : vector<128x1xf32>
    %41 = vector.broadcast %40 : vector<128x1xf32> to vector<128x32xf32>
    %42 = arith.mulf %37, %41 : vector<128x32xf32>
    %43 = vector.broadcast %13 : vector<1x32xf32> to vector<128x32xf32>
    %44 = arith.mulf %42, %43 : vector<128x32xf32>
    %45 = vector.broadcast %14 : vector<1x32xf32> to vector<128x32xf32>
    %46 = arith.addf %44, %45 : vector<128x32xf32>
    %47 = arith.truncf %46 : vector<128x32xf32> to vector<128x32xbf16>
    %cst_31 = arith.constant dense<0.000000e+00> : vector<128x96xf32>
    %48 = tpu.matmul %47, %15, %cst_31 {dimension_numbers = #tpu.dot_dimension_numbers<[1], [0], [0], [1], [0, 0, 1, 1], [], []>} : vector<128x32xbf16>, vector<32x96xbf16>, vector<128x96xf32> -> vector<128x96xf32>
    %49 = vector.broadcast %16 : vector<1x96xf32> to vector<128x96xf32>
    %50 = arith.addf %48, %49 : vector<128x96xf32>
    %51 = vector.extract_strided_slice %50 {offsets = [0, 0], sizes = [128, 32], strides = [1, 1]} : vector<128x96xf32> to vector<128x32xf32>
    %cst_32 = arith.constant 0.353553385 : f32
    %52 = vector.broadcast %cst_32 : f32 to vector<128x32xf32>
    %53 = arith.mulf %51, %52 : vector<128x32xf32>
    %54 = vector.extract_strided_slice %50 {offsets = [0, 32], sizes = [128, 32], strides = [1, 1]} : vector<128x96xf32> to vector<128x32xf32>
    %55 = vector.extract_strided_slice %50 {offsets = [0, 64], sizes = [128, 32], strides = [1, 1]} : vector<128x96xf32> to vector<128x32xf32>
    %56 = vector.shape_cast %53 : vector<128x32xf32> to vector<16x8x32xf32>
    %57 = vector.shape_cast %54 : vector<128x32xf32> to vector<16x8x32xf32>
    %58 = vector.shape_cast %55 : vector<128x32xf32> to vector<16x8x32xf32>
    %59 = vector.shape_cast %56 : vector<16x8x32xf32> to vector<16x1x8x32xf32>
    %60 = vector.broadcast %59 : vector<16x1x8x32xf32> to vector<16x4x8x32xf32>
    %61 = vector.broadcast %10 : vector<1x4x1x32xf32> to vector<16x4x8x32xf32>
    %62 = arith.mulf %60, %61 : vector<16x4x8x32xf32>
    %63 = arith.truncf %62 : vector<16x4x8x32xf32> to vector<16x4x8x32xbf16>
    %64 = vector.shape_cast %63 : vector<16x4x8x32xbf16> to vector<64x8x32xbf16>
    %65 = arith.truncf %57 : vector<16x8x32xf32> to vector<16x8x32xbf16>
    %66 = vector.shape_cast %65 : vector<16x8x32xbf16> to vector<16x1x8x32xbf16>
    %67 = vector.shape_cast %66 : vector<16x1x8x32xbf16> to vector<16x1x8x32xbf16>
    %68 = vector.broadcast %67 : vector<16x1x8x32xbf16> to vector<16x4x8x32xbf16>
    %69 = vector.shape_cast %68 : vector<16x4x8x32xbf16> to vector<64x8x32xbf16>
    %70 = vector.shape_cast %58 : vector<16x8x32xf32> to vector<16x1x8x32xf32>
    %71 = vector.broadcast %70 : vector<16x1x8x32xf32> to vector<16x4x8x32xf32>
    %72 = vector.broadcast %10 : vector<1x4x1x32xf32> to vector<16x4x8x32xf32>
    %73 = arith.mulf %71, %72 : vector<16x4x8x32xf32>
    %74 = arith.truncf %73 : vector<16x4x8x32xf32> to vector<16x4x8x32xbf16>
    %75 = vector.shape_cast %74 : vector<16x4x8x32xbf16> to vector<64x8x32xbf16>
    "tpu.trace_start"() <{level = 10 : i32, message = "bqd,bkd->bqk"}> : () -> ()
    %cst_33 = arith.constant dense<0.000000e+00> : vector<64x8x8xf32>
    %76 = tpu.matmul %64, %69, %cst_33 {dimension_numbers = #tpu.dot_dimension_numbers<[2], [2], [1], [1], [0, 0, 0, 1, 1, 1], [0], [0]>} : vector<64x8x32xbf16>, vector<64x8x32xbf16>, vector<64x8x8xf32> -> vector<64x8x8xf32>
    "tpu.trace_stop"() : () -> ()
    %cst_34 = arith.constant dense<0xFF800000> : vector<64x8xf32>
    %77 = vector.multi_reduction <maximumf>, %76, %cst_34 [2] : vector<64x8x8xf32> to vector<64x8xf32>
    %78 = vector.shape_cast %77 : vector<64x8xf32> to vector<64x8x1xf32>
    %79 = vector.broadcast %78 : vector<64x8x1xf32> to vector<64x8x8xf32>
    %80 = arith.subf %76, %79 : vector<64x8x8xf32>
    %81 = math.exp %80 : vector<64x8x8xf32>
    %cst_35 = arith.constant dense<0.000000e+00> : vector<64x8xf32>
    %82 = vector.multi_reduction <add>, %81, %cst_35 [2] : vector<64x8x8xf32> to vector<64x8xf32>
    %83 = vector.shape_cast %82 : vector<64x8xf32> to vector<64x8x1xf32>
    %84 = arith.truncf %81 : vector<64x8x8xf32> to vector<64x8x8xbf16>
    "tpu.trace_start"() <{level = 10 : i32, message = "bqk,bkd->bqd"}> : () -> ()
    %cst_36 = arith.constant dense<0.000000e+00> : vector<64x8x32xf32>
    %85 = tpu.matmul %84, %75, %cst_36 {dimension_numbers = #tpu.dot_dimension_numbers<[2], [1], [1], [2], [0, 0, 0, 1, 1, 2], [0], [0]>} : vector<64x8x8xbf16>, vector<64x8x32xbf16>, vector<64x8x32xf32> -> vector<64x8x32xf32>
    "tpu.trace_stop"() : () -> ()
    %86 = tpu.reciprocal %83 {approx = true} : vector<64x8x1xf32> -> vector<64x8x1xf32>
    %87 = vector.broadcast %86 : vector<64x8x1xf32> to vector<64x8x32xf32>
    %88 = arith.mulf %85, %87 : vector<64x8x32xf32>
    %89 = vector.shape_cast %88 : vector<64x8x32xf32> to vector<16x4x8x32xf32>
    %cst_37 = arith.constant dense<0.000000e+00> : vector<16x8x32xf32>
    %90 = vector.multi_reduction <add>, %89, %cst_37 [1] : vector<16x4x8x32xf32> to vector<16x8x32xf32>
    %91 = vector.shape_cast %90 : vector<16x8x32xf32> to vector<128x32xf32>
    %92 = arith.truncf %91 : vector<128x32xf32> to vector<128x32xbf16>
    %cst_38 = arith.constant dense<0.000000e+00> : vector<128x32xf32>
    %93 = tpu.matmul %92, %17, %cst_38 {dimension_numbers = #tpu.dot_dimension_numbers<[1], [0], [0], [1], [0, 0, 1, 1], [], []>} : vector<128x32xbf16>, vector<32x32xbf16>, vector<128x32xf32> -> vector<128x32xf32>
    %94 = vector.broadcast %18 : vector<1x32xf32> to vector<128x32xf32>
    %95 = arith.addf %93, %94 : vector<128x32xf32>
    %96 = arith.addf %12, %95 : vector<128x32xf32>
    %cst_39 = arith.constant dense<0.000000e+00> : vector<128xf32>
    %97 = vector.multi_reduction <add>, %96, %cst_39 [1] : vector<128x32xf32> to vector<128xf32>
    %98 = vector.shape_cast %97 : vector<128xf32> to vector<128x1xf32>
    %cst_40 = arith.constant 3.200000e+01 : f32
    %99 = vector.broadcast %cst_40 : f32 to vector<128x1xf32>
    %100 = arith.divf %98, %99 : vector<128x1xf32>
    %101 = vector.broadcast %100 : vector<128x1xf32> to vector<128x32xf32>
    %102 = arith.subf %96, %101 : vector<128x32xf32>
    %103 = arith.mulf %102, %102 : vector<128x32xf32>
    %cst_41 = arith.constant dense<0.000000e+00> : vector<128xf32>
    %104 = vector.multi_reduction <add>, %103, %cst_41 [1] : vector<128x32xf32> to vector<128xf32>
    %105 = vector.shape_cast %104 : vector<128xf32> to vector<128x1xf32>
    %cst_42 = arith.constant 3.200000e+01 : f32
    %106 = vector.broadcast %cst_42 : f32 to vector<128x1xf32>
    %107 = arith.divf %105, %106 : vector<128x1xf32>
    %108 = vector.broadcast %100 : vector<128x1xf32> to vector<128x32xf32>
    %109 = arith.subf %96, %108 : vector<128x32xf32>
    %cst_43 = arith.constant 9.99999974E-6 : f32
    %110 = vector.broadcast %cst_43 : f32 to vector<128x1xf32>
    %111 = arith.addf %107, %110 : vector<128x1xf32>
    %112 = math.rsqrt %111 : vector<128x1xf32>
    %113 = vector.broadcast %112 : vector<128x1xf32> to vector<128x32xf32>
    %114 = arith.mulf %109, %113 : vector<128x32xf32>
    %115 = vector.broadcast %19 : vector<1x32xf32> to vector<128x32xf32>
    %116 = arith.mulf %114, %115 : vector<128x32xf32>
    %117 = vector.broadcast %20 : vector<1x32xf32> to vector<128x32xf32>
    %118 = arith.addf %116, %117 : vector<128x32xf32>
    %119 = arith.truncf %118 : vector<128x32xf32> to vector<128x32xbf16>
    %cst_44 = arith.constant dense<0.000000e+00> : vector<128x128xf32>
    %120 = tpu.matmul %119, %21, %cst_44 {dimension_numbers = #tpu.dot_dimension_numbers<[1], [0], [0], [1], [0, 0, 1, 1], [], []>} : vector<128x32xbf16>, vector<32x128xbf16>, vector<128x128xf32> -> vector<128x128xf32>
    %121 = vector.broadcast %22 : vector<1x128xf32> to vector<128x128xf32>
    %122 = arith.addf %120, %121 : vector<128x128xf32>
    %cst_45 = arith.constant 0.000000e+00 : f32
    %123 = vector.broadcast %cst_45 : f32 to vector<128x128xf32>
    %124 = arith.maximumf %122, %123 : vector<128x128xf32>
    %125 = arith.truncf %124 : vector<128x128xf32> to vector<128x128xbf16>
    %cst_46 = arith.constant dense<0.000000e+00> : vector<128x32xf32>
    %126 = tpu.matmul %125, %23, %cst_46 {dimension_numbers = #tpu.dot_dimension_numbers<[1], [0], [0], [1], [0, 0, 1, 1], [], []>} : vector<128x128xbf16>, vector<128x32xbf16>, vector<128x32xf32> -> vector<128x32xf32>
    %127 = vector.broadcast %24 : vector<1x32xf32> to vector<128x32xf32>
    %128 = arith.addf %126, %127 : vector<128x32xf32>
    %129 = arith.addf %96, %128 : vector<128x32xf32>
    %130 = vector.shape_cast %129 : vector<128x32xf32> to vector<16x8x32xf32>
    %c0_47 = arith.constant 0 : index
    %c0_48 = arith.constant 0 : index
    %c0_49 = arith.constant 0 : index
    %131 = vector.load %arg14[%c0_47, %c0_48, %c0_49] : memref<16x8x32xf32, #tpu.memory_space<vmem>>, vector<16x8x32xf32>
    tpu.vector_store %arg14[%c0_47, %c0_48, %c0_49], %130 {strides = array<i32>} : memref<16x8x32xf32, #tpu.memory_space<vmem>>, vector<16x8x32xf32>,
    return
  }
  func.func @transform_0(%arg0: i32) -> (i32, i32, i32) {
    %c0_i32 = arith.constant 0 : i32
    %c0_i32_0 = arith.constant 0 : i32
    %c0_i32_1 = arith.constant 0 : i32
    return %arg0, %c0_i32, %c0_i32_0 : i32, i32, i32
  }
  func.func @transform_1(%arg0: i32) -> (i32, i32) {
    %c0_i32 = arith.constant 0 : i32
    %c0_i32_0 = arith.constant 0 : i32
    %c0_i32_1 = arith.constant 0 : i32
    return %c0_i32, %c0_i32_0 : i32, i32
  }
  func.func @transform_2(%arg0: i32) -> (i32, i32) {
    %c0_i32 = arith.constant 0 : i32
    %c0_i32_0 = arith.constant 0 : i32
    %c0_i32_1 = arith.constant 0 : i32
    return %c0_i32, %c0_i32_0 : i32, i32
  }
  func.func @transform_3(%arg0: i32) -> (i32, i32) {
    %c0_i32 = arith.constant 0 : i32
    %c0_i32_0 = arith.constant 0 : i32
    %c0_i32_1 = arith.constant 0 : i32
    return %c0_i32, %c0_i32_0 : i32, i32
  }
  func.func @transform_4(%arg0: i32) -> (i32, i32) {
    %c0_i32 = arith.constant 0 : i32
    %c0_i32_0 = arith.constant 0 : i32
    %c0_i32_1 = arith.constant 0 : i32
    return %c0_i32, %c0_i32_0 : i32, i32
  }
  func.func @transform_5(%arg0: i32) -> (i32, i32) {
    %c0_i32 = arith.constant 0 : i32
    %c0_i32_0 = arith.constant 0 : i32
    %c0_i32_1 = arith.constant 0 : i32
    return %c0_i32, %c0_i32_0 : i32, i32
  }
  func.func @transform_6(%arg0: i32) -> (i32, i32) {
    %c0_i32 = arith.constant 0 : i32
    %c0_i32_0 = arith.constant 0 : i32
    %c0_i32_1 = arith.constant 0 : i32
    return %c0_i32, %c0_i32_0 : i32, i32
  }
  func.func @transform_7(%arg0: i32) -> (i32, i32) {
    %c0_i32 = arith.constant 0 : i32
    %c0_i32_0 = arith.constant 0 : i32
    %c0_i32_1 = arith.constant 0 : i32
    return %c0_i32, %c0_i32_0 : i32, i32
  }
  func.func @transform_8(%arg0: i32) -> (i32, i32) {
    %c0_i32 = arith.constant 0 : i32
    %c0_i32_0 = arith.constant 0 : i32
    %c0_i32_1 = arith.constant 0 : i32
    return %c0_i32, %c0_i32_0 : i32, i32
  }
  func.func @transform_9(%arg0: i32) -> (i32, i32) {
    %c0_i32 = arith.constant 0 : i32
    %c0_i32_0 = arith.constant 0 : i32
    %c0_i32_1 = arith.constant 0 : i32
    return %c0_i32, %c0_i32_0 : i32, i32
  }
  func.func @transform_10(%arg0: i32) -> (i32, i32) {
    %c0_i32 = arith.constant 0 : i32
    %c0_i32_0 = arith.constant 0 : i32
    %c0_i32_1 = arith.constant 0 : i32
    return %c0_i32, %c0_i32_0 : i32, i32
  }
  func.func @transform_11(%arg0: i32) -> (i32, i32) {
    %c0_i32 = arith.constant 0 : i32
    %c0_i32_0 = arith.constant 0 : i32
    %c0_i32_1 = arith.constant 0 : i32
    return %c0_i32, %c0_i32_0 : i32, i32
  }
  func.func @transform_12(%arg0: i32) -> (i32, i32) {
    %c0_i32 = arith.constant 0 : i32
    %c0_i32_0 = arith.constant 0 : i32
    %c0_i32_1 = arith.constant 0 : i32
    return %c0_i32, %c0_i32_0 : i32, i32
  }
  func.func @transform_13(%arg0: i32) -> (i32, i32, i32) {
    %c0_i32 = arith.constant 0 : i32
    %c0_i32_0 = arith.constant 0 : i32
    %c0_i32_1 = arith.constant 0 : i32
    return %arg0, %c0_i32, %c0_i32_0 : i32, i32, i32
  }
}

module attributes {stable_mosaic.version = 11 : i64} {
  func.func @encoder_kernel(%arg0: i32, %arg1: memref<8x16x32xf32, #tpu.memory_space<vmem>>, %arg2: memref<1x32xf32, #tpu.memory_space<vmem>>, %arg3: memref<1x32xf32, #tpu.memory_space<vmem>>, %arg4: memref<32x96xbf16, #tpu.memory_space<vmem>>, %arg5: memref<1x96xf32, #tpu.memory_space<vmem>>, %arg6: memref<32x32xbf16, #tpu.memory_space<vmem>>, %arg7: memref<1x32xf32, #tpu.memory_space<vmem>>, %arg8: memref<1x32xf32, #tpu.memory_space<vmem>>, %arg9: memref<1x32xf32, #tpu.memory_space<vmem>>, %arg10: memref<32x128xbf16, #tpu.memory_space<vmem>>, %arg11: memref<1x128xf32, #tpu.memory_space<vmem>>, %arg12: memref<128x32xbf16, #tpu.memory_space<vmem>>, %arg13: memref<1x32xf32, #tpu.memory_space<vmem>>, %arg14: memref<8x16x32xf32, #tpu.memory_space<vmem>>) attributes {dimension_semantics = [#tpu.dimension_semantics<parallel>], iteration_bounds = array<i64: 2>, scalar_prefetch = 0 : i64, scratch_operands = 0 : i64, tpu.core_type = #tpu.core_type<tc>, window_params = [{transform_indices = @transform_0, window_bounds = array<i64: 8, 16, 32>}, {pipeline_mode = #tpu.pipeline_mode<synchronous>, transform_indices = @transform_1, window_bounds = array<i64: 1, 32>}, {pipeline_mode = #tpu.pipeline_mode<synchronous>, transform_indices = @transform_2, window_bounds = array<i64: 1, 32>}, {pipeline_mode = #tpu.pipeline_mode<synchronous>, transform_indices = @transform_3, window_bounds = array<i64: 32, 96>}, {pipeline_mode = #tpu.pipeline_mode<synchronous>, transform_indices = @transform_4, window_bounds = array<i64: 1, 96>}, {pipeline_mode = #tpu.pipeline_mode<synchronous>, transform_indices = @transform_5, window_bounds = array<i64: 32, 32>}, {pipeline_mode = #tpu.pipeline_mode<synchronous>, transform_indices = @transform_6, window_bounds = array<i64: 1, 32>}, {pipeline_mode = #tpu.pipeline_mode<synchronous>, transform_indices = @transform_7, window_bounds = array<i64: 1, 32>}, {pipeline_mode = #tpu.pipeline_mode<synchronous>, transform_indices = @transform_8, window_bounds = array<i64: 1, 32>}, {pipeline_mode = #tpu.pipeline_mode<synchronous>, transform_indices = @transform_9, window_bounds = array<i64: 32, 128>}, {pipeline_mode = #tpu.pipeline_mode<synchronous>, transform_indices = @transform_10, window_bounds = array<i64: 1, 128>}, {pipeline_mode = #tpu.pipeline_mode<synchronous>, transform_indices = @transform_11, window_bounds = array<i64: 128, 32>}, {pipeline_mode = #tpu.pipeline_mode<synchronous>, transform_indices = @transform_12, window_bounds = array<i64: 1, 32>}, {transform_indices = @transform_13, window_bounds = array<i64: 8, 16, 32>}]} {
    %0 = tpu.iota {dimensions = array<i32: 1>} : vector<1x4x1x32xi32>
    %1 = tpu.iota {dimensions = array<i32: 3>} : vector<1x4x1x32xi32>
    %c8_i32 = arith.constant 8 : i32
    %2 = vector.broadcast %c8_i32 : i32 to vector<1x4x1x32xi32>
    %3 = arith.muli %0, %2 : vector<1x4x1x32xi32>
    %4 = arith.cmpi sge, %1, %3 : vector<1x4x1x32xi32>
    %c8_i32_0 = arith.constant 8 : i32
    %5 = vector.broadcast %c8_i32_0 : i32 to vector<1x4x1x32xi32>
    %6 = arith.addi %3, %5 : vector<1x4x1x32xi32>
    %7 = arith.cmpi slt, %1, %6 : vector<1x4x1x32xi32>
    %8 = arith.andi %4, %7 : vector<1x4x1x32xi1>
    %9 = arith.extui %8 : vector<1x4x1x32xi1> to vector<1x4x1x32xi32>
    %10 = arith.sitofp %9 : vector<1x4x1x32xi32> to vector<1x4x1x32xf32>
    %c0 = arith.constant 0 : index
    %c0_1 = arith.constant 0 : index
    %c0_2 = arith.constant 0 : index
    %11 = vector.load %arg1[%c0, %c0_1, %c0_2] : memref<8x16x32xf32, #tpu.memory_space<vmem>>, vector<8x16x32xf32>
    %12 = vector.shape_cast %11 : vector<8x16x32xf32> to vector<128x32xf32>
    %c0_3 = arith.constant 0 : index
    %c0_4 = arith.constant 0 : index
    %13 = vector.load %arg2[%c0_3, %c0_4] : memref<1x32xf32, #tpu.memory_space<vmem>>, vector<1x32xf32>
    %c0_5 = arith.constant 0 : index
    %c0_6 = arith.constant 0 : index
    %14 = vector.load %arg3[%c0_5, %c0_6] : memref<1x32xf32, #tpu.memory_space<vmem>>, vector<1x32xf32>
    %c0_7 = arith.constant 0 : index
    %c0_8 = arith.constant 0 : index
    %15 = vector.load %arg4[%c0_7, %c0_8] : memref<32x96xbf16, #tpu.memory_space<vmem>>, vector<32x96xbf16>
    %c0_9 = arith.constant 0 : index
    %c0_10 = arith.constant 0 : index
    %16 = vector.load %arg5[%c0_9, %c0_10] : memref<1x96xf32, #tpu.memory_space<vmem>>, vector<1x96xf32>
    %c0_11 = arith.constant 0 : index
    %c0_12 = arith.constant 0 : index
    %17 = vector.load %arg6[%c0_11, %c0_12] : memref<32x32xbf16, #tpu.memory_space<vmem>>, vector<32x32xbf16>
    %c0_13 = arith.constant 0 : index
    %c0_14 = arith.constant 0 : index
    %18 = vector.load %arg7[%c0_13, %c0_14] : memref<1x32xf32, #tpu.memory_space<vmem>>, vector<1x32xf32>
    %c0_15 = arith.constant 0 : index
    %c0_16 = arith.constant 0 : index
    %19 = vector.load %arg8[%c0_15, %c0_16] : memref<1x32xf32, #tpu.memory_space<vmem>>, vector<1x32xf32>
    %c0_17 = arith.constant 0 : index
    %c0_18 = arith.constant 0 : index
    %20 = vector.load %arg9[%c0_17, %c0_18] : memref<1x32xf32, #tpu.memory_space<vmem>>, vector<1x32xf32>
    %c0_19 = arith.constant 0 : index
    %c0_20 = arith.constant 0 : index
    %21 = vector.load %arg10[%c0_19, %c0_20] : memref<32x128xbf16, #tpu.memory_space<vmem>>, vector<32x128xbf16>
    %c0_21 = arith.constant 0 : index
    %c0_22 = arith.constant 0 : index
    %22 = vector.load %arg11[%c0_21, %c0_22] : memref<1x128xf32, #tpu.memory_space<vmem>>, vector<1x128xf32>
    %c0_23 = arith.constant 0 : index
    %c0_24 = arith.constant 0 : index
    %23 = vector.load %arg12[%c0_23, %c0_24] : memref<128x32xbf16, #tpu.memory_space<vmem>>, vector<128x32xbf16>
    %c0_25 = arith.constant 0 : index
    %c0_26 = arith.constant 0 : index
    %24 = vector.load %arg13[%c0_25, %c0_26] : memref<1x32xf32, #tpu.memory_space<vmem>>, vector<1x32xf32>
    %cst = arith.constant dense<0.000000e+00> : vector<128xf32>
    %25 = vector.multi_reduction <add>, %12, %cst [1] : vector<128x32xf32> to vector<128xf32>
    %26 = vector.shape_cast %25 : vector<128xf32> to vector<128x1xf32>
    %cst_27 = arith.constant 3.200000e+01 : f32
    %27 = vector.broadcast %cst_27 : f32 to vector<128x1xf32>
    %28 = arith.divf %26, %27 : vector<128x1xf32>
    %29 = vector.broadcast %28 : vector<128x1xf32> to vector<128x32xf32>
    %30 = arith.subf %12, %29 : vector<128x32xf32>
    %31 = arith.mulf %30, %30 : vector<128x32xf32>
    %cst_28 = arith.constant dense<0.000000e+00> : vector<128xf32>
    %32 = vector.multi_reduction <add>, %31, %cst_28 [1] : vector<128x32xf32> to vector<128xf32>
    %33 = vector.shape_cast %32 : vector<128xf32> to vector<128x1xf32>
    %cst_29 = arith.constant 3.200000e+01 : f32
    %34 = vector.broadcast %cst_29 : f32 to vector<128x1xf32>
    %35 = arith.divf %33, %34 : vector<128x1xf32>
    %36 = vector.broadcast %28 : vector<128x1xf32> to vector<128x32xf32>
    %37 = arith.subf %12, %36 : vector<128x32xf32>
    %cst_30 = arith.constant 9.99999974E-6 : f32
    %38 = vector.broadcast %cst_30 : f32 to vector<128x1xf32>
    %39 = arith.addf %35, %38 : vector<128x1xf32>
    %40 = math.rsqrt %39 : vector<128x1xf32>
    %41 = vector.broadcast %40 : vector<128x1xf32> to vector<128x32xf32>
    %42 = arith.mulf %37, %41 : vector<128x32xf32>
    %43 = vector.broadcast %13 : vector<1x32xf32> to vector<128x32xf32>
    %44 = arith.mulf %42, %43 : vector<128x32xf32>
    %45 = vector.broadcast %14 : vector<1x32xf32> to vector<128x32xf32>
    %46 = arith.addf %44, %45 : vector<128x32xf32>
    %47 = arith.truncf %46 : vector<128x32xf32> to vector<128x32xbf16>
    %cst_31 = arith.constant dense<0.000000e+00> : vector<128x96xf32>
    %48 = tpu.matmul %47, %15, %cst_31 {dimension_numbers = #tpu.dot_dimension_numbers<[1], [0], [0], [1], [0, 0, 1, 1], [], []>} : vector<128x32xbf16>, vector<32x96xbf16>, vector<128x96xf32> -> vector<128x96xf32>
    %49 = vector.broadcast %16 : vector<1x96xf32> to vector<128x96xf32>
    %50 = arith.addf %48, %49 : vector<128x96xf32>
    %51 = vector.extract_strided_slice %50 {offsets = [0, 0], sizes = [128, 32], strides = [1, 1]} : vector<128x96xf32> to vector<128x32xf32>
    %cst_32 = arith.constant 0.353553385 : f32
    %52 = vector.broadcast %cst_32 : f32 to vector<128x32xf32>
    %53 = arith.mulf %51, %52 : vector<128x32xf32>
    %54 = vector.extract_strided_slice %50 {offsets = [0, 32], sizes = [128, 32], strides = [1, 1]} : vector<128x96xf32> to vector<128x32xf32>
    %55 = vector.extract_strided_slice %50 {offsets = [0, 64], sizes = [128, 32], strides = [1, 1]} : vector<128x96xf32> to vector<128x32xf32>
    %56 = vector.shape_cast %53 : vector<128x32xf32> to vector<8x16x32xf32>
    %57 = vector.shape_cast %54 : vector<128x32xf32> to vector<8x16x32xf32>
    %58 = vector.shape_cast %55 : vector<128x32xf32> to vector<8x16x32xf32>
    %59 = vector.shape_cast %56 : vector<8x16x32xf32> to vector<8x1x16x32xf32>
    %60 = vector.broadcast %59 : vector<8x1x16x32xf32> to vector<8x4x16x32xf32>
    %61 = vector.broadcast %10 : vector<1x4x1x32xf32> to vector<8x4x16x32xf32>
    %62 = arith.mulf %60, %61 : vector<8x4x16x32xf32>
    %63 = arith.truncf %62 : vector<8x4x16x32xf32> to vector<8x4x16x32xbf16>
    %64 = vector.shape_cast %63 : vector<8x4x16x32xbf16> to vector<32x16x32xbf16>
    %65 = arith.truncf %57 : vector<8x16x32xf32> to vector<8x16x32xbf16>
    %66 = vector.shape_cast %65 : vector<8x16x32xbf16> to vector<8x1x16x32xbf16>
    %67 = vector.shape_cast %66 : vector<8x1x16x32xbf16> to vector<8x1x16x32xbf16>
    %68 = vector.broadcast %67 : vector<8x1x16x32xbf16> to vector<8x4x16x32xbf16>
    %69 = vector.shape_cast %68 : vector<8x4x16x32xbf16> to vector<32x16x32xbf16>
    %70 = vector.shape_cast %58 : vector<8x16x32xf32> to vector<8x1x16x32xf32>
    %71 = vector.broadcast %70 : vector<8x1x16x32xf32> to vector<8x4x16x32xf32>
    %72 = vector.broadcast %10 : vector<1x4x1x32xf32> to vector<8x4x16x32xf32>
    %73 = arith.mulf %71, %72 : vector<8x4x16x32xf32>
    %74 = arith.truncf %73 : vector<8x4x16x32xf32> to vector<8x4x16x32xbf16>
    %75 = vector.shape_cast %74 : vector<8x4x16x32xbf16> to vector<32x16x32xbf16>
    "tpu.trace_start"() <{level = 10 : i32, message = "bqd,bkd->bqk"}> : () -> ()
    %cst_33 = arith.constant dense<0.000000e+00> : vector<32x16x16xf32>
    %76 = tpu.matmul %64, %69, %cst_33 {dimension_numbers = #tpu.dot_dimension_numbers<[2], [2], [1], [1], [0, 0, 0, 1, 1, 1], [0], [0]>} : vector<32x16x32xbf16>, vector<32x16x32xbf16>, vector<32x16x16xf32> -> vector<32x16x16xf32>
    "tpu.trace_stop"() : () -> ()
    %cst_34 = arith.constant dense<0xFF800000> : vector<32x16xf32>
    %77 = vector.multi_reduction <maximumf>, %76, %cst_34 [2] : vector<32x16x16xf32> to vector<32x16xf32>
    %78 = vector.shape_cast %77 : vector<32x16xf32> to vector<32x16x1xf32>
    %79 = vector.broadcast %78 : vector<32x16x1xf32> to vector<32x16x16xf32>
    %80 = arith.subf %76, %79 : vector<32x16x16xf32>
    %81 = math.exp %80 : vector<32x16x16xf32>
    %cst_35 = arith.constant dense<0.000000e+00> : vector<32x16xf32>
    %82 = vector.multi_reduction <add>, %81, %cst_35 [2] : vector<32x16x16xf32> to vector<32x16xf32>
    %83 = vector.shape_cast %82 : vector<32x16xf32> to vector<32x16x1xf32>
    %84 = arith.truncf %81 : vector<32x16x16xf32> to vector<32x16x16xbf16>
    "tpu.trace_start"() <{level = 10 : i32, message = "bqk,bkd->bqd"}> : () -> ()
    %cst_36 = arith.constant dense<0.000000e+00> : vector<32x16x32xf32>
    %85 = tpu.matmul %84, %75, %cst_36 {dimension_numbers = #tpu.dot_dimension_numbers<[2], [1], [1], [2], [0, 0, 0, 1, 1, 2], [0], [0]>} : vector<32x16x16xbf16>, vector<32x16x32xbf16>, vector<32x16x32xf32> -> vector<32x16x32xf32>
    "tpu.trace_stop"() : () -> ()
    %86 = tpu.reciprocal %83 {approx = true} : vector<32x16x1xf32> -> vector<32x16x1xf32>
    %87 = vector.broadcast %86 : vector<32x16x1xf32> to vector<32x16x32xf32>
    %88 = arith.mulf %85, %87 : vector<32x16x32xf32>
    %89 = vector.shape_cast %88 : vector<32x16x32xf32> to vector<8x4x16x32xf32>
    %cst_37 = arith.constant dense<0.000000e+00> : vector<8x16x32xf32>
    %90 = vector.multi_reduction <add>, %89, %cst_37 [1] : vector<8x4x16x32xf32> to vector<8x16x32xf32>
    %91 = vector.shape_cast %90 : vector<8x16x32xf32> to vector<128x32xf32>
    %92 = arith.truncf %91 : vector<128x32xf32> to vector<128x32xbf16>
    %cst_38 = arith.constant dense<0.000000e+00> : vector<128x32xf32>
    %93 = tpu.matmul %92, %17, %cst_38 {dimension_numbers = #tpu.dot_dimension_numbers<[1], [0], [0], [1], [0, 0, 1, 1], [], []>} : vector<128x32xbf16>, vector<32x32xbf16>, vector<128x32xf32> -> vector<128x32xf32>
    %94 = vector.broadcast %18 : vector<1x32xf32> to vector<128x32xf32>
    %95 = arith.addf %93, %94 : vector<128x32xf32>
    %96 = arith.addf %12, %95 : vector<128x32xf32>
    %cst_39 = arith.constant dense<0.000000e+00> : vector<128xf32>
    %97 = vector.multi_reduction <add>, %96, %cst_39 [1] : vector<128x32xf32> to vector<128xf32>
    %98 = vector.shape_cast %97 : vector<128xf32> to vector<128x1xf32>
    %cst_40 = arith.constant 3.200000e+01 : f32
    %99 = vector.broadcast %cst_40 : f32 to vector<128x1xf32>
    %100 = arith.divf %98, %99 : vector<128x1xf32>
    %101 = vector.broadcast %100 : vector<128x1xf32> to vector<128x32xf32>
    %102 = arith.subf %96, %101 : vector<128x32xf32>
    %103 = arith.mulf %102, %102 : vector<128x32xf32>
    %cst_41 = arith.constant dense<0.000000e+00> : vector<128xf32>
    %104 = vector.multi_reduction <add>, %103, %cst_41 [1] : vector<128x32xf32> to vector<128xf32>
    %105 = vector.shape_cast %104 : vector<128xf32> to vector<128x1xf32>
    %cst_42 = arith.constant 3.200000e+01 : f32
    %106 = vector.broadcast %cst_42 : f32 to vector<128x1xf32>
    %107 = arith.divf %105, %106 : vector<128x1xf32>
    %108 = vector.broadcast %100 : vector<128x1xf32> to vector<128x32xf32>
    %109 = arith.subf %96, %108 : vector<128x32xf32>
    %cst_43 = arith.constant 9.99999974E-6 : f32
    %110 = vector.broadcast %cst_43 : f32 to vector<128x1xf32>
    %111 = arith.addf %107, %110 : vector<128x1xf32>
    %112 = math.rsqrt %111 : vector<128x1xf32>
    %113 = vector.broadcast %112 : vector<128x1xf32> to vector<128x32xf32>
    %114 = arith.mulf %109, %113 : vector<128x32xf32>
    %115 = vector.broadcast %19 : vector<1x32xf32> to vector<128x32xf32>
    %116 = arith.mulf %114, %115 : vector<128x32xf32>
    %117 = vector.broadcast %20 : vector<1x32xf32> to vector<128x32xf32>
    %118 = arith.addf %116, %117 : vector<128x32xf32>
    %119 = arith.truncf %118 : vector<128x32xf32> to vector<128x32xbf16>
    %cst_44 = arith.constant dense<0.000000e+00> : vector<128x128xf32>
    %120 = tpu.matmul %119, %21, %cst_44 {dimension_numbers = #tpu.dot_dimension_numbers<[1], [0], [0], [1], [0, 0, 1, 1], [], []>} : vector<128x32xbf16>, vector<32x128xbf16>, vector<128x128xf32> -> vector<128x128xf32>
    %121 = vector.broadcast %22 : vector<1x128xf32> to vector<128x128xf32>
    %122 = arith.addf %120, %121 : vector<128x128xf32>
    %cst_45 = arith.constant 0.000000e+00 : f32
    %123 = vector.broadcast %cst_45 : f32 to vector<128x128xf32>
    %124 = arith.maximumf %122, %123 : vector<128x128xf32>
    %125 = arith.truncf %124 : vector<128x128xf32> to vector<128x128xbf16>
    %cst_46 = arith.constant dense<0.000000e+00> : vector<128x32xf32>
    %126 = tpu.matmul %125, %23, %cst_46 {dimension_numbers = #tpu.dot_dimension_numbers<[1], [0], [0], [1], [0, 0, 1, 1], [], []>} : vector<128x128xbf16>, vector<128x32xbf16>, vector<128x32xf32> -> vector<128x32xf32>
    %127 = vector.broadcast %24 : vector<1x32xf32> to vector<128x32xf32>
    %128 = arith.addf %126, %127 : vector<128x32xf32>
    %129 = arith.addf %96, %128 : vector<128x32xf32>
    %130 = vector.shape_cast %129 : vector<128x32xf32> to vector<8x16x32xf32>
    %c0_47 = arith.constant 0 : index
    %c0_48 = arith.constant 0 : index
    %c0_49 = arith.constant 0 : index
    %131 = vector.load %arg14[%c0_47, %c0_48, %c0_49] : memref<8x16x32xf32, #tpu.memory_space<vmem>>, vector<8x16x32xf32>
    tpu.vector_store %arg14[%c0_47, %c0_48, %c0_49], %130 {strides = array<i32>} : memref<8x16x32xf32, #tpu.memory_space<vmem>>, vector<8x16x32xf32>,
    return
  }
  func.func @transform_0(%arg0: i32) -> (i32, i32, i32) {
    %c0_i32 = arith.constant 0 : i32
    %c0_i32_0 = arith.constant 0 : i32
    %c0_i32_1 = arith.constant 0 : i32
    return %arg0, %c0_i32, %c0_i32_0 : i32, i32, i32
  }
  func.func @transform_1(%arg0: i32) -> (i32, i32) {
    %c0_i32 = arith.constant 0 : i32
    %c0_i32_0 = arith.constant 0 : i32
    %c0_i32_1 = arith.constant 0 : i32
    return %c0_i32, %c0_i32_0 : i32, i32
  }
  func.func @transform_2(%arg0: i32) -> (i32, i32) {
    %c0_i32 = arith.constant 0 : i32
    %c0_i32_0 = arith.constant 0 : i32
    %c0_i32_1 = arith.constant 0 : i32
    return %c0_i32, %c0_i32_0 : i32, i32
  }
  func.func @transform_3(%arg0: i32) -> (i32, i32) {
    %c0_i32 = arith.constant 0 : i32
    %c0_i32_0 = arith.constant 0 : i32
    %c0_i32_1 = arith.constant 0 : i32
    return %c0_i32, %c0_i32_0 : i32, i32
  }
  func.func @transform_4(%arg0: i32) -> (i32, i32) {
    %c0_i32 = arith.constant 0 : i32
    %c0_i32_0 = arith.constant 0 : i32
    %c0_i32_1 = arith.constant 0 : i32
    return %c0_i32, %c0_i32_0 : i32, i32
  }
  func.func @transform_5(%arg0: i32) -> (i32, i32) {
    %c0_i32 = arith.constant 0 : i32
    %c0_i32_0 = arith.constant 0 : i32
    %c0_i32_1 = arith.constant 0 : i32
    return %c0_i32, %c0_i32_0 : i32, i32
  }
  func.func @transform_6(%arg0: i32) -> (i32, i32) {
    %c0_i32 = arith.constant 0 : i32
    %c0_i32_0 = arith.constant 0 : i32
    %c0_i32_1 = arith.constant 0 : i32
    return %c0_i32, %c0_i32_0 : i32, i32
  }
  func.func @transform_7(%arg0: i32) -> (i32, i32) {
    %c0_i32 = arith.constant 0 : i32
    %c0_i32_0 = arith.constant 0 : i32
    %c0_i32_1 = arith.constant 0 : i32
    return %c0_i32, %c0_i32_0 : i32, i32
  }
  func.func @transform_8(%arg0: i32) -> (i32, i32) {
    %c0_i32 = arith.constant 0 : i32
    %c0_i32_0 = arith.constant 0 : i32
    %c0_i32_1 = arith.constant 0 : i32
    return %c0_i32, %c0_i32_0 : i32, i32
  }
  func.func @transform_9(%arg0: i32) -> (i32, i32) {
    %c0_i32 = arith.constant 0 : i32
    %c0_i32_0 = arith.constant 0 : i32
    %c0_i32_1 = arith.constant 0 : i32
    return %c0_i32, %c0_i32_0 : i32, i32
  }
  func.func @transform_10(%arg0: i32) -> (i32, i32) {
    %c0_i32 = arith.constant 0 : i32
    %c0_i32_0 = arith.constant 0 : i32
    %c0_i32_1 = arith.constant 0 : i32
    return %c0_i32, %c0_i32_0 : i32, i32
  }
  func.func @transform_11(%arg0: i32) -> (i32, i32) {
    %c0_i32 = arith.constant 0 : i32
    %c0_i32_0 = arith.constant 0 : i32
    %c0_i32_1 = arith.constant 0 : i32
    return %c0_i32, %c0_i32_0 : i32, i32
  }
  func.func @transform_12(%arg0: i32) -> (i32, i32) {
    %c0_i32 = arith.constant 0 : i32
    %c0_i32_0 = arith.constant 0 : i32
    %c0_i32_1 = arith.constant 0 : i32
    return %c0_i32, %c0_i32_0 : i32, i32
  }
  func.func @transform_13(%arg0: i32) -> (i32, i32, i32) {
    %c0_i32 = arith.constant 0 : i32
    %c0_i32_0 = arith.constant 0 : i32
    %c0_i32_1 = arith.constant 0 : i32
    return %arg0, %c0_i32, %c0_i32_0 : i32, i32, i32
  }
}

</mosaic_0001>

<llo_original>
// kernel: msa2msa_forward.3
$region0: #{msa2msa_forward.3}
  #allocation0 [shape = 'u32[]', space=smem, size = 0x4, offset = 0x4, fixed_abs, tag = 'smem constant byte address 0x4 - core index']
  #allocation1 [shape = 'u32[72,128]{1,0:T(1,128)}', space=vmem, size = 0x9000, scoped, tag = 'internal scratch']
  %s0 = inlined_call_operand.vmem [shape: f32[16,16,32], index: 0, kind: input, shape index: {}]
  %s1 = inlined_call_operand.vmem [shape: f32[1,32], index: 1, kind: input, shape index: {}]
  %s2 = inlined_call_operand.vmem [shape: f32[1,32], index: 2, kind: input, shape index: {}]
  %s3 = inlined_call_operand.vmem [shape: bf16[32,96], index: 3, kind: input, shape index: {}]
  %s4 = inlined_call_operand.vmem [shape: f32[1,96], index: 4, kind: input, shape index: {}]
  %s5 = inlined_call_operand.vmem [shape: bf16[32,32], index: 5, kind: input, shape index: {}]
  %s6 = inlined_call_operand.vmem [shape: f32[1,32], index: 6, kind: input, shape index: {}]
  %s7 = inlined_call_operand.vmem [shape: f32[1,32], index: 7, kind: input, shape index: {}]
  %s8 = inlined_call_operand.vmem [shape: f32[1,32], index: 8, kind: input, shape index: {}]
  %s9 = inlined_call_operand.vmem [shape: bf16[32,128], index: 9, kind: input, shape index: {}]
  %s10 = inlined_call_operand.vmem [shape: f32[1,128], index: 10, kind: input, shape index: {}]
  %s11 = inlined_call_operand.vmem [shape: bf16[128,32], index: 11, kind: input, shape index: {}]
  %s12 = inlined_call_operand.vmem [shape: f32[1,32], index: 12, kind: input, shape index: {}]
  %s13 = inlined_call_operand.hbm [shape: f32[16,16,32], index: 13, kind: output, shape index: {}]
  %s14 = sld [smem:[#allocation0]]
  $region85: #{msa2msa_forward.3} parent=0
    _
  %s16 = ssub.s32 1, %s14
  %s17 = scalar_select 0, %s16, %s14
  $region1: #{msa2msa_forward.3} parent=0
    #allocation2 [shape = 'u8[131072]{0}', space=vmem, size = 0x20000, scoped, tag = 'output window, operand 0']
    #allocation3 [shape = 's32[2]{0}', space=sflag, size = 0x8, scoped, tag = 'scoped memory for msa2msa_forward.3']
    %18 = vsyncpa [#allocation3], 0
    %s19 = scalar_lea.sflag [#allocation3], 1
    %20 = vsyncpa %s19, 0
    loop: start=0, step=1, limit=4
    $region2: #{msa2msa_forward.3} parent=1 // loop_pre_header
      _
    $region3: #{msa2msa_forward.3} parent=1 // loop_header
      %s22 = sphi 0, %s26
      %p23 = scmp.ge.s32.totalorder %s22, 4
      %s32 = sphi 0, %s34
      %s35 = sphi 0, %s32
      %s36 = sphi 0, %s35
      %s52 = sphi 0, %s36
      %s56 = sphi 0, %s56
      %s58 = sphi 0, %s56
      %s59 = sphi 0, %s58
      %s73 = sphi 0, %s59
      %s77 = sphi 0, %s77
      %s79 = sphi 0, %s77
      %s80 = sphi 0, %s79
      %s94 = sphi 0, %s80
      %s98 = sphi 0, %s98
      %s100 = sphi 0, %s98
      %s101 = sphi 0, %s100
      %s115 = sphi 0, %s101
      %s119 = sphi 0, %s119
      %s121 = sphi 0, %s119
      %s122 = sphi 0, %s121
      %s136 = sphi 0, %s122
      %s140 = sphi 0, %s140
      %s142 = sphi 0, %s140
      %s143 = sphi 0, %s142
      %s157 = sphi 0, %s143
      %s161 = sphi 0, %s161
      %s163 = sphi 0, %s161
      %s164 = sphi 0, %s163
      %s178 = sphi 0, %s164
      %s182 = sphi 0, %s182
      %s184 = sphi 0, %s182
      %s185 = sphi 0, %s184
      %s199 = sphi 0, %s185
      %s203 = sphi 0, %s203
      %s205 = sphi 0, %s203
      %s206 = sphi 0, %s205
      %s220 = sphi 0, %s206
      %s224 = sphi 0, %s224
      %s226 = sphi 0, %s224
      %s227 = sphi 0, %s226
      %s241 = sphi 0, %s227
      %s245 = sphi 0, %s245
      %s247 = sphi 0, %s245
      %s248 = sphi 0, %s247
      %s262 = sphi 0, %s248
      %s266 = sphi 0, %s266
      %s268 = sphi 0, %s266
      %s269 = sphi 0, %s268
      %s283 = sphi 0, %s269
      %s287 = sphi 0, %s287
      %s289 = sphi 0, %s287
      %s290 = sphi 0, %s289
      %s304 = sphi 0, %s290
      %s310 = sphi 0, %s312
      %s313 = sphi 0, %s310
      %s314 = sphi 0, %s313
      %s330 = sphi 0, %s314
    $region4: #{msa2msa_forward.3} parent=1 // loop_header_branch
      %25 = sbr.rel (%p23) target = $region8
    $region5: #{msa2msa_forward.3} parent=1 // loop_body
      %s27 = ssub.s32 %s22, 1
      %s28 = ssub.s32 %s22, 2
      %s29 = sadd.s32 %s22, 1
      %s30 = ssub.s32 %s22, %s29
      %p31 = scmp.eq.s32.totalorder %s30, 0
      %s33 = sadd.s32 %s32, 1
      %s34 = scalar_select %p31, %s32, %s33
      %p37 = pneg %p31
      %p38 = scmp.eq.s32.totalorder %s22, 1
      %p39 = por %p37, %p38
      %p40 = scmp.ne.s32.totalorder %s32, %s35
      %p41 = scmp.eq.s32.totalorder %s22, 0
      %p42 = por %p40, %p41
      %p43 = scmp.ne.s32.totalorder %s32, %s35
      %p44 = scmp.eq.s32.totalorder %s27, 1
      %p45 = por %p43, %p44
      %p46 = scmp.ne.s32.totalorder %s35, %s36
      %p47 = scmp.eq.s32.totalorder %s27, 0
      %p48 = por %p46, %p47
      %p49 = scmp.ne.s32.totalorder %s35, %s36
      %p50 = scmp.eq.s32.totalorder %s28, 1
      %p51 = por %p49, %p50
      %p53 = scmp.ne.s32.totalorder %s36, %s52
      %p54 = scmp.eq.s32.totalorder %s28, 0
      %p55 = por %p53, %p54
      %s57 = sadd.s32 %s56, 1
      %p60 = scmp.eq.s32.totalorder %s22, 1
      %p61 = scmp.ne.s32.totalorder %s56, %s58
      %p62 = scmp.eq.s32.totalorder %s22, 0
      %p63 = por %p61, %p62
      %p64 = scmp.ne.s32.totalorder %s56, %s58
      %p65 = scmp.eq.s32.totalorder %s27, 1
      %p66 = por %p64, %p65
      %p67 = scmp.ne.s32.totalorder %s58, %s59
      %p68 = scmp.eq.s32.totalorder %s27, 0
      %p69 = por %p67, %p68
      %p70 = scmp.ne.s32.totalorder %s58, %s59
      %p71 = scmp.eq.s32.totalorder %s28, 1
      %p72 = por %p70, %p71
      %p74 = scmp.ne.s32.totalorder %s59, %s73
      %p75 = scmp.eq.s32.totalorder %s28, 0
      %p76 = por %p74, %p75
      %s78 = sadd.s32 %s77, 1
      %p81 = scmp.eq.s32.totalorder %s22, 1
      %p82 = scmp.ne.s32.totalorder %s77, %s79
      %p83 = scmp.eq.s32.totalorder %s22, 0
      %p84 = por %p82, %p83
      %p85 = scmp.ne.s32.totalorder %s77, %s79
      %p86 = scmp.eq.s32.totalorder %s27, 1
      %p87 = por %p85, %p86
      %p88 = scmp.ne.s32.totalorder %s79, %s80
      %p89 = scmp.eq.s32.totalorder %s27, 0
      %p90 = por %p88, %p89
      %p91 = scmp.ne.s32.totalorder %s79, %s80
      %p92 = scmp.eq.s32.totalorder %s28, 1
      %p93 = por %p91, %p92
      %p95 = scmp.ne.s32.totalorder %s80, %s94
      %p96 = scmp.eq.s32.totalorder %s28, 0
      %p97 = por %p95, %p96
      %s99 = sadd.s32 %s98, 1
      %p102 = scmp.eq.s32.totalorder %s22, 1
      %p103 = scmp.ne.s32.totalorder %s98, %s100
      %p104 = scmp.eq.s32.totalorder %s22, 0
      %p105 = por %p103, %p104
      %p106 = scmp.ne.s32.totalorder %s98, %s100
      %p107 = scmp.eq.s32.totalorder %s27, 1
      %p108 = por %p106, %p107
      %p109 = scmp.ne.s32.totalorder %s100, %s101
      %p110 = scmp.eq.s32.totalorder %s27, 0
      %p111 = por %p109, %p110
      %p112 = scmp.ne.s32.totalorder %s100, %s101
      %p113 = scmp.eq.s32.totalorder %s28, 1
      %p114 = por %p112, %p113
      %p116 = scmp.ne.s32.totalorder %s101, %s115
      %p117 = scmp.eq.s32.totalorder %s28, 0
      %p118 = por %p116, %p117
      %s120 = sadd.s32 %s119, 1
      %p123 = scmp.eq.s32.totalorder %s22, 1
      %p124 = scmp.ne.s32.totalorder %s119, %s121
      %p125 = scmp.eq.s32.totalorder %s22, 0
      %p126 = por %p124, %p125
      %p127 = scmp.ne.s32.totalorder %s119, %s121
      %p128 = scmp.eq.s32.totalorder %s27, 1
      %p129 = por %p127, %p128
      %p130 = scmp.ne.s32.totalorder %s121, %s122
      %p131 = scmp.eq.s32.totalorder %s27, 0
      %p132 = por %p130, %p131
      %p133 = scmp.ne.s32.totalorder %s121, %s122
      %p134 = scmp.eq.s32.totalorder %s28, 1
      %p135 = por %p133, %p134
      %p137 = scmp.ne.s32.totalorder %s122, %s136
      %p138 = scmp.eq.s32.totalorder %s28, 0
      %p139 = por %p137, %p138
      %s141 = sadd.s32 %s140, 1
      %p144 = scmp.eq.s32.totalorder %s22, 1
      %p145 = scmp.ne.s32.totalorder %s140, %s142
      %p146 = scmp.eq.s32.totalorder %s22, 0
      %p147 = por %p145, %p146
      %p148 = scmp.ne.s32.totalorder %s140, %s142
      %p149 = scmp.eq.s32.totalorder %s27, 1
      %p150 = por %p148, %p149
      %p151 = scmp.ne.s32.totalorder %s142, %s143
      %p152 = scmp.eq.s32.totalorder %s27, 0
      %p153 = por %p151, %p152
      %p154 = scmp.ne.s32.totalorder %s142, %s143
      %p155 = scmp.eq.s32.totalorder %s28, 1
      %p156 = por %p154, %p155
      %p158 = scmp.ne.s32.totalorder %s143, %s157
      %p159 = scmp.eq.s32.totalorder %s28, 0
      %p160 = por %p158, %p159
      %s162 = sadd.s32 %s161, 1
      %p165 = scmp.eq.s32.totalorder %s22, 1
      %p166 = scmp.ne.s32.totalorder %s161, %s163
      %p167 = scmp.eq.s32.totalorder %s22, 0
      %p168 = por %p166, %p167
      %p169 = scmp.ne.s32.totalorder %s161, %s163
      %p170 = scmp.eq.s32.totalorder %s27, 1
      %p171 = por %p169, %p170
      %p172 = scmp.ne.s32.totalorder %s163, %s164
      %p173 = scmp.eq.s32.totalorder %s27, 0
      %p174 = por %p172, %p173
      %p175 = scmp.ne.s32.totalorder %s163, %s164
      %p176 = scmp.eq.s32.totalorder %s28, 1
      %p177 = por %p175, %p176
      %p179 = scmp.ne.s32.totalorder %s164, %s178
      %p180 = scmp.eq.s32.totalorder %s28, 0
      %p181 = por %p179, %p180
      %s183 = sadd.s32 %s182, 1
      %p186 = scmp.eq.s32.totalorder %s22, 1
      %p187 = scmp.ne.s32.totalorder %s182, %s184
      %p188 = scmp.eq.s32.totalorder %s22, 0
      %p189 = por %p187, %p188
      %p190 = scmp.ne.s32.totalorder %s182, %s184
      %p191 = scmp.eq.s32.totalorder %s27, 1
      %p192 = por %p190, %p191
      %p193 = scmp.ne.s32.totalorder %s184, %s185
      %p194 = scmp.eq.s32.totalorder %s27, 0
      %p195 = por %p193, %p194
      %p196 = scmp.ne.s32.totalorder %s184, %s185
      %p197 = scmp.eq.s32.totalorder %s28, 1
      %p198 = por %p196, %p197
      %p200 = scmp.ne.s32.totalorder %s185, %s199
      %p201 = scmp.eq.s32.totalorder %s28, 0
      %p202 = por %p200, %p201
      %s204 = sadd.s32 %s203, 1
      %p207 = scmp.eq.s32.totalorder %s22, 1
      %p208 = scmp.ne.s32.totalorder %s203, %s205
      %p209 = scmp.eq.s32.totalorder %s22, 0
      %p210 = por %p208, %p209
      %p211 = scmp.ne.s32.totalorder %s203, %s205
      %p212 = scmp.eq.s32.totalorder %s27, 1
      %p213 = por %p211, %p212
      %p214 = scmp.ne.s32.totalorder %s205, %s206
      %p215 = scmp.eq.s32.totalorder %s27, 0
      %p216 = por %p214, %p215
      %p217 = scmp.ne.s32.totalorder %s205, %s206
      %p218 = scmp.eq.s32.totalorder %s28, 1
      %p219 = por %p217, %p218
      %p221 = scmp.ne.s32.totalorder %s206, %s220
      %p222 = scmp.eq.s32.totalorder %s28, 0
      %p223 = por %p221, %p222
      %s225 = sadd.s32 %s224, 1
      %p228 = scmp.eq.s32.totalorder %s22, 1
      %p229 = scmp.ne.s32.totalorder %s224, %s226
      %p230 = scmp.eq.s32.totalorder %s22, 0
      %p231 = por %p229, %p230
      %p232 = scmp.ne.s32.totalorder %s224, %s226
      %p233 = scmp.eq.s32.totalorder %s27, 1
      %p234 = por %p232, %p233
      %p235 = scmp.ne.s32.totalorder %s226, %s227
      %p236 = scmp.eq.s32.totalorder %s27, 0
      %p237 = por %p235, %p236
      %p238 = scmp.ne.s32.totalorder %s226, %s227
      %p239 = scmp.eq.s32.totalorder %s28, 1
      %p240 = por %p238, %p239
      %p242 = scmp.ne.s32.totalorder %s227, %s241
      %p243 = scmp.eq.s32.totalorder %s28, 0
      %p244 = por %p242, %p243
      %s246 = sadd.s32 %s245, 1
      %p249 = scmp.eq.s32.totalorder %s22, 1
      %p250 = scmp.ne.s32.totalorder %s245, %s247
      %p251 = scmp.eq.s32.totalorder %s22, 0
      %p252 = por %p250, %p251
      %p253 = scmp.ne.s32.totalorder %s245, %s247
      %p254 = scmp.eq.s32.totalorder %s27, 1
      %p255 = por %p253, %p254
      %p256 = scmp.ne.s32.totalorder %s247, %s248
      %p257 = scmp.eq.s32.totalorder %s27, 0
      %p258 = por %p256, %p257
      %p259 = scmp.ne.s32.totalorder %s247, %s248
      %p260 = scmp.eq.s32.totalorder %s28, 1
      %p261 = por %p259, %p260
      %p263 = scmp.ne.s32.totalorder %s248, %s262
      %p264 = scmp.eq.s32.totalorder %s28, 0
      %p265 = por %p263, %p264
      %s267 = sadd.s32 %s266, 1
      %p270 = scmp.eq.s32.totalorder %s22, 1
      %p271 = scmp.ne.s32.totalorder %s266, %s268
      %p272 = scmp.eq.s32.totalorder %s22, 0
      %p273 = por %p271, %p272
      %p274 = scmp.ne.s32.totalorder %s266, %s268
      %p275 = scmp.eq.s32.totalorder %s27, 1
      %p276 = por %p274, %p275
      %p277 = scmp.ne.s32.totalorder %s268, %s269
      %p278 = scmp.eq.s32.totalorder %s27, 0
      %p279 = por %p277, %p278
      %p280 = scmp.ne.s32.totalorder %s268, %s269
      %p281 = scmp.eq.s32.totalorder %s28, 1
      %p282 = por %p280, %p281
      %p284 = scmp.ne.s32.totalorder %s269, %s283
      %p285 = scmp.eq.s32.totalorder %s28, 0
      %p286 = por %p284, %p285
      %s288 = sadd.s32 %s287, 1
      %p291 = scmp.eq.s32.totalorder %s22, 1
      %p292 = scmp.ne.s32.totalorder %s287, %s289
      %p293 = scmp.eq.s32.totalorder %s22, 0
      %p294 = por %p292, %p293
      %p295 = scmp.ne.s32.totalorder %s287, %s289
      %p296 = scmp.eq.s32.totalorder %s27, 1
      %p297 = por %p295, %p296
      %p298 = scmp.ne.s32.totalorder %s289, %s290
      %p299 = scmp.eq.s32.totalorder %s27, 0
      %p300 = por %p298, %p299
      %p301 = scmp.ne.s32.totalorder %s289, %s290
      %p302 = scmp.eq.s32.totalorder %s28, 1
      %p303 = por %p301, %p302
      %p305 = scmp.ne.s32.totalorder %s290, %s304
      %p306 = scmp.eq.s32.totalorder %s28, 0
      %p307 = por %p305, %p306
      %s308 = ssub.s32 %s22, %s29
      %p309 = scmp.eq.s32.totalorder %s308, 0
      %s311 = sadd.s32 %s310, 1
      %s312 = scalar_select %p309, %s310, %s311
      %p315 = pneg %p309
      %p316 = scmp.eq.s32.totalorder %s22, 1
      %p317 = por %p315, %p316
      %p318 = scmp.ne.s32.totalorder %s310, %s313
      %p319 = scmp.eq.s32.totalorder %s22, 0
      %p320 = por %p318, %p319
      %p321 = scmp.ne.s32.totalorder %s310, %s313
      %p322 = scmp.eq.s32.totalorder %s27, 1
      %p323 = por %p321, %p322
      %p324 = scmp.ne.s32.totalorder %s313, %s314
      %p325 = scmp.eq.s32.totalorder %s27, 0
      %p326 = por %p324, %p325
      %p327 = scmp.ne.s32.totalorder %s313, %s314
      %p328 = scmp.eq.s32.totalorder %s28, 1
      %p329 = por %p327, %p328
      %p331 = scmp.ne.s32.totalorder %s314, %s330
      %p332 = scmp.eq.s32.totalorder %s28, 0
      %p333 = por %p331, %p332
      %p334 = scmp.le.s32.totalorder 1, %s22
      %p335 = scmp.lt.s32.totalorder %s22, 3
      %p336 = pnand %p334, %p335
      %p337 = pneg %p336
      // Predicated region
      $region9: #{msa2msa_forward.3} parent=5 // pred_check
        _
      $region10: #{msa2msa_forward.3} parent=5 // pred_check_branch
        %339 = sbr.rel (%p336) target = $region12
      $region11: #{msa2msa_forward.3} parent=5 // pred_region
        %s340 = ssub.s32 %s22, 1
        // Predicated region
        $region13: #{msa2msa_forward.3} parent=11 // pred_check
          %p341 = pneg %p69
        $region14: #{msa2msa_forward.3} parent=11 // pred_check_branch
          %343 = sbr.rel (%p341) target = $region16
        $region15: #{msa2msa_forward.3} parent=11 // pred_region
          _
        $region16: #{msa2msa_forward.3} parent=11 // pred_fallthru
          _
        // Predicated region
        $region17: #{msa2msa_forward.3} parent=11 // pred_check
          %p344 = pneg %p90
        $region18: #{msa2msa_forward.3} parent=11 // pred_check_branch
          %346 = sbr.rel (%p344) target = $region20
        $region19: #{msa2msa_forward.3} parent=11 // pred_region
          _
        $region20: #{msa2msa_forward.3} parent=11 // pred_fallthru
          _
        // Predicated region
        $region21: #{msa2msa_forward.3} parent=11 // pred_check
          %p347 = pneg %p111
        $region22: #{msa2msa_forward.3} parent=11 // pred_check_branch
          %349 = sbr.rel (%p347) target = $region24
        $region23: #{msa2msa_forward.3} parent=11 // pred_region
          _
        $region24: #{msa2msa_forward.3} parent=11 // pred_fallthru
          _
        // Predicated region
        $region25: #{msa2msa_forward.3} parent=11 // pred_check
          %p350 = pneg %p132
        $region26: #{msa2msa_forward.3} parent=11 // pred_check_branch
          %352 = sbr.rel (%p350) target = $region28
        $region27: #{msa2msa_forward.3} parent=11 // pred_region
          _
        $region28: #{msa2msa_forward.3} parent=11 // pred_fallthru
          _
        // Predicated region
        $region29: #{msa2msa_forward.3} parent=11 // pred_check
          %p353 = pneg %p153
        $region30: #{msa2msa_forward.3} parent=11 // pred_check_branch
          %355 = sbr.rel (%p353) target = $region32
        $region31: #{msa2msa_forward.3} parent=11 // pred_region
          _
        $region32: #{msa2msa_forward.3} parent=11 // pred_fallthru
          _
        // Predicated region
        $region33: #{msa2msa_forward.3} parent=11 // pred_check
          %p356 = pneg %p174
        $region34: #{msa2msa_forward.3} parent=11 // pred_check_branch
          %358 = sbr.rel (%p356) target = $region36
        $region35: #{msa2msa_forward.3} parent=11 // pred_region
          _
        $region36: #{msa2msa_forward.3} parent=11 // pred_fallthru
          _
        // Predicated region
        $region37: #{msa2msa_forward.3} parent=11 // pred_check
          %p359 = pneg %p195
        $region38: #{msa2msa_forward.3} parent=11 // pred_check_branch
          %361 = sbr.rel (%p359) target = $region40
        $region39: #{msa2msa_forward.3} parent=11 // pred_region
          _
        $region40: #{msa2msa_forward.3} parent=11 // pred_fallthru
          _
        // Predicated region
        $region41: #{msa2msa_forward.3} parent=11 // pred_check
          %p362 = pneg %p216
        $region42: #{msa2msa_forward.3} parent=11 // pred_check_branch
          %364 = sbr.rel (%p362) target = $region44
        $region43: #{msa2msa_forward.3} parent=11 // pred_region
          _
        $region44: #{msa2msa_forward.3} parent=11 // pred_fallthru
          _
        // Predicated region
        $region45: #{msa2msa_forward.3} parent=11 // pred_check
          %p365 = pneg %p237
        $region46: #{msa2msa_forward.3} parent=11 // pred_check_branch
          %367 = sbr.rel (%p365) target = $region48
        $region47: #{msa2msa_forward.3} parent=11 // pred_region
          _
        $region48: #{msa2msa_forward.3} parent=11 // pred_fallthru
          _
        // Predicated region
        $region49: #{msa2msa_forward.3} parent=11 // pred_check
          %p368 = pneg %p258
        $region50: #{msa2msa_forward.3} parent=11 // pred_check_branch
          %370 = sbr.rel (%p368) target = $region52
        $region51: #{msa2msa_forward.3} parent=11 // pred_region
          _
        $region52: #{msa2msa_forward.3} parent=11 // pred_fallthru
          _
        // Predicated region
        $region53: #{msa2msa_forward.3} parent=11 // pred_check
          %p371 = pneg %p279
        $region54: #{msa2msa_forward.3} parent=11 // pred_check_branch
          %373 = sbr.rel (%p371) target = $region56
        $region55: #{msa2msa_forward.3} parent=11 // pred_region
          _
        $region56: #{msa2msa_forward.3} parent=11 // pred_fallthru
          _
        // Predicated region
        $region57: #{msa2msa_forward.3} parent=11 // pred_check
          %p374 = pneg %p300
        $region58: #{msa2msa_forward.3} parent=11 // pred_check_branch
          %376 = sbr.rel (%p374) target = $region60
        $region59: #{msa2msa_forward.3} parent=11 // pred_region
          _
        $region60: #{msa2msa_forward.3} parent=11 // pred_fallthru
          _
      $region12: #{msa2msa_forward.3} parent=5 // pred_fallthru
        _
      %p377 = scmp.lt.s32.totalorder %s22, 2
      // Predicated region
      $region61: #{msa2msa_forward.3} parent=5 // pred_check
        %p378 = pneg %p377
      $region62: #{msa2msa_forward.3} parent=5 // pred_check_branch
        %380 = sbr.rel (%p378) target = $region64
      $region63: #{msa2msa_forward.3} parent=5 // pred_region
        // Predicated region
        $region65: #{msa2msa_forward.3} parent=63 // pred_check
          %p381 = pneg %p42
        $region66: #{msa2msa_forward.3} parent=63 // pred_check_branch
          %383 = sbr.rel (%p381) target = $region68
        $region67: #{msa2msa_forward.3} parent=63 // pred_region
          %s384 = smul.u32 8, %s22
          %p385 = scmp.lt.s32.totalorder %s384, 15
          %s386 = scalar_select %p385, %s384, 15
          %s387 = smul.addr %s386, 2
          %s388 = smul.addr %s387, 8
          %s389 = scalar_lea.vmem %s0, %s388
          %s390 = smul.u32 8, %s22
        $region68: #{msa2msa_forward.3} parent=63 // pred_fallthru
          _
      $region64: #{msa2msa_forward.3} parent=5 // pred_fallthru
        _
      %p391 = scmp.le.s32.totalorder 1, %s22
      %p392 = scmp.lt.s32.totalorder %s22, 3
      %p393 = pnand %p391, %p392
      %p394 = pneg %p393
      // Predicated region
      $region69: #{msa2msa_forward.3} parent=5 // pred_check
        _
      $region70: #{msa2msa_forward.3} parent=5 // pred_check_branch
        %396 = sbr.rel (%p393) target = $region72
      $region71: #{msa2msa_forward.3} parent=5 // pred_region
        %s397 = ssub.s32 %s22, 1
        %s398 = smul.u32 8, %s27
        %p399 = scmp.lt.s32.totalorder %s398, 15
        %s400 = scalar_select %p399, %s398, 15
        %s401 = smul.addr %s400, 2
        %s402 = smul.addr %s401, 8
        %s403 = scalar_lea.vmem %s0, %s402
        %p404 = pneg %p48
        %p405 = pneg %p45
        %p406 = pneg %p69
        %p407 = pneg %p66
        %p408 = pneg %p90
        %p409 = pneg %p87
        %p410 = pneg %p111
        %p411 = pneg %p108
        %p412 = pneg %p132
        %p413 = pneg %p129
        %p414 = pneg %p153
        %p415 = pneg %p150
        %p416 = pneg %p174
        %p417 = pneg %p171
        %p418 = pneg %p195
        %p419 = pneg %p192
        %p420 = pneg %p216
        %p421 = pneg %p213
        %p422 = pneg %p237
        %p423 = pneg %p234
        %p424 = pneg %p258
        %p425 = pneg %p255
        %p426 = pneg %p279
        %p427 = pneg %p276
        %p428 = pneg %p300
        %p429 = pneg %p297
        %p430 = pneg %p326
        %p431 = pneg %p323
        %s432 = sand.u32 %s313, 1
        %s433 = scalar_lea.sflag [#allocation3], %s432
        %s434 = sand.u32 %s313, 1
        %s435 = smul.addr %s434, 128
        %s436 = scalar_lea.vmem [#allocation2], %s435
        %s437 = smul.u32 8, %s27
        %p438 = scmp.lt.s32.totalorder %s437, 15
        %s439 = scalar_select %p438, %s437, 15
        %s440 = smul.addr %s439, 2
        %s441 = smul.addr %s440, 8
        %s442 = scalar_lea.vmem %s0, %s441
        %s443 = smul.u32 8, %s27
        %s444 = smul.u32 8, %s27
        %v446 = vlaneseq
        %v447 = vand.u32 %v446, 127
        %vm448 = vcmp.ge.s32.totalorder %v447, 0
        %vm449 = vcmp.ge.s32.totalorder %v447, 8
        %vm450 = vcmp.ge.s32.totalorder %v447, 16
        %vm451 = vcmp.ge.s32.totalorder %v447, 24
        %vm452 = vcmp.lt.s32.totalorder %v447, 8
        %vm453 = vcmp.lt.s32.totalorder %v447, 16
        %vm454 = vcmp.lt.s32.totalorder %v447, 24
        %vm455 = vcmp.lt.s32.totalorder %v447, 32
        %vm456 = vmand %vm448, %vm452
        %vm457 = vmand %vm449, %vm453
        %vm458 = vmand %vm450, %vm454
        %vm459 = vmand %vm451, %vm455
        %v460 = vsel %vm456, 1, 0
        %v461 = vsel %vm457, 1, 0
        %v462 = vsel %vm458, 1, 0
        %v463 = vsel %vm459, 1, 0
        %v464 = vcvt.s32.f32 %v460
        %v465 = vcvt.s32.f32 %v461
        %v466 = vcvt.s32.f32 %v462
        %v467 = vcvt.s32.f32 %v463
        %v468 = vld [vmem:[%s442] sm:$0xff]
        %v469 = vld [vmem:[%s442 + $0x8] sm:$0xff]
        %v470 = vld [vmem:[%s442 + $0x10] sm:$0xff]
        %v471 = vld [vmem:[%s442 + $0x18] sm:$0xff]
        %v472 = vld [vmem:[%s442 + $0x20] sm:$0xff]
        %v473 = vld [vmem:[%s442 + $0x28] sm:$0xff]
        %v474 = vld [vmem:[%s442 + $0x30] sm:$0xff]
        %v475 = vld [vmem:[%s442 + $0x38] sm:$0xff]
        %v476 = vld [vmem:[%s442 + $0x40] sm:$0xff]
        %v477 = vld [vmem:[%s442 + $0x48] sm:$0xff]
        %v478 = vld [vmem:[%s442 + $0x50] sm:$0xff]
        %v479 = vld [vmem:[%s442 + $0x58] sm:$0xff]
        %v480 = vld [vmem:[%s442 + $0x60] sm:$0xff]
        %v481 = vld [vmem:[%s442 + $0x68] sm:$0xff]
        %v482 = vld [vmem:[%s442 + $0x70] sm:$0xff]
        %v483 = vld [vmem:[%s442 + $0x78] sm:$0xff]
        %v484 = vld [vmem:[%s1] sm:$0x1]
        %v485 = vld [vmem:[%s2] sm:$0x1]
        %v486 = vld [vmem:[%s3] sm:$0xf]
        %v487 = vld [vmem:[%s3 + $0x4] sm:$0xf]
        %v488 = vld [vmem:[%s3 + $0x8] sm:$0xf]
        %v489 = vld [vmem:[%s3 + $0xc] sm:$0xf]
        %v490 = vld [vmem:[%s4] sm:$0x1]
        %v491 = vld [vmem:[%s5] sm:$0xf]
        %v492 = vld [vmem:[%s5 + $0x4] sm:$0xf]
        %v493 = vld [vmem:[%s5 + $0x8] sm:$0xf]
        %v494 = vld [vmem:[%s5 + $0xc] sm:$0xf]
        %v495 = vld [vmem:[%s6] sm:$0x1]
        %v496 = vld [vmem:[%s7] sm:$0x1]
        %v497 = vld [vmem:[%s8] sm:$0x1]
        %v498 = vld [vmem:[%s9] sm:$0xf]
        %v499 = vld [vmem:[%s9 + $0x4] sm:$0xf]
        %v500 = vld [vmem:[%s9 + $0x8] sm:$0xf]
        %v501 = vld [vmem:[%s9 + $0xc] sm:$0xf]
        %v502 = vld [vmem:[%s10] sm:$0x1]
        %v503 = vld [vmem:[%s11] sm:$0xf]
        %v504 = vld [vmem:[%s11 + $0x4] sm:$0xf]
        %v505 = vld [vmem:[%s11 + $0x8] sm:$0xf]
        %v506 = vld [vmem:[%s11 + $0xc] sm:$0xf]
        %v507 = vld [vmem:[%s11 + $0x10] sm:$0xf]
        %v508 = vld [vmem:[%s11 + $0x14] sm:$0xf]
        %v509 = vld [vmem:[%s11 + $0x18] sm:$0xf]
        %v510 = vld [vmem:[%s11 + $0x1c] sm:$0xf]
        %v511 = vld [vmem:[%s11 + $0x20] sm:$0xf]
        %v512 = vld [vmem:[%s11 + $0x24] sm:$0xf]
        %v513 = vld [vmem:[%s11 + $0x28] sm:$0xf]
        %v514 = vld [vmem:[%s11 + $0x2c] sm:$0xf]
        %v515 = vld [vmem:[%s11 + $0x30] sm:$0xf]
        %v516 = vld [vmem:[%s11 + $0x34] sm:$0xf]
        %v517 = vld [vmem:[%s11 + $0x38] sm:$0xf]
        %v518 = vld [vmem:[%s11 + $0x3c] sm:$0xf]
        %v519 = vld [vmem:[%s12] sm:$0x1]
        %vm520 = vcmask 261120
        %v521 = vsel %vm520, %v468, 0.0
        %522 = vadd.xlane.f32.xlu0 %v521
        %v523 = vpop.xlane.xlu0 %522
        %v524 = vsel %vm520, %v469, 0.0
        %525 = vadd.xlane.f32.xlu0 %v524
        %v526 = vpop.xlane.xlu0 %525
        %v527 = vsel %vm520, %v470, 0.0
        %528 = vadd.xlane.f32.xlu0 %v527
        %v529 = vpop.xlane.xlu0 %528
        %v530 = vsel %vm520, %v471, 0.0
        %531 = vadd.xlane.f32.xlu0 %v530
        %v532 = vpop.xlane.xlu0 %531
        %v533 = vsel %vm520, %v472, 0.0
        %534 = vadd.xlane.f32.xlu0 %v533
        %v535 = vpop.xlane.xlu0 %534
        %v536 = vsel %vm520, %v473, 0.0
        %537 = vadd.xlane.f32.xlu0 %v536
        %v538 = vpop.xlane.xlu0 %537
        %v539 = vsel %vm520, %v474, 0.0
        %540 = vadd.xlane.f32.xlu0 %v539
        %v541 = vpop.xlane.xlu0 %540
        %v542 = vsel %vm520, %v475, 0.0
        %543 = vadd.xlane.f32.xlu0 %v542
        %v544 = vpop.xlane.xlu0 %543
        %v545 = vsel %vm520, %v476, 0.0
        %546 = vadd.xlane.f32.xlu0 %v545
        %v547 = vpop.xlane.xlu0 %546
        %v548 = vsel %vm520, %v477, 0.0
        %549 = vadd.xlane.f32.xlu0 %v548
        %v550 = vpop.xlane.xlu0 %549
        %v551 = vsel %vm520, %v478, 0.0
        %552 = vadd.xlane.f32.xlu0 %v551
        %v553 = vpop.xlane.xlu0 %552
        %v554 = vsel %vm520, %v479, 0.0
        %555 = vadd.xlane.f32.xlu0 %v554
        %v556 = vpop.xlane.xlu0 %555
        %v557 = vsel %vm520, %v480, 0.0
        %558 = vadd.xlane.f32.xlu0 %v557
        %v559 = vpop.xlane.xlu0 %558
        %v560 = vsel %vm520, %v481, 0.0
        %561 = vadd.xlane.f32.xlu0 %v560
        %v562 = vpop.xlane.xlu0 %561
        %v563 = vsel %vm520, %v482, 0.0
        %564 = vadd.xlane.f32.xlu0 %v563
        %v565 = vpop.xlane.xlu0 %564
        %v566 = vsel %vm520, %v483, 0.0
        %567 = vadd.xlane.f32.xlu0 %v566
        %v568 = vpop.xlane.xlu0 %567
        %v569 = vrcp.pop 32.0
        %v570 = vmul.f32 32.0, %v569
        %v571 = vsub.f32 1.0, %v570
        %v572 = vmul.f32 %v569, %v571
        %v573 = vadd.f32 %v569, %v572
        %vm574 = vweird.f32 %v569
        %v575 = vsel %vm574, %v569, %v573
        %v576 = vmul.f32 %v523, %v575
        %v577 = vmul.f32 %v526, %v575
        %v578 = vmul.f32 %v529, %v575
        %v579 = vmul.f32 %v532, %v575
        %v580 = vmul.f32 %v535, %v575
        %v581 = vmul.f32 %v538, %v575
        %v582 = vmul.f32 %v541, %v575
        %v583 = vmul.f32 %v544, %v575
        %v584 = vmul.f32 %v547, %v575
        %v585 = vmul.f32 %v550, %v575
        %v586 = vmul.f32 %v553, %v575
        %v587 = vmul.f32 %v556, %v575
        %v588 = vmul.f32 %v559, %v575
        %v589 = vmul.f32 %v562, %v575
        %v590 = vmul.f32 %v565, %v575
        %v591 = vmul.f32 %v568, %v575
        %v592 = vsub.f32 %v468, %v576
        %v593 = vsub.f32 %v469, %v577
        %v594 = vsub.f32 %v470, %v578
        %v595 = vsub.f32 %v471, %v579
        %v596 = vsub.f32 %v472, %v580
        %v597 = vsub.f32 %v473, %v581
        %v598 = vsub.f32 %v474, %v582
        %v599 = vsub.f32 %v475, %v583
        %v600 = vsub.f32 %v476, %v584
        %v601 = vsub.f32 %v477, %v585
        %v602 = vsub.f32 %v478, %v586
        %v603 = vsub.f32 %v479, %v587
        %v604 = vsub.f32 %v480, %v588
        %v605 = vsub.f32 %v481, %v589
        %v606 = vsub.f32 %v482, %v590
        %v607 = vsub.f32 %v483, %v591
        %v608 = vmul.f32 %v592, %v592
        %v609 = vmul.f32 %v593, %v593
        %v610 = vmul.f32 %v594, %v594
        %v611 = vmul.f32 %v595, %v595
        %v612 = vmul.f32 %v596, %v596
        %v613 = vmul.f32 %v597, %v597
        %v614 = vmul.f32 %v598, %v598
        %v615 = vmul.f32 %v599, %v599
        %v616 = vmul.f32 %v600, %v600
        %v617 = vmul.f32 %v601, %v601
        %v618 = vmul.f32 %v602, %v602
        %v619 = vmul.f32 %v603, %v603
        %v620 = vmul.f32 %v604, %v604
        %v621 = vmul.f32 %v605, %v605
        %v622 = vmul.f32 %v606, %v606
        %v623 = vmul.f32 %v607, %v607
        %v624 = vsel %vm520, %v608, 0.0
        %625 = vadd.xlane.f32.xlu0 %v624
        %v626 = vpop.xlane.xlu0 %625
        %v627 = vsel %vm520, %v609, 0.0
        %628 = vadd.xlane.f32.xlu0 %v627
        %v629 = vpop.xlane.xlu0 %628
        %v630 = vsel %vm520, %v610, 0.0
        %631 = vadd.xlane.f32.xlu0 %v630
        %v632 = vpop.xlane.xlu0 %631
        %v633 = vsel %vm520, %v611, 0.0
        %634 = vadd.xlane.f32.xlu0 %v633
        %v635 = vpop.xlane.xlu0 %634
        %v636 = vsel %vm520, %v612, 0.0
        %637 = vadd.xlane.f32.xlu0 %v636
        %v638 = vpop.xlane.xlu0 %637
        %v639 = vsel %vm520, %v613, 0.0
        %640 = vadd.xlane.f32.xlu0 %v639
        %v641 = vpop.xlane.xlu0 %640
        %v642 = vsel %vm520, %v614, 0.0
        %643 = vadd.xlane.f32.xlu0 %v642
        %v644 = vpop.xlane.xlu0 %643
        %v645 = vsel %vm520, %v615, 0.0
        %646 = vadd.xlane.f32.xlu0 %v645
        %v647 = vpop.xlane.xlu0 %646
        %v648 = vsel %vm520, %v616, 0.0
        %649 = vadd.xlane.f32.xlu0 %v648
        %v650 = vpop.xlane.xlu0 %649
        %v651 = vsel %vm520, %v617, 0.0
        %652 = vadd.xlane.f32.xlu0 %v651
        %v653 = vpop.xlane.xlu0 %652
        %v654 = vsel %vm520, %v618, 0.0
        %655 = vadd.xlane.f32.xlu0 %v654
        %v656 = vpop.xlane.xlu0 %655
        %v657 = vsel %vm520, %v619, 0.0
        %658 = vadd.xlane.f32.xlu0 %v657
        %v659 = vpop.xlane.xlu0 %658
        %v660 = vsel %vm520, %v620, 0.0
        %661 = vadd.xlane.f32.xlu0 %v660
        %v662 = vpop.xlane.xlu0 %661
        %v663 = vsel %vm520, %v621, 0.0
        %664 = vadd.xlane.f32.xlu0 %v663
        %v665 = vpop.xlane.xlu0 %664
        %v666 = vsel %vm520, %v622, 0.0
        %667 = vadd.xlane.f32.xlu0 %v666
        %v668 = vpop.xlane.xlu0 %667
        %v669 = vsel %vm520, %v623, 0.0
        %670 = vadd.xlane.f32.xlu0 %v669
        %v671 = vpop.xlane.xlu0 %670
        %v672 = vmul.f32 %v626, %v575
        %v673 = vmul.f32 %v629, %v575
        %v674 = vmul.f32 %v632, %v575
        %v675 = vmul.f32 %v635, %v575
        %v676 = vmul.f32 %v638, %v575
        %v677 = vmul.f32 %v641, %v575
        %v678 = vmul.f32 %v644, %v575
        %v679 = vmul.f32 %v647, %v575
        %v680 = vmul.f32 %v650, %v575
        %v681 = vmul.f32 %v653, %v575
        %v682 = vmul.f32 %v656, %v575
        %v683 = vmul.f32 %v659, %v575
        %v684 = vmul.f32 %v662, %v575
        %v685 = vmul.f32 %v665, %v575
        %v686 = vmul.f32 %v668, %v575
        %v687 = vmul.f32 %v671, %v575
        %v688 = vadd.f32 %v672, 1e-05
        %v689 = vadd.f32 %v673, 1e-05
        %v690 = vadd.f32 %v674, 1e-05
        %v691 = vadd.f32 %v675, 1e-05
        %v692 = vadd.f32 %v676, 1e-05
        %v693 = vadd.f32 %v677, 1e-05
        %v694 = vadd.f32 %v678, 1e-05
        %v695 = vadd.f32 %v679, 1e-05
        %v696 = vadd.f32 %v680, 1e-05
        %v697 = vadd.f32 %v681, 1e-05
        %v698 = vadd.f32 %v682, 1e-05
        %v699 = vadd.f32 %v683, 1e-05
        %v700 = vadd.f32 %v684, 1e-05
        %v701 = vadd.f32 %v685, 1e-05
        %v702 = vadd.f32 %v686, 1e-05
        %v703 = vadd.f32 %v687, 1e-05
        %v704 = vrsqrt.pop %v688
        %v705 = vmul.f32 %v704, %v688
        %v706 = vmul.f32 %v705, %v704
        %v707 = vmul.f32 0.5, %v706
        %v708 = vsub.f32 1.5, %v707
        %v709 = vmul.f32 %v704, %v708
        %vm710 = vweird.f32 %v688
        %vm711 = vweird.f32 %v704
        %vm712 = vmor %vm710, %vm711
        %v713 = vsel %vm712, %v704, %v709
        %v714 = vrsqrt.pop %v689
        %v715 = vmul.f32 %v714, %v689
        %v716 = vmul.f32 %v715, %v714
        %v717 = vmul.f32 0.5, %v716
        %v718 = vsub.f32 1.5, %v717
        %v719 = vmul.f32 %v714, %v718
        %vm720 = vweird.f32 %v689
        %vm721 = vweird.f32 %v714
        %vm722 = vmor %vm720, %vm721
        %v723 = vsel %vm722, %v714, %v719
        %v724 = vrsqrt.pop %v690
        %v725 = vmul.f32 %v724, %v690
        %v726 = vmul.f32 %v725, %v724
        %v727 = vmul.f32 0.5, %v726
        %v728 = vsub.f32 1.5, %v727
        %v729 = vmul.f32 %v724, %v728
        %vm730 = vweird.f32 %v690
        %vm731 = vweird.f32 %v724
        %vm732 = vmor %vm730, %vm731
        %v733 = vsel %vm732, %v724, %v729
        %v734 = vrsqrt.pop %v691
        %v735 = vmul.f32 %v734, %v691
        %v736 = vmul.f32 %v735, %v734
        %v737 = vmul.f32 0.5, %v736
        %v738 = vsub.f32 1.5, %v737
        %v739 = vmul.f32 %v734, %v738
        %vm740 = vweird.f32 %v691
        %vm741 = vweird.f32 %v734
        %vm742 = vmor %vm740, %vm741
        %v743 = vsel %vm742, %v734, %v739
        %v744 = vrsqrt.pop %v692
        %v745 = vmul.f32 %v744, %v692
        %v746 = vmul.f32 %v745, %v744
        %v747 = vmul.f32 0.5, %v746
        %v748 = vsub.f32 1.5, %v747
        %v749 = vmul.f32 %v744, %v748
        %vm750 = vweird.f32 %v692
        %vm751 = vweird.f32 %v744
        %vm752 = vmor %vm750, %vm751
        %v753 = vsel %vm752, %v744, %v749
        %v754 = vrsqrt.pop %v693
        %v755 = vmul.f32 %v754, %v693
        %v756 = vmul.f32 %v755, %v754
        %v757 = vmul.f32 0.5, %v756
        %v758 = vsub.f32 1.5, %v757
        %v759 = vmul.f32 %v754, %v758
        %vm760 = vweird.f32 %v693
        %vm761 = vweird.f32 %v754
        %vm762 = vmor %vm760, %vm761
        %v763 = vsel %vm762, %v754, %v759
        %v764 = vrsqrt.pop %v694
        %v765 = vmul.f32 %v764, %v694
        %v766 = vmul.f32 %v765, %v764
        %v767 = vmul.f32 0.5, %v766
        %v768 = vsub.f32 1.5, %v767
        %v769 = vmul.f32 %v764, %v768
        %vm770 = vweird.f32 %v694
        %vm771 = vweird.f32 %v764
        %vm772 = vmor %vm770, %vm771
        %v773 = vsel %vm772, %v764, %v769
        %v774 = vrsqrt.pop %v695
        %v775 = vmul.f32 %v774, %v695
        %v776 = vmul.f32 %v775, %v774
        %v777 = vmul.f32 0.5, %v776
        %v778 = vsub.f32 1.5, %v777
        %v779 = vmul.f32 %v774, %v778
        %vm780 = vweird.f32 %v695
        %vm781 = vweird.f32 %v774
        %vm782 = vmor %vm780, %vm781
        %v783 = vsel %vm782, %v774, %v779
        %v784 = vrsqrt.pop %v696
        %v785 = vmul.f32 %v784, %v696
        %v786 = vmul.f32 %v785, %v784
        %v787 = vmul.f32 0.5, %v786
        %v788 = vsub.f32 1.5, %v787
        %v789 = vmul.f32 %v784, %v788
        %vm790 = vweird.f32 %v696
        %vm791 = vweird.f32 %v784
        %vm792 = vmor %vm790, %vm791
        %v793 = vsel %vm792, %v784, %v789
        %v794 = vrsqrt.pop %v697
        %v795 = vmul.f32 %v794, %v697
        %v796 = vmul.f32 %v795, %v794
        %v797 = vmul.f32 0.5, %v796
        %v798 = vsub.f32 1.5, %v797
        %v799 = vmul.f32 %v794, %v798
        %vm800 = vweird.f32 %v697
        %vm801 = vweird.f32 %v794
        %vm802 = vmor %vm800, %vm801
        %v803 = vsel %vm802, %v794, %v799
        %v804 = vrsqrt.pop %v698
        %v805 = vmul.f32 %v804, %v698
        %v806 = vmul.f32 %v805, %v804
        %v807 = vmul.f32 0.5, %v806
        %v808 = vsub.f32 1.5, %v807
        %v809 = vmul.f32 %v804, %v808
        %vm810 = vweird.f32 %v698
        %vm811 = vweird.f32 %v804
        %vm812 = vmor %vm810, %vm811
        %v813 = vsel %vm812, %v804, %v809
        %v814 = vrsqrt.pop %v699
        %v815 = vmul.f32 %v814, %v699
        %v816 = vmul.f32 %v815, %v814
        %v817 = vmul.f32 0.5, %v816
        %v818 = vsub.f32 1.5, %v817
        %v819 = vmul.f32 %v814, %v818
        %vm820 = vweird.f32 %v699
        %vm821 = vweird.f32 %v814
        %vm822 = vmor %vm820, %vm821
        %v823 = vsel %vm822, %v814, %v819
        %v824 = vrsqrt.pop %v700
        %v825 = vmul.f32 %v824, %v700
        %v826 = vmul.f32 %v825, %v824
        %v827 = vmul.f32 0.5, %v826
        %v828 = vsub.f32 1.5, %v827
        %v829 = vmul.f32 %v824, %v828
        %vm830 = vweird.f32 %v700
        %vm831 = vweird.f32 %v824
        %vm832 = vmor %vm830, %vm831
        %v833 = vsel %vm832, %v824, %v829
        %v834 = vrsqrt.pop %v701
        %v835 = vmul.f32 %v834, %v701
        %v836 = vmul.f32 %v835, %v834
        %v837 = vmul.f32 0.5, %v836
        %v838 = vsub.f32 1.5, %v837
        %v839 = vmul.f32 %v834, %v838
        %vm840 = vweird.f32 %v701
        %vm841 = vweird.f32 %v834
        %vm842 = vmor %vm840, %vm841
        %v843 = vsel %vm842, %v834, %v839
        %v844 = vrsqrt.pop %v702
        %v845 = vmul.f32 %v844, %v702
        %v846 = vmul.f32 %v845, %v844
        %v847 = vmul.f32 0.5, %v846
        %v848 = vsub.f32 1.5, %v847
        %v849 = vmul.f32 %v844, %v848
        %vm850 = vweird.f32 %v702
        %vm851 = vweird.f32 %v844
        %vm852 = vmor %vm850, %vm851
        %v853 = vsel %vm852, %v844, %v849
        %v854 = vrsqrt.pop %v703
        %v855 = vmul.f32 %v854, %v703
        %v856 = vmul.f32 %v855, %v854
        %v857 = vmul.f32 0.5, %v856
        %v858 = vsub.f32 1.5, %v857
        %v859 = vmul.f32 %v854, %v858
        %vm860 = vweird.f32 %v703
        %vm861 = vweird.f32 %v854
        %vm862 = vmor %vm860, %vm861
        %v863 = vsel %vm862, %v854, %v859
        %v864 = vmul.f32 %v592, %v713
        %v865 = vmul.f32 %v593, %v723
        %v866 = vmul.f32 %v594, %v733
        %v867 = vmul.f32 %v595, %v743
        %v868 = vmul.f32 %v596, %v753
        %v869 = vmul.f32 %v597, %v763
        %v870 = vmul.f32 %v598, %v773
        %v871 = vmul.f32 %v599, %v783
        %v872 = vmul.f32 %v600, %v793
        %v873 = vmul.f32 %v601, %v803
        %v874 = vmul.f32 %v602, %v813
        %v875 = vmul.f32 %v603, %v823
        %v876 = vmul.f32 %v604, %v833
        %v877 = vmul.f32 %v605, %v843
        %v878 = vmul.f32 %v606, %v853
        %v879 = vmul.f32 %v607, %v863
        %v881 = vperm.slane %v484, 0
        %v883 = vmul.f32 %v864, %v881
        %v884 = vmul.f32 %v865, %v881
        %v885 = vmul.f32 %v866, %v881
        %v886 = vmul.f32 %v867, %v881
        %v887 = vmul.f32 %v868, %v881
        %v888 = vmul.f32 %v869, %v881
        %v889 = vmul.f32 %v870, %v881
        %v890 = vmul.f32 %v871, %v881
        %v891 = vmul.f32 %v872, %v881
        %v892 = vmul.f32 %v873, %v881
        %v893 = vmul.f32 %v874, %v881
        %v894 = vmul.f32 %v875, %v881
        %v895 = vmul.f32 %v876, %v881
        %v896 = vmul.f32 %v877, %v881
        %v897 = vmul.f32 %v878, %v881
        %v898 = vmul.f32 %v879, %v881
        %v900 = vperm.slane %v485, 0
        %v902 = vadd.f32 %v883, %v900
        %v903 = vadd.f32 %v884, %v900
        %v904 = vadd.f32 %v885, %v900
        %v905 = vadd.f32 %v886, %v900
        %v906 = vadd.f32 %v887, %v900
        %v907 = vadd.f32 %v888, %v900
        %v908 = vadd.f32 %v889, %v900
        %v909 = vadd.f32 %v890, %v900
        %v910 = vadd.f32 %v891, %v900
        %v911 = vadd.f32 %v892, %v900
        %v912 = vadd.f32 %v893, %v900
        %v913 = vadd.f32 %v894, %v900
        %v914 = vadd.f32 %v895, %v900
        %v915 = vadd.f32 %v896, %v900
        %v916 = vadd.f32 %v897, %v900
        %v917 = vadd.f32 %v898, %v900
        %v918 = vpack.c.bf16 %v903, %v902
        %v919 = vpack.c.bf16 %v905, %v904
        %v920 = vpack.c.bf16 %v907, %v906
        %v921 = vpack.c.bf16 %v909, %v908
        %v922 = vpack.c.bf16 %v911, %v910
        %v923 = vpack.c.bf16 %v913, %v912
        %v924 = vpack.c.bf16 %v915, %v914
        %v925 = vpack.c.bf16 %v917, %v916
        %v927 = vperm.slane %v490, 0
        %v933 = vunpack.c.l.b16 %v486
        %v934 = vunpack.c.l.b16 %v487
        %v935 = vunpack.c.l.b16 %v488
        %v936 = vunpack.c.l.b16 %v489
        %v937 = vpack.c.b16 %v934, %v933
        %v938 = vpack.c.b16 %v936, %v935
        %v942 = vsel %vm520, %v918, 0
        %v945 = vsel %vm520, %v919, 0
        %v948 = vsel %vm520, %v920, 0
        %v951 = vsel %vm520, %v921, 0
        %v954 = vsel %vm520, %v922, 0
        %v957 = vsel %vm520, %v923, 0
        %v960 = vsel %vm520, %v924, 0
        %v963 = vsel %vm520, %v925, 0
        %965 = vmatpush.bf16.msra.mxu0 0
        %966 = vmatpush.bf16.msra.mxu0 0
        %967 = vmatpush.bf16.msra.mxu0 0
        %968 = vmatpush.bf16.msra.mxu0 0
        %969 = vmatpush.bf16.msra.mxu0 0
        %970 = vmatpush.bf16.msra.mxu0 0
        %971 = vmatpush.bf16.msra.mxu0 %v938
        %972 = vmatpush.bf16.msra.mxu0 %v937
        %973 = vmatmul.bf16.gmra.mxu0 %v942
        %v974 = vpop.f32.mrf.mxu0
        %v975 = vadd.f32 %v927, %v974
        %v976 = vpop.f32.mrf.mxu0
        %v977 = vadd.f32 %v927, %v976
        %978 = vmatmul.bf16.gmra.mxu0 %v945
        %v979 = vpop.f32.mrf.mxu0
        %v980 = vadd.f32 %v927, %v979
        %v981 = vpop.f32.mrf.mxu0
        %v982 = vadd.f32 %v927, %v981
        %983 = vmatmul.bf16.gmra.mxu0 %v948
        %v984 = vpop.f32.mrf.mxu0
        %v985 = vadd.f32 %v927, %v984
        %v986 = vpop.f32.mrf.mxu0
        %v987 = vadd.f32 %v927, %v986
        %988 = vmatmul.bf16.gmra.mxu0 %v951
        %v989 = vpop.f32.mrf.mxu0
        %v990 = vadd.f32 %v927, %v989
        %v991 = vpop.f32.mrf.mxu0
        %v992 = vadd.f32 %v927, %v991
        %993 = vmatmul.bf16.gmra.mxu0 %v954
        %v994 = vpop.f32.mrf.mxu0
        %v995 = vadd.f32 %v927, %v994
        %v996 = vpop.f32.mrf.mxu0
        %v997 = vadd.f32 %v927, %v996
        %998 = vmatmul.bf16.gmra.mxu0 %v957
        %v999 = vpop.f32.mrf.mxu0
        %v1000 = vadd.f32 %v927, %v999
        %v1001 = vpop.f32.mrf.mxu0
        %v1002 = vadd.f32 %v927, %v1001
        %1003 = vmatmul.bf16.gmra.mxu0 %v960
        %v1004 = vpop.f32.mrf.mxu0
        %v1005 = vadd.f32 %v927, %v1004
        %v1006 = vpop.f32.mrf.mxu0
        %v1007 = vadd.f32 %v927, %v1006
        %1008 = vmatmul.bf16.gmra.mxu0 %v963
        %v1009 = vpop.f32.mrf.mxu0
        %v1010 = vadd.f32 %v927, %v1009
        %v1011 = vpop.f32.mrf.mxu0
        %v1012 = vadd.f32 %v927, %v1011
        %1013 = vdwg.mxu0
        %v1014 = vmul.f32 %v975, 0.35355338
        %v1015 = vmul.f32 %v977, 0.35355338
        %v1016 = vmul.f32 %v980, 0.35355338
        %v1017 = vmul.f32 %v982, 0.35355338
        %v1018 = vmul.f32 %v985, 0.35355338
        %v1019 = vmul.f32 %v987, 0.35355338
        %v1020 = vmul.f32 %v990, 0.35355338
        %v1021 = vmul.f32 %v992, 0.35355338
        %v1022 = vmul.f32 %v995, 0.35355338
        %v1023 = vmul.f32 %v997, 0.35355338
        %v1024 = vmul.f32 %v1000, 0.35355338
        %v1025 = vmul.f32 %v1002, 0.35355338
        %v1026 = vmul.f32 %v1005, 0.35355338
        %v1027 = vmul.f32 %v1007, 0.35355338
        %v1028 = vmul.f32 %v1010, 0.35355338
        %v1029 = vmul.f32 %v1012, 0.35355338
        %v1030 = vmul.f32 %v1014, %v464
        %v1031 = vmul.f32 %v1015, %v464
        %v1032 = vmul.f32 %v1014, %v465
        %v1033 = vmul.f32 %v1015, %v465
        %v1034 = vmul.f32 %v1014, %v466
        %v1035 = vmul.f32 %v1015, %v466
        %v1036 = vmul.f32 %v1014, %v467
        %v1037 = vmul.f32 %v1015, %v467
        %v1038 = vmul.f32 %v1016, %v464
        %v1039 = vmul.f32 %v1017, %v464
        %v1040 = vmul.f32 %v1016, %v465
        %v1041 = vmul.f32 %v1017, %v465
        %v1042 = vmul.f32 %v1016, %v466
        %v1043 = vmul.f32 %v1017, %v466
        %v1044 = vmul.f32 %v1016, %v467
        %v1045 = vmul.f32 %v1017, %v467
        %v1046 = vmul.f32 %v1018, %v464
        %v1047 = vmul.f32 %v1019, %v464
        %v1048 = vmul.f32 %v1018, %v465
        %v1049 = vmul.f32 %v1019, %v465
        %v1050 = vmul.f32 %v1018, %v466
        %v1051 = vmul.f32 %v1019, %v466
        %v1052 = vmul.f32 %v1018, %v467
        %v1053 = vmul.f32 %v1019, %v467
        %v1054 = vmul.f32 %v1020, %v464
        %v1055 = vmul.f32 %v1021, %v464
        %v1056 = vmul.f32 %v1020, %v465
        %v1057 = vmul.f32 %v1021, %v465
        %v1058 = vmul.f32 %v1020, %v466
        %v1059 = vmul.f32 %v1021, %v466
        %v1060 = vmul.f32 %v1020, %v467
        %v1061 = vmul.f32 %v1021, %v467
        %v1062 = vmul.f32 %v1022, %v464
        %v1063 = vmul.f32 %v1023, %v464
        %v1064 = vmul.f32 %v1022, %v465
        %v1065 = vmul.f32 %v1023, %v465
        %v1066 = vmul.f32 %v1022, %v466
        %v1067 = vmul.f32 %v1023, %v466
        %v1068 = vmul.f32 %v1022, %v467
        %v1069 = vmul.f32 %v1023, %v467
        %v1070 = vmul.f32 %v1024, %v464
        %v1071 = vmul.f32 %v1025, %v464
        %v1072 = vmul.f32 %v1024, %v465
        %v1073 = vmul.f32 %v1025, %v465
        %v1074 = vmul.f32 %v1024, %v466
        %v1075 = vmul.f32 %v1025, %v466
        %v1076 = vmul.f32 %v1024, %v467
        %v1077 = vmul.f32 %v1025, %v467
        %v1078 = vmul.f32 %v1026, %v464
        %v1079 = vmul.f32 %v1027, %v464
        %v1080 = vmul.f32 %v1026, %v465
        %v1081 = vmul.f32 %v1027, %v465
        %v1082 = vmul.f32 %v1026, %v466
        %v1083 = vmul.f32 %v1027, %v466
        %v1084 = vmul.f32 %v1026, %v467
        %v1085 = vmul.f32 %v1027, %v467
        %v1086 = vmul.f32 %v1028, %v464
        %v1087 = vmul.f32 %v1029, %v464
        %v1088 = vmul.f32 %v1028, %v465
        %v1089 = vmul.f32 %v1029, %v465
        %v1090 = vmul.f32 %v1028, %v466
        %v1091 = vmul.f32 %v1029, %v466
        %v1092 = vmul.f32 %v1028, %v467
        %v1093 = vmul.f32 %v1029, %v467
        %v1094 = vpack.c.bf16 %v1030, %v1030
        %v1095 = vpack.c.bf16 %v1031, %v1031
        %v1096 = vpack.c.bf16 %v1032, %v1032
        %v1097 = vpack.c.bf16 %v1033, %v1033
        %v1098 = vpack.c.bf16 %v1034, %v1034
        %v1099 = vpack.c.bf16 %v1035, %v1035
        %v1100 = vpack.c.bf16 %v1036, %v1036
        %v1101 = vpack.c.bf16 %v1037, %v1037
        %v1102 = vpack.c.bf16 %v1038, %v1038
        %v1103 = vpack.c.bf16 %v1039, %v1039
        %v1104 = vpack.c.bf16 %v1040, %v1040
        %v1105 = vpack.c.bf16 %v1041, %v1041
        %v1106 = vpack.c.bf16 %v1042, %v1042
        %v1107 = vpack.c.bf16 %v1043, %v1043
        %v1108 = vpack.c.bf16 %v1044, %v1044
        %v1109 = vpack.c.bf16 %v1045, %v1045
        %v1110 = vpack.c.bf16 %v1046, %v1046
        %v1111 = vpack.c.bf16 %v1047, %v1047
        %v1112 = vpack.c.bf16 %v1048, %v1048
        %v1113 = vpack.c.bf16 %v1049, %v1049
        %v1114 = vpack.c.bf16 %v1050, %v1050
        %v1115 = vpack.c.bf16 %v1051, %v1051
        %v1116 = vpack.c.bf16 %v1052, %v1052
        %v1117 = vpack.c.bf16 %v1053, %v1053
        %v1118 = vpack.c.bf16 %v1054, %v1054
        %v1119 = vpack.c.bf16 %v1055, %v1055
        %v1120 = vpack.c.bf16 %v1056, %v1056
        %v1121 = vpack.c.bf16 %v1057, %v1057
        %v1122 = vpack.c.bf16 %v1058, %v1058
        %v1123 = vpack.c.bf16 %v1059, %v1059
        %v1124 = vpack.c.bf16 %v1060, %v1060
        %v1125 = vpack.c.bf16 %v1061, %v1061
        %v1126 = vpack.c.bf16 %v1062, %v1062
        %v1127 = vpack.c.bf16 %v1063, %v1063
        %v1128 = vpack.c.bf16 %v1064, %v1064
        %v1129 = vpack.c.bf16 %v1065, %v1065
        %v1130 = vpack.c.bf16 %v1066, %v1066
        %v1131 = vpack.c.bf16 %v1067, %v1067
        %v1132 = vpack.c.bf16 %v1068, %v1068
        %v1133 = vpack.c.bf16 %v1069, %v1069
        %v1134 = vpack.c.bf16 %v1070, %v1070
        %v1135 = vpack.c.bf16 %v1071, %v1071
        %v1136 = vpack.c.bf16 %v1072, %v1072
        %v1137 = vpack.c.bf16 %v1073, %v1073
        %v1138 = vpack.c.bf16 %v1074, %v1074
        %v1139 = vpack.c.bf16 %v1075, %v1075
        %v1140 = vpack.c.bf16 %v1076, %v1076
        %v1141 = vpack.c.bf16 %v1077, %v1077
        %v1142 = vpack.c.bf16 %v1078, %v1078
        %v1143 = vpack.c.bf16 %v1079, %v1079
        %v1144 = vpack.c.bf16 %v1080, %v1080
        %v1145 = vpack.c.bf16 %v1081, %v1081
        %v1146 = vpack.c.bf16 %v1082, %v1082
        %v1147 = vpack.c.bf16 %v1083, %v1083
        %v1148 = vpack.c.bf16 %v1084, %v1084
        %v1149 = vpack.c.bf16 %v1085, %v1085
        %v1150 = vpack.c.bf16 %v1086, %v1086
        %v1151 = vpack.c.bf16 %v1087, %v1087
        %v1152 = vpack.c.bf16 %v1088, %v1088
        %v1153 = vpack.c.bf16 %v1089, %v1089
        %v1154 = vpack.c.bf16 %v1090, %v1090
        %v1155 = vpack.c.bf16 %v1091, %v1091
        %v1156 = vpack.c.bf16 %v1092, %v1092
        %v1157 = vpack.c.bf16 %v1093, %v1093
        %v1158 = vpack.c.bf16 %v975, %v975
        %v1159 = vpack.c.bf16 %v977, %v977
        %v1160 = vpack.c.bf16 %v980, %v980
        %v1161 = vpack.c.bf16 %v982, %v982
        %v1162 = vpack.c.bf16 %v985, %v985
        %v1163 = vpack.c.bf16 %v987, %v987
        %v1164 = vpack.c.bf16 %v990, %v990
        %v1165 = vpack.c.bf16 %v992, %v992
        %v1166 = vpack.c.bf16 %v995, %v995
        %v1167 = vpack.c.bf16 %v997, %v997
        %v1168 = vpack.c.bf16 %v1000, %v1000
        %v1169 = vpack.c.bf16 %v1002, %v1002
        %v1170 = vpack.c.bf16 %v1005, %v1005
        %v1171 = vpack.c.bf16 %v1007, %v1007
        %v1172 = vpack.c.bf16 %v1010, %v1010
        %v1173 = vpack.c.bf16 %v1012, %v1012
        %1178 = vrot.lane.b32.xlu0 %v464, 64
        %v1179 = vpop.permute.xlu0 %1178
        %1180 = vrot.lane.b32.xlu0 %v465, 64
        %v1181 = vpop.permute.xlu0 %1180
        %1182 = vrot.lane.b32.xlu0 %v466, 64
        %v1183 = vpop.permute.xlu0 %1182
        %1184 = vrot.lane.b32.xlu0 %v467, 64
        %v1185 = vpop.permute.xlu0 %1184
        %v1190 = vmul.f32 %v975, %v1179
        %v1191 = vmul.f32 %v977, %v1179
        %v1192 = vmul.f32 %v975, %v1181
        %v1193 = vmul.f32 %v977, %v1181
        %v1194 = vmul.f32 %v975, %v1183
        %v1195 = vmul.f32 %v977, %v1183
        %v1196 = vmul.f32 %v975, %v1185
        %v1197 = vmul.f32 %v977, %v1185
        %v1198 = vmul.f32 %v980, %v1179
        %v1199 = vmul.f32 %v982, %v1179
        %v1200 = vmul.f32 %v980, %v1181
        %v1201 = vmul.f32 %v982, %v1181
        %v1202 = vmul.f32 %v980, %v1183
        %v1203 = vmul.f32 %v982, %v1183
        %v1204 = vmul.f32 %v980, %v1185
        %v1205 = vmul.f32 %v982, %v1185
        %v1206 = vmul.f32 %v985, %v1179
        %v1207 = vmul.f32 %v987, %v1179
        %v1208 = vmul.f32 %v985, %v1181
        %v1209 = vmul.f32 %v987, %v1181
        %v1210 = vmul.f32 %v985, %v1183
        %v1211 = vmul.f32 %v987, %v1183
        %v1212 = vmul.f32 %v985, %v1185
        %v1213 = vmul.f32 %v987, %v1185
        %v1214 = vmul.f32 %v990, %v1179
        %v1215 = vmul.f32 %v992, %v1179
        %v1216 = vmul.f32 %v990, %v1181
        %v1217 = vmul.f32 %v992, %v1181
        %v1218 = vmul.f32 %v990, %v1183
        %v1219 = vmul.f32 %v992, %v1183
        %v1220 = vmul.f32 %v990, %v1185
        %v1221 = vmul.f32 %v992, %v1185
        %v1222 = vmul.f32 %v995, %v1179
        %v1223 = vmul.f32 %v997, %v1179
        %v1224 = vmul.f32 %v995, %v1181
        %v1225 = vmul.f32 %v997, %v1181
        %v1226 = vmul.f32 %v995, %v1183
        %v1227 = vmul.f32 %v997, %v1183
        %v1228 = vmul.f32 %v995, %v1185
        %v1229 = vmul.f32 %v997, %v1185
        %v1230 = vmul.f32 %v1000, %v1179
        %v1231 = vmul.f32 %v1002, %v1179
        %v1232 = vmul.f32 %v1000, %v1181
        %v1233 = vmul.f32 %v1002, %v1181
        %v1234 = vmul.f32 %v1000, %v1183
        %v1235 = vmul.f32 %v1002, %v1183
        %v1236 = vmul.f32 %v1000, %v1185
        %v1237 = vmul.f32 %v1002, %v1185
        %v1238 = vmul.f32 %v1005, %v1179
        %v1239 = vmul.f32 %v1007, %v1179
        %v1240 = vmul.f32 %v1005, %v1181
        %v1241 = vmul.f32 %v1007, %v1181
        %v1242 = vmul.f32 %v1005, %v1183
        %v1243 = vmul.f32 %v1007, %v1183
        %v1244 = vmul.f32 %v1005, %v1185
        %v1245 = vmul.f32 %v1007, %v1185
        %v1246 = vmul.f32 %v1010, %v1179
        %v1247 = vmul.f32 %v1012, %v1179
        %v1248 = vmul.f32 %v1010, %v1181
        %v1249 = vmul.f32 %v1012, %v1181
        %v1250 = vmul.f32 %v1010, %v1183
        %v1251 = vmul.f32 %v1012, %v1183
        %v1252 = vmul.f32 %v1010, %v1185
        %v1253 = vmul.f32 %v1012, %v1185
        %v1254 = vpack.c.bf16 %v1190, %v1190
        %v1255 = vpack.c.bf16 %v1191, %v1191
        %v1256 = vpack.c.bf16 %v1192, %v1192
        %v1257 = vpack.c.bf16 %v1193, %v1193
        %v1258 = vpack.c.bf16 %v1194, %v1194
        %v1259 = vpack.c.bf16 %v1195, %v1195
        %v1260 = vpack.c.bf16 %v1196, %v1196
        %v1261 = vpack.c.bf16 %v1197, %v1197
        %v1262 = vpack.c.bf16 %v1198, %v1198
        %v1263 = vpack.c.bf16 %v1199, %v1199
        %v1264 = vpack.c.bf16 %v1200, %v1200
        %v1265 = vpack.c.bf16 %v1201, %v1201
        %v1266 = vpack.c.bf16 %v1202, %v1202
        %v1267 = vpack.c.bf16 %v1203, %v1203
        %v1268 = vpack.c.bf16 %v1204, %v1204
        %v1269 = vpack.c.bf16 %v1205, %v1205
        %v1270 = vpack.c.bf16 %v1206, %v1206
        %v1271 = vpack.c.bf16 %v1207, %v1207
        %v1272 = vpack.c.bf16 %v1208, %v1208
        %v1273 = vpack.c.bf16 %v1209, %v1209
        %v1274 = vpack.c.bf16 %v1210, %v1210
        %v1275 = vpack.c.bf16 %v1211, %v1211
        %v1276 = vpack.c.bf16 %v1212, %v1212
        %v1277 = vpack.c.bf16 %v1213, %v1213
        %v1278 = vpack.c.bf16 %v1214, %v1214
        %v1279 = vpack.c.bf16 %v1215, %v1215
        %v1280 = vpack.c.bf16 %v1216, %v1216
        %v1281 = vpack.c.bf16 %v1217, %v1217
        %v1282 = vpack.c.bf16 %v1218, %v1218
        %v1283 = vpack.c.bf16 %v1219, %v1219
        %v1284 = vpack.c.bf16 %v1220, %v1220
        %v1285 = vpack.c.bf16 %v1221, %v1221
        %v1286 = vpack.c.bf16 %v1222, %v1222
        %v1287 = vpack.c.bf16 %v1223, %v1223
        %v1288 = vpack.c.bf16 %v1224, %v1224
        %v1289 = vpack.c.bf16 %v1225, %v1225
        %v1290 = vpack.c.bf16 %v1226, %v1226
        %v1291 = vpack.c.bf16 %v1227, %v1227
        %v1292 = vpack.c.bf16 %v1228, %v1228
        %v1293 = vpack.c.bf16 %v1229, %v1229
        %v1294 = vpack.c.bf16 %v1230, %v1230
        %v1295 = vpack.c.bf16 %v1231, %v1231
        %v1296 = vpack.c.bf16 %v1232, %v1232
        %v1297 = vpack.c.bf16 %v1233, %v1233
        %v1298 = vpack.c.bf16 %v1234, %v1234
        %v1299 = vpack.c.bf16 %v1235, %v1235
        %v1300 = vpack.c.bf16 %v1236, %v1236
        %v1301 = vpack.c.bf16 %v1237, %v1237
        %v1302 = vpack.c.bf16 %v1238, %v1238
        %v1303 = vpack.c.bf16 %v1239, %v1239
        %v1304 = vpack.c.bf16 %v1240, %v1240
        %v1305 = vpack.c.bf16 %v1241, %v1241
        %v1306 = vpack.c.bf16 %v1242, %v1242
        %v1307 = vpack.c.bf16 %v1243, %v1243
        %v1308 = vpack.c.bf16 %v1244, %v1244
        %v1309 = vpack.c.bf16 %v1245, %v1245
        %v1310 = vpack.c.bf16 %v1246, %v1246
        %v1311 = vpack.c.bf16 %v1247, %v1247
        %v1312 = vpack.c.bf16 %v1248, %v1248
        %v1313 = vpack.c.bf16 %v1249, %v1249
        %v1314 = vpack.c.bf16 %v1250, %v1250
        %v1315 = vpack.c.bf16 %v1251, %v1251
        %v1316 = vpack.c.bf16 %v1252, %v1252
        %v1317 = vpack.c.bf16 %v1253, %v1253
        %v1320 = vunpack.c.l.b16 %v1094
        %v1321 = vunpack.c.l.b16 %v1095
        %v1322 = vpack.c.b16 %v1321, %v1320
        %v1325 = vunpack.c.l.b16 %v1158
        %v1326 = vunpack.c.l.b16 %v1159
        %v1327 = vpack.c.b16 %v1326, %v1325
        %1328 = vrot.lane.b32.xlu0 %v1327, 96
        %v1329 = vpop.permute.xlu0 %1328
        %v1331 = vsel %vm520, %v1322, 0
        %v1334 = vsel %vm520, %v1329, 0
        %1336 = vmatpush.bf16.xpose.msra.mxu0 0
        %1337 = vmatpush.bf16.xpose.msra.mxu0 0
        %1338 = vmatpush.bf16.xpose.msra.mxu0 0
        %1339 = vmatpush.bf16.xpose.msra.mxu0 0
        %1340 = vmatpush.bf16.xpose.msra.mxu0 0
        %1341 = vmatpush.bf16.xpose.msra.mxu0 0
        %1342 = vmatpush.bf16.xpose.msra.mxu0 0
        %1343 = vmatpush.bf16.xpose.msra.mxu0 %v1334
        %1344 = vmatmul.bf16.gmra.mxu0 %v1331
        %v1345 = vpop.f32.mrf.mxu0
        %v1346 = vadd.f32 0.0, %v1345
        %v1347 = vpop.f32.mrf.mxu0
        %v1348 = vadd.f32 0.0, %v1347
        %1349 = vdwg.mxu0
        %v1352 = vunpack.c.l.b16 %v1096
        %v1353 = vunpack.c.l.b16 %v1097
        %v1354 = vpack.c.b16 %v1353, %v1352
        %v1356 = vsel %vm520, %v1354, 0
        %1358 = vmatpush.bf16.xpose.msra.mxu0 0
        %1359 = vmatpush.bf16.xpose.msra.mxu0 0
        %1360 = vmatpush.bf16.xpose.msra.mxu0 0
        %1361 = vmatpush.bf16.xpose.msra.mxu0 0
        %1362 = vmatpush.bf16.xpose.msra.mxu0 0
        %1363 = vmatpush.bf16.xpose.msra.mxu0 0
        %1364 = vmatpush.bf16.xpose.msra.mxu0 0
        %1365 = vmatpush.bf16.xpose.msra.mxu0 %v1334
        %1366 = vmatmul.bf16.gmra.mxu0 %v1356
        %v1367 = vpop.f32.mrf.mxu0
        %v1368 = vadd.f32 0.0, %v1367
        %v1369 = vpop.f32.mrf.mxu0
        %v1370 = vadd.f32 0.0, %v1369
        %1371 = vdwg.mxu0
        %v1374 = vunpack.c.l.b16 %v1098
        %v1375 = vunpack.c.l.b16 %v1099
        %v1376 = vpack.c.b16 %v1375, %v1374
        %v1378 = vsel %vm520, %v1376, 0
        %1380 = vmatpush.bf16.xpose.msra.mxu0 0
        %1381 = vmatpush.bf16.xpose.msra.mxu0 0
        %1382 = vmatpush.bf16.xpose.msra.mxu0 0
        %1383 = vmatpush.bf16.xpose.msra.mxu0 0
        %1384 = vmatpush.bf16.xpose.msra.mxu0 0
        %1385 = vmatpush.bf16.xpose.msra.mxu0 0
        %1386 = vmatpush.bf16.xpose.msra.mxu0 0
        %1387 = vmatpush.bf16.xpose.msra.mxu0 %v1334
        %1388 = vmatmul.bf16.gmra.mxu0 %v1378
        %v1389 = vpop.f32.mrf.mxu0
        %v1390 = vadd.f32 0.0, %v1389
        %v1391 = vpop.f32.mrf.mxu0
        %v1392 = vadd.f32 0.0, %v1391
        %1393 = vdwg.mxu0
        %v1396 = vunpack.c.l.b16 %v1100
        %v1397 = vunpack.c.l.b16 %v1101
        %v1398 = vpack.c.b16 %v1397, %v1396
        %v1400 = vsel %vm520, %v1398, 0
        %1402 = vmatpush.bf16.xpose.msra.mxu0 0
        %1403 = vmatpush.bf16.xpose.msra.mxu0 0
        %1404 = vmatpush.bf16.xpose.msra.mxu0 0
        %1405 = vmatpush.bf16.xpose.msra.mxu0 0
        %1406 = vmatpush.bf16.xpose.msra.mxu0 0
        %1407 = vmatpush.bf16.xpose.msra.mxu0 0
        %1408 = vmatpush.bf16.xpose.msra.mxu0 0
        %1409 = vmatpush.bf16.xpose.msra.mxu0 %v1334
        %1410 = vmatmul.bf16.gmra.mxu0 %v1400
        %v1411 = vpop.f32.mrf.mxu0
        %v1412 = vadd.f32 0.0, %v1411
        %v1413 = vpop.f32.mrf.mxu0
        %v1414 = vadd.f32 0.0, %v1413
        %1415 = vdwg.mxu0
        %v1418 = vunpack.c.l.b16 %v1102
        %v1419 = vunpack.c.l.b16 %v1103
        %v1420 = vpack.c.b16 %v1419, %v1418
        %v1423 = vunpack.c.l.b16 %v1160
        %v1424 = vunpack.c.l.b16 %v1161
        %v1425 = vpack.c.b16 %v1424, %v1423
        %1426 = vrot.lane.b32.xlu0 %v1425, 96
        %v1427 = vpop.permute.xlu0 %1426
        %v1429 = vsel %vm520, %v1420, 0
        %v1432 = vsel %vm520, %v1427, 0
        %1434 = vmatpush.bf16.xpose.msra.mxu0 0
        %1435 = vmatpush.bf16.xpose.msra.mxu0 0
        %1436 = vmatpush.bf16.xpose.msra.mxu0 0
        %1437 = vmatpush.bf16.xpose.msra.mxu0 0
        %1438 = vmatpush.bf16.xpose.msra.mxu0 0
        %1439 = vmatpush.bf16.xpose.msra.mxu0 0
        %1440 = vmatpush.bf16.xpose.msra.mxu0 0
        %1441 = vmatpush.bf16.xpose.msra.mxu0 %v1432
        %1442 = vmatmul.bf16.gmra.mxu0 %v1429
        %v1443 = vpop.f32.mrf.mxu0
        %v1444 = vadd.f32 0.0, %v1443
        %v1445 = vpop.f32.mrf.mxu0
        %v1446 = vadd.f32 0.0, %v1445
        %1447 = vdwg.mxu0
        %v1450 = vunpack.c.l.b16 %v1104
        %v1451 = vunpack.c.l.b16 %v1105
        %v1452 = vpack.c.b16 %v1451, %v1450
        %v1454 = vsel %vm520, %v1452, 0
        %1456 = vmatpush.bf16.xpose.msra.mxu0 0
        %1457 = vmatpush.bf16.xpose.msra.mxu0 0
        %1458 = vmatpush.bf16.xpose.msra.mxu0 0
        %1459 = vmatpush.bf16.xpose.msra.mxu0 0
        %1460 = vmatpush.bf16.xpose.msra.mxu0 0
        %1461 = vmatpush.bf16.xpose.msra.mxu0 0
        %1462 = vmatpush.bf16.xpose.msra.mxu0 0
        %1463 = vmatpush.bf16.xpose.msra.mxu0 %v1432
        %1464 = vmatmul.bf16.gmra.mxu0 %v1454
        %v1465 = vpop.f32.mrf.mxu0
        %v1466 = vadd.f32 0.0, %v1465
        %v1467 = vpop.f32.mrf.mxu0
        %v1468 = vadd.f32 0.0, %v1467
        %1469 = vdwg.mxu0
        %v1472 = vunpack.c.l.b16 %v1106
        %v1473 = vunpack.c.l.b16 %v1107
        %v1474 = vpack.c.b16 %v1473, %v1472
        %v1476 = vsel %vm520, %v1474, 0
        %1478 = vmatpush.bf16.xpose.msra.mxu0 0
        %1479 = vmatpush.bf16.xpose.msra.mxu0 0
        %1480 = vmatpush.bf16.xpose.msra.mxu0 0
        %1481 = vmatpush.bf16.xpose.msra.mxu0 0
        %1482 = vmatpush.bf16.xpose.msra.mxu0 0
        %1483 = vmatpush.bf16.xpose.msra.mxu0 0
        %1484 = vmatpush.bf16.xpose.msra.mxu0 0
        %1485 = vmatpush.bf16.xpose.msra.mxu0 %v1432
        %1486 = vmatmul.bf16.gmra.mxu0 %v1476
        %v1487 = vpop.f32.mrf.mxu0
        %v1488 = vadd.f32 0.0, %v1487
        %v1489 = vpop.f32.mrf.mxu0
        %v1490 = vadd.f32 0.0, %v1489
        %1491 = vdwg.mxu0
        %v1494 = vunpack.c.l.b16 %v1108
        %v1495 = vunpack.c.l.b16 %v1109
        %v1496 = vpack.c.b16 %v1495, %v1494
        %v1498 = vsel %vm520, %v1496, 0
        %1500 = vmatpush.bf16.xpose.msra.mxu0 0
        %1501 = vmatpush.bf16.xpose.msra.mxu0 0
        %1502 = vmatpush.bf16.xpose.msra.mxu0 0
        %1503 = vmatpush.bf16.xpose.msra.mxu0 0
        %1504 = vmatpush.bf16.xpose.msra.mxu0 0
        %1505 = vmatpush.bf16.xpose.msra.mxu0 0
        %1506 = vmatpush.bf16.xpose.msra.mxu0 0
        %1507 = vmatpush.bf16.xpose.msra.mxu0 %v1432
        %1508 = vmatmul.bf16.gmra.mxu0 %v1498
        %v1509 = vpop.f32.mrf.mxu0
        %v1510 = vadd.f32 0.0, %v1509
        %v1511 = vpop.f32.mrf.mxu0
        %v1512 = vadd.f32 0.0, %v1511
        %1513 = vdwg.mxu0
        %v1516 = vunpack.c.l.b16 %v1110
        %v1517 = vunpack.c.l.b16 %v1111
        %v1518 = vpack.c.b16 %v1517, %v1516
        %v1521 = vunpack.c.l.b16 %v1162
        %v1522 = vunpack.c.l.b16 %v1163
        %v1523 = vpack.c.b16 %v1522, %v1521
        %1524 = vrot.lane.b32.xlu0 %v1523, 96
        %v1525 = vpop.permute.xlu0 %1524
        %v1527 = vsel %vm520, %v1518, 0
        %v1530 = vsel %vm520, %v1525, 0
        %1532 = vmatpush.bf16.xpose.msra.mxu0 0
        %1533 = vmatpush.bf16.xpose.msra.mxu0 0
        %1534 = vmatpush.bf16.xpose.msra.mxu0 0
        %1535 = vmatpush.bf16.xpose.msra.mxu0 0
        %1536 = vmatpush.bf16.xpose.msra.mxu0 0
        %1537 = vmatpush.bf16.xpose.msra.mxu0 0
        %1538 = vmatpush.bf16.xpose.msra.mxu0 0
        %1539 = vmatpush.bf16.xpose.msra.mxu0 %v1530
        %1540 = vmatmul.bf16.gmra.mxu0 %v1527
        %v1541 = vpop.f32.mrf.mxu0
        %v1542 = vadd.f32 0.0, %v1541
        %v1543 = vpop.f32.mrf.mxu0
        %v1544 = vadd.f32 0.0, %v1543
        %1545 = vdwg.mxu0
        %v1548 = vunpack.c.l.b16 %v1112
        %v1549 = vunpack.c.l.b16 %v1113
        %v1550 = vpack.c.b16 %v1549, %v1548
        %v1552 = vsel %vm520, %v1550, 0
        %1554 = vmatpush.bf16.xpose.msra.mxu0 0
        %1555 = vmatpush.bf16.xpose.msra.mxu0 0
        %1556 = vmatpush.bf16.xpose.msra.mxu0 0
        %1557 = vmatpush.bf16.xpose.msra.mxu0 0
        %1558 = vmatpush.bf16.xpose.msra.mxu0 0
        %1559 = vmatpush.bf16.xpose.msra.mxu0 0
        %1560 = vmatpush.bf16.xpose.msra.mxu0 0
        %1561 = vmatpush.bf16.xpose.msra.mxu0 %v1530
        %1562 = vmatmul.bf16.gmra.mxu0 %v1552
        %v1563 = vpop.f32.mrf.mxu0
        %v1564 = vadd.f32 0.0, %v1563
        %v1565 = vpop.f32.mrf.mxu0
        %v1566 = vadd.f32 0.0, %v1565
        %1567 = vdwg.mxu0
        %v1570 = vunpack.c.l.b16 %v1114
        %v1571 = vunpack.c.l.b16 %v1115
        %v1572 = vpack.c.b16 %v1571, %v1570
        %v1574 = vsel %vm520, %v1572, 0
        %1576 = vmatpush.bf16.xpose.msra.mxu0 0
        %1577 = vmatpush.bf16.xpose.msra.mxu0 0
        %1578 = vmatpush.bf16.xpose.msra.mxu0 0
        %1579 = vmatpush.bf16.xpose.msra.mxu0 0
        %1580 = vmatpush.bf16.xpose.msra.mxu0 0
        %1581 = vmatpush.bf16.xpose.msra.mxu0 0
        %1582 = vmatpush.bf16.xpose.msra.mxu0 0
        %1583 = vmatpush.bf16.xpose.msra.mxu0 %v1530
        %1584 = vmatmul.bf16.gmra.mxu0 %v1574
        %v1585 = vpop.f32.mrf.mxu0
        %v1586 = vadd.f32 0.0, %v1585
        %v1587 = vpop.f32.mrf.mxu0
        %v1588 = vadd.f32 0.0, %v1587
        %1589 = vdwg.mxu0
        %v1592 = vunpack.c.l.b16 %v1116
        %v1593 = vunpack.c.l.b16 %v1117
        %v1594 = vpack.c.b16 %v1593, %v1592
        %v1596 = vsel %vm520, %v1594, 0
        %1598 = vmatpush.bf16.xpose.msra.mxu0 0
        %1599 = vmatpush.bf16.xpose.msra.mxu0 0
        %1600 = vmatpush.bf16.xpose.msra.mxu0 0
        %1601 = vmatpush.bf16.xpose.msra.mxu0 0
        %1602 = vmatpush.bf16.xpose.msra.mxu0 0
        %1603 = vmatpush.bf16.xpose.msra.mxu0 0
        %1604 = vmatpush.bf16.xpose.msra.mxu0 0
        %1605 = vmatpush.bf16.xpose.msra.mxu0 %v1530
        %1606 = vmatmul.bf16.gmra.mxu0 %v1596
        %v1607 = vpop.f32.mrf.mxu0
        %v1608 = vadd.f32 0.0, %v1607
        %v1609 = vpop.f32.mrf.mxu0
        %v1610 = vadd.f32 0.0, %v1609
        %1611 = vdwg.mxu0
        %v1614 = vunpack.c.l.b16 %v1118
        %v1615 = vunpack.c.l.b16 %v1119
        %v1616 = vpack.c.b16 %v1615, %v1614
        %v1619 = vunpack.c.l.b16 %v1164
        %v1620 = vunpack.c.l.b16 %v1165
        %v1621 = vpack.c.b16 %v1620, %v1619
        %1622 = vrot.lane.b32.xlu0 %v1621, 96
        %v1623 = vpop.permute.xlu0 %1622
        %v1625 = vsel %vm520, %v1616, 0
        %v1628 = vsel %vm520, %v1623, 0
        %1630 = vmatpush.bf16.xpose.msra.mxu0 0
        %1631 = vmatpush.bf16.xpose.msra.mxu0 0
        %1632 = vmatpush.bf16.xpose.msra.mxu0 0
        %1633 = vmatpush.bf16.xpose.msra.mxu0 0
        %1634 = vmatpush.bf16.xpose.msra.mxu0 0
        %1635 = vmatpush.bf16.xpose.msra.mxu0 0
        %1636 = vmatpush.bf16.xpose.msra.mxu0 0
        %1637 = vmatpush.bf16.xpose.msra.mxu0 %v1628
        %1638 = vmatmul.bf16.gmra.mxu0 %v1625
        %v1639 = vpop.f32.mrf.mxu0
        %v1640 = vadd.f32 0.0, %v1639
        %v1641 = vpop.f32.mrf.mxu0
        %v1642 = vadd.f32 0.0, %v1641
        %1643 = vdwg.mxu0
        %v1646 = vunpack.c.l.b16 %v1120
        %v1647 = vunpack.c.l.b16 %v1121
        %v1648 = vpack.c.b16 %v1647, %v1646
        %v1650 = vsel %vm520, %v1648, 0
        %1652 = vmatpush.bf16.xpose.msra.mxu0 0
        %1653 = vmatpush.bf16.xpose.msra.mxu0 0
        %1654 = vmatpush.bf16.xpose.msra.mxu0 0
        %1655 = vmatpush.bf16.xpose.msra.mxu0 0
        %1656 = vmatpush.bf16.xpose.msra.mxu0 0
        %1657 = vmatpush.bf16.xpose.msra.mxu0 0
        %1658 = vmatpush.bf16.xpose.msra.mxu0 0
        %1659 = vmatpush.bf16.xpose.msra.mxu0 %v1628
        %1660 = vmatmul.bf16.gmra.mxu0 %v1650
        %v1661 = vpop.f32.mrf.mxu0
        %v1662 = vadd.f32 0.0, %v1661
        %v1663 = vpop.f32.mrf.mxu0
        %v1664 = vadd.f32 0.0, %v1663
        %1665 = vdwg.mxu0
        %v1668 = vunpack.c.l.b16 %v1122
        %v1669 = vunpack.c.l.b16 %v1123
        %v1670 = vpack.c.b16 %v1669, %v1668
        %v1672 = vsel %vm520, %v1670, 0
        %1674 = vmatpush.bf16.xpose.msra.mxu0 0
        %1675 = vmatpush.bf16.xpose.msra.mxu0 0
        %1676 = vmatpush.bf16.xpose.msra.mxu0 0
        %1677 = vmatpush.bf16.xpose.msra.mxu0 0
        %1678 = vmatpush.bf16.xpose.msra.mxu0 0
        %1679 = vmatpush.bf16.xpose.msra.mxu0 0
        %1680 = vmatpush.bf16.xpose.msra.mxu0 0
        %1681 = vmatpush.bf16.xpose.msra.mxu0 %v1628
        %1682 = vmatmul.bf16.gmra.mxu0 %v1672
        %v1683 = vpop.f32.mrf.mxu0
        %v1684 = vadd.f32 0.0, %v1683
        %v1685 = vpop.f32.mrf.mxu0
        %v1686 = vadd.f32 0.0, %v1685
        %1687 = vdwg.mxu0
        %v1690 = vunpack.c.l.b16 %v1124
        %v1691 = vunpack.c.l.b16 %v1125
        %v1692 = vpack.c.b16 %v1691, %v1690
        %v1694 = vsel %vm520, %v1692, 0
        %1696 = vmatpush.bf16.xpose.msra.mxu0 0
        %1697 = vmatpush.bf16.xpose.msra.mxu0 0
        %1698 = vmatpush.bf16.xpose.msra.mxu0 0
        %1699 = vmatpush.bf16.xpose.msra.mxu0 0
        %1700 = vmatpush.bf16.xpose.msra.mxu0 0
        %1701 = vmatpush.bf16.xpose.msra.mxu0 0
        %1702 = vmatpush.bf16.xpose.msra.mxu0 0
        %1703 = vmatpush.bf16.xpose.msra.mxu0 %v1628
        %1704 = vmatmul.bf16.gmra.mxu0 %v1694
        %v1705 = vpop.f32.mrf.mxu0
        %v1706 = vadd.f32 0.0, %v1705
        %v1707 = vpop.f32.mrf.mxu0
        %v1708 = vadd.f32 0.0, %v1707
        %1709 = vdwg.mxu0
        %v1712 = vunpack.c.l.b16 %v1126
        %v1713 = vunpack.c.l.b16 %v1127
        %v1714 = vpack.c.b16 %v1713, %v1712
        %v1717 = vunpack.c.l.b16 %v1166
        %v1718 = vunpack.c.l.b16 %v1167
        %v1719 = vpack.c.b16 %v1718, %v1717
        %1720 = vrot.lane.b32.xlu0 %v1719, 96
        %v1721 = vpop.permute.xlu0 %1720
        %v1723 = vsel %vm520, %v1714, 0
        %v1726 = vsel %vm520, %v1721, 0
        %1728 = vmatpush.bf16.xpose.msra.mxu0 0
        %1729 = vmatpush.bf16.xpose.msra.mxu0 0
        %1730 = vmatpush.bf16.xpose.msra.mxu0 0
        %1731 = vmatpush.bf16.xpose.msra.mxu0 0
        %1732 = vmatpush.bf16.xpose.msra.mxu0 0
        %1733 = vmatpush.bf16.xpose.msra.mxu0 0
        %1734 = vmatpush.bf16.xpose.msra.mxu0 0
        %1735 = vmatpush.bf16.xpose.msra.mxu0 %v1726
        %1736 = vmatmul.bf16.gmra.mxu0 %v1723
        %v1737 = vpop.f32.mrf.mxu0
        %v1738 = vadd.f32 0.0, %v1737
        %v1739 = vpop.f32.mrf.mxu0
        %v1740 = vadd.f32 0.0, %v1739
        %1741 = vdwg.mxu0
        %v1744 = vunpack.c.l.b16 %v1128
        %v1745 = vunpack.c.l.b16 %v1129
        %v1746 = vpack.c.b16 %v1745, %v1744
        %v1748 = vsel %vm520, %v1746, 0
        %1750 = vmatpush.bf16.xpose.msra.mxu0 0
        %1751 = vmatpush.bf16.xpose.msra.mxu0 0
        %1752 = vmatpush.bf16.xpose.msra.mxu0 0
        %1753 = vmatpush.bf16.xpose.msra.mxu0 0
        %1754 = vmatpush.bf16.xpose.msra.mxu0 0
        %1755 = vmatpush.bf16.xpose.msra.mxu0 0
        %1756 = vmatpush.bf16.xpose.msra.mxu0 0
        %1757 = vmatpush.bf16.xpose.msra.mxu0 %v1726
        %1758 = vmatmul.bf16.gmra.mxu0 %v1748
        %v1759 = vpop.f32.mrf.mxu0
        %v1760 = vadd.f32 0.0, %v1759
        %v1761 = vpop.f32.mrf.mxu0
        %v1762 = vadd.f32 0.0, %v1761
        %1763 = vdwg.mxu0
        %v1766 = vunpack.c.l.b16 %v1130
        %v1767 = vunpack.c.l.b16 %v1131
        %v1768 = vpack.c.b16 %v1767, %v1766
        %v1770 = vsel %vm520, %v1768, 0
        %1772 = vmatpush.bf16.xpose.msra.mxu0 0
        %1773 = vmatpush.bf16.xpose.msra.mxu0 0
        %1774 = vmatpush.bf16.xpose.msra.mxu0 0
        %1775 = vmatpush.bf16.xpose.msra.mxu0 0
        %1776 = vmatpush.bf16.xpose.msra.mxu0 0
        %1777 = vmatpush.bf16.xpose.msra.mxu0 0
        %1778 = vmatpush.bf16.xpose.msra.mxu0 0
        %1779 = vmatpush.bf16.xpose.msra.mxu0 %v1726
        %1780 = vmatmul.bf16.gmra.mxu0 %v1770
        %v1781 = vpop.f32.mrf.mxu0
        %v1782 = vadd.f32 0.0, %v1781
        %v1783 = vpop.f32.mrf.mxu0
        %v1784 = vadd.f32 0.0, %v1783
        %1785 = vdwg.mxu0
        %v1788 = vunpack.c.l.b16 %v1132
        %v1789 = vunpack.c.l.b16 %v1133
        %v1790 = vpack.c.b16 %v1789, %v1788
        %v1792 = vsel %vm520, %v1790, 0
        %1794 = vmatpush.bf16.xpose.msra.mxu0 0
        %1795 = vmatpush.bf16.xpose.msra.mxu0 0
        %1796 = vmatpush.bf16.xpose.msra.mxu0 0
        %1797 = vmatpush.bf16.xpose.msra.mxu0 0
        %1798 = vmatpush.bf16.xpose.msra.mxu0 0
        %1799 = vmatpush.bf16.xpose.msra.mxu0 0
        %1800 = vmatpush.bf16.xpose.msra.mxu0 0
        %1801 = vmatpush.bf16.xpose.msra.mxu0 %v1726
        %1802 = vmatmul.bf16.gmra.mxu0 %v1792
        %v1803 = vpop.f32.mrf.mxu0
        %v1804 = vadd.f32 0.0, %v1803
        %v1805 = vpop.f32.mrf.mxu0
        %v1806 = vadd.f32 0.0, %v1805
        %1807 = vdwg.mxu0
        %v1810 = vunpack.c.l.b16 %v1134
        %v1811 = vunpack.c.l.b16 %v1135
        %v1812 = vpack.c.b16 %v1811, %v1810
        %v1815 = vunpack.c.l.b16 %v1168
        %v1816 = vunpack.c.l.b16 %v1169
        %v1817 = vpack.c.b16 %v1816, %v1815
        %1818 = vrot.lane.b32.xlu0 %v1817, 96
        %v1819 = vpop.permute.xlu0 %1818
        %v1821 = vsel %vm520, %v1812, 0
        %v1824 = vsel %vm520, %v1819, 0
        %1826 = vmatpush.bf16.xpose.msra.mxu0 0
        %1827 = vmatpush.bf16.xpose.msra.mxu0 0
        %1828 = vmatpush.bf16.xpose.msra.mxu0 0
        %1829 = vmatpush.bf16.xpose.msra.mxu0 0
        %1830 = vmatpush.bf16.xpose.msra.mxu0 0
        %1831 = vmatpush.bf16.xpose.msra.mxu0 0
        %1832 = vmatpush.bf16.xpose.msra.mxu0 0
        %1833 = vmatpush.bf16.xpose.msra.mxu0 %v1824
        %1834 = vmatmul.bf16.gmra.mxu0 %v1821
        %v1835 = vpop.f32.mrf.mxu0
        %v1836 = vadd.f32 0.0, %v1835
        %v1837 = vpop.f32.mrf.mxu0
        %v1838 = vadd.f32 0.0, %v1837
        %1839 = vdwg.mxu0
        %v1842 = vunpack.c.l.b16 %v1136
        %v1843 = vunpack.c.l.b16 %v1137
        %v1844 = vpack.c.b16 %v1843, %v1842
        %v1846 = vsel %vm520, %v1844, 0
        %1848 = vmatpush.bf16.xpose.msra.mxu0 0
        %1849 = vmatpush.bf16.xpose.msra.mxu0 0
        %1850 = vmatpush.bf16.xpose.msra.mxu0 0
        %1851 = vmatpush.bf16.xpose.msra.mxu0 0
        %1852 = vmatpush.bf16.xpose.msra.mxu0 0
        %1853 = vmatpush.bf16.xpose.msra.mxu0 0
        %1854 = vmatpush.bf16.xpose.msra.mxu0 0
        %1855 = vmatpush.bf16.xpose.msra.mxu0 %v1824
        %1856 = vmatmul.bf16.gmra.mxu0 %v1846
        %v1857 = vpop.f32.mrf.mxu0
        %v1858 = vadd.f32 0.0, %v1857
        %v1859 = vpop.f32.mrf.mxu0
        %v1860 = vadd.f32 0.0, %v1859
        %1861 = vdwg.mxu0
        %v1864 = vunpack.c.l.b16 %v1138
        %v1865 = vunpack.c.l.b16 %v1139
        %v1866 = vpack.c.b16 %v1865, %v1864
        %v1868 = vsel %vm520, %v1866, 0
        %1870 = vmatpush.bf16.xpose.msra.mxu0 0
        %1871 = vmatpush.bf16.xpose.msra.mxu0 0
        %1872 = vmatpush.bf16.xpose.msra.mxu0 0
        %1873 = vmatpush.bf16.xpose.msra.mxu0 0
        %1874 = vmatpush.bf16.xpose.msra.mxu0 0
        %1875 = vmatpush.bf16.xpose.msra.mxu0 0
        %1876 = vmatpush.bf16.xpose.msra.mxu0 0
        %1877 = vmatpush.bf16.xpose.msra.mxu0 %v1824
        %1878 = vmatmul.bf16.gmra.mxu0 %v1868
        %v1879 = vpop.f32.mrf.mxu0
        %v1880 = vadd.f32 0.0, %v1879
        %v1881 = vpop.f32.mrf.mxu0
        %v1882 = vadd.f32 0.0, %v1881
        %1883 = vdwg.mxu0
        %v1886 = vunpack.c.l.b16 %v1140
        %v1887 = vunpack.c.l.b16 %v1141
        %v1888 = vpack.c.b16 %v1887, %v1886
        %v1890 = vsel %vm520, %v1888, 0
        %1892 = vmatpush.bf16.xpose.msra.mxu0 0
        %1893 = vmatpush.bf16.xpose.msra.mxu0 0
        %1894 = vmatpush.bf16.xpose.msra.mxu0 0
        %1895 = vmatpush.bf16.xpose.msra.mxu0 0
        %1896 = vmatpush.bf16.xpose.msra.mxu0 0
        %1897 = vmatpush.bf16.xpose.msra.mxu0 0
        %1898 = vmatpush.bf16.xpose.msra.mxu0 0
        %1899 = vmatpush.bf16.xpose.msra.mxu0 %v1824
        %1900 = vmatmul.bf16.gmra.mxu0 %v1890
        %v1901 = vpop.f32.mrf.mxu0
        %v1902 = vadd.f32 0.0, %v1901
        %v1903 = vpop.f32.mrf.mxu0
        %v1904 = vadd.f32 0.0, %v1903
        %1905 = vdwg.mxu0
        %v1908 = vunpack.c.l.b16 %v1142
        %v1909 = vunpack.c.l.b16 %v1143
        %v1910 = vpack.c.b16 %v1909, %v1908
        %v1913 = vunpack.c.l.b16 %v1170
        %v1914 = vunpack.c.l.b16 %v1171
        %v1915 = vpack.c.b16 %v1914, %v1913
        %1916 = vrot.lane.b32.xlu0 %v1915, 96
        %v1917 = vpop.permute.xlu0 %1916
        %v1919 = vsel %vm520, %v1910, 0
        %v1922 = vsel %vm520, %v1917, 0
        %1924 = vmatpush.bf16.xpose.msra.mxu0 0
        %1925 = vmatpush.bf16.xpose.msra.mxu0 0
        %1926 = vmatpush.bf16.xpose.msra.mxu0 0
        %1927 = vmatpush.bf16.xpose.msra.mxu0 0
        %1928 = vmatpush.bf16.xpose.msra.mxu0 0
        %1929 = vmatpush.bf16.xpose.msra.mxu0 0
        %1930 = vmatpush.bf16.xpose.msra.mxu0 0
        %1931 = vmatpush.bf16.xpose.msra.mxu0 %v1922
        %1932 = vmatmul.bf16.gmra.mxu0 %v1919
        %v1933 = vpop.f32.mrf.mxu0
        %v1934 = vadd.f32 0.0, %v1933
        %v1935 = vpop.f32.mrf.mxu0
        %v1936 = vadd.f32 0.0, %v1935
        %1937 = vdwg.mxu0
        %v1940 = vunpack.c.l.b16 %v1144
        %v1941 = vunpack.c.l.b16 %v1145
        %v1942 = vpack.c.b16 %v1941, %v1940
        %v1944 = vsel %vm520, %v1942, 0
        %1946 = vmatpush.bf16.xpose.msra.mxu0 0
        %1947 = vmatpush.bf16.xpose.msra.mxu0 0
        %1948 = vmatpush.bf16.xpose.msra.mxu0 0
        %1949 = vmatpush.bf16.xpose.msra.mxu0 0
        %1950 = vmatpush.bf16.xpose.msra.mxu0 0
        %1951 = vmatpush.bf16.xpose.msra.mxu0 0
        %1952 = vmatpush.bf16.xpose.msra.mxu0 0
        %1953 = vmatpush.bf16.xpose.msra.mxu0 %v1922
        %1954 = vmatmul.bf16.gmra.mxu0 %v1944
        %v1955 = vpop.f32.mrf.mxu0
        %v1956 = vadd.f32 0.0, %v1955
        %v1957 = vpop.f32.mrf.mxu0
        %v1958 = vadd.f32 0.0, %v1957
        %1959 = vdwg.mxu0
        %v1962 = vunpack.c.l.b16 %v1146
        %v1963 = vunpack.c.l.b16 %v1147
        %v1964 = vpack.c.b16 %v1963, %v1962
        %v1966 = vsel %vm520, %v1964, 0
        %1968 = vmatpush.bf16.xpose.msra.mxu0 0
        %1969 = vmatpush.bf16.xpose.msra.mxu0 0
        %1970 = vmatpush.bf16.xpose.msra.mxu0 0
        %1971 = vmatpush.bf16.xpose.msra.mxu0 0
        %1972 = vmatpush.bf16.xpose.msra.mxu0 0
        %1973 = vmatpush.bf16.xpose.msra.mxu0 0
        %1974 = vmatpush.bf16.xpose.msra.mxu0 0
        %1975 = vmatpush.bf16.xpose.msra.mxu0 %v1922
        %1976 = vmatmul.bf16.gmra.mxu0 %v1966
        %v1977 = vpop.f32.mrf.mxu0
        %v1978 = vadd.f32 0.0, %v1977
        %v1979 = vpop.f32.mrf.mxu0
        %v1980 = vadd.f32 0.0, %v1979
        %1981 = vdwg.mxu0
        %v1984 = vunpack.c.l.b16 %v1148
        %v1985 = vunpack.c.l.b16 %v1149
        %v1986 = vpack.c.b16 %v1985, %v1984
        %v1988 = vsel %vm520, %v1986, 0
        %1990 = vmatpush.bf16.xpose.msra.mxu0 0
        %1991 = vmatpush.bf16.xpose.msra.mxu0 0
        %1992 = vmatpush.bf16.xpose.msra.mxu0 0
        %1993 = vmatpush.bf16.xpose.msra.mxu0 0
        %1994 = vmatpush.bf16.xpose.msra.mxu0 0
        %1995 = vmatpush.bf16.xpose.msra.mxu0 0
        %1996 = vmatpush.bf16.xpose.msra.mxu0 0
        %1997 = vmatpush.bf16.xpose.msra.mxu0 %v1922
        %1998 = vmatmul.bf16.gmra.mxu0 %v1988
        %v1999 = vpop.f32.mrf.mxu0
        %v2000 = vadd.f32 0.0, %v1999
        %v2001 = vpop.f32.mrf.mxu0
        %v2002 = vadd.f32 0.0, %v2001
        %2003 = vdwg.mxu0
        %v2006 = vunpack.c.l.b16 %v1150
        %v2007 = vunpack.c.l.b16 %v1151
        %v2008 = vpack.c.b16 %v2007, %v2006
        %v2011 = vunpack.c.l.b16 %v1172
        %v2012 = vunpack.c.l.b16 %v1173
        %v2013 = vpack.c.b16 %v2012, %v2011
        %2014 = vrot.lane.b32.xlu0 %v2013, 96
        %v2015 = vpop.permute.xlu0 %2014
        %v2017 = vsel %vm520, %v2008, 0
        %v2020 = vsel %vm520, %v2015, 0
        %2022 = vmatpush.bf16.xpose.msra.mxu0 0
        %2023 = vmatpush.bf16.xpose.msra.mxu0 0
        %2024 = vmatpush.bf16.xpose.msra.mxu0 0
        %2025 = vmatpush.bf16.xpose.msra.mxu0 0
        %2026 = vmatpush.bf16.xpose.msra.mxu0 0
        %2027 = vmatpush.bf16.xpose.msra.mxu0 0
        %2028 = vmatpush.bf16.xpose.msra.mxu0 0
        %2029 = vmatpush.bf16.xpose.msra.mxu0 %v2020
        %2030 = vmatmul.bf16.gmra.mxu0 %v2017
        %v2031 = vpop.f32.mrf.mxu0
        %v2032 = vadd.f32 0.0, %v2031
        %v2033 = vpop.f32.mrf.mxu0
        %v2034 = vadd.f32 0.0, %v2033
        %2035 = vdwg.mxu0
        %v2038 = vunpack.c.l.b16 %v1152
        %v2039 = vunpack.c.l.b16 %v1153
        %v2040 = vpack.c.b16 %v2039, %v2038
        %v2042 = vsel %vm520, %v2040, 0
        %2044 = vmatpush.bf16.xpose.msra.mxu0 0
        %2045 = vmatpush.bf16.xpose.msra.mxu0 0
        %2046 = vmatpush.bf16.xpose.msra.mxu0 0
        %2047 = vmatpush.bf16.xpose.msra.mxu0 0
        %2048 = vmatpush.bf16.xpose.msra.mxu0 0
        %2049 = vmatpush.bf16.xpose.msra.mxu0 0
        %2050 = vmatpush.bf16.xpose.msra.mxu0 0
        %2051 = vmatpush.bf16.xpose.msra.mxu0 %v2020
        %2052 = vmatmul.bf16.gmra.mxu0 %v2042
        %v2053 = vpop.f32.mrf.mxu0
        %v2054 = vadd.f32 0.0, %v2053
        %v2055 = vpop.f32.mrf.mxu0
        %v2056 = vadd.f32 0.0, %v2055
        %2057 = vdwg.mxu0
        %v2060 = vunpack.c.l.b16 %v1154
        %v2061 = vunpack.c.l.b16 %v1155
        %v2062 = vpack.c.b16 %v2061, %v2060
        %v2064 = vsel %vm520, %v2062, 0
        %2066 = vmatpush.bf16.xpose.msra.mxu0 0
        %2067 = vmatpush.bf16.xpose.msra.mxu0 0
        %2068 = vmatpush.bf16.xpose.msra.mxu0 0
        %2069 = vmatpush.bf16.xpose.msra.mxu0 0
        %2070 = vmatpush.bf16.xpose.msra.mxu0 0
        %2071 = vmatpush.bf16.xpose.msra.mxu0 0
        %2072 = vmatpush.bf16.xpose.msra.mxu0 0
        %2073 = vmatpush.bf16.xpose.msra.mxu0 %v2020
        %2074 = vmatmul.bf16.gmra.mxu0 %v2064
        %v2075 = vpop.f32.mrf.mxu0
        %v2076 = vadd.f32 0.0, %v2075
        %v2077 = vpop.f32.mrf.mxu0
        %v2078 = vadd.f32 0.0, %v2077
        %2079 = vdwg.mxu0
        %v2082 = vunpack.c.l.b16 %v1156
        %v2083 = vunpack.c.l.b16 %v1157
        %v2084 = vpack.c.b16 %v2083, %v2082
        %v2086 = vsel %vm520, %v2084, 0
        %2088 = vmatpush.bf16.xpose.msra.mxu0 0
        %2089 = vmatpush.bf16.xpose.msra.mxu0 0
        %2090 = vmatpush.bf16.xpose.msra.mxu0 0
        %2091 = vmatpush.bf16.xpose.msra.mxu0 0
        %2092 = vmatpush.bf16.xpose.msra.mxu0 0
        %2093 = vmatpush.bf16.xpose.msra.mxu0 0
        %2094 = vmatpush.bf16.xpose.msra.mxu0 0
        %2095 = vmatpush.bf16.xpose.msra.mxu0 %v2020
        %2096 = vmatmul.bf16.gmra.mxu0 %v2086
        %v2097 = vpop.f32.mrf.mxu0
        %v2098 = vadd.f32 0.0, %v2097
        %v2099 = vpop.f32.mrf.mxu0
        %v2100 = vadd.f32 0.0, %v2099
        %2101 = vdwg.mxu0
        %vm2102 = vcmask 130048
        %v2103 = vsel %vm2102, %v1346, -inf
        %2104 = vmax.xlane.f32.xlu0 %v2103
        %v2105 = vpop.xlane.xlu0 %2104
        %v2106 = vsel %vm2102, %v1348, -inf
        %2107 = vmax.xlane.f32.xlu0 %v2106
        %v2108 = vpop.xlane.xlu0 %2107
        %v2109 = vsel %vm2102, %v1368, -inf
        %2110 = vmax.xlane.f32.xlu0 %v2109
        %v2111 = vpop.xlane.xlu0 %2110
        %v2112 = vsel %vm2102, %v1370, -inf
        %2113 = vmax.xlane.f32.xlu0 %v2112
        %v2114 = vpop.xlane.xlu0 %2113
        %v2115 = vsel %vm2102, %v1390, -inf
        %2116 = vmax.xlane.f32.xlu0 %v2115
        %v2117 = vpop.xlane.xlu0 %2116
        %v2118 = vsel %vm2102, %v1392, -inf
        %2119 = vmax.xlane.f32.xlu0 %v2118
        %v2120 = vpop.xlane.xlu0 %2119
        %v2121 = vsel %vm2102, %v1412, -inf
        %2122 = vmax.xlane.f32.xlu0 %v2121
        %v2123 = vpop.xlane.xlu0 %2122
        %v2124 = vsel %vm2102, %v1414, -inf
        %2125 = vmax.xlane.f32.xlu0 %v2124
        %v2126 = vpop.xlane.xlu0 %2125
        %v2127 = vsel %vm2102, %v1444, -inf
        %2128 = vmax.xlane.f32.xlu0 %v2127
        %v2129 = vpop.xlane.xlu0 %2128
        %v2130 = vsel %vm2102, %v1446, -inf
        %2131 = vmax.xlane.f32.xlu0 %v2130
        %v2132 = vpop.xlane.xlu0 %2131
        %v2133 = vsel %vm2102, %v1466, -inf
        %2134 = vmax.xlane.f32.xlu0 %v2133
        %v2135 = vpop.xlane.xlu0 %2134
        %v2136 = vsel %vm2102, %v1468, -inf
        %2137 = vmax.xlane.f32.xlu0 %v2136
        %v2138 = vpop.xlane.xlu0 %2137
        %v2139 = vsel %vm2102, %v1488, -inf
        %2140 = vmax.xlane.f32.xlu0 %v2139
        %v2141 = vpop.xlane.xlu0 %2140
        %v2142 = vsel %vm2102, %v1490, -inf
        %2143 = vmax.xlane.f32.xlu0 %v2142
        %v2144 = vpop.xlane.xlu0 %2143
        %v2145 = vsel %vm2102, %v1510, -inf
        %2146 = vmax.xlane.f32.xlu0 %v2145
        %v2147 = vpop.xlane.xlu0 %2146
        %v2148 = vsel %vm2102, %v1512, -inf
        %2149 = vmax.xlane.f32.xlu0 %v2148
        %v2150 = vpop.xlane.xlu0 %2149
        %v2151 = vsel %vm2102, %v1542, -inf
        %2152 = vmax.xlane.f32.xlu0 %v2151
        %v2153 = vpop.xlane.xlu0 %2152
        %v2154 = vsel %vm2102, %v1544, -inf
        %2155 = vmax.xlane.f32.xlu0 %v2154
        %v2156 = vpop.xlane.xlu0 %2155
        %v2157 = vsel %vm2102, %v1564, -inf
        %2158 = vmax.xlane.f32.xlu0 %v2157
        %v2159 = vpop.xlane.xlu0 %2158
        %v2160 = vsel %vm2102, %v1566, -inf
        %2161 = vmax.xlane.f32.xlu0 %v2160
        %v2162 = vpop.xlane.xlu0 %2161
        %v2163 = vsel %vm2102, %v1586, -inf
        %2164 = vmax.xlane.f32.xlu0 %v2163
        %v2165 = vpop.xlane.xlu0 %2164
        %v2166 = vsel %vm2102, %v1588, -inf
        %2167 = vmax.xlane.f32.xlu0 %v2166
        %v2168 = vpop.xlane.xlu0 %2167
        %v2169 = vsel %vm2102, %v1608, -inf
        %2170 = vmax.xlane.f32.xlu0 %v2169
        %v2171 = vpop.xlane.xlu0 %2170
        %v2172 = vsel %vm2102, %v1610, -inf
        %2173 = vmax.xlane.f32.xlu0 %v2172
        %v2174 = vpop.xlane.xlu0 %2173
        %v2175 = vsel %vm2102, %v1640, -inf
        %2176 = vmax.xlane.f32.xlu0 %v2175
        %v2177 = vpop.xlane.xlu0 %2176
        %v2178 = vsel %vm2102, %v1642, -inf
        %2179 = vmax.xlane.f32.xlu0 %v2178
        %v2180 = vpop.xlane.xlu0 %2179
        %v2181 = vsel %vm2102, %v1662, -inf
        %2182 = vmax.xlane.f32.xlu0 %v2181
        %v2183 = vpop.xlane.xlu0 %2182
        %v2184 = vsel %vm2102, %v1664, -inf
        %2185 = vmax.xlane.f32.xlu0 %v2184
        %v2186 = vpop.xlane.xlu0 %2185
        %v2187 = vsel %vm2102, %v1684, -inf
        %2188 = vmax.xlane.f32.xlu0 %v2187
        %v2189 = vpop.xlane.xlu0 %2188
        %v2190 = vsel %vm2102, %v1686, -inf
        %2191 = vmax.xlane.f32.xlu0 %v2190
        %v2192 = vpop.xlane.xlu0 %2191
        %v2193 = vsel %vm2102, %v1706, -inf
        %2194 = vmax.xlane.f32.xlu0 %v2193
        %v2195 = vpop.xlane.xlu0 %2194
        %v2196 = vsel %vm2102, %v1708, -inf
        %2197 = vmax.xlane.f32.xlu0 %v2196
        %v2198 = vpop.xlane.xlu0 %2197
        %v2199 = vsel %vm2102, %v1738, -inf
        %2200 = vmax.xlane.f32.xlu0 %v2199
        %v2201 = vpop.xlane.xlu0 %2200
        %v2202 = vsel %vm2102, %v1740, -inf
        %2203 = vmax.xlane.f32.xlu0 %v2202
        %v2204 = vpop.xlane.xlu0 %2203
        %v2205 = vsel %vm2102, %v1760, -inf
        %2206 = vmax.xlane.f32.xlu0 %v2205
        %v2207 = vpop.xlane.xlu0 %2206
        %v2208 = vsel %vm2102, %v1762, -inf
        %2209 = vmax.xlane.f32.xlu0 %v2208
        %v2210 = vpop.xlane.xlu0 %2209
        %v2211 = vsel %vm2102, %v1782, -inf
        %2212 = vmax.xlane.f32.xlu0 %v2211
        %v2213 = vpop.xlane.xlu0 %2212
        %v2214 = vsel %vm2102, %v1784, -inf
        %2215 = vmax.xlane.f32.xlu0 %v2214
        %v2216 = vpop.xlane.xlu0 %2215
        %v2217 = vsel %vm2102, %v1804, -inf
        %2218 = vmax.xlane.f32.xlu0 %v2217
        %v2219 = vpop.xlane.xlu0 %2218
        %v2220 = vsel %vm2102, %v1806, -inf
        %2221 = vmax.xlane.f32.xlu0 %v2220
        %v2222 = vpop.xlane.xlu0 %2221
        %v2223 = vsel %vm2102, %v1836, -inf
        %2224 = vmax.xlane.f32.xlu0 %v2223
        %v2225 = vpop.xlane.xlu0 %2224
        %v2226 = vsel %vm2102, %v1838, -inf
        %2227 = vmax.xlane.f32.xlu0 %v2226
        %v2228 = vpop.xlane.xlu0 %2227
        %v2229 = vsel %vm2102, %v1858, -inf
        %2230 = vmax.xlane.f32.xlu0 %v2229
        %v2231 = vpop.xlane.xlu0 %2230
        %v2232 = vsel %vm2102, %v1860, -inf
        %2233 = vmax.xlane.f32.xlu0 %v2232
        %v2234 = vpop.xlane.xlu0 %2233
        %v2235 = vsel %vm2102, %v1880, -inf
        %2236 = vmax.xlane.f32.xlu0 %v2235
        %v2237 = vpop.xlane.xlu0 %2236
        %v2238 = vsel %vm2102, %v1882, -inf
        %2239 = vmax.xlane.f32.xlu0 %v2238
        %v2240 = vpop.xlane.xlu0 %2239
        %v2241 = vsel %vm2102, %v1902, -inf
        %2242 = vmax.xlane.f32.xlu0 %v2241
        %v2243 = vpop.xlane.xlu0 %2242
        %v2244 = vsel %vm2102, %v1904, -inf
        %2245 = vmax.xlane.f32.xlu0 %v2244
        %v2246 = vpop.xlane.xlu0 %2245
        %v2247 = vsel %vm2102, %v1934, -inf
        %2248 = vmax.xlane.f32.xlu0 %v2247
        %v2249 = vpop.xlane.xlu0 %2248
        %v2250 = vsel %vm2102, %v1936, -inf
        %2251 = vmax.xlane.f32.xlu0 %v2250
        %v2252 = vpop.xlane.xlu0 %2251
        %v2253 = vsel %vm2102, %v1956, -inf
        %2254 = vmax.xlane.f32.xlu0 %v2253
        %v2255 = vpop.xlane.xlu0 %2254
        %v2256 = vsel %vm2102, %v1958, -inf
        %2257 = vmax.xlane.f32.xlu0 %v2256
        %v2258 = vpop.xlane.xlu0 %2257
        %v2259 = vsel %vm2102, %v1978, -inf
        %2260 = vmax.xlane.f32.xlu0 %v2259
        %v2261 = vpop.xlane.xlu0 %2260
        %v2262 = vsel %vm2102, %v1980, -inf
        %2263 = vmax.xlane.f32.xlu0 %v2262
        %v2264 = vpop.xlane.xlu0 %2263
        %v2265 = vsel %vm2102, %v2000, -inf
        %2266 = vmax.xlane.f32.xlu0 %v2265
        %v2267 = vpop.xlane.xlu0 %2266
        %v2268 = vsel %vm2102, %v2002, -inf
        %2269 = vmax.xlane.f32.xlu0 %v2268
        %v2270 = vpop.xlane.xlu0 %2269
        %v2271 = vsel %vm2102, %v2032, -inf
        %2272 = vmax.xlane.f32.xlu0 %v2271
        %v2273 = vpop.xlane.xlu0 %2272
        %v2274 = vsel %vm2102, %v2034, -inf
        %2275 = vmax.xlane.f32.xlu0 %v2274
        %v2276 = vpop.xlane.xlu0 %2275
        %v2277 = vsel %vm2102, %v2054, -inf
        %2278 = vmax.xlane.f32.xlu0 %v2277
        %v2279 = vpop.xlane.xlu0 %2278
        %v2280 = vsel %vm2102, %v2056, -inf
        %2281 = vmax.xlane.f32.xlu0 %v2280
        %v2282 = vpop.xlane.xlu0 %2281
        %v2283 = vsel %vm2102, %v2076, -inf
        %2284 = vmax.xlane.f32.xlu0 %v2283
        %v2285 = vpop.xlane.xlu0 %2284
        %v2286 = vsel %vm2102, %v2078, -inf
        %2287 = vmax.xlane.f32.xlu0 %v2286
        %v2288 = vpop.xlane.xlu0 %2287
        %v2289 = vsel %vm2102, %v2098, -inf
        %2290 = vmax.xlane.f32.xlu0 %v2289
        %v2291 = vpop.xlane.xlu0 %2290
        %v2292 = vsel %vm2102, %v2100, -inf
        %2293 = vmax.xlane.f32.xlu0 %v2292
        %v2294 = vpop.xlane.xlu0 %2293
        %v2295 = vsub.f32 %v1346, %v2105
        %v2296 = vsub.f32 %v1348, %v2108
        %v2297 = vsub.f32 %v1368, %v2111
        %v2298 = vsub.f32 %v1370, %v2114
        %v2299 = vsub.f32 %v1390, %v2117
        %v2300 = vsub.f32 %v1392, %v2120
        %v2301 = vsub.f32 %v1412, %v2123
        %v2302 = vsub.f32 %v1414, %v2126
        %v2303 = vsub.f32 %v1444, %v2129
        %v2304 = vsub.f32 %v1446, %v2132
        %v2305 = vsub.f32 %v1466, %v2135
        %v2306 = vsub.f32 %v1468, %v2138
        %v2307 = vsub.f32 %v1488, %v2141
        %v2308 = vsub.f32 %v1490, %v2144
        %v2309 = vsub.f32 %v1510, %v2147
        %v2310 = vsub.f32 %v1512, %v2150
        %v2311 = vsub.f32 %v1542, %v2153
        %v2312 = vsub.f32 %v1544, %v2156
        %v2313 = vsub.f32 %v1564, %v2159
        %v2314 = vsub.f32 %v1566, %v2162
        %v2315 = vsub.f32 %v1586, %v2165
        %v2316 = vsub.f32 %v1588, %v2168
        %v2317 = vsub.f32 %v1608, %v2171
        %v2318 = vsub.f32 %v1610, %v2174
        %v2319 = vsub.f32 %v1640, %v2177
        %v2320 = vsub.f32 %v1642, %v2180
        %v2321 = vsub.f32 %v1662, %v2183
        %v2322 = vsub.f32 %v1664, %v2186
        %v2323 = vsub.f32 %v1684, %v2189
        %v2324 = vsub.f32 %v1686, %v2192
        %v2325 = vsub.f32 %v1706, %v2195
        %v2326 = vsub.f32 %v1708, %v2198
        %v2327 = vsub.f32 %v1738, %v2201
        %v2328 = vsub.f32 %v1740, %v2204
        %v2329 = vsub.f32 %v1760, %v2207
        %v2330 = vsub.f32 %v1762, %v2210
        %v2331 = vsub.f32 %v1782, %v2213
        %v2332 = vsub.f32 %v1784, %v2216
        %v2333 = vsub.f32 %v1804, %v2219
        %v2334 = vsub.f32 %v1806, %v2222
        %v2335 = vsub.f32 %v1836, %v2225
        %v2336 = vsub.f32 %v1838, %v2228
        %v2337 = vsub.f32 %v1858, %v2231
        %v2338 = vsub.f32 %v1860, %v2234
        %v2339 = vsub.f32 %v1880, %v2237
        %v2340 = vsub.f32 %v1882, %v2240
        %v2341 = vsub.f32 %v1902, %v2243
        %v2342 = vsub.f32 %v1904, %v2246
        %v2343 = vsub.f32 %v1934, %v2249
        %v2344 = vsub.f32 %v1936, %v2252
        %v2345 = vsub.f32 %v1956, %v2255
        %v2346 = vsub.f32 %v1958, %v2258
        %v2347 = vsub.f32 %v1978, %v2261
        %v2348 = vsub.f32 %v1980, %v2264
        %v2349 = vsub.f32 %v2000, %v2267
        %v2350 = vsub.f32 %v2002, %v2270
        %v2351 = vsub.f32 %v2032, %v2273
        %v2352 = vsub.f32 %v2034, %v2276
        %v2353 = vsub.f32 %v2054, %v2279
        %v2354 = vsub.f32 %v2056, %v2282
        %v2355 = vsub.f32 %v2076, %v2285
        %v2356 = vsub.f32 %v2078, %v2288
        %v2357 = vsub.f32 %v2098, %v2291
        %v2358 = vsub.f32 %v2100, %v2294
        %v2359 = vmul.f32 %v2295, 1.442695
        %v2360 = vpow.pop %v2359
        %v2361 = vmul.f32 %v2296, 1.442695
        %v2362 = vpow.pop %v2361
        %v2363 = vmul.f32 %v2297, 1.442695
        %v2364 = vpow.pop %v2363
        %v2365 = vmul.f32 %v2298, 1.442695
        %v2366 = vpow.pop %v2365
        %v2367 = vmul.f32 %v2299, 1.442695
        %v2368 = vpow.pop %v2367
        %v2369 = vmul.f32 %v2300, 1.442695
        %v2370 = vpow.pop %v2369
        %v2371 = vmul.f32 %v2301, 1.442695
        %v2372 = vpow.pop %v2371
        %v2373 = vmul.f32 %v2302, 1.442695
        %v2374 = vpow.pop %v2373
        %v2375 = vmul.f32 %v2303, 1.442695
        %v2376 = vpow.pop %v2375
        %v2377 = vmul.f32 %v2304, 1.442695
        %v2378 = vpow.pop %v2377
        %v2379 = vmul.f32 %v2305, 1.442695
        %v2380 = vpow.pop %v2379
        %v2381 = vmul.f32 %v2306, 1.442695
        %v2382 = vpow.pop %v2381
        %v2383 = vmul.f32 %v2307, 1.442695
        %v2384 = vpow.pop %v2383
        %v2385 = vmul.f32 %v2308, 1.442695
        %v2386 = vpow.pop %v2385
        %v2387 = vmul.f32 %v2309, 1.442695
        %v2388 = vpow.pop %v2387
        %v2389 = vmul.f32 %v2310, 1.442695
        %v2390 = vpow.pop %v2389
        %v2391 = vmul.f32 %v2311, 1.442695
        %v2392 = vpow.pop %v2391
        %v2393 = vmul.f32 %v2312, 1.442695
        %v2394 = vpow.pop %v2393
        %v2395 = vmul.f32 %v2313, 1.442695
        %v2396 = vpow.pop %v2395
        %v2397 = vmul.f32 %v2314, 1.442695
        %v2398 = vpow.pop %v2397
        %v2399 = vmul.f32 %v2315, 1.442695
        %v2400 = vpow.pop %v2399
        %v2401 = vmul.f32 %v2316, 1.442695
        %v2402 = vpow.pop %v2401
        %v2403 = vmul.f32 %v2317, 1.442695
        %v2404 = vpow.pop %v2403
        %v2405 = vmul.f32 %v2318, 1.442695
        %v2406 = vpow.pop %v2405
        %v2407 = vmul.f32 %v2319, 1.442695
        %v2408 = vpow.pop %v2407
        %v2409 = vmul.f32 %v2320, 1.442695
        %v2410 = vpow.pop %v2409
        %v2411 = vmul.f32 %v2321, 1.442695
        %v2412 = vpow.pop %v2411
        %v2413 = vmul.f32 %v2322, 1.442695
        %v2414 = vpow.pop %v2413
        %v2415 = vmul.f32 %v2323, 1.442695
        %v2416 = vpow.pop %v2415
        %v2417 = vmul.f32 %v2324, 1.442695
        %v2418 = vpow.pop %v2417
        %v2419 = vmul.f32 %v2325, 1.442695
        %v2420 = vpow.pop %v2419
        %v2421 = vmul.f32 %v2326, 1.442695
        %v2422 = vpow.pop %v2421
        %v2423 = vmul.f32 %v2327, 1.442695
        %v2424 = vpow.pop %v2423
        %v2425 = vmul.f32 %v2328, 1.442695
        %v2426 = vpow.pop %v2425
        %v2427 = vmul.f32 %v2329, 1.442695
        %v2428 = vpow.pop %v2427
        %v2429 = vmul.f32 %v2330, 1.442695
        %v2430 = vpow.pop %v2429
        %v2431 = vmul.f32 %v2331, 1.442695
        %v2432 = vpow.pop %v2431
        %v2433 = vmul.f32 %v2332, 1.442695
        %v2434 = vpow.pop %v2433
        %v2435 = vmul.f32 %v2333, 1.442695
        %v2436 = vpow.pop %v2435
        %v2437 = vmul.f32 %v2334, 1.442695
        %v2438 = vpow.pop %v2437
        %v2439 = vmul.f32 %v2335, 1.442695
        %v2440 = vpow.pop %v2439
        %v2441 = vmul.f32 %v2336, 1.442695
        %v2442 = vpow.pop %v2441
        %v2443 = vmul.f32 %v2337, 1.442695
        %v2444 = vpow.pop %v2443
        %v2445 = vmul.f32 %v2338, 1.442695
        %v2446 = vpow.pop %v2445
        %v2447 = vmul.f32 %v2339, 1.442695
        %v2448 = vpow.pop %v2447
        %v2449 = vmul.f32 %v2340, 1.442695
        %v2450 = vpow.pop %v2449
        %v2451 = vmul.f32 %v2341, 1.442695
        %v2452 = vpow.pop %v2451
        %v2453 = vmul.f32 %v2342, 1.442695
        %v2454 = vpow.pop %v2453
        %v2455 = vmul.f32 %v2343, 1.442695
        %v2456 = vpow.pop %v2455
        %v2457 = vmul.f32 %v2344, 1.442695
        %v2458 = vpow.pop %v2457
        %v2459 = vmul.f32 %v2345, 1.442695
        %v2460 = vpow.pop %v2459
        %v2461 = vmul.f32 %v2346, 1.442695
        %v2462 = vpow.pop %v2461
        %v2463 = vmul.f32 %v2347, 1.442695
        %v2464 = vpow.pop %v2463
        %v2465 = vmul.f32 %v2348, 1.442695
        %v2466 = vpow.pop %v2465
        %v2467 = vmul.f32 %v2349, 1.442695
        %v2468 = vpow.pop %v2467
        %v2469 = vmul.f32 %v2350, 1.442695
        %v2470 = vpow.pop %v2469
        %v2471 = vmul.f32 %v2351, 1.442695
        %v2472 = vpow.pop %v2471
        %v2473 = vmul.f32 %v2352, 1.442695
        %v2474 = vpow.pop %v2473
        %v2475 = vmul.f32 %v2353, 1.442695
        %v2476 = vpow.pop %v2475
        %v2477 = vmul.f32 %v2354, 1.442695
        %v2478 = vpow.pop %v2477
        %v2479 = vmul.f32 %v2355, 1.442695
        %v2480 = vpow.pop %v2479
        %v2481 = vmul.f32 %v2356, 1.442695
        %v2482 = vpow.pop %v2481
        %v2483 = vmul.f32 %v2357, 1.442695
        %v2484 = vpow.pop %v2483
        %v2485 = vmul.f32 %v2358, 1.442695
        %v2486 = vpow.pop %v2485
        %v2487 = vsel %vm2102, %v2360, 0.0
        %2488 = vadd.xlane.f32.xlu0 %v2487
        %v2489 = vpop.xlane.xlu0 %2488
        %v2490 = vsel %vm2102, %v2362, 0.0
        %2491 = vadd.xlane.f32.xlu0 %v2490
        %v2492 = vpop.xlane.xlu0 %2491
        %v2493 = vsel %vm2102, %v2364, 0.0
        %2494 = vadd.xlane.f32.xlu0 %v2493
        %v2495 = vpop.xlane.xlu0 %2494
        %v2496 = vsel %vm2102, %v2366, 0.0
        %2497 = vadd.xlane.f32.xlu0 %v2496
        %v2498 = vpop.xlane.xlu0 %2497
        %v2499 = vsel %vm2102, %v2368, 0.0
        %2500 = vadd.xlane.f32.xlu0 %v2499
        %v2501 = vpop.xlane.xlu0 %2500
        %v2502 = vsel %vm2102, %v2370, 0.0
        %2503 = vadd.xlane.f32.xlu0 %v2502
        %v2504 = vpop.xlane.xlu0 %2503
        %v2505 = vsel %vm2102, %v2372, 0.0
        %2506 = vadd.xlane.f32.xlu0 %v2505
        %v2507 = vpop.xlane.xlu0 %2506
        %v2508 = vsel %vm2102, %v2374, 0.0
        %2509 = vadd.xlane.f32.xlu0 %v2508
        %v2510 = vpop.xlane.xlu0 %2509
        %v2511 = vsel %vm2102, %v2376, 0.0
        %2512 = vadd.xlane.f32.xlu0 %v2511
        %v2513 = vpop.xlane.xlu0 %2512
        %v2514 = vsel %vm2102, %v2378, 0.0
        %2515 = vadd.xlane.f32.xlu0 %v2514
        %v2516 = vpop.xlane.xlu0 %2515
        %v2517 = vsel %vm2102, %v2380, 0.0
        %2518 = vadd.xlane.f32.xlu0 %v2517
        %v2519 = vpop.xlane.xlu0 %2518
        %v2520 = vsel %vm2102, %v2382, 0.0
        %2521 = vadd.xlane.f32.xlu0 %v2520
        %v2522 = vpop.xlane.xlu0 %2521
        %v2523 = vsel %vm2102, %v2384, 0.0
        %2524 = vadd.xlane.f32.xlu0 %v2523
        %v2525 = vpop.xlane.xlu0 %2524
        %v2526 = vsel %vm2102, %v2386, 0.0
        %2527 = vadd.xlane.f32.xlu0 %v2526
        %v2528 = vpop.xlane.xlu0 %2527
        %v2529 = vsel %vm2102, %v2388, 0.0
        %2530 = vadd.xlane.f32.xlu0 %v2529
        %v2531 = vpop.xlane.xlu0 %2530
        %v2532 = vsel %vm2102, %v2390, 0.0
        %2533 = vadd.xlane.f32.xlu0 %v2532
        %v2534 = vpop.xlane.xlu0 %2533
        %v2535 = vsel %vm2102, %v2392, 0.0
        %2536 = vadd.xlane.f32.xlu0 %v2535
        %v2537 = vpop.xlane.xlu0 %2536
        %v2538 = vsel %vm2102, %v2394, 0.0
        %2539 = vadd.xlane.f32.xlu0 %v2538
        %v2540 = vpop.xlane.xlu0 %2539
        %v2541 = vsel %vm2102, %v2396, 0.0
        %2542 = vadd.xlane.f32.xlu0 %v2541
        %v2543 = vpop.xlane.xlu0 %2542
        %v2544 = vsel %vm2102, %v2398, 0.0
        %2545 = vadd.xlane.f32.xlu0 %v2544
        %v2546 = vpop.xlane.xlu0 %2545
        %v2547 = vsel %vm2102, %v2400, 0.0
        %2548 = vadd.xlane.f32.xlu0 %v2547
        %v2549 = vpop.xlane.xlu0 %2548
        %v2550 = vsel %vm2102, %v2402, 0.0
        %2551 = vadd.xlane.f32.xlu0 %v2550
        %v2552 = vpop.xlane.xlu0 %2551
        %v2553 = vsel %vm2102, %v2404, 0.0
        %2554 = vadd.xlane.f32.xlu0 %v2553
        %v2555 = vpop.xlane.xlu0 %2554
        %v2556 = vsel %vm2102, %v2406, 0.0
        %2557 = vadd.xlane.f32.xlu0 %v2556
        %v2558 = vpop.xlane.xlu0 %2557
        %v2559 = vsel %vm2102, %v2408, 0.0
        %2560 = vadd.xlane.f32.xlu0 %v2559
        %v2561 = vpop.xlane.xlu0 %2560
        %v2562 = vsel %vm2102, %v2410, 0.0
        %2563 = vadd.xlane.f32.xlu0 %v2562
        %v2564 = vpop.xlane.xlu0 %2563
        %v2565 = vsel %vm2102, %v2412, 0.0
        %2566 = vadd.xlane.f32.xlu0 %v2565
        %v2567 = vpop.xlane.xlu0 %2566
        %v2568 = vsel %vm2102, %v2414, 0.0
        %2569 = vadd.xlane.f32.xlu0 %v2568
        %v2570 = vpop.xlane.xlu0 %2569
        %v2571 = vsel %vm2102, %v2416, 0.0
        %2572 = vadd.xlane.f32.xlu0 %v2571
        %v2573 = vpop.xlane.xlu0 %2572
        %v2574 = vsel %vm2102, %v2418, 0.0
        %2575 = vadd.xlane.f32.xlu0 %v2574
        %v2576 = vpop.xlane.xlu0 %2575
        %v2577 = vsel %vm2102, %v2420, 0.0
        %2578 = vadd.xlane.f32.xlu0 %v2577
        %v2579 = vpop.xlane.xlu0 %2578
        %v2580 = vsel %vm2102, %v2422, 0.0
        %2581 = vadd.xlane.f32.xlu0 %v2580
        %v2582 = vpop.xlane.xlu0 %2581
        %v2583 = vsel %vm2102, %v2424, 0.0
        %2584 = vadd.xlane.f32.xlu0 %v2583
        %v2585 = vpop.xlane.xlu0 %2584
        %v2586 = vsel %vm2102, %v2426, 0.0
        %2587 = vadd.xlane.f32.xlu0 %v2586
        %v2588 = vpop.xlane.xlu0 %2587
        %v2589 = vsel %vm2102, %v2428, 0.0
        %2590 = vadd.xlane.f32.xlu0 %v2589
        %v2591 = vpop.xlane.xlu0 %2590
        %v2592 = vsel %vm2102, %v2430, 0.0
        %2593 = vadd.xlane.f32.xlu0 %v2592
        %v2594 = vpop.xlane.xlu0 %2593
        %v2595 = vsel %vm2102, %v2432, 0.0
        %2596 = vadd.xlane.f32.xlu0 %v2595
        %v2597 = vpop.xlane.xlu0 %2596
        %v2598 = vsel %vm2102, %v2434, 0.0
        %2599 = vadd.xlane.f32.xlu0 %v2598
        %v2600 = vpop.xlane.xlu0 %2599
        %v2601 = vsel %vm2102, %v2436, 0.0
        %2602 = vadd.xlane.f32.xlu0 %v2601
        %v2603 = vpop.xlane.xlu0 %2602
        %v2604 = vsel %vm2102, %v2438, 0.0
        %2605 = vadd.xlane.f32.xlu0 %v2604
        %v2606 = vpop.xlane.xlu0 %2605
        %v2607 = vsel %vm2102, %v2440, 0.0
        %2608 = vadd.xlane.f32.xlu0 %v2607
        %v2609 = vpop.xlane.xlu0 %2608
        %v2610 = vsel %vm2102, %v2442, 0.0
        %2611 = vadd.xlane.f32.xlu0 %v2610
        %v2612 = vpop.xlane.xlu0 %2611
        %v2613 = vsel %vm2102, %v2444, 0.0
        %2614 = vadd.xlane.f32.xlu0 %v2613
        %v2615 = vpop.xlane.xlu0 %2614
        %v2616 = vsel %vm2102, %v2446, 0.0
        %2617 = vadd.xlane.f32.xlu0 %v2616
        %v2618 = vpop.xlane.xlu0 %2617
        %v2619 = vsel %vm2102, %v2448, 0.0
        %2620 = vadd.xlane.f32.xlu0 %v2619
        %v2621 = vpop.xlane.xlu0 %2620
        %v2622 = vsel %vm2102, %v2450, 0.0
        %2623 = vadd.xlane.f32.xlu0 %v2622
        %v2624 = vpop.xlane.xlu0 %2623
        %v2625 = vsel %vm2102, %v2452, 0.0
        %2626 = vadd.xlane.f32.xlu0 %v2625
        %v2627 = vpop.xlane.xlu0 %2626
        %v2628 = vsel %vm2102, %v2454, 0.0
        %2629 = vadd.xlane.f32.xlu0 %v2628
        %v2630 = vpop.xlane.xlu0 %2629
        %v2631 = vsel %vm2102, %v2456, 0.0
        %2632 = vadd.xlane.f32.xlu0 %v2631
        %v2633 = vpop.xlane.xlu0 %2632
        %v2634 = vsel %vm2102, %v2458, 0.0
        %2635 = vadd.xlane.f32.xlu0 %v2634
        %v2636 = vpop.xlane.xlu0 %2635
        %v2637 = vsel %vm2102, %v2460, 0.0
        %2638 = vadd.xlane.f32.xlu0 %v2637
        %v2639 = vpop.xlane.xlu0 %2638
        %v2640 = vsel %vm2102, %v2462, 0.0
        %2641 = vadd.xlane.f32.xlu0 %v2640
        %v2642 = vpop.xlane.xlu0 %2641
        %v2643 = vsel %vm2102, %v2464, 0.0
        %2644 = vadd.xlane.f32.xlu0 %v2643
        %v2645 = vpop.xlane.xlu0 %2644
        %v2646 = vsel %vm2102, %v2466, 0.0
        %2647 = vadd.xlane.f32.xlu0 %v2646
        %v2648 = vpop.xlane.xlu0 %2647
        %v2649 = vsel %vm2102, %v2468, 0.0
        %2650 = vadd.xlane.f32.xlu0 %v2649
        %v2651 = vpop.xlane.xlu0 %2650
        %v2652 = vsel %vm2102, %v2470, 0.0
        %2653 = vadd.xlane.f32.xlu0 %v2652
        %v2654 = vpop.xlane.xlu0 %2653
        %v2655 = vsel %vm2102, %v2472, 0.0
        %2656 = vadd.xlane.f32.xlu0 %v2655
        %v2657 = vpop.xlane.xlu0 %2656
        %v2658 = vsel %vm2102, %v2474, 0.0
        %2659 = vadd.xlane.f32.xlu0 %v2658
        %v2660 = vpop.xlane.xlu0 %2659
        %v2661 = vsel %vm2102, %v2476, 0.0
        %2662 = vadd.xlane.f32.xlu0 %v2661
        %v2663 = vpop.xlane.xlu0 %2662
        %v2664 = vsel %vm2102, %v2478, 0.0
        %2665 = vadd.xlane.f32.xlu0 %v2664
        %v2666 = vpop.xlane.xlu0 %2665
        %v2667 = vsel %vm2102, %v2480, 0.0
        %2668 = vadd.xlane.f32.xlu0 %v2667
        %v2669 = vpop.xlane.xlu0 %2668
        %v2670 = vsel %vm2102, %v2482, 0.0
        %2671 = vadd.xlane.f32.xlu0 %v2670
        %v2672 = vpop.xlane.xlu0 %2671
        %v2673 = vsel %vm2102, %v2484, 0.0
        %2674 = vadd.xlane.f32.xlu0 %v2673
        %v2675 = vpop.xlane.xlu0 %2674
        %v2676 = vsel %vm2102, %v2486, 0.0
        %2677 = vadd.xlane.f32.xlu0 %v2676
        %v2678 = vpop.xlane.xlu0 %2677
        %v2679 = vpack.c.bf16 %v2360, %v2360
        %v2680 = vpack.c.bf16 %v2362, %v2362
        %v2681 = vpack.c.bf16 %v2364, %v2364
        %v2682 = vpack.c.bf16 %v2366, %v2366
        %v2683 = vpack.c.bf16 %v2368, %v2368
        %v2684 = vpack.c.bf16 %v2370, %v2370
        %v2685 = vpack.c.bf16 %v2372, %v2372
        %v2686 = vpack.c.bf16 %v2374, %v2374
        %v2687 = vpack.c.bf16 %v2376, %v2376
        %v2688 = vpack.c.bf16 %v2378, %v2378
        %v2689 = vpack.c.bf16 %v2380, %v2380
        %v2690 = vpack.c.bf16 %v2382, %v2382
        %v2691 = vpack.c.bf16 %v2384, %v2384
        %v2692 = vpack.c.bf16 %v2386, %v2386
        %v2693 = vpack.c.bf16 %v2388, %v2388
        %v2694 = vpack.c.bf16 %v2390, %v2390
        %v2695 = vpack.c.bf16 %v2392, %v2392
        %v2696 = vpack.c.bf16 %v2394, %v2394
        %v2697 = vpack.c.bf16 %v2396, %v2396
        %v2698 = vpack.c.bf16 %v2398, %v2398
        %v2699 = vpack.c.bf16 %v2400, %v2400
        %v2700 = vpack.c.bf16 %v2402, %v2402
        %v2701 = vpack.c.bf16 %v2404, %v2404
        %v2702 = vpack.c.bf16 %v2406, %v2406
        %v2703 = vpack.c.bf16 %v2408, %v2408
        %v2704 = vpack.c.bf16 %v2410, %v2410
        %v2705 = vpack.c.bf16 %v2412, %v2412
        %v2706 = vpack.c.bf16 %v2414, %v2414
        %v2707 = vpack.c.bf16 %v2416, %v2416
        %v2708 = vpack.c.bf16 %v2418, %v2418
        %v2709 = vpack.c.bf16 %v2420, %v2420
        %v2710 = vpack.c.bf16 %v2422, %v2422
        %v2711 = vpack.c.bf16 %v2424, %v2424
        %v2712 = vpack.c.bf16 %v2426, %v2426
        %v2713 = vpack.c.bf16 %v2428, %v2428
        %v2714 = vpack.c.bf16 %v2430, %v2430
        %v2715 = vpack.c.bf16 %v2432, %v2432
        %v2716 = vpack.c.bf16 %v2434, %v2434
        %v2717 = vpack.c.bf16 %v2436, %v2436
        %v2718 = vpack.c.bf16 %v2438, %v2438
        %v2719 = vpack.c.bf16 %v2440, %v2440
        %v2720 = vpack.c.bf16 %v2442, %v2442
        %v2721 = vpack.c.bf16 %v2444, %v2444
        %v2722 = vpack.c.bf16 %v2446, %v2446
        %v2723 = vpack.c.bf16 %v2448, %v2448
        %v2724 = vpack.c.bf16 %v2450, %v2450
        %v2725 = vpack.c.bf16 %v2452, %v2452
        %v2726 = vpack.c.bf16 %v2454, %v2454
        %v2727 = vpack.c.bf16 %v2456, %v2456
        %v2728 = vpack.c.bf16 %v2458, %v2458
        %v2729 = vpack.c.bf16 %v2460, %v2460
        %v2730 = vpack.c.bf16 %v2462, %v2462
        %v2731 = vpack.c.bf16 %v2464, %v2464
        %v2732 = vpack.c.bf16 %v2466, %v2466
        %v2733 = vpack.c.bf16 %v2468, %v2468
        %v2734 = vpack.c.bf16 %v2470, %v2470
        %v2735 = vpack.c.bf16 %v2472, %v2472
        %v2736 = vpack.c.bf16 %v2474, %v2474
        %v2737 = vpack.c.bf16 %v2476, %v2476
        %v2738 = vpack.c.bf16 %v2478, %v2478
        %v2739 = vpack.c.bf16 %v2480, %v2480
        %v2740 = vpack.c.bf16 %v2482, %v2482
        %v2741 = vpack.c.bf16 %v2484, %v2484
        %v2742 = vpack.c.bf16 %v2486, %v2486
        %v2745 = vunpack.c.l.b16 %v2679
        %v2746 = vunpack.c.l.b16 %v2680
        %v2747 = vpack.c.b16 %v2746, %v2745
        %v2750 = vunpack.c.l.b16 %v1254
        %v2751 = vunpack.c.l.b16 %v1255
        %v2752 = vpack.c.b16 %v2751, %v2750
        %2753 = vrot.lane.b32.xlu0 %v2752, 64
        %v2754 = vpop.permute.xlu0 %2753
        %v2757 = vsel %vm2102, %v2747, 0
        %2759 = vmatpush.bf16.msra.mxu0 0
        %2760 = vmatpush.bf16.msra.mxu0 0
        %2761 = vmatpush.bf16.msra.mxu0 0
        %2762 = vmatpush.bf16.msra.mxu0 0
        %2763 = vmatpush.bf16.msra.mxu0 0
        %2764 = vmatpush.bf16.msra.mxu0 0
        %2765 = vmatpush.bf16.msra.mxu0 0
        %2766 = vmatpush.bf16.msra.mxu0 %v2754
        %2767 = vmatmul.bf16.gmra.mxu0 %v2757
        %v2768 = vpop.f32.mrf.mxu0
        %v2769 = vadd.f32 0.0, %v2768
        %v2770 = vpop.f32.mrf.mxu0
        %v2771 = vadd.f32 0.0, %v2770
        %2772 = vdwg.mxu0
        %v2775 = vunpack.c.l.b16 %v2681
        %v2776 = vunpack.c.l.b16 %v2682
        %v2777 = vpack.c.b16 %v2776, %v2775
        %v2780 = vunpack.c.l.b16 %v1256
        %v2781 = vunpack.c.l.b16 %v1257
        %v2782 = vpack.c.b16 %v2781, %v2780
        %2783 = vrot.lane.b32.xlu0 %v2782, 64
        %v2784 = vpop.permute.xlu0 %2783
        %v2787 = vsel %vm2102, %v2777, 0
        %2789 = vmatpush.bf16.msra.mxu0 0
        %2790 = vmatpush.bf16.msra.mxu0 0
        %2791 = vmatpush.bf16.msra.mxu0 0
        %2792 = vmatpush.bf16.msra.mxu0 0
        %2793 = vmatpush.bf16.msra.mxu0 0
        %2794 = vmatpush.bf16.msra.mxu0 0
        %2795 = vmatpush.bf16.msra.mxu0 0
        %2796 = vmatpush.bf16.msra.mxu0 %v2784
        %2797 = vmatmul.bf16.gmra.mxu0 %v2787
        %v2798 = vpop.f32.mrf.mxu0
        %v2799 = vadd.f32 0.0, %v2798
        %v2800 = vpop.f32.mrf.mxu0
        %v2801 = vadd.f32 0.0, %v2800
        %2802 = vdwg.mxu0
        %v2805 = vunpack.c.l.b16 %v2683
        %v2806 = vunpack.c.l.b16 %v2684
        %v2807 = vpack.c.b16 %v2806, %v2805
        %v2810 = vunpack.c.l.b16 %v1258
        %v2811 = vunpack.c.l.b16 %v1259
        %v2812 = vpack.c.b16 %v2811, %v2810
        %2813 = vrot.lane.b32.xlu0 %v2812, 64
        %v2814 = vpop.permute.xlu0 %2813
        %v2817 = vsel %vm2102, %v2807, 0
        %2819 = vmatpush.bf16.msra.mxu0 0
        %2820 = vmatpush.bf16.msra.mxu0 0
        %2821 = vmatpush.bf16.msra.mxu0 0
        %2822 = vmatpush.bf16.msra.mxu0 0
        %2823 = vmatpush.bf16.msra.mxu0 0
        %2824 = vmatpush.bf16.msra.mxu0 0
        %2825 = vmatpush.bf16.msra.mxu0 0
        %2826 = vmatpush.bf16.msra.mxu0 %v2814
        %2827 = vmatmul.bf16.gmra.mxu0 %v2817
        %v2828 = vpop.f32.mrf.mxu0
        %v2829 = vadd.f32 0.0, %v2828
        %v2830 = vpop.f32.mrf.mxu0
        %v2831 = vadd.f32 0.0, %v2830
        %2832 = vdwg.mxu0
        %v2835 = vunpack.c.l.b16 %v2685
        %v2836 = vunpack.c.l.b16 %v2686
        %v2837 = vpack.c.b16 %v2836, %v2835
        %v2840 = vunpack.c.l.b16 %v1260
        %v2841 = vunpack.c.l.b16 %v1261
        %v2842 = vpack.c.b16 %v2841, %v2840
        %2843 = vrot.lane.b32.xlu0 %v2842, 64
        %v2844 = vpop.permute.xlu0 %2843
        %v2847 = vsel %vm2102, %v2837, 0
        %2849 = vmatpush.bf16.msra.mxu0 0
        %2850 = vmatpush.bf16.msra.mxu0 0
        %2851 = vmatpush.bf16.msra.mxu0 0
        %2852 = vmatpush.bf16.msra.mxu0 0
        %2853 = vmatpush.bf16.msra.mxu0 0
        %2854 = vmatpush.bf16.msra.mxu0 0
        %2855 = vmatpush.bf16.msra.mxu0 0
        %2856 = vmatpush.bf16.msra.mxu0 %v2844
        %2857 = vmatmul.bf16.gmra.mxu0 %v2847
        %v2858 = vpop.f32.mrf.mxu0
        %v2859 = vadd.f32 0.0, %v2858
        %v2860 = vpop.f32.mrf.mxu0
        %v2861 = vadd.f32 0.0, %v2860
        %2862 = vdwg.mxu0
        %v2865 = vunpack.c.l.b16 %v2687
        %v2866 = vunpack.c.l.b16 %v2688
        %v2867 = vpack.c.b16 %v2866, %v2865
        %v2870 = vunpack.c.l.b16 %v1262
        %v2871 = vunpack.c.l.b16 %v1263
        %v2872 = vpack.c.b16 %v2871, %v2870
        %2873 = vrot.lane.b32.xlu0 %v2872, 64
        %v2874 = vpop.permute.xlu0 %2873
        %v2877 = vsel %vm2102, %v2867, 0
        %2879 = vmatpush.bf16.msra.mxu0 0
        %2880 = vmatpush.bf16.msra.mxu0 0
        %2881 = vmatpush.bf16.msra.mxu0 0
        %2882 = vmatpush.bf16.msra.mxu0 0
        %2883 = vmatpush.bf16.msra.mxu0 0
        %2884 = vmatpush.bf16.msra.mxu0 0
        %2885 = vmatpush.bf16.msra.mxu0 0
        %2886 = vmatpush.bf16.msra.mxu0 %v2874
        %2887 = vmatmul.bf16.gmra.mxu0 %v2877
        %v2888 = vpop.f32.mrf.mxu0
        %v2889 = vadd.f32 0.0, %v2888
        %v2890 = vpop.f32.mrf.mxu0
        %v2891 = vadd.f32 0.0, %v2890
        %2892 = vdwg.mxu0
        %v2895 = vunpack.c.l.b16 %v2689
        %v2896 = vunpack.c.l.b16 %v2690
        %v2897 = vpack.c.b16 %v2896, %v2895
        %v2900 = vunpack.c.l.b16 %v1264
        %v2901 = vunpack.c.l.b16 %v1265
        %v2902 = vpack.c.b16 %v2901, %v2900
        %2903 = vrot.lane.b32.xlu0 %v2902, 64
        %v2904 = vpop.permute.xlu0 %2903
        %v2907 = vsel %vm2102, %v2897, 0
        %2909 = vmatpush.bf16.msra.mxu0 0
        %2910 = vmatpush.bf16.msra.mxu0 0
        %2911 = vmatpush.bf16.msra.mxu0 0
        %2912 = vmatpush.bf16.msra.mxu0 0
        %2913 = vmatpush.bf16.msra.mxu0 0
        %2914 = vmatpush.bf16.msra.mxu0 0
        %2915 = vmatpush.bf16.msra.mxu0 0
        %2916 = vmatpush.bf16.msra.mxu0 %v2904
        %2917 = vmatmul.bf16.gmra.mxu0 %v2907
        %v2918 = vpop.f32.mrf.mxu0
        %v2919 = vadd.f32 0.0, %v2918
        %v2920 = vpop.f32.mrf.mxu0
        %v2921 = vadd.f32 0.0, %v2920
        %2922 = vdwg.mxu0
        %v2925 = vunpack.c.l.b16 %v2691
        %v2926 = vunpack.c.l.b16 %v2692
        %v2927 = vpack.c.b16 %v2926, %v2925
        %v2930 = vunpack.c.l.b16 %v1266
        %v2931 = vunpack.c.l.b16 %v1267
        %v2932 = vpack.c.b16 %v2931, %v2930
        %2933 = vrot.lane.b32.xlu0 %v2932, 64
        %v2934 = vpop.permute.xlu0 %2933
        %v2937 = vsel %vm2102, %v2927, 0
        %2939 = vmatpush.bf16.msra.mxu0 0
        %2940 = vmatpush.bf16.msra.mxu0 0
        %2941 = vmatpush.bf16.msra.mxu0 0
        %2942 = vmatpush.bf16.msra.mxu0 0
        %2943 = vmatpush.bf16.msra.mxu0 0
        %2944 = vmatpush.bf16.msra.mxu0 0
        %2945 = vmatpush.bf16.msra.mxu0 0
        %2946 = vmatpush.bf16.msra.mxu0 %v2934
        %2947 = vmatmul.bf16.gmra.mxu0 %v2937
        %v2948 = vpop.f32.mrf.mxu0
        %v2949 = vadd.f32 0.0, %v2948
        %v2950 = vpop.f32.mrf.mxu0
        %v2951 = vadd.f32 0.0, %v2950
        %2952 = vdwg.mxu0
        %v2955 = vunpack.c.l.b16 %v2693
        %v2956 = vunpack.c.l.b16 %v2694
        %v2957 = vpack.c.b16 %v2956, %v2955
        %v2960 = vunpack.c.l.b16 %v1268
        %v2961 = vunpack.c.l.b16 %v1269
        %v2962 = vpack.c.b16 %v2961, %v2960
        %2963 = vrot.lane.b32.xlu0 %v2962, 64
        %v2964 = vpop.permute.xlu0 %2963
        %v2967 = vsel %vm2102, %v2957, 0
        %2969 = vmatpush.bf16.msra.mxu0 0
        %2970 = vmatpush.bf16.msra.mxu0 0
        %2971 = vmatpush.bf16.msra.mxu0 0
        %2972 = vmatpush.bf16.msra.mxu0 0
        %2973 = vmatpush.bf16.msra.mxu0 0
        %2974 = vmatpush.bf16.msra.mxu0 0
        %2975 = vmatpush.bf16.msra.mxu0 0
        %2976 = vmatpush.bf16.msra.mxu0 %v2964
        %2977 = vmatmul.bf16.gmra.mxu0 %v2967
        %v2978 = vpop.f32.mrf.mxu0
        %v2979 = vadd.f32 0.0, %v2978
        %v2980 = vpop.f32.mrf.mxu0
        %v2981 = vadd.f32 0.0, %v2980
        %2982 = vdwg.mxu0
        %v2985 = vunpack.c.l.b16 %v2695
        %v2986 = vunpack.c.l.b16 %v2696
        %v2987 = vpack.c.b16 %v2986, %v2985
        %v2990 = vunpack.c.l.b16 %v1270
        %v2991 = vunpack.c.l.b16 %v1271
        %v2992 = vpack.c.b16 %v2991, %v2990
        %2993 = vrot.lane.b32.xlu0 %v2992, 64
        %v2994 = vpop.permute.xlu0 %2993
        %v2997 = vsel %vm2102, %v2987, 0
        %2999 = vmatpush.bf16.msra.mxu0 0
        %3000 = vmatpush.bf16.msra.mxu0 0
        %3001 = vmatpush.bf16.msra.mxu0 0
        %3002 = vmatpush.bf16.msra.mxu0 0
        %3003 = vmatpush.bf16.msra.mxu0 0
        %3004 = vmatpush.bf16.msra.mxu0 0
        %3005 = vmatpush.bf16.msra.mxu0 0
        %3006 = vmatpush.bf16.msra.mxu0 %v2994
        %3007 = vmatmul.bf16.gmra.mxu0 %v2997
        %v3008 = vpop.f32.mrf.mxu0
        %v3009 = vadd.f32 0.0, %v3008
        %v3010 = vpop.f32.mrf.mxu0
        %v3011 = vadd.f32 0.0, %v3010
        %3012 = vdwg.mxu0
        %v3015 = vunpack.c.l.b16 %v2697
        %v3016 = vunpack.c.l.b16 %v2698
        %v3017 = vpack.c.b16 %v3016, %v3015
        %v3020 = vunpack.c.l.b16 %v1272
        %v3021 = vunpack.c.l.b16 %v1273
        %v3022 = vpack.c.b16 %v3021, %v3020
        %3023 = vrot.lane.b32.xlu0 %v3022, 64
        %v3024 = vpop.permute.xlu0 %3023
        %v3027 = vsel %vm2102, %v3017, 0
        %3029 = vmatpush.bf16.msra.mxu0 0
        %3030 = vmatpush.bf16.msra.mxu0 0
        %3031 = vmatpush.bf16.msra.mxu0 0
        %3032 = vmatpush.bf16.msra.mxu0 0
        %3033 = vmatpush.bf16.msra.mxu0 0
        %3034 = vmatpush.bf16.msra.mxu0 0
        %3035 = vmatpush.bf16.msra.mxu0 0
        %3036 = vmatpush.bf16.msra.mxu0 %v3024
        %3037 = vmatmul.bf16.gmra.mxu0 %v3027
        %v3038 = vpop.f32.mrf.mxu0
        %v3039 = vadd.f32 0.0, %v3038
        %v3040 = vpop.f32.mrf.mxu0
        %v3041 = vadd.f32 0.0, %v3040
        %3042 = vdwg.mxu0
        %v3045 = vunpack.c.l.b16 %v2699
        %v3046 = vunpack.c.l.b16 %v2700
        %v3047 = vpack.c.b16 %v3046, %v3045
        %v3050 = vunpack.c.l.b16 %v1274
        %v3051 = vunpack.c.l.b16 %v1275
        %v3052 = vpack.c.b16 %v3051, %v3050
        %3053 = vrot.lane.b32.xlu0 %v3052, 64
        %v3054 = vpop.permute.xlu0 %3053
        %v3057 = vsel %vm2102, %v3047, 0
        %3059 = vmatpush.bf16.msra.mxu0 0
        %3060 = vmatpush.bf16.msra.mxu0 0
        %3061 = vmatpush.bf16.msra.mxu0 0
        %3062 = vmatpush.bf16.msra.mxu0 0
        %3063 = vmatpush.bf16.msra.mxu0 0
        %3064 = vmatpush.bf16.msra.mxu0 0
        %3065 = vmatpush.bf16.msra.mxu0 0
        %3066 = vmatpush.bf16.msra.mxu0 %v3054
        %3067 = vmatmul.bf16.gmra.mxu0 %v3057
        %v3068 = vpop.f32.mrf.mxu0
        %v3069 = vadd.f32 0.0, %v3068
        %v3070 = vpop.f32.mrf.mxu0
        %v3071 = vadd.f32 0.0, %v3070
        %3072 = vdwg.mxu0
        %v3075 = vunpack.c.l.b16 %v2701
        %v3076 = vunpack.c.l.b16 %v2702
        %v3077 = vpack.c.b16 %v3076, %v3075
        %v3080 = vunpack.c.l.b16 %v1276
        %v3081 = vunpack.c.l.b16 %v1277
        %v3082 = vpack.c.b16 %v3081, %v3080
        %3083 = vrot.lane.b32.xlu0 %v3082, 64
        %v3084 = vpop.permute.xlu0 %3083
        %v3087 = vsel %vm2102, %v3077, 0
        %3089 = vmatpush.bf16.msra.mxu0 0
        %3090 = vmatpush.bf16.msra.mxu0 0
        %3091 = vmatpush.bf16.msra.mxu0 0
        %3092 = vmatpush.bf16.msra.mxu0 0
        %3093 = vmatpush.bf16.msra.mxu0 0
        %3094 = vmatpush.bf16.msra.mxu0 0
        %3095 = vmatpush.bf16.msra.mxu0 0
        %3096 = vmatpush.bf16.msra.mxu0 %v3084
        %3097 = vmatmul.bf16.gmra.mxu0 %v3087
        %v3098 = vpop.f32.mrf.mxu0
        %v3099 = vadd.f32 0.0, %v3098
        %v3100 = vpop.f32.mrf.mxu0
        %v3101 = vadd.f32 0.0, %v3100
        %3102 = vdwg.mxu0
        %v3105 = vunpack.c.l.b16 %v2703
        %v3106 = vunpack.c.l.b16 %v2704
        %v3107 = vpack.c.b16 %v3106, %v3105
        %v3110 = vunpack.c.l.b16 %v1278
        %v3111 = vunpack.c.l.b16 %v1279
        %v3112 = vpack.c.b16 %v3111, %v3110
        %3113 = vrot.lane.b32.xlu0 %v3112, 64
        %v3114 = vpop.permute.xlu0 %3113
        %v3117 = vsel %vm2102, %v3107, 0
        %3119 = vmatpush.bf16.msra.mxu0 0
        %3120 = vmatpush.bf16.msra.mxu0 0
        %3121 = vmatpush.bf16.msra.mxu0 0
        %3122 = vmatpush.bf16.msra.mxu0 0
        %3123 = vmatpush.bf16.msra.mxu0 0
        %3124 = vmatpush.bf16.msra.mxu0 0
        %3125 = vmatpush.bf16.msra.mxu0 0
        %3126 = vmatpush.bf16.msra.mxu0 %v3114
        %3127 = vmatmul.bf16.gmra.mxu0 %v3117
        %v3128 = vpop.f32.mrf.mxu0
        %v3129 = vadd.f32 0.0, %v3128
        %v3130 = vpop.f32.mrf.mxu0
        %v3131 = vadd.f32 0.0, %v3130
        %3132 = vdwg.mxu0
        %v3135 = vunpack.c.l.b16 %v2705
        %v3136 = vunpack.c.l.b16 %v2706
        %v3137 = vpack.c.b16 %v3136, %v3135
        %v3140 = vunpack.c.l.b16 %v1280
        %v3141 = vunpack.c.l.b16 %v1281
        %v3142 = vpack.c.b16 %v3141, %v3140
        %3143 = vrot.lane.b32.xlu0 %v3142, 64
        %v3144 = vpop.permute.xlu0 %3143
        %v3147 = vsel %vm2102, %v3137, 0
        %3149 = vmatpush.bf16.msra.mxu0 0
        %3150 = vmatpush.bf16.msra.mxu0 0
        %3151 = vmatpush.bf16.msra.mxu0 0
        %3152 = vmatpush.bf16.msra.mxu0 0
        %3153 = vmatpush.bf16.msra.mxu0 0
        %3154 = vmatpush.bf16.msra.mxu0 0
        %3155 = vmatpush.bf16.msra.mxu0 0
        %3156 = vmatpush.bf16.msra.mxu0 %v3144
        %3157 = vmatmul.bf16.gmra.mxu0 %v3147
        %v3158 = vpop.f32.mrf.mxu0
        %v3159 = vadd.f32 0.0, %v3158
        %v3160 = vpop.f32.mrf.mxu0
        %v3161 = vadd.f32 0.0, %v3160
        %3162 = vdwg.mxu0
        %v3165 = vunpack.c.l.b16 %v2707
        %v3166 = vunpack.c.l.b16 %v2708
        %v3167 = vpack.c.b16 %v3166, %v3165
        %v3170 = vunpack.c.l.b16 %v1282
        %v3171 = vunpack.c.l.b16 %v1283
        %v3172 = vpack.c.b16 %v3171, %v3170
        %3173 = vrot.lane.b32.xlu0 %v3172, 64
        %v3174 = vpop.permute.xlu0 %3173
        %v3177 = vsel %vm2102, %v3167, 0
        %3179 = vmatpush.bf16.msra.mxu0 0
        %3180 = vmatpush.bf16.msra.mxu0 0
        %3181 = vmatpush.bf16.msra.mxu0 0
        %3182 = vmatpush.bf16.msra.mxu0 0
        %3183 = vmatpush.bf16.msra.mxu0 0
        %3184 = vmatpush.bf16.msra.mxu0 0
        %3185 = vmatpush.bf16.msra.mxu0 0
        %3186 = vmatpush.bf16.msra.mxu0 %v3174
        %3187 = vmatmul.bf16.gmra.mxu0 %v3177
        %v3188 = vpop.f32.mrf.mxu0
        %v3189 = vadd.f32 0.0, %v3188
        %v3190 = vpop.f32.mrf.mxu0
        %v3191 = vadd.f32 0.0, %v3190
        %3192 = vdwg.mxu0
        %v3195 = vunpack.c.l.b16 %v2709
        %v3196 = vunpack.c.l.b16 %v2710
        %v3197 = vpack.c.b16 %v3196, %v3195
        %v3200 = vunpack.c.l.b16 %v1284
        %v3201 = vunpack.c.l.b16 %v1285
        %v3202 = vpack.c.b16 %v3201, %v3200
        %3203 = vrot.lane.b32.xlu0 %v3202, 64
        %v3204 = vpop.permute.xlu0 %3203
        %v3207 = vsel %vm2102, %v3197, 0
        %3209 = vmatpush.bf16.msra.mxu0 0
        %3210 = vmatpush.bf16.msra.mxu0 0
        %3211 = vmatpush.bf16.msra.mxu0 0
        %3212 = vmatpush.bf16.msra.mxu0 0
        %3213 = vmatpush.bf16.msra.mxu0 0
        %3214 = vmatpush.bf16.msra.mxu0 0
        %3215 = vmatpush.bf16.msra.mxu0 0
        %3216 = vmatpush.bf16.msra.mxu0 %v3204
        %3217 = vmatmul.bf16.gmra.mxu0 %v3207
        %v3218 = vpop.f32.mrf.mxu0
        %v3219 = vadd.f32 0.0, %v3218
        %v3220 = vpop.f32.mrf.mxu0
        %v3221 = vadd.f32 0.0, %v3220
        %3222 = vdwg.mxu0
        %v3225 = vunpack.c.l.b16 %v2711
        %v3226 = vunpack.c.l.b16 %v2712
        %v3227 = vpack.c.b16 %v3226, %v3225
        %v3230 = vunpack.c.l.b16 %v1286
        %v3231 = vunpack.c.l.b16 %v1287
        %v3232 = vpack.c.b16 %v3231, %v3230
        %3233 = vrot.lane.b32.xlu0 %v3232, 64
        %v3234 = vpop.permute.xlu0 %3233
        %v3237 = vsel %vm2102, %v3227, 0
        %3239 = vmatpush.bf16.msra.mxu0 0
        %3240 = vmatpush.bf16.msra.mxu0 0
        %3241 = vmatpush.bf16.msra.mxu0 0
        %3242 = vmatpush.bf16.msra.mxu0 0
        %3243 = vmatpush.bf16.msra.mxu0 0
        %3244 = vmatpush.bf16.msra.mxu0 0
        %3245 = vmatpush.bf16.msra.mxu0 0
        %3246 = vmatpush.bf16.msra.mxu0 %v3234
        %3247 = vmatmul.bf16.gmra.mxu0 %v3237
        %v3248 = vpop.f32.mrf.mxu0
        %v3249 = vadd.f32 0.0, %v3248
        %v3250 = vpop.f32.mrf.mxu0
        %v3251 = vadd.f32 0.0, %v3250
        %3252 = vdwg.mxu0
        %v3255 = vunpack.c.l.b16 %v2713
        %v3256 = vunpack.c.l.b16 %v2714
        %v3257 = vpack.c.b16 %v3256, %v3255
        %v3260 = vunpack.c.l.b16 %v1288
        %v3261 = vunpack.c.l.b16 %v1289
        %v3262 = vpack.c.b16 %v3261, %v3260
        %3263 = vrot.lane.b32.xlu0 %v3262, 64
        %v3264 = vpop.permute.xlu0 %3263
        %v3267 = vsel %vm2102, %v3257, 0
        %3269 = vmatpush.bf16.msra.mxu0 0
        %3270 = vmatpush.bf16.msra.mxu0 0
        %3271 = vmatpush.bf16.msra.mxu0 0
        %3272 = vmatpush.bf16.msra.mxu0 0
        %3273 = vmatpush.bf16.msra.mxu0 0
        %3274 = vmatpush.bf16.msra.mxu0 0
        %3275 = vmatpush.bf16.msra.mxu0 0
        %3276 = vmatpush.bf16.msra.mxu0 %v3264
        %3277 = vmatmul.bf16.gmra.mxu0 %v3267
        %v3278 = vpop.f32.mrf.mxu0
        %v3279 = vadd.f32 0.0, %v3278
        %v3280 = vpop.f32.mrf.mxu0
        %v3281 = vadd.f32 0.0, %v3280
        %3282 = vdwg.mxu0
        %v3285 = vunpack.c.l.b16 %v2715
        %v3286 = vunpack.c.l.b16 %v2716
        %v3287 = vpack.c.b16 %v3286, %v3285
        %v3290 = vunpack.c.l.b16 %v1290
        %v3291 = vunpack.c.l.b16 %v1291
        %v3292 = vpack.c.b16 %v3291, %v3290
        %3293 = vrot.lane.b32.xlu0 %v3292, 64
        %v3294 = vpop.permute.xlu0 %3293
        %v3297 = vsel %vm2102, %v3287, 0
        %3299 = vmatpush.bf16.msra.mxu0 0
        %3300 = vmatpush.bf16.msra.mxu0 0
        %3301 = vmatpush.bf16.msra.mxu0 0
        %3302 = vmatpush.bf16.msra.mxu0 0
        %3303 = vmatpush.bf16.msra.mxu0 0
        %3304 = vmatpush.bf16.msra.mxu0 0
        %3305 = vmatpush.bf16.msra.mxu0 0
        %3306 = vmatpush.bf16.msra.mxu0 %v3294
        %3307 = vmatmul.bf16.gmra.mxu0 %v3297
        %v3308 = vpop.f32.mrf.mxu0
        %v3309 = vadd.f32 0.0, %v3308
        %v3310 = vpop.f32.mrf.mxu0
        %v3311 = vadd.f32 0.0, %v3310
        %3312 = vdwg.mxu0
        %v3315 = vunpack.c.l.b16 %v2717
        %v3316 = vunpack.c.l.b16 %v2718
        %v3317 = vpack.c.b16 %v3316, %v3315
        %v3320 = vunpack.c.l.b16 %v1292
        %v3321 = vunpack.c.l.b16 %v1293
        %v3322 = vpack.c.b16 %v3321, %v3320
        %3323 = vrot.lane.b32.xlu0 %v3322, 64
        %v3324 = vpop.permute.xlu0 %3323
        %v3327 = vsel %vm2102, %v3317, 0
        %3329 = vmatpush.bf16.msra.mxu0 0
        %3330 = vmatpush.bf16.msra.mxu0 0
        %3331 = vmatpush.bf16.msra.mxu0 0
        %3332 = vmatpush.bf16.msra.mxu0 0
        %3333 = vmatpush.bf16.msra.mxu0 0
        %3334 = vmatpush.bf16.msra.mxu0 0
        %3335 = vmatpush.bf16.msra.mxu0 0
        %3336 = vmatpush.bf16.msra.mxu0 %v3324
        %3337 = vmatmul.bf16.gmra.mxu0 %v3327
        %v3338 = vpop.f32.mrf.mxu0
        %v3339 = vadd.f32 0.0, %v3338
        %v3340 = vpop.f32.mrf.mxu0
        %v3341 = vadd.f32 0.0, %v3340
        %3342 = vdwg.mxu0
        %v3345 = vunpack.c.l.b16 %v2719
        %v3346 = vunpack.c.l.b16 %v2720
        %v3347 = vpack.c.b16 %v3346, %v3345
        %v3350 = vunpack.c.l.b16 %v1294
        %v3351 = vunpack.c.l.b16 %v1295
        %v3352 = vpack.c.b16 %v3351, %v3350
        %3353 = vrot.lane.b32.xlu0 %v3352, 64
        %v3354 = vpop.permute.xlu0 %3353
        %v3357 = vsel %vm2102, %v3347, 0
        %3359 = vmatpush.bf16.msra.mxu0 0
        %3360 = vmatpush.bf16.msra.mxu0 0
        %3361 = vmatpush.bf16.msra.mxu0 0
        %3362 = vmatpush.bf16.msra.mxu0 0
        %3363 = vmatpush.bf16.msra.mxu0 0
        %3364 = vmatpush.bf16.msra.mxu0 0
        %3365 = vmatpush.bf16.msra.mxu0 0
        %3366 = vmatpush.bf16.msra.mxu0 %v3354
        %3367 = vmatmul.bf16.gmra.mxu0 %v3357
        %v3368 = vpop.f32.mrf.mxu0
        %v3369 = vadd.f32 0.0, %v3368
        %v3370 = vpop.f32.mrf.mxu0
        %v3371 = vadd.f32 0.0, %v3370
        %3372 = vdwg.mxu0
        %v3375 = vunpack.c.l.b16 %v2721
        %v3376 = vunpack.c.l.b16 %v2722
        %v3377 = vpack.c.b16 %v3376, %v3375
        %v3380 = vunpack.c.l.b16 %v1296
        %v3381 = vunpack.c.l.b16 %v1297
        %v3382 = vpack.c.b16 %v3381, %v3380
        %3383 = vrot.lane.b32.xlu0 %v3382, 64
        %v3384 = vpop.permute.xlu0 %3383
        %v3387 = vsel %vm2102, %v3377, 0
        %3389 = vmatpush.bf16.msra.mxu0 0
        %3390 = vmatpush.bf16.msra.mxu0 0
        %3391 = vmatpush.bf16.msra.mxu0 0
        %3392 = vmatpush.bf16.msra.mxu0 0
        %3393 = vmatpush.bf16.msra.mxu0 0
        %3394 = vmatpush.bf16.msra.mxu0 0
        %3395 = vmatpush.bf16.msra.mxu0 0
        %3396 = vmatpush.bf16.msra.mxu0 %v3384
        %3397 = vmatmul.bf16.gmra.mxu0 %v3387
        %v3398 = vpop.f32.mrf.mxu0
        %v3399 = vadd.f32 0.0, %v3398
        %v3400 = vpop.f32.mrf.mxu0
        %v3401 = vadd.f32 0.0, %v3400
        %3402 = vdwg.mxu0
        %v3405 = vunpack.c.l.b16 %v2723
        %v3406 = vunpack.c.l.b16 %v2724
        %v3407 = vpack.c.b16 %v3406, %v3405
        %v3410 = vunpack.c.l.b16 %v1298
        %v3411 = vunpack.c.l.b16 %v1299
        %v3412 = vpack.c.b16 %v3411, %v3410
        %3413 = vrot.lane.b32.xlu0 %v3412, 64
        %v3414 = vpop.permute.xlu0 %3413
        %v3417 = vsel %vm2102, %v3407, 0
        %3419 = vmatpush.bf16.msra.mxu0 0
        %3420 = vmatpush.bf16.msra.mxu0 0
        %3421 = vmatpush.bf16.msra.mxu0 0
        %3422 = vmatpush.bf16.msra.mxu0 0
        %3423 = vmatpush.bf16.msra.mxu0 0
        %3424 = vmatpush.bf16.msra.mxu0 0
        %3425 = vmatpush.bf16.msra.mxu0 0
        %3426 = vmatpush.bf16.msra.mxu0 %v3414
        %3427 = vmatmul.bf16.gmra.mxu0 %v3417
        %v3428 = vpop.f32.mrf.mxu0
        %v3429 = vadd.f32 0.0, %v3428
        %v3430 = vpop.f32.mrf.mxu0
        %v3431 = vadd.f32 0.0, %v3430
        %3432 = vdwg.mxu0
        %v3435 = vunpack.c.l.b16 %v2725
        %v3436 = vunpack.c.l.b16 %v2726
        %v3437 = vpack.c.b16 %v3436, %v3435
        %v3440 = vunpack.c.l.b16 %v1300
        %v3441 = vunpack.c.l.b16 %v1301
        %v3442 = vpack.c.b16 %v3441, %v3440
        %3443 = vrot.lane.b32.xlu0 %v3442, 64
        %v3444 = vpop.permute.xlu0 %3443
        %v3447 = vsel %vm2102, %v3437, 0
        %3449 = vmatpush.bf16.msra.mxu0 0
        %3450 = vmatpush.bf16.msra.mxu0 0
        %3451 = vmatpush.bf16.msra.mxu0 0
        %3452 = vmatpush.bf16.msra.mxu0 0
        %3453 = vmatpush.bf16.msra.mxu0 0
        %3454 = vmatpush.bf16.msra.mxu0 0
        %3455 = vmatpush.bf16.msra.mxu0 0
        %3456 = vmatpush.bf16.msra.mxu0 %v3444
        %3457 = vmatmul.bf16.gmra.mxu0 %v3447
        %v3458 = vpop.f32.mrf.mxu0
        %v3459 = vadd.f32 0.0, %v3458
        %v3460 = vpop.f32.mrf.mxu0
        %v3461 = vadd.f32 0.0, %v3460
        %3462 = vdwg.mxu0
        %v3465 = vunpack.c.l.b16 %v2727
        %v3466 = vunpack.c.l.b16 %v2728
        %v3467 = vpack.c.b16 %v3466, %v3465
        %v3470 = vunpack.c.l.b16 %v1302
        %v3471 = vunpack.c.l.b16 %v1303
        %v3472 = vpack.c.b16 %v3471, %v3470
        %3473 = vrot.lane.b32.xlu0 %v3472, 64
        %v3474 = vpop.permute.xlu0 %3473
        %v3477 = vsel %vm2102, %v3467, 0
        %3479 = vmatpush.bf16.msra.mxu0 0
        %3480 = vmatpush.bf16.msra.mxu0 0
        %3481 = vmatpush.bf16.msra.mxu0 0
        %3482 = vmatpush.bf16.msra.mxu0 0
        %3483 = vmatpush.bf16.msra.mxu0 0
        %3484 = vmatpush.bf16.msra.mxu0 0
        %3485 = vmatpush.bf16.msra.mxu0 0
        %3486 = vmatpush.bf16.msra.mxu0 %v3474
        %3487 = vmatmul.bf16.gmra.mxu0 %v3477
        %v3488 = vpop.f32.mrf.mxu0
        %v3489 = vadd.f32 0.0, %v3488
        %v3490 = vpop.f32.mrf.mxu0
        %v3491 = vadd.f32 0.0, %v3490
        %3492 = vdwg.mxu0
        %v3495 = vunpack.c.l.b16 %v2729
        %v3496 = vunpack.c.l.b16 %v2730
        %v3497 = vpack.c.b16 %v3496, %v3495
        %v3500 = vunpack.c.l.b16 %v1304
        %v3501 = vunpack.c.l.b16 %v1305
        %v3502 = vpack.c.b16 %v3501, %v3500
        %3503 = vrot.lane.b32.xlu0 %v3502, 64
        %v3504 = vpop.permute.xlu0 %3503
        %v3507 = vsel %vm2102, %v3497, 0
        %3509 = vmatpush.bf16.msra.mxu0 0
        %3510 = vmatpush.bf16.msra.mxu0 0
        %3511 = vmatpush.bf16.msra.mxu0 0
        %3512 = vmatpush.bf16.msra.mxu0 0
        %3513 = vmatpush.bf16.msra.mxu0 0
        %3514 = vmatpush.bf16.msra.mxu0 0
        %3515 = vmatpush.bf16.msra.mxu0 0
        %3516 = vmatpush.bf16.msra.mxu0 %v3504
        %3517 = vmatmul.bf16.gmra.mxu0 %v3507
        %v3518 = vpop.f32.mrf.mxu0
        %v3519 = vadd.f32 0.0, %v3518
        %v3520 = vpop.f32.mrf.mxu0
        %v3521 = vadd.f32 0.0, %v3520
        %3522 = vdwg.mxu0
        %v3525 = vunpack.c.l.b16 %v2731
        %v3526 = vunpack.c.l.b16 %v2732
        %v3527 = vpack.c.b16 %v3526, %v3525
        %v3530 = vunpack.c.l.b16 %v1306
        %v3531 = vunpack.c.l.b16 %v1307
        %v3532 = vpack.c.b16 %v3531, %v3530
        %3533 = vrot.lane.b32.xlu0 %v3532, 64
        %v3534 = vpop.permute.xlu0 %3533
        %v3537 = vsel %vm2102, %v3527, 0
        %3539 = vmatpush.bf16.msra.mxu0 0
        %3540 = vmatpush.bf16.msra.mxu0 0
        %3541 = vmatpush.bf16.msra.mxu0 0
        %3542 = vmatpush.bf16.msra.mxu0 0
        %3543 = vmatpush.bf16.msra.mxu0 0
        %3544 = vmatpush.bf16.msra.mxu0 0
        %3545 = vmatpush.bf16.msra.mxu0 0
        %3546 = vmatpush.bf16.msra.mxu0 %v3534
        %3547 = vmatmul.bf16.gmra.mxu0 %v3537
        %v3548 = vpop.f32.mrf.mxu0
        %v3549 = vadd.f32 0.0, %v3548
        %v3550 = vpop.f32.mrf.mxu0
        %v3551 = vadd.f32 0.0, %v3550
        %3552 = vdwg.mxu0
        %v3555 = vunpack.c.l.b16 %v2733
        %v3556 = vunpack.c.l.b16 %v2734
        %v3557 = vpack.c.b16 %v3556, %v3555
        %v3560 = vunpack.c.l.b16 %v1308
        %v3561 = vunpack.c.l.b16 %v1309
        %v3562 = vpack.c.b16 %v3561, %v3560
        %3563 = vrot.lane.b32.xlu0 %v3562, 64
        %v3564 = vpop.permute.xlu0 %3563
        %v3567 = vsel %vm2102, %v3557, 0
        %3569 = vmatpush.bf16.msra.mxu0 0
        %3570 = vmatpush.bf16.msra.mxu0 0
        %3571 = vmatpush.bf16.msra.mxu0 0
        %3572 = vmatpush.bf16.msra.mxu0 0
        %3573 = vmatpush.bf16.msra.mxu0 0
        %3574 = vmatpush.bf16.msra.mxu0 0
        %3575 = vmatpush.bf16.msra.mxu0 0
        %3576 = vmatpush.bf16.msra.mxu0 %v3564
        %3577 = vmatmul.bf16.gmra.mxu0 %v3567
        %v3578 = vpop.f32.mrf.mxu0
        %v3579 = vadd.f32 0.0, %v3578
        %v3580 = vpop.f32.mrf.mxu0
        %v3581 = vadd.f32 0.0, %v3580
        %3582 = vdwg.mxu0
        %v3585 = vunpack.c.l.b16 %v2735
        %v3586 = vunpack.c.l.b16 %v2736
        %v3587 = vpack.c.b16 %v3586, %v3585
        %v3590 = vunpack.c.l.b16 %v1310
        %v3591 = vunpack.c.l.b16 %v1311
        %v3592 = vpack.c.b16 %v3591, %v3590
        %3593 = vrot.lane.b32.xlu0 %v3592, 64
        %v3594 = vpop.permute.xlu0 %3593
        %v3597 = vsel %vm2102, %v3587, 0
        %3599 = vmatpush.bf16.msra.mxu0 0
        %3600 = vmatpush.bf16.msra.mxu0 0
        %3601 = vmatpush.bf16.msra.mxu0 0
        %3602 = vmatpush.bf16.msra.mxu0 0
        %3603 = vmatpush.bf16.msra.mxu0 0
        %3604 = vmatpush.bf16.msra.mxu0 0
        %3605 = vmatpush.bf16.msra.mxu0 0
        %3606 = vmatpush.bf16.msra.mxu0 %v3594
        %3607 = vmatmul.bf16.gmra.mxu0 %v3597
        %v3608 = vpop.f32.mrf.mxu0
        %v3609 = vadd.f32 0.0, %v3608
        %v3610 = vpop.f32.mrf.mxu0
        %v3611 = vadd.f32 0.0, %v3610
        %3612 = vdwg.mxu0
        %v3615 = vunpack.c.l.b16 %v2737
        %v3616 = vunpack.c.l.b16 %v2738
        %v3617 = vpack.c.b16 %v3616, %v3615
        %v3620 = vunpack.c.l.b16 %v1312
        %v3621 = vunpack.c.l.b16 %v1313
        %v3622 = vpack.c.b16 %v3621, %v3620
        %3623 = vrot.lane.b32.xlu0 %v3622, 64
        %v3624 = vpop.permute.xlu0 %3623
        %v3627 = vsel %vm2102, %v3617, 0
        %3629 = vmatpush.bf16.msra.mxu0 0
        %3630 = vmatpush.bf16.msra.mxu0 0
        %3631 = vmatpush.bf16.msra.mxu0 0
        %3632 = vmatpush.bf16.msra.mxu0 0
        %3633 = vmatpush.bf16.msra.mxu0 0
        %3634 = vmatpush.bf16.msra.mxu0 0
        %3635 = vmatpush.bf16.msra.mxu0 0
        %3636 = vmatpush.bf16.msra.mxu0 %v3624
        %3637 = vmatmul.bf16.gmra.mxu0 %v3627
        %v3638 = vpop.f32.mrf.mxu0
        %v3639 = vadd.f32 0.0, %v3638
        %v3640 = vpop.f32.mrf.mxu0
        %v3641 = vadd.f32 0.0, %v3640
        %3642 = vdwg.mxu0
        %v3645 = vunpack.c.l.b16 %v2739
        %v3646 = vunpack.c.l.b16 %v2740
        %v3647 = vpack.c.b16 %v3646, %v3645
        %v3650 = vunpack.c.l.b16 %v1314
        %v3651 = vunpack.c.l.b16 %v1315
        %v3652 = vpack.c.b16 %v3651, %v3650
        %3653 = vrot.lane.b32.xlu0 %v3652, 64
        %v3654 = vpop.permute.xlu0 %3653
        %v3657 = vsel %vm2102, %v3647, 0
        %3659 = vmatpush.bf16.msra.mxu0 0
        %3660 = vmatpush.bf16.msra.mxu0 0
        %3661 = vmatpush.bf16.msra.mxu0 0
        %3662 = vmatpush.bf16.msra.mxu0 0
        %3663 = vmatpush.bf16.msra.mxu0 0
        %3664 = vmatpush.bf16.msra.mxu0 0
        %3665 = vmatpush.bf16.msra.mxu0 0
        %3666 = vmatpush.bf16.msra.mxu0 %v3654
        %3667 = vmatmul.bf16.gmra.mxu0 %v3657
        %v3668 = vpop.f32.mrf.mxu0
        %v3669 = vadd.f32 0.0, %v3668
        %v3670 = vpop.f32.mrf.mxu0
        %v3671 = vadd.f32 0.0, %v3670
        %3672 = vdwg.mxu0
        %v3675 = vunpack.c.l.b16 %v2741
        %v3676 = vunpack.c.l.b16 %v2742
        %v3677 = vpack.c.b16 %v3676, %v3675
        %v3680 = vunpack.c.l.b16 %v1316
        %v3681 = vunpack.c.l.b16 %v1317
        %v3682 = vpack.c.b16 %v3681, %v3680
        %3683 = vrot.lane.b32.xlu0 %v3682, 64
        %v3684 = vpop.permute.xlu0 %3683
        %v3687 = vsel %vm2102, %v3677, 0
        %3689 = vmatpush.bf16.msra.mxu0 0
        %3690 = vmatpush.bf16.msra.mxu0 0
        %3691 = vmatpush.bf16.msra.mxu0 0
        %3692 = vmatpush.bf16.msra.mxu0 0
        %3693 = vmatpush.bf16.msra.mxu0 0
        %3694 = vmatpush.bf16.msra.mxu0 0
        %3695 = vmatpush.bf16.msra.mxu0 0
        %3696 = vmatpush.bf16.msra.mxu0 %v3684
        %3697 = vmatmul.bf16.gmra.mxu0 %v3687
        %v3698 = vpop.f32.mrf.mxu0
        %v3699 = vadd.f32 0.0, %v3698
        %v3700 = vpop.f32.mrf.mxu0
        %v3701 = vadd.f32 0.0, %v3700
        %3702 = vdwg.mxu0
        %v3703 = vrcp.pop %v2489
        %v3704 = vrcp.pop %v2492
        %v3705 = vrcp.pop %v2495
        %v3706 = vrcp.pop %v2498
        %v3707 = vrcp.pop %v2501
        %v3708 = vrcp.pop %v2504
        %v3709 = vrcp.pop %v2507
        %v3710 = vrcp.pop %v2510
        %v3711 = vrcp.pop %v2513
        %v3712 = vrcp.pop %v2516
        %v3713 = vrcp.pop %v2519
        %v3714 = vrcp.pop %v2522
        %v3715 = vrcp.pop %v2525
        %v3716 = vrcp.pop %v2528
        %v3717 = vrcp.pop %v2531
        %v3718 = vrcp.pop %v2534
        %v3719 = vrcp.pop %v2537
        %v3720 = vrcp.pop %v2540
        %v3721 = vrcp.pop %v2543
        %v3722 = vrcp.pop %v2546
        %v3723 = vrcp.pop %v2549
        %v3724 = vrcp.pop %v2552
        %v3725 = vrcp.pop %v2555
        %v3726 = vrcp.pop %v2558
        %v3727 = vrcp.pop %v2561
        %v3728 = vrcp.pop %v2564
        %v3729 = vrcp.pop %v2567
        %v3730 = vrcp.pop %v2570
        %v3731 = vrcp.pop %v2573
        %v3732 = vrcp.pop %v2576
        %v3733 = vrcp.pop %v2579
        %v3734 = vrcp.pop %v2582
        %v3735 = vrcp.pop %v2585
        %v3736 = vrcp.pop %v2588
        %v3737 = vrcp.pop %v2591
        %v3738 = vrcp.pop %v2594
        %v3739 = vrcp.pop %v2597
        %v3740 = vrcp.pop %v2600
        %v3741 = vrcp.pop %v2603
        %v3742 = vrcp.pop %v2606
        %v3743 = vrcp.pop %v2609
        %v3744 = vrcp.pop %v2612
        %v3745 = vrcp.pop %v2615
        %v3746 = vrcp.pop %v2618
        %v3747 = vrcp.pop %v2621
        %v3748 = vrcp.pop %v2624
        %v3749 = vrcp.pop %v2627
        %v3750 = vrcp.pop %v2630
        %v3751 = vrcp.pop %v2633
        %v3752 = vrcp.pop %v2636
        %v3753 = vrcp.pop %v2639
        %v3754 = vrcp.pop %v2642
        %v3755 = vrcp.pop %v2645
        %v3756 = vrcp.pop %v2648
        %v3757 = vrcp.pop %v2651
        %v3758 = vrcp.pop %v2654
        %v3759 = vrcp.pop %v2657
        %v3760 = vrcp.pop %v2660
        %v3761 = vrcp.pop %v2663
        %v3762 = vrcp.pop %v2666
        %v3763 = vrcp.pop %v2669
        %v3764 = vrcp.pop %v2672
        %v3765 = vrcp.pop %v2675
        %v3766 = vrcp.pop %v2678
        %v3767 = vmul.f32 %v2769, %v3703
        %v3768 = vmul.f32 %v2771, %v3704
        %v3769 = vmul.f32 %v2799, %v3705
        %v3770 = vmul.f32 %v2801, %v3706
        %v3771 = vmul.f32 %v2829, %v3707
        %v3772 = vmul.f32 %v2831, %v3708
        %v3773 = vmul.f32 %v2859, %v3709
        %v3774 = vmul.f32 %v2861, %v3710
        %v3775 = vmul.f32 %v2889, %v3711
        %v3776 = vmul.f32 %v2891, %v3712
        %v3777 = vmul.f32 %v2919, %v3713
        %v3778 = vmul.f32 %v2921, %v3714
        %v3779 = vmul.f32 %v2949, %v3715
        %v3780 = vmul.f32 %v2951, %v3716
        %v3781 = vmul.f32 %v2979, %v3717
        %v3782 = vmul.f32 %v2981, %v3718
        %v3783 = vmul.f32 %v3009, %v3719
        %v3784 = vmul.f32 %v3011, %v3720
        %v3785 = vmul.f32 %v3039, %v3721
        %v3786 = vmul.f32 %v3041, %v3722
        %v3787 = vmul.f32 %v3069, %v3723
        %v3788 = vmul.f32 %v3071, %v3724
        %v3789 = vmul.f32 %v3099, %v3725
        %v3790 = vmul.f32 %v3101, %v3726
        %v3791 = vmul.f32 %v3129, %v3727
        %v3792 = vmul.f32 %v3131, %v3728
        %v3793 = vmul.f32 %v3159, %v3729
        %v3794 = vmul.f32 %v3161, %v3730
        %v3795 = vmul.f32 %v3189, %v3731
        %v3796 = vmul.f32 %v3191, %v3732
        %v3797 = vmul.f32 %v3219, %v3733
        %v3798 = vmul.f32 %v3221, %v3734
        %v3799 = vmul.f32 %v3249, %v3735
        %v3800 = vmul.f32 %v3251, %v3736
        %v3801 = vmul.f32 %v3279, %v3737
        %v3802 = vmul.f32 %v3281, %v3738
        %v3803 = vmul.f32 %v3309, %v3739
        %v3804 = vmul.f32 %v3311, %v3740
        %v3805 = vmul.f32 %v3339, %v3741
        %v3806 = vmul.f32 %v3341, %v3742
        %v3807 = vmul.f32 %v3369, %v3743
        %v3808 = vmul.f32 %v3371, %v3744
        %v3809 = vmul.f32 %v3399, %v3745
        %v3810 = vmul.f32 %v3401, %v3746
        %v3811 = vmul.f32 %v3429, %v3747
        %v3812 = vmul.f32 %v3431, %v3748
        %v3813 = vmul.f32 %v3459, %v3749
        %v3814 = vmul.f32 %v3461, %v3750
        %v3815 = vmul.f32 %v3489, %v3751
        %v3816 = vmul.f32 %v3491, %v3752
        %v3817 = vmul.f32 %v3519, %v3753
        %v3818 = vmul.f32 %v3521, %v3754
        %v3819 = vmul.f32 %v3549, %v3755
        %v3820 = vmul.f32 %v3551, %v3756
        %v3821 = vmul.f32 %v3579, %v3757
        %v3822 = vmul.f32 %v3581, %v3758
        %v3823 = vmul.f32 %v3609, %v3759
        %v3824 = vmul.f32 %v3611, %v3760
        %v3825 = vmul.f32 %v3639, %v3761
        %v3826 = vmul.f32 %v3641, %v3762
        %v3827 = vmul.f32 %v3669, %v3763
        %v3828 = vmul.f32 %v3671, %v3764
        %v3829 = vmul.f32 %v3699, %v3765
        %v3830 = vmul.f32 %v3701, %v3766
        %v3831 = vsel %vm520, %v3767, 0.0
        %v3832 = vsel %vm520, %v3769, 0.0
        %v3833 = vadd.f32 %v3831, %v3832
        %v3834 = vsel %vm520, %v3771, 0.0
        %v3835 = vadd.f32 %v3833, %v3834
        %v3836 = vsel %vm520, %v3773, 0.0
        %v3837 = vadd.f32 %v3835, %v3836
        %v3838 = vsel %vm520, %v3768, 0.0
        %v3839 = vsel %vm520, %v3770, 0.0
        %v3840 = vadd.f32 %v3838, %v3839
        %v3841 = vsel %vm520, %v3772, 0.0
        %v3842 = vadd.f32 %v3840, %v3841
        %v3843 = vsel %vm520, %v3774, 0.0
        %v3844 = vadd.f32 %v3842, %v3843
        %v3845 = vsel %vm520, %v3775, 0.0
        %v3846 = vsel %vm520, %v3777, 0.0
        %v3847 = vadd.f32 %v3845, %v3846
        %v3848 = vsel %vm520, %v3779, 0.0
        %v3849 = vadd.f32 %v3847, %v3848
        %v3850 = vsel %vm520, %v3781, 0.0
        %v3851 = vadd.f32 %v3849, %v3850
        %v3852 = vsel %vm520, %v3776, 0.0
        %v3853 = vsel %vm520, %v3778, 0.0
        %v3854 = vadd.f32 %v3852, %v3853
        %v3855 = vsel %vm520, %v3780, 0.0
        %v3856 = vadd.f32 %v3854, %v3855
        %v3857 = vsel %vm520, %v3782, 0.0
        %v3858 = vadd.f32 %v3856, %v3857
        %v3859 = vsel %vm520, %v3783, 0.0
        %v3860 = vsel %vm520, %v3785, 0.0
        %v3861 = vadd.f32 %v3859, %v3860
        %v3862 = vsel %vm520, %v3787, 0.0
        %v3863 = vadd.f32 %v3861, %v3862
        %v3864 = vsel %vm520, %v3789, 0.0
        %v3865 = vadd.f32 %v3863, %v3864
        %v3866 = vsel %vm520, %v3784, 0.0
        %v3867 = vsel %vm520, %v3786, 0.0
        %v3868 = vadd.f32 %v3866, %v3867
        %v3869 = vsel %vm520, %v3788, 0.0
        %v3870 = vadd.f32 %v3868, %v3869
        %v3871 = vsel %vm520, %v3790, 0.0
        %v3872 = vadd.f32 %v3870, %v3871
        %v3873 = vsel %vm520, %v3791, 0.0
        %v3874 = vsel %vm520, %v3793, 0.0
        %v3875 = vadd.f32 %v3873, %v3874
        %v3876 = vsel %vm520, %v3795, 0.0
        %v3877 = vadd.f32 %v3875, %v3876
        %v3878 = vsel %vm520, %v3797, 0.0
        %v3879 = vadd.f32 %v3877, %v3878
        %v3880 = vsel %vm520, %v3792, 0.0
        %v3881 = vsel %vm520, %v3794, 0.0
        %v3882 = vadd.f32 %v3880, %v3881
        %v3883 = vsel %vm520, %v3796, 0.0
        %v3884 = vadd.f32 %v3882, %v3883
        %v3885 = vsel %vm520, %v3798, 0.0
        %v3886 = vadd.f32 %v3884, %v3885
        %v3887 = vsel %vm520, %v3799, 0.0
        %v3888 = vsel %vm520, %v3801, 0.0
        %v3889 = vadd.f32 %v3887, %v3888
        %v3890 = vsel %vm520, %v3803, 0.0
        %v3891 = vadd.f32 %v3889, %v3890
        %v3892 = vsel %vm520, %v3805, 0.0
        %v3893 = vadd.f32 %v3891, %v3892
        %v3894 = vsel %vm520, %v3800, 0.0
        %v3895 = vsel %vm520, %v3802, 0.0
        %v3896 = vadd.f32 %v3894, %v3895
        %v3897 = vsel %vm520, %v3804, 0.0
        %v3898 = vadd.f32 %v3896, %v3897
        %v3899 = vsel %vm520, %v3806, 0.0
        %v3900 = vadd.f32 %v3898, %v3899
        %v3901 = vsel %vm520, %v3807, 0.0
        %v3902 = vsel %vm520, %v3809, 0.0
        %v3903 = vadd.f32 %v3901, %v3902
        %v3904 = vsel %vm520, %v3811, 0.0
        %v3905 = vadd.f32 %v3903, %v3904
        %v3906 = vsel %vm520, %v3813, 0.0
        %v3907 = vadd.f32 %v3905, %v3906
        %v3908 = vsel %vm520, %v3808, 0.0
        %v3909 = vsel %vm520, %v3810, 0.0
        %v3910 = vadd.f32 %v3908, %v3909
        %v3911 = vsel %vm520, %v3812, 0.0
        %v3912 = vadd.f32 %v3910, %v3911
        %v3913 = vsel %vm520, %v3814, 0.0
        %v3914 = vadd.f32 %v3912, %v3913
        %v3915 = vsel %vm520, %v3815, 0.0
        %v3916 = vsel %vm520, %v3817, 0.0
        %v3917 = vadd.f32 %v3915, %v3916
        %v3918 = vsel %vm520, %v3819, 0.0
        %v3919 = vadd.f32 %v3917, %v3918
        %v3920 = vsel %vm520, %v3821, 0.0
        %v3921 = vadd.f32 %v3919, %v3920
        %v3922 = vsel %vm520, %v3816, 0.0
        %v3923 = vsel %vm520, %v3818, 0.0
        %v3924 = vadd.f32 %v3922, %v3923
        %v3925 = vsel %vm520, %v3820, 0.0
        %v3926 = vadd.f32 %v3924, %v3925
        %v3927 = vsel %vm520, %v3822, 0.0
        %v3928 = vadd.f32 %v3926, %v3927
        %v3929 = vsel %vm520, %v3823, 0.0
        %v3930 = vsel %vm520, %v3825, 0.0
        %v3931 = vadd.f32 %v3929, %v3930
        %v3932 = vsel %vm520, %v3827, 0.0
        %v3933 = vadd.f32 %v3931, %v3932
        %v3934 = vsel %vm520, %v3829, 0.0
        %v3935 = vadd.f32 %v3933, %v3934
        %v3936 = vsel %vm520, %v3824, 0.0
        %v3937 = vsel %vm520, %v3826, 0.0
        %v3938 = vadd.f32 %v3936, %v3937
        %v3939 = vsel %vm520, %v3828, 0.0
        %v3940 = vadd.f32 %v3938, %v3939
        %v3941 = vsel %vm520, %v3830, 0.0
        %v3942 = vadd.f32 %v3940, %v3941
        %v3943 = vpack.c.bf16 %v3844, %v3837
        %v3944 = vpack.c.bf16 %v3858, %v3851
        %v3945 = vpack.c.bf16 %v3872, %v3865
        %v3946 = vpack.c.bf16 %v3886, %v3879
        %v3947 = vpack.c.bf16 %v3900, %v3893
        %v3948 = vpack.c.bf16 %v3914, %v3907
        %v3949 = vpack.c.bf16 %v3928, %v3921
        %v3950 = vpack.c.bf16 %v3942, %v3935
        %v3952 = vperm.slane %v495, 0
        %v3958 = vunpack.c.l.b16 %v491
        %v3959 = vunpack.c.l.b16 %v492
        %v3960 = vunpack.c.l.b16 %v493
        %v3961 = vunpack.c.l.b16 %v494
        %v3962 = vpack.c.b16 %v3959, %v3958
        %v3963 = vpack.c.b16 %v3961, %v3960
        %v3967 = vsel %vm520, %v3943, 0
        %v3970 = vsel %vm520, %v3944, 0
        %v3973 = vsel %vm520, %v3945, 0
        %v3976 = vsel %vm520, %v3946, 0
        %v3979 = vsel %vm520, %v3947, 0
        %v3982 = vsel %vm520, %v3948, 0
        %v3985 = vsel %vm520, %v3949, 0
        %v3988 = vsel %vm520, %v3950, 0
        %3990 = vmatpush.bf16.msra.mxu0 0
        %3991 = vmatpush.bf16.msra.mxu0 0
        %3992 = vmatpush.bf16.msra.mxu0 0
        %3993 = vmatpush.bf16.msra.mxu0 0
        %3994 = vmatpush.bf16.msra.mxu0 0
        %3995 = vmatpush.bf16.msra.mxu0 0
        %3996 = vmatpush.bf16.msra.mxu0 %v3963
        %3997 = vmatpush.bf16.msra.mxu0 %v3962
        %3998 = vmatmul.bf16.gmra.mxu0 %v3967
        %v3999 = vpop.f32.mrf.mxu0
        %v4000 = vadd.f32 %v3952, %v3999
        %v4001 = vpop.f32.mrf.mxu0
        %v4002 = vadd.f32 %v3952, %v4001
        %4003 = vmatmul.bf16.gmra.mxu0 %v3970
        %v4004 = vpop.f32.mrf.mxu0
        %v4005 = vadd.f32 %v3952, %v4004
        %v4006 = vpop.f32.mrf.mxu0
        %v4007 = vadd.f32 %v3952, %v4006
        %4008 = vmatmul.bf16.gmra.mxu0 %v3973
        %v4009 = vpop.f32.mrf.mxu0
        %v4010 = vadd.f32 %v3952, %v4009
        %v4011 = vpop.f32.mrf.mxu0
        %v4012 = vadd.f32 %v3952, %v4011
        %4013 = vmatmul.bf16.gmra.mxu0 %v3976
        %v4014 = vpop.f32.mrf.mxu0
        %v4015 = vadd.f32 %v3952, %v4014
        %v4016 = vpop.f32.mrf.mxu0
        %v4017 = vadd.f32 %v3952, %v4016
        %4018 = vmatmul.bf16.gmra.mxu0 %v3979
        %v4019 = vpop.f32.mrf.mxu0
        %v4020 = vadd.f32 %v3952, %v4019
        %v4021 = vpop.f32.mrf.mxu0
        %v4022 = vadd.f32 %v3952, %v4021
        %4023 = vmatmul.bf16.gmra.mxu0 %v3982
        %v4024 = vpop.f32.mrf.mxu0
        %v4025 = vadd.f32 %v3952, %v4024
        %v4026 = vpop.f32.mrf.mxu0
        %v4027 = vadd.f32 %v3952, %v4026
        %4028 = vmatmul.bf16.gmra.mxu0 %v3985
        %v4029 = vpop.f32.mrf.mxu0
        %v4030 = vadd.f32 %v3952, %v4029
        %v4031 = vpop.f32.mrf.mxu0
        %v4032 = vadd.f32 %v3952, %v4031
        %4033 = vmatmul.bf16.gmra.mxu0 %v3988
        %v4034 = vpop.f32.mrf.mxu0
        %v4035 = vadd.f32 %v3952, %v4034
        %v4036 = vpop.f32.mrf.mxu0
        %v4037 = vadd.f32 %v3952, %v4036
        %4038 = vdwg.mxu0
        %v4039 = vadd.f32 %v468, %v4000
        %v4040 = vadd.f32 %v469, %v4002
        %v4041 = vadd.f32 %v470, %v4005
        %v4042 = vadd.f32 %v471, %v4007
        %v4043 = vadd.f32 %v472, %v4010
        %v4044 = vadd.f32 %v473, %v4012
        %v4045 = vadd.f32 %v474, %v4015
        %v4046 = vadd.f32 %v475, %v4017
        %v4047 = vadd.f32 %v476, %v4020
        %v4048 = vadd.f32 %v477, %v4022
        %v4049 = vadd.f32 %v478, %v4025
        %v4050 = vadd.f32 %v479, %v4027
        %v4051 = vadd.f32 %v480, %v4030
        %v4052 = vadd.f32 %v481, %v4032
        %v4053 = vadd.f32 %v482, %v4035
        %v4054 = vadd.f32 %v483, %v4037
        %v4055 = vsel %vm520, %v4039, 0.0
        %4056 = vadd.xlane.f32.xlu0 %v4055
        %v4057 = vpop.xlane.xlu0 %4056
        %v4058 = vsel %vm520, %v4040, 0.0
        %4059 = vadd.xlane.f32.xlu0 %v4058
        %v4060 = vpop.xlane.xlu0 %4059
        %v4061 = vsel %vm520, %v4041, 0.0
        %4062 = vadd.xlane.f32.xlu0 %v4061
        %v4063 = vpop.xlane.xlu0 %4062
        %v4064 = vsel %vm520, %v4042, 0.0
        %4065 = vadd.xlane.f32.xlu0 %v4064
        %v4066 = vpop.xlane.xlu0 %4065
        %v4067 = vsel %vm520, %v4043, 0.0
        %4068 = vadd.xlane.f32.xlu0 %v4067
        %v4069 = vpop.xlane.xlu0 %4068
        %v4070 = vsel %vm520, %v4044, 0.0
        %4071 = vadd.xlane.f32.xlu0 %v4070
        %v4072 = vpop.xlane.xlu0 %4071
        %v4073 = vsel %vm520, %v4045, 0.0
        %4074 = vadd.xlane.f32.xlu0 %v4073
        %v4075 = vpop.xlane.xlu0 %4074
        %v4076 = vsel %vm520, %v4046, 0.0
        %4077 = vadd.xlane.f32.xlu0 %v4076
        %v4078 = vpop.xlane.xlu0 %4077
        %v4079 = vsel %vm520, %v4047, 0.0
        %4080 = vadd.xlane.f32.xlu0 %v4079
        %v4081 = vpop.xlane.xlu0 %4080
        %v4082 = vsel %vm520, %v4048, 0.0
        %4083 = vadd.xlane.f32.xlu0 %v4082
        %v4084 = vpop.xlane.xlu0 %4083
        %v4085 = vsel %vm520, %v4049, 0.0
        %4086 = vadd.xlane.f32.xlu0 %v4085
        %v4087 = vpop.xlane.xlu0 %4086
        %v4088 = vsel %vm520, %v4050, 0.0
        %4089 = vadd.xlane.f32.xlu0 %v4088
        %v4090 = vpop.xlane.xlu0 %4089
        %v4091 = vsel %vm520, %v4051, 0.0
        %4092 = vadd.xlane.f32.xlu0 %v4091
        %v4093 = vpop.xlane.xlu0 %4092
        %v4094 = vsel %vm520, %v4052, 0.0
        %4095 = vadd.xlane.f32.xlu0 %v4094
        %v4096 = vpop.xlane.xlu0 %4095
        %v4097 = vsel %vm520, %v4053, 0.0
        %4098 = vadd.xlane.f32.xlu0 %v4097
        %v4099 = vpop.xlane.xlu0 %4098
        %v4100 = vsel %vm520, %v4054, 0.0
        %4101 = vadd.xlane.f32.xlu0 %v4100
        %v4102 = vpop.xlane.xlu0 %4101
        %v4103 = vmul.f32 %v4057, %v575
        %v4104 = vmul.f32 %v4060, %v575
        %v4105 = vmul.f32 %v4063, %v575
        %v4106 = vmul.f32 %v4066, %v575
        %v4107 = vmul.f32 %v4069, %v575
        %v4108 = vmul.f32 %v4072, %v575
        %v4109 = vmul.f32 %v4075, %v575
        %v4110 = vmul.f32 %v4078, %v575
        %v4111 = vmul.f32 %v4081, %v575
        %v4112 = vmul.f32 %v4084, %v575
        %v4113 = vmul.f32 %v4087, %v575
        %v4114 = vmul.f32 %v4090, %v575
        %v4115 = vmul.f32 %v4093, %v575
        %v4116 = vmul.f32 %v4096, %v575
        %v4117 = vmul.f32 %v4099, %v575
        %v4118 = vmul.f32 %v4102, %v575
        %v4119 = vsub.f32 %v4039, %v4103
        %v4120 = vsub.f32 %v4040, %v4104
        %v4121 = vsub.f32 %v4041, %v4105
        %v4122 = vsub.f32 %v4042, %v4106
        %v4123 = vsub.f32 %v4043, %v4107
        %v4124 = vsub.f32 %v4044, %v4108
        %v4125 = vsub.f32 %v4045, %v4109
        %v4126 = vsub.f32 %v4046, %v4110
        %v4127 = vsub.f32 %v4047, %v4111
        %v4128 = vsub.f32 %v4048, %v4112
        %v4129 = vsub.f32 %v4049, %v4113
        %v4130 = vsub.f32 %v4050, %v4114
        %v4131 = vsub.f32 %v4051, %v4115
        %v4132 = vsub.f32 %v4052, %v4116
        %v4133 = vsub.f32 %v4053, %v4117
        %v4134 = vsub.f32 %v4054, %v4118
        %v4135 = vmul.f32 %v4119, %v4119
        %v4136 = vmul.f32 %v4120, %v4120
        %v4137 = vmul.f32 %v4121, %v4121
        %v4138 = vmul.f32 %v4122, %v4122
        %v4139 = vmul.f32 %v4123, %v4123
        %v4140 = vmul.f32 %v4124, %v4124
        %v4141 = vmul.f32 %v4125, %v4125
        %v4142 = vmul.f32 %v4126, %v4126
        %v4143 = vmul.f32 %v4127, %v4127
        %v4144 = vmul.f32 %v4128, %v4128
        %v4145 = vmul.f32 %v4129, %v4129
        %v4146 = vmul.f32 %v4130, %v4130
        %v4147 = vmul.f32 %v4131, %v4131
        %v4148 = vmul.f32 %v4132, %v4132
        %v4149 = vmul.f32 %v4133, %v4133
        %v4150 = vmul.f32 %v4134, %v4134
        %v4151 = vsel %vm520, %v4135, 0.0
        %4152 = vadd.xlane.f32.xlu0 %v4151
        %v4153 = vpop.xlane.xlu0 %4152
        %v4154 = vsel %vm520, %v4136, 0.0
        %4155 = vadd.xlane.f32.xlu0 %v4154
        %v4156 = vpop.xlane.xlu0 %4155
        %v4157 = vsel %vm520, %v4137, 0.0
        %4158 = vadd.xlane.f32.xlu0 %v4157
        %v4159 = vpop.xlane.xlu0 %4158
        %v4160 = vsel %vm520, %v4138, 0.0
        %4161 = vadd.xlane.f32.xlu0 %v4160
        %v4162 = vpop.xlane.xlu0 %4161
        %v4163 = vsel %vm520, %v4139, 0.0
        %4164 = vadd.xlane.f32.xlu0 %v4163
        %v4165 = vpop.xlane.xlu0 %4164
        %v4166 = vsel %vm520, %v4140, 0.0
        %4167 = vadd.xlane.f32.xlu0 %v4166
        %v4168 = vpop.xlane.xlu0 %4167
        %v4169 = vsel %vm520, %v4141, 0.0
        %4170 = vadd.xlane.f32.xlu0 %v4169
        %v4171 = vpop.xlane.xlu0 %4170
        %v4172 = vsel %vm520, %v4142, 0.0
        %4173 = vadd.xlane.f32.xlu0 %v4172
        %v4174 = vpop.xlane.xlu0 %4173
        %v4175 = vsel %vm520, %v4143, 0.0
        %4176 = vadd.xlane.f32.xlu0 %v4175
        %v4177 = vpop.xlane.xlu0 %4176
        %v4178 = vsel %vm520, %v4144, 0.0
        %4179 = vadd.xlane.f32.xlu0 %v4178
        %v4180 = vpop.xlane.xlu0 %4179
        %v4181 = vsel %vm520, %v4145, 0.0
        %4182 = vadd.xlane.f32.xlu0 %v4181
        %v4183 = vpop.xlane.xlu0 %4182
        %v4184 = vsel %vm520, %v4146, 0.0
        %4185 = vadd.xlane.f32.xlu0 %v4184
        %v4186 = vpop.xlane.xlu0 %4185
        %v4187 = vsel %vm520, %v4147, 0.0
        %4188 = vadd.xlane.f32.xlu0 %v4187
        %v4189 = vpop.xlane.xlu0 %4188
        %v4190 = vsel %vm520, %v4148, 0.0
        %4191 = vadd.xlane.f32.xlu0 %v4190
        %v4192 = vpop.xlane.xlu0 %4191
        %v4193 = vsel %vm520, %v4149, 0.0
        %4194 = vadd.xlane.f32.xlu0 %v4193
        %v4195 = vpop.xlane.xlu0 %4194
        %v4196 = vsel %vm520, %v4150, 0.0
        %4197 = vadd.xlane.f32.xlu0 %v4196
        %v4198 = vpop.xlane.xlu0 %4197
        %v4199 = vmul.f32 %v4153, %v575
        %v4200 = vmul.f32 %v4156, %v575
        %v4201 = vmul.f32 %v4159, %v575
        %v4202 = vmul.f32 %v4162, %v575
        %v4203 = vmul.f32 %v4165, %v575
        %v4204 = vmul.f32 %v4168, %v575
        %v4205 = vmul.f32 %v4171, %v575
        %v4206 = vmul.f32 %v4174, %v575
        %v4207 = vmul.f32 %v4177, %v575
        %v4208 = vmul.f32 %v4180, %v575
        %v4209 = vmul.f32 %v4183, %v575
        %v4210 = vmul.f32 %v4186, %v575
        %v4211 = vmul.f32 %v4189, %v575
        %v4212 = vmul.f32 %v4192, %v575
        %v4213 = vmul.f32 %v4195, %v575
        %v4214 = vmul.f32 %v4198, %v575
        %v4215 = vadd.f32 %v4199, 1e-05
        %v4216 = vadd.f32 %v4200, 1e-05
        %v4217 = vadd.f32 %v4201, 1e-05
        %v4218 = vadd.f32 %v4202, 1e-05
        %v4219 = vadd.f32 %v4203, 1e-05
        %v4220 = vadd.f32 %v4204, 1e-05
        %v4221 = vadd.f32 %v4205, 1e-05
        %v4222 = vadd.f32 %v4206, 1e-05
        %v4223 = vadd.f32 %v4207, 1e-05
        %v4224 = vadd.f32 %v4208, 1e-05
        %v4225 = vadd.f32 %v4209, 1e-05
        %v4226 = vadd.f32 %v4210, 1e-05
        %v4227 = vadd.f32 %v4211, 1e-05
        %v4228 = vadd.f32 %v4212, 1e-05
        %v4229 = vadd.f32 %v4213, 1e-05
        %v4230 = vadd.f32 %v4214, 1e-05
        %v4231 = vrsqrt.pop %v4215
        %v4232 = vmul.f32 %v4231, %v4215
        %v4233 = vmul.f32 %v4232, %v4231
        %v4234 = vmul.f32 0.5, %v4233
        %v4235 = vsub.f32 1.5, %v4234
        %v4236 = vmul.f32 %v4231, %v4235
        %vm4237 = vweird.f32 %v4215
        %vm4238 = vweird.f32 %v4231
        %vm4239 = vmor %vm4237, %vm4238
        %v4240 = vsel %vm4239, %v4231, %v4236
        %v4241 = vrsqrt.pop %v4216
        %v4242 = vmul.f32 %v4241, %v4216
        %v4243 = vmul.f32 %v4242, %v4241
        %v4244 = vmul.f32 0.5, %v4243
        %v4245 = vsub.f32 1.5, %v4244
        %v4246 = vmul.f32 %v4241, %v4245
        %vm4247 = vweird.f32 %v4216
        %vm4248 = vweird.f32 %v4241
        %vm4249 = vmor %vm4247, %vm4248
        %v4250 = vsel %vm4249, %v4241, %v4246
        %v4251 = vrsqrt.pop %v4217
        %v4252 = vmul.f32 %v4251, %v4217
        %v4253 = vmul.f32 %v4252, %v4251
        %v4254 = vmul.f32 0.5, %v4253
        %v4255 = vsub.f32 1.5, %v4254
        %v4256 = vmul.f32 %v4251, %v4255
        %vm4257 = vweird.f32 %v4217
        %vm4258 = vweird.f32 %v4251
        %vm4259 = vmor %vm4257, %vm4258
        %v4260 = vsel %vm4259, %v4251, %v4256
        %v4261 = vrsqrt.pop %v4218
        %v4262 = vmul.f32 %v4261, %v4218
        %v4263 = vmul.f32 %v4262, %v4261
        %v4264 = vmul.f32 0.5, %v4263
        %v4265 = vsub.f32 1.5, %v4264
        %v4266 = vmul.f32 %v4261, %v4265
        %vm4267 = vweird.f32 %v4218
        %vm4268 = vweird.f32 %v4261
        %vm4269 = vmor %vm4267, %vm4268
        %v4270 = vsel %vm4269, %v4261, %v4266
        %v4271 = vrsqrt.pop %v4219
        %v4272 = vmul.f32 %v4271, %v4219
        %v4273 = vmul.f32 %v4272, %v4271
        %v4274 = vmul.f32 0.5, %v4273
        %v4275 = vsub.f32 1.5, %v4274
        %v4276 = vmul.f32 %v4271, %v4275
        %vm4277 = vweird.f32 %v4219
        %vm4278 = vweird.f32 %v4271
        %vm4279 = vmor %vm4277, %vm4278
        %v4280 = vsel %vm4279, %v4271, %v4276
        %v4281 = vrsqrt.pop %v4220
        %v4282 = vmul.f32 %v4281, %v4220
        %v4283 = vmul.f32 %v4282, %v4281
        %v4284 = vmul.f32 0.5, %v4283
        %v4285 = vsub.f32 1.5, %v4284
        %v4286 = vmul.f32 %v4281, %v4285
        %vm4287 = vweird.f32 %v4220
        %vm4288 = vweird.f32 %v4281
        %vm4289 = vmor %vm4287, %vm4288
        %v4290 = vsel %vm4289, %v4281, %v4286
        %v4291 = vrsqrt.pop %v4221
        %v4292 = vmul.f32 %v4291, %v4221
        %v4293 = vmul.f32 %v4292, %v4291
        %v4294 = vmul.f32 0.5, %v4293
        %v4295 = vsub.f32 1.5, %v4294
        %v4296 = vmul.f32 %v4291, %v4295
        %vm4297 = vweird.f32 %v4221
        %vm4298 = vweird.f32 %v4291
        %vm4299 = vmor %vm4297, %vm4298
        %v4300 = vsel %vm4299, %v4291, %v4296
        %v4301 = vrsqrt.pop %v4222
        %v4302 = vmul.f32 %v4301, %v4222
        %v4303 = vmul.f32 %v4302, %v4301
        %v4304 = vmul.f32 0.5, %v4303
        %v4305 = vsub.f32 1.5, %v4304
        %v4306 = vmul.f32 %v4301, %v4305
        %vm4307 = vweird.f32 %v4222
        %vm4308 = vweird.f32 %v4301
        %vm4309 = vmor %vm4307, %vm4308
        %v4310 = vsel %vm4309, %v4301, %v4306
        %v4311 = vrsqrt.pop %v4223
        %v4312 = vmul.f32 %v4311, %v4223
        %v4313 = vmul.f32 %v4312, %v4311
        %v4314 = vmul.f32 0.5, %v4313
        %v4315 = vsub.f32 1.5, %v4314
        %v4316 = vmul.f32 %v4311, %v4315
        %vm4317 = vweird.f32 %v4223
        %vm4318 = vweird.f32 %v4311
        %vm4319 = vmor %vm4317, %vm4318
        %v4320 = vsel %vm4319, %v4311, %v4316
        %v4321 = vrsqrt.pop %v4224
        %v4322 = vmul.f32 %v4321, %v4224
        %v4323 = vmul.f32 %v4322, %v4321
        %v4324 = vmul.f32 0.5, %v4323
        %v4325 = vsub.f32 1.5, %v4324
        %v4326 = vmul.f32 %v4321, %v4325
        %vm4327 = vweird.f32 %v4224
        %vm4328 = vweird.f32 %v4321
        %vm4329 = vmor %vm4327, %vm4328
        %v4330 = vsel %vm4329, %v4321, %v4326
        %v4331 = vrsqrt.pop %v4225
        %v4332 = vmul.f32 %v4331, %v4225
        %v4333 = vmul.f32 %v4332, %v4331
        %v4334 = vmul.f32 0.5, %v4333
        %v4335 = vsub.f32 1.5, %v4334
        %v4336 = vmul.f32 %v4331, %v4335
        %vm4337 = vweird.f32 %v4225
        %vm4338 = vweird.f32 %v4331
        %vm4339 = vmor %vm4337, %vm4338
        %v4340 = vsel %vm4339, %v4331, %v4336
        %v4341 = vrsqrt.pop %v4226
        %v4342 = vmul.f32 %v4341, %v4226
        %v4343 = vmul.f32 %v4342, %v4341
        %v4344 = vmul.f32 0.5, %v4343
        %v4345 = vsub.f32 1.5, %v4344
        %v4346 = vmul.f32 %v4341, %v4345
        %vm4347 = vweird.f32 %v4226
        %vm4348 = vweird.f32 %v4341
        %vm4349 = vmor %vm4347, %vm4348
        %v4350 = vsel %vm4349, %v4341, %v4346
        %v4351 = vrsqrt.pop %v4227
        %v4352 = vmul.f32 %v4351, %v4227
        %v4353 = vmul.f32 %v4352, %v4351
        %v4354 = vmul.f32 0.5, %v4353
        %v4355 = vsub.f32 1.5, %v4354
        %v4356 = vmul.f32 %v4351, %v4355
        %vm4357 = vweird.f32 %v4227
        %vm4358 = vweird.f32 %v4351
        %vm4359 = vmor %vm4357, %vm4358
        %v4360 = vsel %vm4359, %v4351, %v4356
        %v4361 = vrsqrt.pop %v4228
        %v4362 = vmul.f32 %v4361, %v4228
        %v4363 = vmul.f32 %v4362, %v4361
        %v4364 = vmul.f32 0.5, %v4363
        %v4365 = vsub.f32 1.5, %v4364
        %v4366 = vmul.f32 %v4361, %v4365
        %vm4367 = vweird.f32 %v4228
        %vm4368 = vweird.f32 %v4361
        %vm4369 = vmor %vm4367, %vm4368
        %v4370 = vsel %vm4369, %v4361, %v4366
        %v4371 = vrsqrt.pop %v4229
        %v4372 = vmul.f32 %v4371, %v4229
        %v4373 = vmul.f32 %v4372, %v4371
        %v4374 = vmul.f32 0.5, %v4373
        %v4375 = vsub.f32 1.5, %v4374
        %v4376 = vmul.f32 %v4371, %v4375
        %vm4377 = vweird.f32 %v4229
        %vm4378 = vweird.f32 %v4371
        %vm4379 = vmor %vm4377, %vm4378
        %v4380 = vsel %vm4379, %v4371, %v4376
        %v4381 = vrsqrt.pop %v4230
        %v4382 = vmul.f32 %v4381, %v4230
        %v4383 = vmul.f32 %v4382, %v4381
        %v4384 = vmul.f32 0.5, %v4383
        %v4385 = vsub.f32 1.5, %v4384
        %v4386 = vmul.f32 %v4381, %v4385
        %vm4387 = vweird.f32 %v4230
        %vm4388 = vweird.f32 %v4381
        %vm4389 = vmor %vm4387, %vm4388
        %v4390 = vsel %vm4389, %v4381, %v4386
        %v4391 = vmul.f32 %v4119, %v4240
        %v4392 = vmul.f32 %v4120, %v4250
        %v4393 = vmul.f32 %v4121, %v4260
        %v4394 = vmul.f32 %v4122, %v4270
        %v4395 = vmul.f32 %v4123, %v4280
        %v4396 = vmul.f32 %v4124, %v4290
        %v4397 = vmul.f32 %v4125, %v4300
        %v4398 = vmul.f32 %v4126, %v4310
        %v4399 = vmul.f32 %v4127, %v4320
        %v4400 = vmul.f32 %v4128, %v4330
        %v4401 = vmul.f32 %v4129, %v4340
        %v4402 = vmul.f32 %v4130, %v4350
        %v4403 = vmul.f32 %v4131, %v4360
        %v4404 = vmul.f32 %v4132, %v4370
        %v4405 = vmul.f32 %v4133, %v4380
        %v4406 = vmul.f32 %v4134, %v4390
        %v4408 = vperm.slane %v496, 0
        %v4410 = vmul.f32 %v4391, %v4408
        %v4411 = vmul.f32 %v4392, %v4408
        %v4412 = vmul.f32 %v4393, %v4408
        %v4413 = vmul.f32 %v4394, %v4408
        %v4414 = vmul.f32 %v4395, %v4408
        %v4415 = vmul.f32 %v4396, %v4408
        %v4416 = vmul.f32 %v4397, %v4408
        %v4417 = vmul.f32 %v4398, %v4408
        %v4418 = vmul.f32 %v4399, %v4408
        %v4419 = vmul.f32 %v4400, %v4408
        %v4420 = vmul.f32 %v4401, %v4408
        %v4421 = vmul.f32 %v4402, %v4408
        %v4422 = vmul.f32 %v4403, %v4408
        %v4423 = vmul.f32 %v4404, %v4408
        %v4424 = vmul.f32 %v4405, %v4408
        %v4425 = vmul.f32 %v4406, %v4408
        %v4427 = vperm.slane %v497, 0
        %v4429 = vadd.f32 %v4410, %v4427
        %v4430 = vadd.f32 %v4411, %v4427
        %v4431 = vadd.f32 %v4412, %v4427
        %v4432 = vadd.f32 %v4413, %v4427
        %v4433 = vadd.f32 %v4414, %v4427
        %v4434 = vadd.f32 %v4415, %v4427
        %v4435 = vadd.f32 %v4416, %v4427
        %v4436 = vadd.f32 %v4417, %v4427
        %v4437 = vadd.f32 %v4418, %v4427
        %v4438 = vadd.f32 %v4419, %v4427
        %v4439 = vadd.f32 %v4420, %v4427
        %v4440 = vadd.f32 %v4421, %v4427
        %v4441 = vadd.f32 %v4422, %v4427
        %v4442 = vadd.f32 %v4423, %v4427
        %v4443 = vadd.f32 %v4424, %v4427
        %v4444 = vadd.f32 %v4425, %v4427
        %v4445 = vpack.c.bf16 %v4430, %v4429
        %v4446 = vpack.c.bf16 %v4432, %v4431
        %v4447 = vpack.c.bf16 %v4434, %v4433
        %v4448 = vpack.c.bf16 %v4436, %v4435
        %v4449 = vpack.c.bf16 %v4438, %v4437
        %v4450 = vpack.c.bf16 %v4440, %v4439
        %v4451 = vpack.c.bf16 %v4442, %v4441
        %v4452 = vpack.c.bf16 %v4444, %v4443
        %v4454 = vperm.slane %v502, 0
        %v4460 = vunpack.c.l.b16 %v498
        %v4461 = vunpack.c.l.b16 %v499
        %v4462 = vunpack.c.l.b16 %v500
        %v4463 = vunpack.c.l.b16 %v501
        %v4464 = vpack.c.b16 %v4461, %v4460
        %v4465 = vpack.c.b16 %v4463, %v4462
        %v4469 = vsel %vm520, %v4445, 0
        %v4472 = vsel %vm520, %v4446, 0
        %v4475 = vsel %vm520, %v4447, 0
        %v4478 = vsel %vm520, %v4448, 0
        %v4481 = vsel %vm520, %v4449, 0
        %v4484 = vsel %vm520, %v4450, 0
        %v4487 = vsel %vm520, %v4451, 0
        %v4490 = vsel %vm520, %v4452, 0
        %4492 = vmatpush.bf16.msra.mxu0 0
        %4493 = vmatpush.bf16.msra.mxu0 0
        %4494 = vmatpush.bf16.msra.mxu0 0
        %4495 = vmatpush.bf16.msra.mxu0 0
        %4496 = vmatpush.bf16.msra.mxu0 0
        %4497 = vmatpush.bf16.msra.mxu0 0
        %4498 = vmatpush.bf16.msra.mxu0 %v4465
        %4499 = vmatpush.bf16.msra.mxu0 %v4464
        %4500 = vmatmul.bf16.gmra.mxu0 %v4469
        %v4501 = vpop.f32.mrf.mxu0
        %v4502 = vadd.f32 %v4454, %v4501
        %v4503 = vpop.f32.mrf.mxu0
        %v4504 = vadd.f32 %v4454, %v4503
        %4505 = vmatmul.bf16.gmra.mxu0 %v4472
        %v4506 = vpop.f32.mrf.mxu0
        %v4507 = vadd.f32 %v4454, %v4506
        %v4508 = vpop.f32.mrf.mxu0
        %v4509 = vadd.f32 %v4454, %v4508
        %4510 = vmatmul.bf16.gmra.mxu0 %v4475
        %v4511 = vpop.f32.mrf.mxu0
        %v4512 = vadd.f32 %v4454, %v4511
        %v4513 = vpop.f32.mrf.mxu0
        %v4514 = vadd.f32 %v4454, %v4513
        %4515 = vmatmul.bf16.gmra.mxu0 %v4478
        %v4516 = vpop.f32.mrf.mxu0
        %v4517 = vadd.f32 %v4454, %v4516
        %v4518 = vpop.f32.mrf.mxu0
        %v4519 = vadd.f32 %v4454, %v4518
        %4520 = vmatmul.bf16.gmra.mxu0 %v4481
        %v4521 = vpop.f32.mrf.mxu0
        %v4522 = vadd.f32 %v4454, %v4521
        %v4523 = vpop.f32.mrf.mxu0
        %v4524 = vadd.f32 %v4454, %v4523
        %4525 = vmatmul.bf16.gmra.mxu0 %v4484
        %v4526 = vpop.f32.mrf.mxu0
        %v4527 = vadd.f32 %v4454, %v4526
        %v4528 = vpop.f32.mrf.mxu0
        %v4529 = vadd.f32 %v4454, %v4528
        %4530 = vmatmul.bf16.gmra.mxu0 %v4487
        %v4531 = vpop.f32.mrf.mxu0
        %v4532 = vadd.f32 %v4454, %v4531
        %v4533 = vpop.f32.mrf.mxu0
        %v4534 = vadd.f32 %v4454, %v4533
        %4535 = vmatmul.bf16.gmra.mxu0 %v4490
        %v4536 = vpop.f32.mrf.mxu0
        %v4537 = vadd.f32 %v4454, %v4536
        %v4538 = vpop.f32.mrf.mxu0
        %v4539 = vadd.f32 %v4454, %v4538
        %4540 = vdwg.mxu0
        %v4541 = vmax.f32 %v4502, 0.0
        %v4542 = vmax.f32 %v4504, 0.0
        %v4543 = vmax.f32 %v4507, 0.0
        %v4544 = vmax.f32 %v4509, 0.0
        %v4545 = vmax.f32 %v4512, 0.0
        %v4546 = vmax.f32 %v4514, 0.0
        %v4547 = vmax.f32 %v4517, 0.0
        %v4548 = vmax.f32 %v4519, 0.0
        %v4549 = vmax.f32 %v4522, 0.0
        %v4550 = vmax.f32 %v4524, 0.0
        %v4551 = vmax.f32 %v4527, 0.0
        %v4552 = vmax.f32 %v4529, 0.0
        %v4553 = vmax.f32 %v4532, 0.0
        %v4554 = vmax.f32 %v4534, 0.0
        %v4555 = vmax.f32 %v4537, 0.0
        %v4556 = vmax.f32 %v4539, 0.0
        %v4557 = vpack.c.bf16 %v4542, %v4541
        %v4558 = vpack.c.bf16 %v4544, %v4543
        %v4559 = vpack.c.bf16 %v4546, %v4545
        %v4560 = vpack.c.bf16 %v4548, %v4547
        %v4561 = vpack.c.bf16 %v4550, %v4549
        %v4562 = vpack.c.bf16 %v4552, %v4551
        %v4563 = vpack.c.bf16 %v4554, %v4553
        %v4564 = vpack.c.bf16 %v4556, %v4555
        %v4566 = vperm.slane %v519, 0
        %v4584 = vunpack.c.l.b16 %v503
        %v4585 = vunpack.c.l.b16 %v504
        %v4586 = vunpack.c.l.b16 %v505
        %v4587 = vunpack.c.l.b16 %v506
        %v4588 = vunpack.c.l.b16 %v507
        %v4589 = vunpack.c.l.b16 %v508
        %v4590 = vunpack.c.l.b16 %v509
        %v4591 = vunpack.c.l.b16 %v510
        %v4592 = vunpack.c.l.b16 %v511
        %v4593 = vunpack.c.l.b16 %v512
        %v4594 = vunpack.c.l.b16 %v513
        %v4595 = vunpack.c.l.b16 %v514
        %v4596 = vunpack.c.l.b16 %v515
        %v4597 = vunpack.c.l.b16 %v516
        %v4598 = vunpack.c.l.b16 %v517
        %v4599 = vunpack.c.l.b16 %v518
        %v4600 = vpack.c.b16 %v4585, %v4584
        %v4601 = vpack.c.b16 %v4587, %v4586
        %v4602 = vpack.c.b16 %v4589, %v4588
        %v4603 = vpack.c.b16 %v4591, %v4590
        %v4604 = vpack.c.b16 %v4593, %v4592
        %v4605 = vpack.c.b16 %v4595, %v4594
        %v4606 = vpack.c.b16 %v4597, %v4596
        %v4607 = vpack.c.b16 %v4599, %v4598
        %4616 = vmatpush.bf16.msra.mxu0 %v4607
        %4617 = vmatpush.bf16.msra.mxu0 %v4606
        %4618 = vmatpush.bf16.msra.mxu0 %v4605
        %4619 = vmatpush.bf16.msra.mxu0 %v4604
        %4620 = vmatpush.bf16.msra.mxu0 %v4603
        %4621 = vmatpush.bf16.msra.mxu0 %v4602
        %4622 = vmatpush.bf16.msra.mxu0 %v4601
        %4623 = vmatpush.bf16.msra.mxu0 %v4600
        %4624 = vmatmul.bf16.gmra.mxu0 %v4557
        %v4625 = vpop.f32.mrf.mxu0
        %v4626 = vadd.f32 %v4566, %v4625
        %v4627 = vpop.f32.mrf.mxu0
        %v4628 = vadd.f32 %v4566, %v4627
        %4629 = vmatmul.bf16.gmra.mxu0 %v4558
        %v4630 = vpop.f32.mrf.mxu0
        %v4631 = vadd.f32 %v4566, %v4630
        %v4632 = vpop.f32.mrf.mxu0
        %v4633 = vadd.f32 %v4566, %v4632
        %4634 = vmatmul.bf16.gmra.mxu0 %v4559
        %v4635 = vpop.f32.mrf.mxu0
        %v4636 = vadd.f32 %v4566, %v4635
        %v4637 = vpop.f32.mrf.mxu0
        %v4638 = vadd.f32 %v4566, %v4637
        %4639 = vmatmul.bf16.gmra.mxu0 %v4560
        %v4640 = vpop.f32.mrf.mxu0
        %v4641 = vadd.f32 %v4566, %v4640
        %v4642 = vpop.f32.mrf.mxu0
        %v4643 = vadd.f32 %v4566, %v4642
        %4644 = vmatmul.bf16.gmra.mxu0 %v4561
        %v4645 = vpop.f32.mrf.mxu0
        %v4646 = vadd.f32 %v4566, %v4645
        %v4647 = vpop.f32.mrf.mxu0
        %v4648 = vadd.f32 %v4566, %v4647
        %4649 = vmatmul.bf16.gmra.mxu0 %v4562
        %v4650 = vpop.f32.mrf.mxu0
        %v4651 = vadd.f32 %v4566, %v4650
        %v4652 = vpop.f32.mrf.mxu0
        %v4653 = vadd.f32 %v4566, %v4652
        %4654 = vmatmul.bf16.gmra.mxu0 %v4563
        %v4655 = vpop.f32.mrf.mxu0
        %v4656 = vadd.f32 %v4566, %v4655
        %v4657 = vpop.f32.mrf.mxu0
        %v4658 = vadd.f32 %v4566, %v4657
        %4659 = vmatmul.bf16.gmra.mxu0 %v4564
        %v4660 = vpop.f32.mrf.mxu0
        %v4661 = vadd.f32 %v4566, %v4660
        %v4662 = vpop.f32.mrf.mxu0
        %v4663 = vadd.f32 %v4566, %v4662
        %4664 = vdwg.mxu0
        %v4665 = vadd.f32 %v4039, %v4626
        %v4666 = vadd.f32 %v4040, %v4628
        %v4667 = vadd.f32 %v4041, %v4631
        %v4668 = vadd.f32 %v4042, %v4633
        %v4669 = vadd.f32 %v4043, %v4636
        %v4670 = vadd.f32 %v4044, %v4638
        %v4671 = vadd.f32 %v4045, %v4641
        %v4672 = vadd.f32 %v4046, %v4643
        %v4673 = vadd.f32 %v4047, %v4646
        %v4674 = vadd.f32 %v4048, %v4648
        %v4675 = vadd.f32 %v4049, %v4651
        %v4676 = vadd.f32 %v4050, %v4653
        %v4677 = vadd.f32 %v4051, %v4656
        %v4678 = vadd.f32 %v4052, %v4658
        %v4679 = vadd.f32 %v4053, %v4661
        %v4680 = vadd.f32 %v4054, %v4663
        %4681 = vst.msk [vmem:[%s436] sm:$0xff] %vm520, %v4665
        %4682 = vst.msk [vmem:[%s436 + $0x8] sm:$0xff] %vm520, %v4666
        %4683 = vst.msk [vmem:[%s436 + $0x10] sm:$0xff] %vm520, %v4667
        %4684 = vst.msk [vmem:[%s436 + $0x18] sm:$0xff] %vm520, %v4668
        %4685 = vst.msk [vmem:[%s436 + $0x20] sm:$0xff] %vm520, %v4669
        %4686 = vst.msk [vmem:[%s436 + $0x28] sm:$0xff] %vm520, %v4670
        %4687 = vst.msk [vmem:[%s436 + $0x30] sm:$0xff] %vm520, %v4671
        %4688 = vst.msk [vmem:[%s436 + $0x38] sm:$0xff] %vm520, %v4672
        %4689 = vst.msk [vmem:[%s436 + $0x40] sm:$0xff] %vm520, %v4673
        %4690 = vst.msk [vmem:[%s436 + $0x48] sm:$0xff] %vm520, %v4674
        %4691 = vst.msk [vmem:[%s436 + $0x50] sm:$0xff] %vm520, %v4675
        %4692 = vst.msk [vmem:[%s436 + $0x58] sm:$0xff] %vm520, %v4676
        %4693 = vst.msk [vmem:[%s436 + $0x60] sm:$0xff] %vm520, %v4677
        %4694 = vst.msk [vmem:[%s436 + $0x68] sm:$0xff] %vm520, %v4678
        %4695 = vst.msk [vmem:[%s436 + $0x70] sm:$0xff] %vm520, %v4679
        %4696 = vst.msk [vmem:[%s436 + $0x78] sm:$0xff] %vm520, %v4680
        %s4697 = sand.u32 %s313, 1
        %s4698 = scalar_lea.sflag [#allocation3], %s4697
        %s4699 = sand.u32 %s313, 1
        %s4700 = smul.addr %s4699, 128
        %s4701 = scalar_lea.vmem [#allocation2], %s4700
        // Predicated region
        $region73: #{msa2msa_forward.3} parent=71 // pred_check
          %p4702 = pneg %p323
        $region74: #{msa2msa_forward.3} parent=71 // pred_check_branch
          %4704 = sbr.rel (%p4702) target = $region76
        $region75: #{msa2msa_forward.3} parent=71 // pred_region
          %s4705 = smul.u32 8, %s27
          %4707 = vsyncadd %s4698, 0
          %s4708 = smul.addr %s4705, 2
          %s4709 = smul.addr %s4708, 8
          %s4710 = scalar_lea.hbm %s13, %s4709
          %s4711 = sshll.u32 %s4701, 4
          %s4712 = int_to_ptr.vmem [resolvable:$true] %s4711
          %s4713 = sshll.u32 %s4710, 4
          %s4714 = int_to_ptr.hbm [resolvable:$true] %s4713
          %4719 = dma.vmem_to_hbm [thread:$0]  %s4712, 2048, %s4714, %s4698, 128, 128, 8
        $region76: #{msa2msa_forward.3} parent=71 // pred_fallthru
          _
      $region72: #{msa2msa_forward.3} parent=5 // pred_fallthru
        _
      %p4720 = scmp.le.s32.totalorder 2, %s22
      // Predicated region
      $region77: #{msa2msa_forward.3} parent=5 // pred_check
        %p4721 = pneg %p4720
      $region78: #{msa2msa_forward.3} parent=5 // pred_check_branch
        %4723 = sbr.rel (%p4721) target = $region80
      $region79: #{msa2msa_forward.3} parent=5 // pred_region
        %s4724 = ssub.s32 %s22, 2
        // Predicated region
        $region81: #{msa2msa_forward.3} parent=79 // pred_check
          %p4725 = pneg %p329
        $region82: #{msa2msa_forward.3} parent=79 // pred_check_branch
          %4727 = sbr.rel (%p4725) target = $region84
        $region83: #{msa2msa_forward.3} parent=79 // pred_region
          %s4728 = sand.u32 %s314, 1
          %s4729 = scalar_lea.sflag [#allocation3], %s4728
          %s4730 = sand.u32 %s314, 1
          %s4731 = smul.addr %s4730, 128
          %s4732 = scalar_lea.vmem [#allocation2], %s4731
          %4734 = dma.done %s4729, 2048
        $region84: #{msa2msa_forward.3} parent=79 // pred_fallthru
          _
      $region80: #{msa2msa_forward.3} parent=5 // pred_fallthru
        _
    $region6: #{msa2msa_forward.3} parent=1 // loop_footer
      %s26 = sadd.s32 1, %s22
    $region7: #{msa2msa_forward.3} parent=1 // loop_footer_branch
      %21 = sbr.rel target = $region3
    $region8: #{msa2msa_forward.3} parent=1 // loop_exit
      _
    %4735 = vsyncpa [#allocation3], 1
    %s4736 = scalar_lea.sflag [#allocation3], 1
    %4737 = vsyncpa %s4736, 1

// kernel: msa2msa_forward.2
$region0: #{msa2msa_forward.2}
  #allocation0 [shape = 'u32[]', space=smem, size = 0x4, offset = 0x4, fixed_abs, tag = 'smem constant byte address 0x4 - core index']
  #allocation1 [shape = 'u32[72,128]{1,0:T(1,128)}', space=vmem, size = 0x9000, scoped, tag = 'internal scratch']
  %s0 = inlined_call_operand.vmem [shape: f32[32,8,32], index: 0, kind: input, shape index: {}]
  %s1 = inlined_call_operand.vmem [shape: f32[1,32], index: 1, kind: input, shape index: {}]
  %s2 = inlined_call_operand.vmem [shape: f32[1,32], index: 2, kind: input, shape index: {}]
  %s3 = inlined_call_operand.vmem [shape: bf16[32,96], index: 3, kind: input, shape index: {}]
  %s4 = inlined_call_operand.vmem [shape: f32[1,96], index: 4, kind: input, shape index: {}]
  %s5 = inlined_call_operand.vmem [shape: bf16[32,32], index: 5, kind: input, shape index: {}]
  %s6 = inlined_call_operand.vmem [shape: f32[1,32], index: 6, kind: input, shape index: {}]
  %s7 = inlined_call_operand.vmem [shape: f32[1,32], index: 7, kind: input, shape index: {}]
  %s8 = inlined_call_operand.vmem [shape: f32[1,32], index: 8, kind: input, shape index: {}]
  %s9 = inlined_call_operand.vmem [shape: bf16[32,128], index: 9, kind: input, shape index: {}]
  %s10 = inlined_call_operand.vmem [shape: f32[1,128], index: 10, kind: input, shape index: {}]
  %s11 = inlined_call_operand.vmem [shape: bf16[128,32], index: 11, kind: input, shape index: {}]
  %s12 = inlined_call_operand.vmem [shape: f32[1,32], index: 12, kind: input, shape index: {}]
  %s13 = inlined_call_operand.vmem [shape: f32[32,8,32], index: 13, kind: output, shape index: {}]
  %s14 = sld [smem:[#allocation0]]
  $region85: #{msa2msa_forward.2} parent=0
    _
  %s16 = ssub.s32 1, %s14
  %s17 = scalar_select 0, %s16, %s14
  loop: start=0, step=1, limit=4
  $region2: #{msa2msa_forward.2} parent=0 // loop_pre_header
    _
  $region3: #{msa2msa_forward.2} parent=0 // loop_header
    %s19 = sphi 0, %s23
    %p20 = scmp.ge.s32.totalorder %s19, 4
    %s29 = sphi 0, %s31
    %s32 = sphi 0, %s29
    %s33 = sphi 0, %s32
    %s49 = sphi 0, %s33
    %s53 = sphi 0, %s53
    %s55 = sphi 0, %s53
    %s56 = sphi 0, %s55
    %s70 = sphi 0, %s56
    %s74 = sphi 0, %s74
    %s76 = sphi 0, %s74
    %s77 = sphi 0, %s76
    %s91 = sphi 0, %s77
    %s95 = sphi 0, %s95
    %s97 = sphi 0, %s95
    %s98 = sphi 0, %s97
    %s112 = sphi 0, %s98
    %s116 = sphi 0, %s116
    %s118 = sphi 0, %s116
    %s119 = sphi 0, %s118
    %s133 = sphi 0, %s119
    %s137 = sphi 0, %s137
    %s139 = sphi 0, %s137
    %s140 = sphi 0, %s139
    %s154 = sphi 0, %s140
    %s158 = sphi 0, %s158
    %s160 = sphi 0, %s158
    %s161 = sphi 0, %s160
    %s175 = sphi 0, %s161
    %s179 = sphi 0, %s179
    %s181 = sphi 0, %s179
    %s182 = sphi 0, %s181
    %s196 = sphi 0, %s182
    %s200 = sphi 0, %s200
    %s202 = sphi 0, %s200
    %s203 = sphi 0, %s202
    %s217 = sphi 0, %s203
    %s221 = sphi 0, %s221
    %s223 = sphi 0, %s221
    %s224 = sphi 0, %s223
    %s238 = sphi 0, %s224
    %s242 = sphi 0, %s242
    %s244 = sphi 0, %s242
    %s245 = sphi 0, %s244
    %s259 = sphi 0, %s245
    %s263 = sphi 0, %s263
    %s265 = sphi 0, %s263
    %s266 = sphi 0, %s265
    %s280 = sphi 0, %s266
    %s284 = sphi 0, %s284
    %s286 = sphi 0, %s284
    %s287 = sphi 0, %s286
    %s301 = sphi 0, %s287
    %s307 = sphi 0, %s309
    %s310 = sphi 0, %s307
    %s311 = sphi 0, %s310
    %s327 = sphi 0, %s311
  $region4: #{msa2msa_forward.2} parent=0 // loop_header_branch
    %22 = sbr.rel (%p20) target = $region8
  $region5: #{msa2msa_forward.2} parent=0 // loop_body
    %s24 = ssub.s32 %s19, 1
    %s25 = ssub.s32 %s19, 2
    %s26 = sadd.s32 %s19, 1
    %s27 = ssub.s32 %s19, %s26
    %p28 = scmp.eq.s32.totalorder %s27, 0
    %s30 = sadd.s32 %s29, 1
    %s31 = scalar_select %p28, %s29, %s30
    %p34 = pneg %p28
    %p35 = scmp.eq.s32.totalorder %s19, 1
    %p36 = por %p34, %p35
    %p37 = scmp.ne.s32.totalorder %s29, %s32
    %p38 = scmp.eq.s32.totalorder %s19, 0
    %p39 = por %p37, %p38
    %p40 = scmp.ne.s32.totalorder %s29, %s32
    %p41 = scmp.eq.s32.totalorder %s24, 1
    %p42 = por %p40, %p41
    %p43 = scmp.ne.s32.totalorder %s32, %s33
    %p44 = scmp.eq.s32.totalorder %s24, 0
    %p45 = por %p43, %p44
    %p46 = scmp.ne.s32.totalorder %s32, %s33
    %p47 = scmp.eq.s32.totalorder %s25, 1
    %p48 = por %p46, %p47
    %p50 = scmp.ne.s32.totalorder %s33, %s49
    %p51 = scmp.eq.s32.totalorder %s25, 0
    %p52 = por %p50, %p51
    %s54 = sadd.s32 %s53, 1
    %p57 = scmp.eq.s32.totalorder %s19, 1
    %p58 = scmp.ne.s32.totalorder %s53, %s55
    %p59 = scmp.eq.s32.totalorder %s19, 0
    %p60 = por %p58, %p59
    %p61 = scmp.ne.s32.totalorder %s53, %s55
    %p62 = scmp.eq.s32.totalorder %s24, 1
    %p63 = por %p61, %p62
    %p64 = scmp.ne.s32.totalorder %s55, %s56
    %p65 = scmp.eq.s32.totalorder %s24, 0
    %p66 = por %p64, %p65
    %p67 = scmp.ne.s32.totalorder %s55, %s56
    %p68 = scmp.eq.s32.totalorder %s25, 1
    %p69 = por %p67, %p68
    %p71 = scmp.ne.s32.totalorder %s56, %s70
    %p72 = scmp.eq.s32.totalorder %s25, 0
    %p73 = por %p71, %p72
    %s75 = sadd.s32 %s74, 1
    %p78 = scmp.eq.s32.totalorder %s19, 1
    %p79 = scmp.ne.s32.totalorder %s74, %s76
    %p80 = scmp.eq.s32.totalorder %s19, 0
    %p81 = por %p79, %p80
    %p82 = scmp.ne.s32.totalorder %s74, %s76
    %p83 = scmp.eq.s32.totalorder %s24, 1
    %p84 = por %p82, %p83
    %p85 = scmp.ne.s32.totalorder %s76, %s77
    %p86 = scmp.eq.s32.totalorder %s24, 0
    %p87 = por %p85, %p86
    %p88 = scmp.ne.s32.totalorder %s76, %s77
    %p89 = scmp.eq.s32.totalorder %s25, 1
    %p90 = por %p88, %p89
    %p92 = scmp.ne.s32.totalorder %s77, %s91
    %p93 = scmp.eq.s32.totalorder %s25, 0
    %p94 = por %p92, %p93
    %s96 = sadd.s32 %s95, 1
    %p99 = scmp.eq.s32.totalorder %s19, 1
    %p100 = scmp.ne.s32.totalorder %s95, %s97
    %p101 = scmp.eq.s32.totalorder %s19, 0
    %p102 = por %p100, %p101
    %p103 = scmp.ne.s32.totalorder %s95, %s97
    %p104 = scmp.eq.s32.totalorder %s24, 1
    %p105 = por %p103, %p104
    %p106 = scmp.ne.s32.totalorder %s97, %s98
    %p107 = scmp.eq.s32.totalorder %s24, 0
    %p108 = por %p106, %p107
    %p109 = scmp.ne.s32.totalorder %s97, %s98
    %p110 = scmp.eq.s32.totalorder %s25, 1
    %p111 = por %p109, %p110
    %p113 = scmp.ne.s32.totalorder %s98, %s112
    %p114 = scmp.eq.s32.totalorder %s25, 0
    %p115 = por %p113, %p114
    %s117 = sadd.s32 %s116, 1
    %p120 = scmp.eq.s32.totalorder %s19, 1
    %p121 = scmp.ne.s32.totalorder %s116, %s118
    %p122 = scmp.eq.s32.totalorder %s19, 0
    %p123 = por %p121, %p122
    %p124 = scmp.ne.s32.totalorder %s116, %s118
    %p125 = scmp.eq.s32.totalorder %s24, 1
    %p126 = por %p124, %p125
    %p127 = scmp.ne.s32.totalorder %s118, %s119
    %p128 = scmp.eq.s32.totalorder %s24, 0
    %p129 = por %p127, %p128
    %p130 = scmp.ne.s32.totalorder %s118, %s119
    %p131 = scmp.eq.s32.totalorder %s25, 1
    %p132 = por %p130, %p131
    %p134 = scmp.ne.s32.totalorder %s119, %s133
    %p135 = scmp.eq.s32.totalorder %s25, 0
    %p136 = por %p134, %p135
    %s138 = sadd.s32 %s137, 1
    %p141 = scmp.eq.s32.totalorder %s19, 1
    %p142 = scmp.ne.s32.totalorder %s137, %s139
    %p143 = scmp.eq.s32.totalorder %s19, 0
    %p144 = por %p142, %p143
    %p145 = scmp.ne.s32.totalorder %s137, %s139
    %p146 = scmp.eq.s32.totalorder %s24, 1
    %p147 = por %p145, %p146
    %p148 = scmp.ne.s32.totalorder %s139, %s140
    %p149 = scmp.eq.s32.totalorder %s24, 0
    %p150 = por %p148, %p149
    %p151 = scmp.ne.s32.totalorder %s139, %s140
    %p152 = scmp.eq.s32.totalorder %s25, 1
    %p153 = por %p151, %p152
    %p155 = scmp.ne.s32.totalorder %s140, %s154
    %p156 = scmp.eq.s32.totalorder %s25, 0
    %p157 = por %p155, %p156
    %s159 = sadd.s32 %s158, 1
    %p162 = scmp.eq.s32.totalorder %s19, 1
    %p163 = scmp.ne.s32.totalorder %s158, %s160
    %p164 = scmp.eq.s32.totalorder %s19, 0
    %p165 = por %p163, %p164
    %p166 = scmp.ne.s32.totalorder %s158, %s160
    %p167 = scmp.eq.s32.totalorder %s24, 1
    %p168 = por %p166, %p167
    %p169 = scmp.ne.s32.totalorder %s160, %s161
    %p170 = scmp.eq.s32.totalorder %s24, 0
    %p171 = por %p169, %p170
    %p172 = scmp.ne.s32.totalorder %s160, %s161
    %p173 = scmp.eq.s32.totalorder %s25, 1
    %p174 = por %p172, %p173
    %p176 = scmp.ne.s32.totalorder %s161, %s175
    %p177 = scmp.eq.s32.totalorder %s25, 0
    %p178 = por %p176, %p177
    %s180 = sadd.s32 %s179, 1
    %p183 = scmp.eq.s32.totalorder %s19, 1
    %p184 = scmp.ne.s32.totalorder %s179, %s181
    %p185 = scmp.eq.s32.totalorder %s19, 0
    %p186 = por %p184, %p185
    %p187 = scmp.ne.s32.totalorder %s179, %s181
    %p188 = scmp.eq.s32.totalorder %s24, 1
    %p189 = por %p187, %p188
    %p190 = scmp.ne.s32.totalorder %s181, %s182
    %p191 = scmp.eq.s32.totalorder %s24, 0
    %p192 = por %p190, %p191
    %p193 = scmp.ne.s32.totalorder %s181, %s182
    %p194 = scmp.eq.s32.totalorder %s25, 1
    %p195 = por %p193, %p194
    %p197 = scmp.ne.s32.totalorder %s182, %s196
    %p198 = scmp.eq.s32.totalorder %s25, 0
    %p199 = por %p197, %p198
    %s201 = sadd.s32 %s200, 1
    %p204 = scmp.eq.s32.totalorder %s19, 1
    %p205 = scmp.ne.s32.totalorder %s200, %s202
    %p206 = scmp.eq.s32.totalorder %s19, 0
    %p207 = por %p205, %p206
    %p208 = scmp.ne.s32.totalorder %s200, %s202
    %p209 = scmp.eq.s32.totalorder %s24, 1
    %p210 = por %p208, %p209
    %p211 = scmp.ne.s32.totalorder %s202, %s203
    %p212 = scmp.eq.s32.totalorder %s24, 0
    %p213 = por %p211, %p212
    %p214 = scmp.ne.s32.totalorder %s202, %s203
    %p215 = scmp.eq.s32.totalorder %s25, 1
    %p216 = por %p214, %p215
    %p218 = scmp.ne.s32.totalorder %s203, %s217
    %p219 = scmp.eq.s32.totalorder %s25, 0
    %p220 = por %p218, %p219
    %s222 = sadd.s32 %s221, 1
    %p225 = scmp.eq.s32.totalorder %s19, 1
    %p226 = scmp.ne.s32.totalorder %s221, %s223
    %p227 = scmp.eq.s32.totalorder %s19, 0
    %p228 = por %p226, %p227
    %p229 = scmp.ne.s32.totalorder %s221, %s223
    %p230 = scmp.eq.s32.totalorder %s24, 1
    %p231 = por %p229, %p230
    %p232 = scmp.ne.s32.totalorder %s223, %s224
    %p233 = scmp.eq.s32.totalorder %s24, 0
    %p234 = por %p232, %p233
    %p235 = scmp.ne.s32.totalorder %s223, %s224
    %p236 = scmp.eq.s32.totalorder %s25, 1
    %p237 = por %p235, %p236
    %p239 = scmp.ne.s32.totalorder %s224, %s238
    %p240 = scmp.eq.s32.totalorder %s25, 0
    %p241 = por %p239, %p240
    %s243 = sadd.s32 %s242, 1
    %p246 = scmp.eq.s32.totalorder %s19, 1
    %p247 = scmp.ne.s32.totalorder %s242, %s244
    %p248 = scmp.eq.s32.totalorder %s19, 0
    %p249 = por %p247, %p248
    %p250 = scmp.ne.s32.totalorder %s242, %s244
    %p251 = scmp.eq.s32.totalorder %s24, 1
    %p252 = por %p250, %p251
    %p253 = scmp.ne.s32.totalorder %s244, %s245
    %p254 = scmp.eq.s32.totalorder %s24, 0
    %p255 = por %p253, %p254
    %p256 = scmp.ne.s32.totalorder %s244, %s245
    %p257 = scmp.eq.s32.totalorder %s25, 1
    %p258 = por %p256, %p257
    %p260 = scmp.ne.s32.totalorder %s245, %s259
    %p261 = scmp.eq.s32.totalorder %s25, 0
    %p262 = por %p260, %p261
    %s264 = sadd.s32 %s263, 1
    %p267 = scmp.eq.s32.totalorder %s19, 1
    %p268 = scmp.ne.s32.totalorder %s263, %s265
    %p269 = scmp.eq.s32.totalorder %s19, 0
    %p270 = por %p268, %p269
    %p271 = scmp.ne.s32.totalorder %s263, %s265
    %p272 = scmp.eq.s32.totalorder %s24, 1
    %p273 = por %p271, %p272
    %p274 = scmp.ne.s32.totalorder %s265, %s266
    %p275 = scmp.eq.s32.totalorder %s24, 0
    %p276 = por %p274, %p275
    %p277 = scmp.ne.s32.totalorder %s265, %s266
    %p278 = scmp.eq.s32.totalorder %s25, 1
    %p279 = por %p277, %p278
    %p281 = scmp.ne.s32.totalorder %s266, %s280
    %p282 = scmp.eq.s32.totalorder %s25, 0
    %p283 = por %p281, %p282
    %s285 = sadd.s32 %s284, 1
    %p288 = scmp.eq.s32.totalorder %s19, 1
    %p289 = scmp.ne.s32.totalorder %s284, %s286
    %p290 = scmp.eq.s32.totalorder %s19, 0
    %p291 = por %p289, %p290
    %p292 = scmp.ne.s32.totalorder %s284, %s286
    %p293 = scmp.eq.s32.totalorder %s24, 1
    %p294 = por %p292, %p293
    %p295 = scmp.ne.s32.totalorder %s286, %s287
    %p296 = scmp.eq.s32.totalorder %s24, 0
    %p297 = por %p295, %p296
    %p298 = scmp.ne.s32.totalorder %s286, %s287
    %p299 = scmp.eq.s32.totalorder %s25, 1
    %p300 = por %p298, %p299
    %p302 = scmp.ne.s32.totalorder %s287, %s301
    %p303 = scmp.eq.s32.totalorder %s25, 0
    %p304 = por %p302, %p303
    %s305 = ssub.s32 %s19, %s26
    %p306 = scmp.eq.s32.totalorder %s305, 0
    %s308 = sadd.s32 %s307, 1
    %s309 = scalar_select %p306, %s307, %s308
    %p312 = pneg %p306
    %p313 = scmp.eq.s32.totalorder %s19, 1
    %p314 = por %p312, %p313
    %p315 = scmp.ne.s32.totalorder %s307, %s310
    %p316 = scmp.eq.s32.totalorder %s19, 0
    %p317 = por %p315, %p316
    %p318 = scmp.ne.s32.totalorder %s307, %s310
    %p319 = scmp.eq.s32.totalorder %s24, 1
    %p320 = por %p318, %p319
    %p321 = scmp.ne.s32.totalorder %s310, %s311
    %p322 = scmp.eq.s32.totalorder %s24, 0
    %p323 = por %p321, %p322
    %p324 = scmp.ne.s32.totalorder %s310, %s311
    %p325 = scmp.eq.s32.totalorder %s25, 1
    %p326 = por %p324, %p325
    %p328 = scmp.ne.s32.totalorder %s311, %s327
    %p329 = scmp.eq.s32.totalorder %s25, 0
    %p330 = por %p328, %p329
    %p331 = scmp.le.s32.totalorder 1, %s19
    %p332 = scmp.lt.s32.totalorder %s19, 3
    %p333 = pnand %p331, %p332
    %p334 = pneg %p333
    // Predicated region
    $region9: #{msa2msa_forward.2} parent=5 // pred_check
      _
    $region10: #{msa2msa_forward.2} parent=5 // pred_check_branch
      %336 = sbr.rel (%p333) target = $region12
    $region11: #{msa2msa_forward.2} parent=5 // pred_region
      %s337 = ssub.s32 %s19, 1
      // Predicated region
      $region13: #{msa2msa_forward.2} parent=11 // pred_check
        %p338 = pneg %p66
      $region14: #{msa2msa_forward.2} parent=11 // pred_check_branch
        %340 = sbr.rel (%p338) target = $region16
      $region15: #{msa2msa_forward.2} parent=11 // pred_region
        _
      $region16: #{msa2msa_forward.2} parent=11 // pred_fallthru
        _
      // Predicated region
      $region17: #{msa2msa_forward.2} parent=11 // pred_check
        %p341 = pneg %p87
      $region18: #{msa2msa_forward.2} parent=11 // pred_check_branch
        %343 = sbr.rel (%p341) target = $region20
      $region19: #{msa2msa_forward.2} parent=11 // pred_region
        _
      $region20: #{msa2msa_forward.2} parent=11 // pred_fallthru
        _
      // Predicated region
      $region21: #{msa2msa_forward.2} parent=11 // pred_check
        %p344 = pneg %p108
      $region22: #{msa2msa_forward.2} parent=11 // pred_check_branch
        %346 = sbr.rel (%p344) target = $region24
      $region23: #{msa2msa_forward.2} parent=11 // pred_region
        _
      $region24: #{msa2msa_forward.2} parent=11 // pred_fallthru
        _
      // Predicated region
      $region25: #{msa2msa_forward.2} parent=11 // pred_check
        %p347 = pneg %p129
      $region26: #{msa2msa_forward.2} parent=11 // pred_check_branch
        %349 = sbr.rel (%p347) target = $region28
      $region27: #{msa2msa_forward.2} parent=11 // pred_region
        _
      $region28: #{msa2msa_forward.2} parent=11 // pred_fallthru
        _
      // Predicated region
      $region29: #{msa2msa_forward.2} parent=11 // pred_check
        %p350 = pneg %p150
      $region30: #{msa2msa_forward.2} parent=11 // pred_check_branch
        %352 = sbr.rel (%p350) target = $region32
      $region31: #{msa2msa_forward.2} parent=11 // pred_region
        _
      $region32: #{msa2msa_forward.2} parent=11 // pred_fallthru
        _
      // Predicated region
      $region33: #{msa2msa_forward.2} parent=11 // pred_check
        %p353 = pneg %p171
      $region34: #{msa2msa_forward.2} parent=11 // pred_check_branch
        %355 = sbr.rel (%p353) target = $region36
      $region35: #{msa2msa_forward.2} parent=11 // pred_region
        _
      $region36: #{msa2msa_forward.2} parent=11 // pred_fallthru
        _
      // Predicated region
      $region37: #{msa2msa_forward.2} parent=11 // pred_check
        %p356 = pneg %p192
      $region38: #{msa2msa_forward.2} parent=11 // pred_check_branch
        %358 = sbr.rel (%p356) target = $region40
      $region39: #{msa2msa_forward.2} parent=11 // pred_region
        _
      $region40: #{msa2msa_forward.2} parent=11 // pred_fallthru
        _
      // Predicated region
      $region41: #{msa2msa_forward.2} parent=11 // pred_check
        %p359 = pneg %p213
      $region42: #{msa2msa_forward.2} parent=11 // pred_check_branch
        %361 = sbr.rel (%p359) target = $region44
      $region43: #{msa2msa_forward.2} parent=11 // pred_region
        _
      $region44: #{msa2msa_forward.2} parent=11 // pred_fallthru
        _
      // Predicated region
      $region45: #{msa2msa_forward.2} parent=11 // pred_check
        %p362 = pneg %p234
      $region46: #{msa2msa_forward.2} parent=11 // pred_check_branch
        %364 = sbr.rel (%p362) target = $region48
      $region47: #{msa2msa_forward.2} parent=11 // pred_region
        _
      $region48: #{msa2msa_forward.2} parent=11 // pred_fallthru
        _
      // Predicated region
      $region49: #{msa2msa_forward.2} parent=11 // pred_check
        %p365 = pneg %p255
      $region50: #{msa2msa_forward.2} parent=11 // pred_check_branch
        %367 = sbr.rel (%p365) target = $region52
      $region51: #{msa2msa_forward.2} parent=11 // pred_region
        _
      $region52: #{msa2msa_forward.2} parent=11 // pred_fallthru
        _
      // Predicated region
      $region53: #{msa2msa_forward.2} parent=11 // pred_check
        %p368 = pneg %p276
      $region54: #{msa2msa_forward.2} parent=11 // pred_check_branch
        %370 = sbr.rel (%p368) target = $region56
      $region55: #{msa2msa_forward.2} parent=11 // pred_region
        _
      $region56: #{msa2msa_forward.2} parent=11 // pred_fallthru
        _
      // Predicated region
      $region57: #{msa2msa_forward.2} parent=11 // pred_check
        %p371 = pneg %p297
      $region58: #{msa2msa_forward.2} parent=11 // pred_check_branch
        %373 = sbr.rel (%p371) target = $region60
      $region59: #{msa2msa_forward.2} parent=11 // pred_region
        _
      $region60: #{msa2msa_forward.2} parent=11 // pred_fallthru
        _
    $region12: #{msa2msa_forward.2} parent=5 // pred_fallthru
      _
    %p374 = scmp.lt.s32.totalorder %s19, 2
    // Predicated region
    $region61: #{msa2msa_forward.2} parent=5 // pred_check
      %p375 = pneg %p374
    $region62: #{msa2msa_forward.2} parent=5 // pred_check_branch
      %377 = sbr.rel (%p375) target = $region64
    $region63: #{msa2msa_forward.2} parent=5 // pred_region
      // Predicated region
      $region65: #{msa2msa_forward.2} parent=63 // pred_check
        %p378 = pneg %p39
      $region66: #{msa2msa_forward.2} parent=63 // pred_check_branch
        %380 = sbr.rel (%p378) target = $region68
      $region67: #{msa2msa_forward.2} parent=63 // pred_region
        %s381 = smul.u32 16, %s19
        %p382 = scmp.lt.s32.totalorder %s381, 31
        %s383 = scalar_select %p382, %s381, 31
        %s384 = smul.addr %s383, 8
        %s385 = scalar_lea.vmem %s0, %s384
        %s386 = smul.u32 16, %s19
      $region68: #{msa2msa_forward.2} parent=63 // pred_fallthru
        _
    $region64: #{msa2msa_forward.2} parent=5 // pred_fallthru
      _
    %p387 = scmp.le.s32.totalorder 1, %s19
    %p388 = scmp.lt.s32.totalorder %s19, 3
    %p389 = pnand %p387, %p388
    %p390 = pneg %p389
    // Predicated region
    $region69: #{msa2msa_forward.2} parent=5 // pred_check
      _
    $region70: #{msa2msa_forward.2} parent=5 // pred_check_branch
      %392 = sbr.rel (%p389) target = $region72
    $region71: #{msa2msa_forward.2} parent=5 // pred_region
      %s393 = ssub.s32 %s19, 1
      %s394 = smul.u32 16, %s24
      %p395 = scmp.lt.s32.totalorder %s394, 31
      %s396 = scalar_select %p395, %s394, 31
      %s397 = smul.addr %s396, 8
      %s398 = scalar_lea.vmem %s0, %s397
      %p399 = pneg %p45
      %p400 = pneg %p42
      %p401 = pneg %p66
      %p402 = pneg %p63
      %p403 = pneg %p87
      %p404 = pneg %p84
      %p405 = pneg %p108
      %p406 = pneg %p105
      %p407 = pneg %p129
      %p408 = pneg %p126
      %p409 = pneg %p150
      %p410 = pneg %p147
      %p411 = pneg %p171
      %p412 = pneg %p168
      %p413 = pneg %p192
      %p414 = pneg %p189
      %p415 = pneg %p213
      %p416 = pneg %p210
      %p417 = pneg %p234
      %p418 = pneg %p231
      %p419 = pneg %p255
      %p420 = pneg %p252
      %p421 = pneg %p276
      %p422 = pneg %p273
      %p423 = pneg %p297
      %p424 = pneg %p294
      %p425 = pneg %p323
      %p426 = pneg %p320
      %s427 = smul.u32 16, %s24
      %p428 = scmp.lt.s32.totalorder %s427, 31
      %s429 = scalar_select %p428, %s427, 31
      %s430 = smul.addr %s429, 8
      %s431 = scalar_lea.vmem %s13, %s430
      %s432 = smul.u32 16, %s24
      %p433 = scmp.lt.s32.totalorder %s432, 31
      %s434 = scalar_select %p433, %s432, 31
      %s435 = smul.addr %s434, 8
      %s436 = scalar_lea.vmem %s0, %s435
      %s437 = smul.u32 16, %s24
      %s438 = smul.u32 16, %s24
      %p439 = scmp.lt.s32.totalorder %s438, 31
      %s440 = scalar_select %p439, %s438, 31
      %s441 = smul.addr %s440, 8
      %s442 = scalar_lea.vmem %s13, %s441
      %s443 = smul.u32 16, %s24
      %v445 = vlaneseq
      %v446 = vand.u32 %v445, 127
      %vm447 = vcmp.ge.s32.totalorder %v446, 0
      %vm448 = vcmp.ge.s32.totalorder %v446, 8
      %vm449 = vcmp.ge.s32.totalorder %v446, 16
      %vm450 = vcmp.ge.s32.totalorder %v446, 24
      %vm451 = vcmp.lt.s32.totalorder %v446, 8
      %vm452 = vcmp.lt.s32.totalorder %v446, 16
      %vm453 = vcmp.lt.s32.totalorder %v446, 24
      %vm454 = vcmp.lt.s32.totalorder %v446, 32
      %vm455 = vmand %vm447, %vm451
      %vm456 = vmand %vm448, %vm452
      %vm457 = vmand %vm449, %vm453
      %vm458 = vmand %vm450, %vm454
      %v459 = vsel %vm455, 1, 0
      %v460 = vsel %vm456, 1, 0
      %v461 = vsel %vm457, 1, 0
      %v462 = vsel %vm458, 1, 0
      %v463 = vcvt.s32.f32 %v459
      %v464 = vcvt.s32.f32 %v460
      %v465 = vcvt.s32.f32 %v461
      %v466 = vcvt.s32.f32 %v462
      %v467 = vld [vmem:[%s436] sm:$0xff]
      %v468 = vld [vmem:[%s436 + $0x8] sm:$0xff]
      %v469 = vld [vmem:[%s436 + $0x10] sm:$0xff]
      %v470 = vld [vmem:[%s436 + $0x18] sm:$0xff]
      %v471 = vld [vmem:[%s436 + $0x20] sm:$0xff]
      %v472 = vld [vmem:[%s436 + $0x28] sm:$0xff]
      %v473 = vld [vmem:[%s436 + $0x30] sm:$0xff]
      %v474 = vld [vmem:[%s436 + $0x38] sm:$0xff]
      %v475 = vld [vmem:[%s436 + $0x40] sm:$0xff]
      %v476 = vld [vmem:[%s436 + $0x48] sm:$0xff]
      %v477 = vld [vmem:[%s436 + $0x50] sm:$0xff]
      %v478 = vld [vmem:[%s436 + $0x58] sm:$0xff]
      %v479 = vld [vmem:[%s436 + $0x60] sm:$0xff]
      %v480 = vld [vmem:[%s436 + $0x68] sm:$0xff]
      %v481 = vld [vmem:[%s436 + $0x70] sm:$0xff]
      %v482 = vld [vmem:[%s436 + $0x78] sm:$0xff]
      %v483 = vld [vmem:[%s1] sm:$0x1]
      %v484 = vld [vmem:[%s2] sm:$0x1]
      %v485 = vld [vmem:[%s3] sm:$0xf]
      %v486 = vld [vmem:[%s3 + $0x4] sm:$0xf]
      %v487 = vld [vmem:[%s3 + $0x8] sm:$0xf]
      %v488 = vld [vmem:[%s3 + $0xc] sm:$0xf]
      %v489 = vld [vmem:[%s4] sm:$0x1]
      %v490 = vld [vmem:[%s5] sm:$0xf]
      %v491 = vld [vmem:[%s5 + $0x4] sm:$0xf]
      %v492 = vld [vmem:[%s5 + $0x8] sm:$0xf]
      %v493 = vld [vmem:[%s5 + $0xc] sm:$0xf]
      %v494 = vld [vmem:[%s6] sm:$0x1]
      %v495 = vld [vmem:[%s7] sm:$0x1]
      %v496 = vld [vmem:[%s8] sm:$0x1]
      %v497 = vld [vmem:[%s9] sm:$0xf]
      %v498 = vld [vmem:[%s9 + $0x4] sm:$0xf]
      %v499 = vld [vmem:[%s9 + $0x8] sm:$0xf]
      %v500 = vld [vmem:[%s9 + $0xc] sm:$0xf]
      %v501 = vld [vmem:[%s10] sm:$0x1]
      %v502 = vld [vmem:[%s11] sm:$0xf]
      %v503 = vld [vmem:[%s11 + $0x4] sm:$0xf]
      %v504 = vld [vmem:[%s11 + $0x8] sm:$0xf]
      %v505 = vld [vmem:[%s11 + $0xc] sm:$0xf]
      %v506 = vld [vmem:[%s11 + $0x10] sm:$0xf]
      %v507 = vld [vmem:[%s11 + $0x14] sm:$0xf]
      %v508 = vld [vmem:[%s11 + $0x18] sm:$0xf]
      %v509 = vld [vmem:[%s11 + $0x1c] sm:$0xf]
      %v510 = vld [vmem:[%s11 + $0x20] sm:$0xf]
      %v511 = vld [vmem:[%s11 + $0x24] sm:$0xf]
      %v512 = vld [vmem:[%s11 + $0x28] sm:$0xf]
      %v513 = vld [vmem:[%s11 + $0x2c] sm:$0xf]
      %v514 = vld [vmem:[%s11 + $0x30] sm:$0xf]
      %v515 = vld [vmem:[%s11 + $0x34] sm:$0xf]
      %v516 = vld [vmem:[%s11 + $0x38] sm:$0xf]
      %v517 = vld [vmem:[%s11 + $0x3c] sm:$0xf]
      %v518 = vld [vmem:[%s12] sm:$0x1]
      %vm519 = vcmask 261120
      %v520 = vsel %vm519, %v467, 0.0
      %521 = vadd.xlane.f32.xlu0 %v520
      %v522 = vpop.xlane.xlu0 %521
      %v523 = vsel %vm519, %v468, 0.0
      %524 = vadd.xlane.f32.xlu0 %v523
      %v525 = vpop.xlane.xlu0 %524
      %v526 = vsel %vm519, %v469, 0.0
      %527 = vadd.xlane.f32.xlu0 %v526
      %v528 = vpop.xlane.xlu0 %527
      %v529 = vsel %vm519, %v470, 0.0
      %530 = vadd.xlane.f32.xlu0 %v529
      %v531 = vpop.xlane.xlu0 %530
      %v532 = vsel %vm519, %v471, 0.0
      %533 = vadd.xlane.f32.xlu0 %v532
      %v534 = vpop.xlane.xlu0 %533
      %v535 = vsel %vm519, %v472, 0.0
      %536 = vadd.xlane.f32.xlu0 %v535
      %v537 = vpop.xlane.xlu0 %536
      %v538 = vsel %vm519, %v473, 0.0
      %539 = vadd.xlane.f32.xlu0 %v538
      %v540 = vpop.xlane.xlu0 %539
      %v541 = vsel %vm519, %v474, 0.0
      %542 = vadd.xlane.f32.xlu0 %v541
      %v543 = vpop.xlane.xlu0 %542
      %v544 = vsel %vm519, %v475, 0.0
      %545 = vadd.xlane.f32.xlu0 %v544
      %v546 = vpop.xlane.xlu0 %545
      %v547 = vsel %vm519, %v476, 0.0
      %548 = vadd.xlane.f32.xlu0 %v547
      %v549 = vpop.xlane.xlu0 %548
      %v550 = vsel %vm519, %v477, 0.0
      %551 = vadd.xlane.f32.xlu0 %v550
      %v552 = vpop.xlane.xlu0 %551
      %v553 = vsel %vm519, %v478, 0.0
      %554 = vadd.xlane.f32.xlu0 %v553
      %v555 = vpop.xlane.xlu0 %554
      %v556 = vsel %vm519, %v479, 0.0
      %557 = vadd.xlane.f32.xlu0 %v556
      %v558 = vpop.xlane.xlu0 %557
      %v559 = vsel %vm519, %v480, 0.0
      %560 = vadd.xlane.f32.xlu0 %v559
      %v561 = vpop.xlane.xlu0 %560
      %v562 = vsel %vm519, %v481, 0.0
      %563 = vadd.xlane.f32.xlu0 %v562
      %v564 = vpop.xlane.xlu0 %563
      %v565 = vsel %vm519, %v482, 0.0
      %566 = vadd.xlane.f32.xlu0 %v565
      %v567 = vpop.xlane.xlu0 %566
      %v568 = vrcp.pop 32.0
      %v569 = vmul.f32 32.0, %v568
      %v570 = vsub.f32 1.0, %v569
      %v571 = vmul.f32 %v568, %v570
      %v572 = vadd.f32 %v568, %v571
      %vm573 = vweird.f32 %v568
      %v574 = vsel %vm573, %v568, %v572
      %v575 = vmul.f32 %v522, %v574
      %v576 = vmul.f32 %v525, %v574
      %v577 = vmul.f32 %v528, %v574
      %v578 = vmul.f32 %v531, %v574
      %v579 = vmul.f32 %v534, %v574
      %v580 = vmul.f32 %v537, %v574
      %v581 = vmul.f32 %v540, %v574
      %v582 = vmul.f32 %v543, %v574
      %v583 = vmul.f32 %v546, %v574
      %v584 = vmul.f32 %v549, %v574
      %v585 = vmul.f32 %v552, %v574
      %v586 = vmul.f32 %v555, %v574
      %v587 = vmul.f32 %v558, %v574
      %v588 = vmul.f32 %v561, %v574
      %v589 = vmul.f32 %v564, %v574
      %v590 = vmul.f32 %v567, %v574
      %v591 = vsub.f32 %v467, %v575
      %v592 = vsub.f32 %v468, %v576
      %v593 = vsub.f32 %v469, %v577
      %v594 = vsub.f32 %v470, %v578
      %v595 = vsub.f32 %v471, %v579
      %v596 = vsub.f32 %v472, %v580
      %v597 = vsub.f32 %v473, %v581
      %v598 = vsub.f32 %v474, %v582
      %v599 = vsub.f32 %v475, %v583
      %v600 = vsub.f32 %v476, %v584
      %v601 = vsub.f32 %v477, %v585
      %v602 = vsub.f32 %v478, %v586
      %v603 = vsub.f32 %v479, %v587
      %v604 = vsub.f32 %v480, %v588
      %v605 = vsub.f32 %v481, %v589
      %v606 = vsub.f32 %v482, %v590
      %v607 = vmul.f32 %v591, %v591
      %v608 = vmul.f32 %v592, %v592
      %v609 = vmul.f32 %v593, %v593
      %v610 = vmul.f32 %v594, %v594
      %v611 = vmul.f32 %v595, %v595
      %v612 = vmul.f32 %v596, %v596
      %v613 = vmul.f32 %v597, %v597
      %v614 = vmul.f32 %v598, %v598
      %v615 = vmul.f32 %v599, %v599
      %v616 = vmul.f32 %v600, %v600
      %v617 = vmul.f32 %v601, %v601
      %v618 = vmul.f32 %v602, %v602
      %v619 = vmul.f32 %v603, %v603
      %v620 = vmul.f32 %v604, %v604
      %v621 = vmul.f32 %v605, %v605
      %v622 = vmul.f32 %v606, %v606
      %v623 = vsel %vm519, %v607, 0.0
      %624 = vadd.xlane.f32.xlu0 %v623
      %v625 = vpop.xlane.xlu0 %624
      %v626 = vsel %vm519, %v608, 0.0
      %627 = vadd.xlane.f32.xlu0 %v626
      %v628 = vpop.xlane.xlu0 %627
      %v629 = vsel %vm519, %v609, 0.0
      %630 = vadd.xlane.f32.xlu0 %v629
      %v631 = vpop.xlane.xlu0 %630
      %v632 = vsel %vm519, %v610, 0.0
      %633 = vadd.xlane.f32.xlu0 %v632
      %v634 = vpop.xlane.xlu0 %633
      %v635 = vsel %vm519, %v611, 0.0
      %636 = vadd.xlane.f32.xlu0 %v635
      %v637 = vpop.xlane.xlu0 %636
      %v638 = vsel %vm519, %v612, 0.0
      %639 = vadd.xlane.f32.xlu0 %v638
      %v640 = vpop.xlane.xlu0 %639
      %v641 = vsel %vm519, %v613, 0.0
      %642 = vadd.xlane.f32.xlu0 %v641
      %v643 = vpop.xlane.xlu0 %642
      %v644 = vsel %vm519, %v614, 0.0
      %645 = vadd.xlane.f32.xlu0 %v644
      %v646 = vpop.xlane.xlu0 %645
      %v647 = vsel %vm519, %v615, 0.0
      %648 = vadd.xlane.f32.xlu0 %v647
      %v649 = vpop.xlane.xlu0 %648
      %v650 = vsel %vm519, %v616, 0.0
      %651 = vadd.xlane.f32.xlu0 %v650
      %v652 = vpop.xlane.xlu0 %651
      %v653 = vsel %vm519, %v617, 0.0
      %654 = vadd.xlane.f32.xlu0 %v653
      %v655 = vpop.xlane.xlu0 %654
      %v656 = vsel %vm519, %v618, 0.0
      %657 = vadd.xlane.f32.xlu0 %v656
      %v658 = vpop.xlane.xlu0 %657
      %v659 = vsel %vm519, %v619, 0.0
      %660 = vadd.xlane.f32.xlu0 %v659
      %v661 = vpop.xlane.xlu0 %660
      %v662 = vsel %vm519, %v620, 0.0
      %663 = vadd.xlane.f32.xlu0 %v662
      %v664 = vpop.xlane.xlu0 %663
      %v665 = vsel %vm519, %v621, 0.0
      %666 = vadd.xlane.f32.xlu0 %v665
      %v667 = vpop.xlane.xlu0 %666
      %v668 = vsel %vm519, %v622, 0.0
      %669 = vadd.xlane.f32.xlu0 %v668
      %v670 = vpop.xlane.xlu0 %669
      %v671 = vmul.f32 %v625, %v574
      %v672 = vmul.f32 %v628, %v574
      %v673 = vmul.f32 %v631, %v574
      %v674 = vmul.f32 %v634, %v574
      %v675 = vmul.f32 %v637, %v574
      %v676 = vmul.f32 %v640, %v574
      %v677 = vmul.f32 %v643, %v574
      %v678 = vmul.f32 %v646, %v574
      %v679 = vmul.f32 %v649, %v574
      %v680 = vmul.f32 %v652, %v574
      %v681 = vmul.f32 %v655, %v574
      %v682 = vmul.f32 %v658, %v574
      %v683 = vmul.f32 %v661, %v574
      %v684 = vmul.f32 %v664, %v574
      %v685 = vmul.f32 %v667, %v574
      %v686 = vmul.f32 %v670, %v574
      %v687 = vadd.f32 %v671, 1e-05
      %v688 = vadd.f32 %v672, 1e-05
      %v689 = vadd.f32 %v673, 1e-05
      %v690 = vadd.f32 %v674, 1e-05
      %v691 = vadd.f32 %v675, 1e-05
      %v692 = vadd.f32 %v676, 1e-05
      %v693 = vadd.f32 %v677, 1e-05
      %v694 = vadd.f32 %v678, 1e-05
      %v695 = vadd.f32 %v679, 1e-05
      %v696 = vadd.f32 %v680, 1e-05
      %v697 = vadd.f32 %v681, 1e-05
      %v698 = vadd.f32 %v682, 1e-05
      %v699 = vadd.f32 %v683, 1e-05
      %v700 = vadd.f32 %v684, 1e-05
      %v701 = vadd.f32 %v685, 1e-05
      %v702 = vadd.f32 %v686, 1e-05
      %v703 = vrsqrt.pop %v687
      %v704 = vmul.f32 %v703, %v687
      %v705 = vmul.f32 %v704, %v703
      %v706 = vmul.f32 0.5, %v705
      %v707 = vsub.f32 1.5, %v706
      %v708 = vmul.f32 %v703, %v707
      %vm709 = vweird.f32 %v687
      %vm710 = vweird.f32 %v703
      %vm711 = vmor %vm709, %vm710
      %v712 = vsel %vm711, %v703, %v708
      %v713 = vrsqrt.pop %v688
      %v714 = vmul.f32 %v713, %v688
      %v715 = vmul.f32 %v714, %v713
      %v716 = vmul.f32 0.5, %v715
      %v717 = vsub.f32 1.5, %v716
      %v718 = vmul.f32 %v713, %v717
      %vm719 = vweird.f32 %v688
      %vm720 = vweird.f32 %v713
      %vm721 = vmor %vm719, %vm720
      %v722 = vsel %vm721, %v713, %v718
      %v723 = vrsqrt.pop %v689
      %v724 = vmul.f32 %v723, %v689
      %v725 = vmul.f32 %v724, %v723
      %v726 = vmul.f32 0.5, %v725
      %v727 = vsub.f32 1.5, %v726
      %v728 = vmul.f32 %v723, %v727
      %vm729 = vweird.f32 %v689
      %vm730 = vweird.f32 %v723
      %vm731 = vmor %vm729, %vm730
      %v732 = vsel %vm731, %v723, %v728
      %v733 = vrsqrt.pop %v690
      %v734 = vmul.f32 %v733, %v690
      %v735 = vmul.f32 %v734, %v733
      %v736 = vmul.f32 0.5, %v735
      %v737 = vsub.f32 1.5, %v736
      %v738 = vmul.f32 %v733, %v737
      %vm739 = vweird.f32 %v690
      %vm740 = vweird.f32 %v733
      %vm741 = vmor %vm739, %vm740
      %v742 = vsel %vm741, %v733, %v738
      %v743 = vrsqrt.pop %v691
      %v744 = vmul.f32 %v743, %v691
      %v745 = vmul.f32 %v744, %v743
      %v746 = vmul.f32 0.5, %v745
      %v747 = vsub.f32 1.5, %v746
      %v748 = vmul.f32 %v743, %v747
      %vm749 = vweird.f32 %v691
      %vm750 = vweird.f32 %v743
      %vm751 = vmor %vm749, %vm750
      %v752 = vsel %vm751, %v743, %v748
      %v753 = vrsqrt.pop %v692
      %v754 = vmul.f32 %v753, %v692
      %v755 = vmul.f32 %v754, %v753
      %v756 = vmul.f32 0.5, %v755
      %v757 = vsub.f32 1.5, %v756
      %v758 = vmul.f32 %v753, %v757
      %vm759 = vweird.f32 %v692
      %vm760 = vweird.f32 %v753
      %vm761 = vmor %vm759, %vm760
      %v762 = vsel %vm761, %v753, %v758
      %v763 = vrsqrt.pop %v693
      %v764 = vmul.f32 %v763, %v693
      %v765 = vmul.f32 %v764, %v763
      %v766 = vmul.f32 0.5, %v765
      %v767 = vsub.f32 1.5, %v766
      %v768 = vmul.f32 %v763, %v767
      %vm769 = vweird.f32 %v693
      %vm770 = vweird.f32 %v763
      %vm771 = vmor %vm769, %vm770
      %v772 = vsel %vm771, %v763, %v768
      %v773 = vrsqrt.pop %v694
      %v774 = vmul.f32 %v773, %v694
      %v775 = vmul.f32 %v774, %v773
      %v776 = vmul.f32 0.5, %v775
      %v777 = vsub.f32 1.5, %v776
      %v778 = vmul.f32 %v773, %v777
      %vm779 = vweird.f32 %v694
      %vm780 = vweird.f32 %v773
      %vm781 = vmor %vm779, %vm780
      %v782 = vsel %vm781, %v773, %v778
      %v783 = vrsqrt.pop %v695
      %v784 = vmul.f32 %v783, %v695
      %v785 = vmul.f32 %v784, %v783
      %v786 = vmul.f32 0.5, %v785
      %v787 = vsub.f32 1.5, %v786
      %v788 = vmul.f32 %v783, %v787
      %vm789 = vweird.f32 %v695
      %vm790 = vweird.f32 %v783
      %vm791 = vmor %vm789, %vm790
      %v792 = vsel %vm791, %v783, %v788
      %v793 = vrsqrt.pop %v696
      %v794 = vmul.f32 %v793, %v696
      %v795 = vmul.f32 %v794, %v793
      %v796 = vmul.f32 0.5, %v795
      %v797 = vsub.f32 1.5, %v796
      %v798 = vmul.f32 %v793, %v797
      %vm799 = vweird.f32 %v696
      %vm800 = vweird.f32 %v793
      %vm801 = vmor %vm799, %vm800
      %v802 = vsel %vm801, %v793, %v798
      %v803 = vrsqrt.pop %v697
      %v804 = vmul.f32 %v803, %v697
      %v805 = vmul.f32 %v804, %v803
      %v806 = vmul.f32 0.5, %v805
      %v807 = vsub.f32 1.5, %v806
      %v808 = vmul.f32 %v803, %v807
      %vm809 = vweird.f32 %v697
      %vm810 = vweird.f32 %v803
      %vm811 = vmor %vm809, %vm810
      %v812 = vsel %vm811, %v803, %v808
      %v813 = vrsqrt.pop %v698
      %v814 = vmul.f32 %v813, %v698
      %v815 = vmul.f32 %v814, %v813
      %v816 = vmul.f32 0.5, %v815
      %v817 = vsub.f32 1.5, %v816
      %v818 = vmul.f32 %v813, %v817
      %vm819 = vweird.f32 %v698
      %vm820 = vweird.f32 %v813
      %vm821 = vmor %vm819, %vm820
      %v822 = vsel %vm821, %v813, %v818
      %v823 = vrsqrt.pop %v699
      %v824 = vmul.f32 %v823, %v699
      %v825 = vmul.f32 %v824, %v823
      %v826 = vmul.f32 0.5, %v825
      %v827 = vsub.f32 1.5, %v826
      %v828 = vmul.f32 %v823, %v827
      %vm829 = vweird.f32 %v699
      %vm830 = vweird.f32 %v823
      %vm831 = vmor %vm829, %vm830
      %v832 = vsel %vm831, %v823, %v828
      %v833 = vrsqrt.pop %v700
      %v834 = vmul.f32 %v833, %v700
      %v835 = vmul.f32 %v834, %v833
      %v836 = vmul.f32 0.5, %v835
      %v837 = vsub.f32 1.5, %v836
      %v838 = vmul.f32 %v833, %v837
      %vm839 = vweird.f32 %v700
      %vm840 = vweird.f32 %v833
      %vm841 = vmor %vm839, %vm840
      %v842 = vsel %vm841, %v833, %v838
      %v843 = vrsqrt.pop %v701
      %v844 = vmul.f32 %v843, %v701
      %v845 = vmul.f32 %v844, %v843
      %v846 = vmul.f32 0.5, %v845
      %v847 = vsub.f32 1.5, %v846
      %v848 = vmul.f32 %v843, %v847
      %vm849 = vweird.f32 %v701
      %vm850 = vweird.f32 %v843
      %vm851 = vmor %vm849, %vm850
      %v852 = vsel %vm851, %v843, %v848
      %v853 = vrsqrt.pop %v702
      %v854 = vmul.f32 %v853, %v702
      %v855 = vmul.f32 %v854, %v853
      %v856 = vmul.f32 0.5, %v855
      %v857 = vsub.f32 1.5, %v856
      %v858 = vmul.f32 %v853, %v857
      %vm859 = vweird.f32 %v702
      %vm860 = vweird.f32 %v853
      %vm861 = vmor %vm859, %vm860
      %v862 = vsel %vm861, %v853, %v858
      %v863 = vmul.f32 %v591, %v712
      %v864 = vmul.f32 %v592, %v722
      %v865 = vmul.f32 %v593, %v732
      %v866 = vmul.f32 %v594, %v742
      %v867 = vmul.f32 %v595, %v752
      %v868 = vmul.f32 %v596, %v762
      %v869 = vmul.f32 %v597, %v772
      %v870 = vmul.f32 %v598, %v782
      %v871 = vmul.f32 %v599, %v792
      %v872 = vmul.f32 %v600, %v802
      %v873 = vmul.f32 %v601, %v812
      %v874 = vmul.f32 %v602, %v822
      %v875 = vmul.f32 %v603, %v832
      %v876 = vmul.f32 %v604, %v842
      %v877 = vmul.f32 %v605, %v852
      %v878 = vmul.f32 %v606, %v862
      %v880 = vperm.slane %v483, 0
      %v882 = vmul.f32 %v863, %v880
      %v883 = vmul.f32 %v864, %v880
      %v884 = vmul.f32 %v865, %v880
      %v885 = vmul.f32 %v866, %v880
      %v886 = vmul.f32 %v867, %v880
      %v887 = vmul.f32 %v868, %v880
      %v888 = vmul.f32 %v869, %v880
      %v889 = vmul.f32 %v870, %v880
      %v890 = vmul.f32 %v871, %v880
      %v891 = vmul.f32 %v872, %v880
      %v892 = vmul.f32 %v873, %v880
      %v893 = vmul.f32 %v874, %v880
      %v894 = vmul.f32 %v875, %v880
      %v895 = vmul.f32 %v876, %v880
      %v896 = vmul.f32 %v877, %v880
      %v897 = vmul.f32 %v878, %v880
      %v899 = vperm.slane %v484, 0
      %v901 = vadd.f32 %v882, %v899
      %v902 = vadd.f32 %v883, %v899
      %v903 = vadd.f32 %v884, %v899
      %v904 = vadd.f32 %v885, %v899
      %v905 = vadd.f32 %v886, %v899
      %v906 = vadd.f32 %v887, %v899
      %v907 = vadd.f32 %v888, %v899
      %v908 = vadd.f32 %v889, %v899
      %v909 = vadd.f32 %v890, %v899
      %v910 = vadd.f32 %v891, %v899
      %v911 = vadd.f32 %v892, %v899
      %v912 = vadd.f32 %v893, %v899
      %v913 = vadd.f32 %v894, %v899
      %v914 = vadd.f32 %v895, %v899
      %v915 = vadd.f32 %v896, %v899
      %v916 = vadd.f32 %v897, %v899
      %v917 = vpack.c.bf16 %v902, %v901
      %v918 = vpack.c.bf16 %v904, %v903
      %v919 = vpack.c.bf16 %v906, %v905
      %v920 = vpack.c.bf16 %v908, %v907
      %v921 = vpack.c.bf16 %v910, %v909
      %v922 = vpack.c.bf16 %v912, %v911
      %v923 = vpack.c.bf16 %v914, %v913
      %v924 = vpack.c.bf16 %v916, %v915
      %v926 = vperm.slane %v489, 0
      %v932 = vunpack.c.l.b16 %v485
      %v933 = vunpack.c.l.b16 %v486
      %v934 = vunpack.c.l.b16 %v487
      %v935 = vunpack.c.l.b16 %v488
      %v936 = vpack.c.b16 %v933, %v932
      %v937 = vpack.c.b16 %v935, %v934
      %v941 = vsel %vm519, %v917, 0
      %v944 = vsel %vm519, %v918, 0
      %v947 = vsel %vm519, %v919, 0
      %v950 = vsel %vm519, %v920, 0
      %v953 = vsel %vm519, %v921, 0
      %v956 = vsel %vm519, %v922, 0
      %v959 = vsel %vm519, %v923, 0
      %v962 = vsel %vm519, %v924, 0
      %964 = vmatpush.bf16.msra.mxu0 0
      %965 = vmatpush.bf16.msra.mxu0 0
      %966 = vmatpush.bf16.msra.mxu0 0
      %967 = vmatpush.bf16.msra.mxu0 0
      %968 = vmatpush.bf16.msra.mxu0 0
      %969 = vmatpush.bf16.msra.mxu0 0
      %970 = vmatpush.bf16.msra.mxu0 %v937
      %971 = vmatpush.bf16.msra.mxu0 %v936
      %972 = vmatmul.bf16.gmra.mxu0 %v941
      %v973 = vpop.f32.mrf.mxu0
      %v974 = vadd.f32 %v926, %v973
      %v975 = vpop.f32.mrf.mxu0
      %v976 = vadd.f32 %v926, %v975
      %977 = vmatmul.bf16.gmra.mxu0 %v944
      %v978 = vpop.f32.mrf.mxu0
      %v979 = vadd.f32 %v926, %v978
      %v980 = vpop.f32.mrf.mxu0
      %v981 = vadd.f32 %v926, %v980
      %982 = vmatmul.bf16.gmra.mxu0 %v947
      %v983 = vpop.f32.mrf.mxu0
      %v984 = vadd.f32 %v926, %v983
      %v985 = vpop.f32.mrf.mxu0
      %v986 = vadd.f32 %v926, %v985
      %987 = vmatmul.bf16.gmra.mxu0 %v950
      %v988 = vpop.f32.mrf.mxu0
      %v989 = vadd.f32 %v926, %v988
      %v990 = vpop.f32.mrf.mxu0
      %v991 = vadd.f32 %v926, %v990
      %992 = vmatmul.bf16.gmra.mxu0 %v953
      %v993 = vpop.f32.mrf.mxu0
      %v994 = vadd.f32 %v926, %v993
      %v995 = vpop.f32.mrf.mxu0
      %v996 = vadd.f32 %v926, %v995
      %997 = vmatmul.bf16.gmra.mxu0 %v956
      %v998 = vpop.f32.mrf.mxu0
      %v999 = vadd.f32 %v926, %v998
      %v1000 = vpop.f32.mrf.mxu0
      %v1001 = vadd.f32 %v926, %v1000
      %1002 = vmatmul.bf16.gmra.mxu0 %v959
      %v1003 = vpop.f32.mrf.mxu0
      %v1004 = vadd.f32 %v926, %v1003
      %v1005 = vpop.f32.mrf.mxu0
      %v1006 = vadd.f32 %v926, %v1005
      %1007 = vmatmul.bf16.gmra.mxu0 %v962
      %v1008 = vpop.f32.mrf.mxu0
      %v1009 = vadd.f32 %v926, %v1008
      %v1010 = vpop.f32.mrf.mxu0
      %v1011 = vadd.f32 %v926, %v1010
      %1012 = vdwg.mxu0
      %v1013 = vmul.f32 %v974, 0.35355338
      %v1014 = vmul.f32 %v976, 0.35355338
      %v1015 = vmul.f32 %v979, 0.35355338
      %v1016 = vmul.f32 %v981, 0.35355338
      %v1017 = vmul.f32 %v984, 0.35355338
      %v1018 = vmul.f32 %v986, 0.35355338
      %v1019 = vmul.f32 %v989, 0.35355338
      %v1020 = vmul.f32 %v991, 0.35355338
      %v1021 = vmul.f32 %v994, 0.35355338
      %v1022 = vmul.f32 %v996, 0.35355338
      %v1023 = vmul.f32 %v999, 0.35355338
      %v1024 = vmul.f32 %v1001, 0.35355338
      %v1025 = vmul.f32 %v1004, 0.35355338
      %v1026 = vmul.f32 %v1006, 0.35355338
      %v1027 = vmul.f32 %v1009, 0.35355338
      %v1028 = vmul.f32 %v1011, 0.35355338
      %v1029 = vmul.f32 %v1013, %v463
      %v1030 = vmul.f32 %v1013, %v464
      %v1031 = vmul.f32 %v1013, %v465
      %v1032 = vmul.f32 %v1013, %v466
      %v1033 = vmul.f32 %v1014, %v463
      %v1034 = vmul.f32 %v1014, %v464
      %v1035 = vmul.f32 %v1014, %v465
      %v1036 = vmul.f32 %v1014, %v466
      %v1037 = vmul.f32 %v1015, %v463
      %v1038 = vmul.f32 %v1015, %v464
      %v1039 = vmul.f32 %v1015, %v465
      %v1040 = vmul.f32 %v1015, %v466
      %v1041 = vmul.f32 %v1016, %v463
      %v1042 = vmul.f32 %v1016, %v464
      %v1043 = vmul.f32 %v1016, %v465
      %v1044 = vmul.f32 %v1016, %v466
      %v1045 = vmul.f32 %v1017, %v463
      %v1046 = vmul.f32 %v1017, %v464
      %v1047 = vmul.f32 %v1017, %v465
      %v1048 = vmul.f32 %v1017, %v466
      %v1049 = vmul.f32 %v1018, %v463
      %v1050 = vmul.f32 %v1018, %v464
      %v1051 = vmul.f32 %v1018, %v465
      %v1052 = vmul.f32 %v1018, %v466
      %v1053 = vmul.f32 %v1019, %v463
      %v1054 = vmul.f32 %v1019, %v464
      %v1055 = vmul.f32 %v1019, %v465
      %v1056 = vmul.f32 %v1019, %v466
      %v1057 = vmul.f32 %v1020, %v463
      %v1058 = vmul.f32 %v1020, %v464
      %v1059 = vmul.f32 %v1020, %v465
      %v1060 = vmul.f32 %v1020, %v466
      %v1061 = vmul.f32 %v1021, %v463
      %v1062 = vmul.f32 %v1021, %v464
      %v1063 = vmul.f32 %v1021, %v465
      %v1064 = vmul.f32 %v1021, %v466
      %v1065 = vmul.f32 %v1022, %v463
      %v1066 = vmul.f32 %v1022, %v464
      %v1067 = vmul.f32 %v1022, %v465
      %v1068 = vmul.f32 %v1022, %v466
      %v1069 = vmul.f32 %v1023, %v463
      %v1070 = vmul.f32 %v1023, %v464
      %v1071 = vmul.f32 %v1023, %v465
      %v1072 = vmul.f32 %v1023, %v466
      %v1073 = vmul.f32 %v1024, %v463
      %v1074 = vmul.f32 %v1024, %v464
      %v1075 = vmul.f32 %v1024, %v465
      %v1076 = vmul.f32 %v1024, %v466
      %v1077 = vmul.f32 %v1025, %v463
      %v1078 = vmul.f32 %v1025, %v464
      %v1079 = vmul.f32 %v1025, %v465
      %v1080 = vmul.f32 %v1025, %v466
      %v1081 = vmul.f32 %v1026, %v463
      %v1082 = vmul.f32 %v1026, %v464
      %v1083 = vmul.f32 %v1026, %v465
      %v1084 = vmul.f32 %v1026, %v466
      %v1085 = vmul.f32 %v1027, %v463
      %v1086 = vmul.f32 %v1027, %v464
      %v1087 = vmul.f32 %v1027, %v465
      %v1088 = vmul.f32 %v1027, %v466
      %v1089 = vmul.f32 %v1028, %v463
      %v1090 = vmul.f32 %v1028, %v464
      %v1091 = vmul.f32 %v1028, %v465
      %v1092 = vmul.f32 %v1028, %v466
      %v1093 = vpack.c.bf16 %v1029, %v1029
      %v1094 = vpack.c.bf16 %v1030, %v1030
      %v1095 = vpack.c.bf16 %v1031, %v1031
      %v1096 = vpack.c.bf16 %v1032, %v1032
      %v1097 = vpack.c.bf16 %v1033, %v1033
      %v1098 = vpack.c.bf16 %v1034, %v1034
      %v1099 = vpack.c.bf16 %v1035, %v1035
      %v1100 = vpack.c.bf16 %v1036, %v1036
      %v1101 = vpack.c.bf16 %v1037, %v1037
      %v1102 = vpack.c.bf16 %v1038, %v1038
      %v1103 = vpack.c.bf16 %v1039, %v1039
      %v1104 = vpack.c.bf16 %v1040, %v1040
      %v1105 = vpack.c.bf16 %v1041, %v1041
      %v1106 = vpack.c.bf16 %v1042, %v1042
      %v1107 = vpack.c.bf16 %v1043, %v1043
      %v1108 = vpack.c.bf16 %v1044, %v1044
      %v1109 = vpack.c.bf16 %v1045, %v1045
      %v1110 = vpack.c.bf16 %v1046, %v1046
      %v1111 = vpack.c.bf16 %v1047, %v1047
      %v1112 = vpack.c.bf16 %v1048, %v1048
      %v1113 = vpack.c.bf16 %v1049, %v1049
      %v1114 = vpack.c.bf16 %v1050, %v1050
      %v1115 = vpack.c.bf16 %v1051, %v1051
      %v1116 = vpack.c.bf16 %v1052, %v1052
      %v1117 = vpack.c.bf16 %v1053, %v1053
      %v1118 = vpack.c.bf16 %v1054, %v1054
      %v1119 = vpack.c.bf16 %v1055, %v1055
      %v1120 = vpack.c.bf16 %v1056, %v1056
      %v1121 = vpack.c.bf16 %v1057, %v1057
      %v1122 = vpack.c.bf16 %v1058, %v1058
      %v1123 = vpack.c.bf16 %v1059, %v1059
      %v1124 = vpack.c.bf16 %v1060, %v1060
      %v1125 = vpack.c.bf16 %v1061, %v1061
      %v1126 = vpack.c.bf16 %v1062, %v1062
      %v1127 = vpack.c.bf16 %v1063, %v1063
      %v1128 = vpack.c.bf16 %v1064, %v1064
      %v1129 = vpack.c.bf16 %v1065, %v1065
      %v1130 = vpack.c.bf16 %v1066, %v1066
      %v1131 = vpack.c.bf16 %v1067, %v1067
      %v1132 = vpack.c.bf16 %v1068, %v1068
      %v1133 = vpack.c.bf16 %v1069, %v1069
      %v1134 = vpack.c.bf16 %v1070, %v1070
      %v1135 = vpack.c.bf16 %v1071, %v1071
      %v1136 = vpack.c.bf16 %v1072, %v1072
      %v1137 = vpack.c.bf16 %v1073, %v1073
      %v1138 = vpack.c.bf16 %v1074, %v1074
      %v1139 = vpack.c.bf16 %v1075, %v1075
      %v1140 = vpack.c.bf16 %v1076, %v1076
      %v1141 = vpack.c.bf16 %v1077, %v1077
      %v1142 = vpack.c.bf16 %v1078, %v1078
      %v1143 = vpack.c.bf16 %v1079, %v1079
      %v1144 = vpack.c.bf16 %v1080, %v1080
      %v1145 = vpack.c.bf16 %v1081, %v1081
      %v1146 = vpack.c.bf16 %v1082, %v1082
      %v1147 = vpack.c.bf16 %v1083, %v1083
      %v1148 = vpack.c.bf16 %v1084, %v1084
      %v1149 = vpack.c.bf16 %v1085, %v1085
      %v1150 = vpack.c.bf16 %v1086, %v1086
      %v1151 = vpack.c.bf16 %v1087, %v1087
      %v1152 = vpack.c.bf16 %v1088, %v1088
      %v1153 = vpack.c.bf16 %v1089, %v1089
      %v1154 = vpack.c.bf16 %v1090, %v1090
      %v1155 = vpack.c.bf16 %v1091, %v1091
      %v1156 = vpack.c.bf16 %v1092, %v1092
      %v1157 = vpack.c.bf16 %v974, %v974
      %v1158 = vpack.c.bf16 %v976, %v976
      %v1159 = vpack.c.bf16 %v979, %v979
      %v1160 = vpack.c.bf16 %v981, %v981
      %v1161 = vpack.c.bf16 %v984, %v984
      %v1162 = vpack.c.bf16 %v986, %v986
      %v1163 = vpack.c.bf16 %v989, %v989
      %v1164 = vpack.c.bf16 %v991, %v991
      %v1165 = vpack.c.bf16 %v994, %v994
      %v1166 = vpack.c.bf16 %v996, %v996
      %v1167 = vpack.c.bf16 %v999, %v999
      %v1168 = vpack.c.bf16 %v1001, %v1001
      %v1169 = vpack.c.bf16 %v1004, %v1004
      %v1170 = vpack.c.bf16 %v1006, %v1006
      %v1171 = vpack.c.bf16 %v1009, %v1009
      %v1172 = vpack.c.bf16 %v1011, %v1011
      %1177 = vrot.lane.b32.xlu0 %v463, 64
      %v1178 = vpop.permute.xlu0 %1177
      %1179 = vrot.lane.b32.xlu0 %v464, 64
      %v1180 = vpop.permute.xlu0 %1179
      %1181 = vrot.lane.b32.xlu0 %v465, 64
      %v1182 = vpop.permute.xlu0 %1181
      %1183 = vrot.lane.b32.xlu0 %v466, 64
      %v1184 = vpop.permute.xlu0 %1183
      %v1189 = vmul.f32 %v974, %v1178
      %v1190 = vmul.f32 %v974, %v1180
      %v1191 = vmul.f32 %v974, %v1182
      %v1192 = vmul.f32 %v974, %v1184
      %v1193 = vmul.f32 %v976, %v1178
      %v1194 = vmul.f32 %v976, %v1180
      %v1195 = vmul.f32 %v976, %v1182
      %v1196 = vmul.f32 %v976, %v1184
      %v1197 = vmul.f32 %v979, %v1178
      %v1198 = vmul.f32 %v979, %v1180
      %v1199 = vmul.f32 %v979, %v1182
      %v1200 = vmul.f32 %v979, %v1184
      %v1201 = vmul.f32 %v981, %v1178
      %v1202 = vmul.f32 %v981, %v1180
      %v1203 = vmul.f32 %v981, %v1182
      %v1204 = vmul.f32 %v981, %v1184
      %v1205 = vmul.f32 %v984, %v1178
      %v1206 = vmul.f32 %v984, %v1180
      %v1207 = vmul.f32 %v984, %v1182
      %v1208 = vmul.f32 %v984, %v1184
      %v1209 = vmul.f32 %v986, %v1178
      %v1210 = vmul.f32 %v986, %v1180
      %v1211 = vmul.f32 %v986, %v1182
      %v1212 = vmul.f32 %v986, %v1184
      %v1213 = vmul.f32 %v989, %v1178
      %v1214 = vmul.f32 %v989, %v1180
      %v1215 = vmul.f32 %v989, %v1182
      %v1216 = vmul.f32 %v989, %v1184
      %v1217 = vmul.f32 %v991, %v1178
      %v1218 = vmul.f32 %v991, %v1180
      %v1219 = vmul.f32 %v991, %v1182
      %v1220 = vmul.f32 %v991, %v1184
      %v1221 = vmul.f32 %v994, %v1178
      %v1222 = vmul.f32 %v994, %v1180
      %v1223 = vmul.f32 %v994, %v1182
      %v1224 = vmul.f32 %v994, %v1184
      %v1225 = vmul.f32 %v996, %v1178
      %v1226 = vmul.f32 %v996, %v1180
      %v1227 = vmul.f32 %v996, %v1182
      %v1228 = vmul.f32 %v996, %v1184
      %v1229 = vmul.f32 %v999, %v1178
      %v1230 = vmul.f32 %v999, %v1180
      %v1231 = vmul.f32 %v999, %v1182
      %v1232 = vmul.f32 %v999, %v1184
      %v1233 = vmul.f32 %v1001, %v1178
      %v1234 = vmul.f32 %v1001, %v1180
      %v1235 = vmul.f32 %v1001, %v1182
      %v1236 = vmul.f32 %v1001, %v1184
      %v1237 = vmul.f32 %v1004, %v1178
      %v1238 = vmul.f32 %v1004, %v1180
      %v1239 = vmul.f32 %v1004, %v1182
      %v1240 = vmul.f32 %v1004, %v1184
      %v1241 = vmul.f32 %v1006, %v1178
      %v1242 = vmul.f32 %v1006, %v1180
      %v1243 = vmul.f32 %v1006, %v1182
      %v1244 = vmul.f32 %v1006, %v1184
      %v1245 = vmul.f32 %v1009, %v1178
      %v1246 = vmul.f32 %v1009, %v1180
      %v1247 = vmul.f32 %v1009, %v1182
      %v1248 = vmul.f32 %v1009, %v1184
      %v1249 = vmul.f32 %v1011, %v1178
      %v1250 = vmul.f32 %v1011, %v1180
      %v1251 = vmul.f32 %v1011, %v1182
      %v1252 = vmul.f32 %v1011, %v1184
      %v1253 = vpack.c.bf16 %v1189, %v1189
      %v1254 = vpack.c.bf16 %v1190, %v1190
      %v1255 = vpack.c.bf16 %v1191, %v1191
      %v1256 = vpack.c.bf16 %v1192, %v1192
      %v1257 = vpack.c.bf16 %v1193, %v1193
      %v1258 = vpack.c.bf16 %v1194, %v1194
      %v1259 = vpack.c.bf16 %v1195, %v1195
      %v1260 = vpack.c.bf16 %v1196, %v1196
      %v1261 = vpack.c.bf16 %v1197, %v1197
      %v1262 = vpack.c.bf16 %v1198, %v1198
      %v1263 = vpack.c.bf16 %v1199, %v1199
      %v1264 = vpack.c.bf16 %v1200, %v1200
      %v1265 = vpack.c.bf16 %v1201, %v1201
      %v1266 = vpack.c.bf16 %v1202, %v1202
      %v1267 = vpack.c.bf16 %v1203, %v1203
      %v1268 = vpack.c.bf16 %v1204, %v1204
      %v1269 = vpack.c.bf16 %v1205, %v1205
      %v1270 = vpack.c.bf16 %v1206, %v1206
      %v1271 = vpack.c.bf16 %v1207, %v1207
      %v1272 = vpack.c.bf16 %v1208, %v1208
      %v1273 = vpack.c.bf16 %v1209, %v1209
      %v1274 = vpack.c.bf16 %v1210, %v1210
      %v1275 = vpack.c.bf16 %v1211, %v1211
      %v1276 = vpack.c.bf16 %v1212, %v1212
      %v1277 = vpack.c.bf16 %v1213, %v1213
      %v1278 = vpack.c.bf16 %v1214, %v1214
      %v1279 = vpack.c.bf16 %v1215, %v1215
      %v1280 = vpack.c.bf16 %v1216, %v1216
      %v1281 = vpack.c.bf16 %v1217, %v1217
      %v1282 = vpack.c.bf16 %v1218, %v1218
      %v1283 = vpack.c.bf16 %v1219, %v1219
      %v1284 = vpack.c.bf16 %v1220, %v1220
      %v1285 = vpack.c.bf16 %v1221, %v1221
      %v1286 = vpack.c.bf16 %v1222, %v1222
      %v1287 = vpack.c.bf16 %v1223, %v1223
      %v1288 = vpack.c.bf16 %v1224, %v1224
      %v1289 = vpack.c.bf16 %v1225, %v1225
      %v1290 = vpack.c.bf16 %v1226, %v1226
      %v1291 = vpack.c.bf16 %v1227, %v1227
      %v1292 = vpack.c.bf16 %v1228, %v1228
      %v1293 = vpack.c.bf16 %v1229, %v1229
      %v1294 = vpack.c.bf16 %v1230, %v1230
      %v1295 = vpack.c.bf16 %v1231, %v1231
      %v1296 = vpack.c.bf16 %v1232, %v1232
      %v1297 = vpack.c.bf16 %v1233, %v1233
      %v1298 = vpack.c.bf16 %v1234, %v1234
      %v1299 = vpack.c.bf16 %v1235, %v1235
      %v1300 = vpack.c.bf16 %v1236, %v1236
      %v1301 = vpack.c.bf16 %v1237, %v1237
      %v1302 = vpack.c.bf16 %v1238, %v1238
      %v1303 = vpack.c.bf16 %v1239, %v1239
      %v1304 = vpack.c.bf16 %v1240, %v1240
      %v1305 = vpack.c.bf16 %v1241, %v1241
      %v1306 = vpack.c.bf16 %v1242, %v1242
      %v1307 = vpack.c.bf16 %v1243, %v1243
      %v1308 = vpack.c.bf16 %v1244, %v1244
      %v1309 = vpack.c.bf16 %v1245, %v1245
      %v1310 = vpack.c.bf16 %v1246, %v1246
      %v1311 = vpack.c.bf16 %v1247, %v1247
      %v1312 = vpack.c.bf16 %v1248, %v1248
      %v1313 = vpack.c.bf16 %v1249, %v1249
      %v1314 = vpack.c.bf16 %v1250, %v1250
      %v1315 = vpack.c.bf16 %v1251, %v1251
      %v1316 = vpack.c.bf16 %v1252, %v1252
      %v1318 = vunpack.c.l.b16 %v1157
      %v1319 = vpack.c.b16 %v1318, %v1318
      %1320 = vrot.lane.b32.xlu0 %v1319, 96
      %v1321 = vpop.permute.xlu0 %1320
      %v1323 = vsel %vm519, %v1093, 0
      %v1326 = vsel %vm519, %v1321, 0
      %1328 = vmatpush.bf16.xpose.msra.mxu0 0
      %1329 = vmatpush.bf16.xpose.msra.mxu0 0
      %1330 = vmatpush.bf16.xpose.msra.mxu0 0
      %1331 = vmatpush.bf16.xpose.msra.mxu0 0
      %1332 = vmatpush.bf16.xpose.msra.mxu0 0
      %1333 = vmatpush.bf16.xpose.msra.mxu0 0
      %1334 = vmatpush.bf16.xpose.msra.mxu0 0
      %1335 = vmatpush.bf16.xpose.msra.mxu0 %v1326
      %1336 = vmatmul.bf16.gmra.mxu0 %v1323
      %v1337 = vpop.f32.mrf.mxu0
      %v1338 = vadd.f32 0.0, %v1337
      %v1339 = vpop.f32.mrf.mxu0
      %1340 = vdwg.mxu0
      %v1342 = vsel %vm519, %v1094, 0
      %1344 = vmatpush.bf16.xpose.msra.mxu0 0
      %1345 = vmatpush.bf16.xpose.msra.mxu0 0
      %1346 = vmatpush.bf16.xpose.msra.mxu0 0
      %1347 = vmatpush.bf16.xpose.msra.mxu0 0
      %1348 = vmatpush.bf16.xpose.msra.mxu0 0
      %1349 = vmatpush.bf16.xpose.msra.mxu0 0
      %1350 = vmatpush.bf16.xpose.msra.mxu0 0
      %1351 = vmatpush.bf16.xpose.msra.mxu0 %v1326
      %1352 = vmatmul.bf16.gmra.mxu0 %v1342
      %v1353 = vpop.f32.mrf.mxu0
      %v1354 = vadd.f32 0.0, %v1353
      %v1355 = vpop.f32.mrf.mxu0
      %1356 = vdwg.mxu0
      %v1358 = vsel %vm519, %v1095, 0
      %1360 = vmatpush.bf16.xpose.msra.mxu0 0
      %1361 = vmatpush.bf16.xpose.msra.mxu0 0
      %1362 = vmatpush.bf16.xpose.msra.mxu0 0
      %1363 = vmatpush.bf16.xpose.msra.mxu0 0
      %1364 = vmatpush.bf16.xpose.msra.mxu0 0
      %1365 = vmatpush.bf16.xpose.msra.mxu0 0
      %1366 = vmatpush.bf16.xpose.msra.mxu0 0
      %1367 = vmatpush.bf16.xpose.msra.mxu0 %v1326
      %1368 = vmatmul.bf16.gmra.mxu0 %v1358
      %v1369 = vpop.f32.mrf.mxu0
      %v1370 = vadd.f32 0.0, %v1369
      %v1371 = vpop.f32.mrf.mxu0
      %1372 = vdwg.mxu0
      %v1374 = vsel %vm519, %v1096, 0
      %1376 = vmatpush.bf16.xpose.msra.mxu0 0
      %1377 = vmatpush.bf16.xpose.msra.mxu0 0
      %1378 = vmatpush.bf16.xpose.msra.mxu0 0
      %1379 = vmatpush.bf16.xpose.msra.mxu0 0
      %1380 = vmatpush.bf16.xpose.msra.mxu0 0
      %1381 = vmatpush.bf16.xpose.msra.mxu0 0
      %1382 = vmatpush.bf16.xpose.msra.mxu0 0
      %1383 = vmatpush.bf16.xpose.msra.mxu0 %v1326
      %1384 = vmatmul.bf16.gmra.mxu0 %v1374
      %v1385 = vpop.f32.mrf.mxu0
      %v1386 = vadd.f32 0.0, %v1385
      %v1387 = vpop.f32.mrf.mxu0
      %1388 = vdwg.mxu0
      %v1390 = vunpack.c.l.b16 %v1158
      %v1391 = vpack.c.b16 %v1390, %v1390
      %1392 = vrot.lane.b32.xlu0 %v1391, 96
      %v1393 = vpop.permute.xlu0 %1392
      %v1395 = vsel %vm519, %v1097, 0
      %v1398 = vsel %vm519, %v1393, 0
      %1400 = vmatpush.bf16.xpose.msra.mxu0 0
      %1401 = vmatpush.bf16.xpose.msra.mxu0 0
      %1402 = vmatpush.bf16.xpose.msra.mxu0 0
      %1403 = vmatpush.bf16.xpose.msra.mxu0 0
      %1404 = vmatpush.bf16.xpose.msra.mxu0 0
      %1405 = vmatpush.bf16.xpose.msra.mxu0 0
      %1406 = vmatpush.bf16.xpose.msra.mxu0 0
      %1407 = vmatpush.bf16.xpose.msra.mxu0 %v1398
      %1408 = vmatmul.bf16.gmra.mxu0 %v1395
      %v1409 = vpop.f32.mrf.mxu0
      %v1410 = vadd.f32 0.0, %v1409
      %v1411 = vpop.f32.mrf.mxu0
      %1412 = vdwg.mxu0
      %v1414 = vsel %vm519, %v1098, 0
      %1416 = vmatpush.bf16.xpose.msra.mxu0 0
      %1417 = vmatpush.bf16.xpose.msra.mxu0 0
      %1418 = vmatpush.bf16.xpose.msra.mxu0 0
      %1419 = vmatpush.bf16.xpose.msra.mxu0 0
      %1420 = vmatpush.bf16.xpose.msra.mxu0 0
      %1421 = vmatpush.bf16.xpose.msra.mxu0 0
      %1422 = vmatpush.bf16.xpose.msra.mxu0 0
      %1423 = vmatpush.bf16.xpose.msra.mxu0 %v1398
      %1424 = vmatmul.bf16.gmra.mxu0 %v1414
      %v1425 = vpop.f32.mrf.mxu0
      %v1426 = vadd.f32 0.0, %v1425
      %v1427 = vpop.f32.mrf.mxu0
      %1428 = vdwg.mxu0
      %v1430 = vsel %vm519, %v1099, 0
      %1432 = vmatpush.bf16.xpose.msra.mxu0 0
      %1433 = vmatpush.bf16.xpose.msra.mxu0 0
      %1434 = vmatpush.bf16.xpose.msra.mxu0 0
      %1435 = vmatpush.bf16.xpose.msra.mxu0 0
      %1436 = vmatpush.bf16.xpose.msra.mxu0 0
      %1437 = vmatpush.bf16.xpose.msra.mxu0 0
      %1438 = vmatpush.bf16.xpose.msra.mxu0 0
      %1439 = vmatpush.bf16.xpose.msra.mxu0 %v1398
      %1440 = vmatmul.bf16.gmra.mxu0 %v1430
      %v1441 = vpop.f32.mrf.mxu0
      %v1442 = vadd.f32 0.0, %v1441
      %v1443 = vpop.f32.mrf.mxu0
      %1444 = vdwg.mxu0
      %v1446 = vsel %vm519, %v1100, 0
      %1448 = vmatpush.bf16.xpose.msra.mxu0 0
      %1449 = vmatpush.bf16.xpose.msra.mxu0 0
      %1450 = vmatpush.bf16.xpose.msra.mxu0 0
      %1451 = vmatpush.bf16.xpose.msra.mxu0 0
      %1452 = vmatpush.bf16.xpose.msra.mxu0 0
      %1453 = vmatpush.bf16.xpose.msra.mxu0 0
      %1454 = vmatpush.bf16.xpose.msra.mxu0 0
      %1455 = vmatpush.bf16.xpose.msra.mxu0 %v1398
      %1456 = vmatmul.bf16.gmra.mxu0 %v1446
      %v1457 = vpop.f32.mrf.mxu0
      %v1458 = vadd.f32 0.0, %v1457
      %v1459 = vpop.f32.mrf.mxu0
      %1460 = vdwg.mxu0
      %v1462 = vunpack.c.l.b16 %v1159
      %v1463 = vpack.c.b16 %v1462, %v1462
      %1464 = vrot.lane.b32.xlu0 %v1463, 96
      %v1465 = vpop.permute.xlu0 %1464
      %v1467 = vsel %vm519, %v1101, 0
      %v1470 = vsel %vm519, %v1465, 0
      %1472 = vmatpush.bf16.xpose.msra.mxu0 0
      %1473 = vmatpush.bf16.xpose.msra.mxu0 0
      %1474 = vmatpush.bf16.xpose.msra.mxu0 0
      %1475 = vmatpush.bf16.xpose.msra.mxu0 0
      %1476 = vmatpush.bf16.xpose.msra.mxu0 0
      %1477 = vmatpush.bf16.xpose.msra.mxu0 0
      %1478 = vmatpush.bf16.xpose.msra.mxu0 0
      %1479 = vmatpush.bf16.xpose.msra.mxu0 %v1470
      %1480 = vmatmul.bf16.gmra.mxu0 %v1467
      %v1481 = vpop.f32.mrf.mxu0
      %v1482 = vadd.f32 0.0, %v1481
      %v1483 = vpop.f32.mrf.mxu0
      %1484 = vdwg.mxu0
      %v1486 = vsel %vm519, %v1102, 0
      %1488 = vmatpush.bf16.xpose.msra.mxu0 0
      %1489 = vmatpush.bf16.xpose.msra.mxu0 0
      %1490 = vmatpush.bf16.xpose.msra.mxu0 0
      %1491 = vmatpush.bf16.xpose.msra.mxu0 0
      %1492 = vmatpush.bf16.xpose.msra.mxu0 0
      %1493 = vmatpush.bf16.xpose.msra.mxu0 0
      %1494 = vmatpush.bf16.xpose.msra.mxu0 0
      %1495 = vmatpush.bf16.xpose.msra.mxu0 %v1470
      %1496 = vmatmul.bf16.gmra.mxu0 %v1486
      %v1497 = vpop.f32.mrf.mxu0
      %v1498 = vadd.f32 0.0, %v1497
      %v1499 = vpop.f32.mrf.mxu0
      %1500 = vdwg.mxu0
      %v1502 = vsel %vm519, %v1103, 0
      %1504 = vmatpush.bf16.xpose.msra.mxu0 0
      %1505 = vmatpush.bf16.xpose.msra.mxu0 0
      %1506 = vmatpush.bf16.xpose.msra.mxu0 0
      %1507 = vmatpush.bf16.xpose.msra.mxu0 0
      %1508 = vmatpush.bf16.xpose.msra.mxu0 0
      %1509 = vmatpush.bf16.xpose.msra.mxu0 0
      %1510 = vmatpush.bf16.xpose.msra.mxu0 0
      %1511 = vmatpush.bf16.xpose.msra.mxu0 %v1470
      %1512 = vmatmul.bf16.gmra.mxu0 %v1502
      %v1513 = vpop.f32.mrf.mxu0
      %v1514 = vadd.f32 0.0, %v1513
      %v1515 = vpop.f32.mrf.mxu0
      %1516 = vdwg.mxu0
      %v1518 = vsel %vm519, %v1104, 0
      %1520 = vmatpush.bf16.xpose.msra.mxu0 0
      %1521 = vmatpush.bf16.xpose.msra.mxu0 0
      %1522 = vmatpush.bf16.xpose.msra.mxu0 0
      %1523 = vmatpush.bf16.xpose.msra.mxu0 0
      %1524 = vmatpush.bf16.xpose.msra.mxu0 0
      %1525 = vmatpush.bf16.xpose.msra.mxu0 0
      %1526 = vmatpush.bf16.xpose.msra.mxu0 0
      %1527 = vmatpush.bf16.xpose.msra.mxu0 %v1470
      %1528 = vmatmul.bf16.gmra.mxu0 %v1518
      %v1529 = vpop.f32.mrf.mxu0
      %v1530 = vadd.f32 0.0, %v1529
      %v1531 = vpop.f32.mrf.mxu0
      %1532 = vdwg.mxu0
      %v1534 = vunpack.c.l.b16 %v1160
      %v1535 = vpack.c.b16 %v1534, %v1534
      %1536 = vrot.lane.b32.xlu0 %v1535, 96
      %v1537 = vpop.permute.xlu0 %1536
      %v1539 = vsel %vm519, %v1105, 0
      %v1542 = vsel %vm519, %v1537, 0
      %1544 = vmatpush.bf16.xpose.msra.mxu0 0
      %1545 = vmatpush.bf16.xpose.msra.mxu0 0
      %1546 = vmatpush.bf16.xpose.msra.mxu0 0
      %1547 = vmatpush.bf16.xpose.msra.mxu0 0
      %1548 = vmatpush.bf16.xpose.msra.mxu0 0
      %1549 = vmatpush.bf16.xpose.msra.mxu0 0
      %1550 = vmatpush.bf16.xpose.msra.mxu0 0
      %1551 = vmatpush.bf16.xpose.msra.mxu0 %v1542
      %1552 = vmatmul.bf16.gmra.mxu0 %v1539
      %v1553 = vpop.f32.mrf.mxu0
      %v1554 = vadd.f32 0.0, %v1553
      %v1555 = vpop.f32.mrf.mxu0
      %1556 = vdwg.mxu0
      %v1558 = vsel %vm519, %v1106, 0
      %1560 = vmatpush.bf16.xpose.msra.mxu0 0
      %1561 = vmatpush.bf16.xpose.msra.mxu0 0
      %1562 = vmatpush.bf16.xpose.msra.mxu0 0
      %1563 = vmatpush.bf16.xpose.msra.mxu0 0
      %1564 = vmatpush.bf16.xpose.msra.mxu0 0
      %1565 = vmatpush.bf16.xpose.msra.mxu0 0
      %1566 = vmatpush.bf16.xpose.msra.mxu0 0
      %1567 = vmatpush.bf16.xpose.msra.mxu0 %v1542
      %1568 = vmatmul.bf16.gmra.mxu0 %v1558
      %v1569 = vpop.f32.mrf.mxu0
      %v1570 = vadd.f32 0.0, %v1569
      %v1571 = vpop.f32.mrf.mxu0
      %1572 = vdwg.mxu0
      %v1574 = vsel %vm519, %v1107, 0
      %1576 = vmatpush.bf16.xpose.msra.mxu0 0
      %1577 = vmatpush.bf16.xpose.msra.mxu0 0
      %1578 = vmatpush.bf16.xpose.msra.mxu0 0
      %1579 = vmatpush.bf16.xpose.msra.mxu0 0
      %1580 = vmatpush.bf16.xpose.msra.mxu0 0
      %1581 = vmatpush.bf16.xpose.msra.mxu0 0
      %1582 = vmatpush.bf16.xpose.msra.mxu0 0
      %1583 = vmatpush.bf16.xpose.msra.mxu0 %v1542
      %1584 = vmatmul.bf16.gmra.mxu0 %v1574
      %v1585 = vpop.f32.mrf.mxu0
      %v1586 = vadd.f32 0.0, %v1585
      %v1587 = vpop.f32.mrf.mxu0
      %1588 = vdwg.mxu0
      %v1590 = vsel %vm519, %v1108, 0
      %1592 = vmatpush.bf16.xpose.msra.mxu0 0
      %1593 = vmatpush.bf16.xpose.msra.mxu0 0
      %1594 = vmatpush.bf16.xpose.msra.mxu0 0
      %1595 = vmatpush.bf16.xpose.msra.mxu0 0
      %1596 = vmatpush.bf16.xpose.msra.mxu0 0
      %1597 = vmatpush.bf16.xpose.msra.mxu0 0
      %1598 = vmatpush.bf16.xpose.msra.mxu0 0
      %1599 = vmatpush.bf16.xpose.msra.mxu0 %v1542
      %1600 = vmatmul.bf16.gmra.mxu0 %v1590
      %v1601 = vpop.f32.mrf.mxu0
      %v1602 = vadd.f32 0.0, %v1601
      %v1603 = vpop.f32.mrf.mxu0
      %1604 = vdwg.mxu0
      %v1606 = vunpack.c.l.b16 %v1161
      %v1607 = vpack.c.b16 %v1606, %v1606
      %1608 = vrot.lane.b32.xlu0 %v1607, 96
      %v1609 = vpop.permute.xlu0 %1608
      %v1611 = vsel %vm519, %v1109, 0
      %v1614 = vsel %vm519, %v1609, 0
      %1616 = vmatpush.bf16.xpose.msra.mxu0 0
      %1617 = vmatpush.bf16.xpose.msra.mxu0 0
      %1618 = vmatpush.bf16.xpose.msra.mxu0 0
      %1619 = vmatpush.bf16.xpose.msra.mxu0 0
      %1620 = vmatpush.bf16.xpose.msra.mxu0 0
      %1621 = vmatpush.bf16.xpose.msra.mxu0 0
      %1622 = vmatpush.bf16.xpose.msra.mxu0 0
      %1623 = vmatpush.bf16.xpose.msra.mxu0 %v1614
      %1624 = vmatmul.bf16.gmra.mxu0 %v1611
      %v1625 = vpop.f32.mrf.mxu0
      %v1626 = vadd.f32 0.0, %v1625
      %v1627 = vpop.f32.mrf.mxu0
      %1628 = vdwg.mxu0
      %v1630 = vsel %vm519, %v1110, 0
      %1632 = vmatpush.bf16.xpose.msra.mxu0 0
      %1633 = vmatpush.bf16.xpose.msra.mxu0 0
      %1634 = vmatpush.bf16.xpose.msra.mxu0 0
      %1635 = vmatpush.bf16.xpose.msra.mxu0 0
      %1636 = vmatpush.bf16.xpose.msra.mxu0 0
      %1637 = vmatpush.bf16.xpose.msra.mxu0 0
      %1638 = vmatpush.bf16.xpose.msra.mxu0 0
      %1639 = vmatpush.bf16.xpose.msra.mxu0 %v1614
      %1640 = vmatmul.bf16.gmra.mxu0 %v1630
      %v1641 = vpop.f32.mrf.mxu0
      %v1642 = vadd.f32 0.0, %v1641
      %v1643 = vpop.f32.mrf.mxu0
      %1644 = vdwg.mxu0
      %v1646 = vsel %vm519, %v1111, 0
      %1648 = vmatpush.bf16.xpose.msra.mxu0 0
      %1649 = vmatpush.bf16.xpose.msra.mxu0 0
      %1650 = vmatpush.bf16.xpose.msra.mxu0 0
      %1651 = vmatpush.bf16.xpose.msra.mxu0 0
      %1652 = vmatpush.bf16.xpose.msra.mxu0 0
      %1653 = vmatpush.bf16.xpose.msra.mxu0 0
      %1654 = vmatpush.bf16.xpose.msra.mxu0 0
      %1655 = vmatpush.bf16.xpose.msra.mxu0 %v1614
      %1656 = vmatmul.bf16.gmra.mxu0 %v1646
      %v1657 = vpop.f32.mrf.mxu0
      %v1658 = vadd.f32 0.0, %v1657
      %v1659 = vpop.f32.mrf.mxu0
      %1660 = vdwg.mxu0
      %v1662 = vsel %vm519, %v1112, 0
      %1664 = vmatpush.bf16.xpose.msra.mxu0 0
      %1665 = vmatpush.bf16.xpose.msra.mxu0 0
      %1666 = vmatpush.bf16.xpose.msra.mxu0 0
      %1667 = vmatpush.bf16.xpose.msra.mxu0 0
      %1668 = vmatpush.bf16.xpose.msra.mxu0 0
      %1669 = vmatpush.bf16.xpose.msra.mxu0 0
      %1670 = vmatpush.bf16.xpose.msra.mxu0 0
      %1671 = vmatpush.bf16.xpose.msra.mxu0 %v1614
      %1672 = vmatmul.bf16.gmra.mxu0 %v1662
      %v1673 = vpop.f32.mrf.mxu0
      %v1674 = vadd.f32 0.0, %v1673
      %v1675 = vpop.f32.mrf.mxu0
      %1676 = vdwg.mxu0
      %v1678 = vunpack.c.l.b16 %v1162
      %v1679 = vpack.c.b16 %v1678, %v1678
      %1680 = vrot.lane.b32.xlu0 %v1679, 96
      %v1681 = vpop.permute.xlu0 %1680
      %v1683 = vsel %vm519, %v1113, 0
      %v1686 = vsel %vm519, %v1681, 0
      %1688 = vmatpush.bf16.xpose.msra.mxu0 0
      %1689 = vmatpush.bf16.xpose.msra.mxu0 0
      %1690 = vmatpush.bf16.xpose.msra.mxu0 0
      %1691 = vmatpush.bf16.xpose.msra.mxu0 0
      %1692 = vmatpush.bf16.xpose.msra.mxu0 0
      %1693 = vmatpush.bf16.xpose.msra.mxu0 0
      %1694 = vmatpush.bf16.xpose.msra.mxu0 0
      %1695 = vmatpush.bf16.xpose.msra.mxu0 %v1686
      %1696 = vmatmul.bf16.gmra.mxu0 %v1683
      %v1697 = vpop.f32.mrf.mxu0
      %v1698 = vadd.f32 0.0, %v1697
      %v1699 = vpop.f32.mrf.mxu0
      %1700 = vdwg.mxu0
      %v1702 = vsel %vm519, %v1114, 0
      %1704 = vmatpush.bf16.xpose.msra.mxu0 0
      %1705 = vmatpush.bf16.xpose.msra.mxu0 0
      %1706 = vmatpush.bf16.xpose.msra.mxu0 0
      %1707 = vmatpush.bf16.xpose.msra.mxu0 0
      %1708 = vmatpush.bf16.xpose.msra.mxu0 0
      %1709 = vmatpush.bf16.xpose.msra.mxu0 0
      %1710 = vmatpush.bf16.xpose.msra.mxu0 0
      %1711 = vmatpush.bf16.xpose.msra.mxu0 %v1686
      %1712 = vmatmul.bf16.gmra.mxu0 %v1702
      %v1713 = vpop.f32.mrf.mxu0
      %v1714 = vadd.f32 0.0, %v1713
      %v1715 = vpop.f32.mrf.mxu0
      %1716 = vdwg.mxu0
      %v1718 = vsel %vm519, %v1115, 0
      %1720 = vmatpush.bf16.xpose.msra.mxu0 0
      %1721 = vmatpush.bf16.xpose.msra.mxu0 0
      %1722 = vmatpush.bf16.xpose.msra.mxu0 0
      %1723 = vmatpush.bf16.xpose.msra.mxu0 0
      %1724 = vmatpush.bf16.xpose.msra.mxu0 0
      %1725 = vmatpush.bf16.xpose.msra.mxu0 0
      %1726 = vmatpush.bf16.xpose.msra.mxu0 0
      %1727 = vmatpush.bf16.xpose.msra.mxu0 %v1686
      %1728 = vmatmul.bf16.gmra.mxu0 %v1718
      %v1729 = vpop.f32.mrf.mxu0
      %v1730 = vadd.f32 0.0, %v1729
      %v1731 = vpop.f32.mrf.mxu0
      %1732 = vdwg.mxu0
      %v1734 = vsel %vm519, %v1116, 0
      %1736 = vmatpush.bf16.xpose.msra.mxu0 0
      %1737 = vmatpush.bf16.xpose.msra.mxu0 0
      %1738 = vmatpush.bf16.xpose.msra.mxu0 0
      %1739 = vmatpush.bf16.xpose.msra.mxu0 0
      %1740 = vmatpush.bf16.xpose.msra.mxu0 0
      %1741 = vmatpush.bf16.xpose.msra.mxu0 0
      %1742 = vmatpush.bf16.xpose.msra.mxu0 0
      %1743 = vmatpush.bf16.xpose.msra.mxu0 %v1686
      %1744 = vmatmul.bf16.gmra.mxu0 %v1734
      %v1745 = vpop.f32.mrf.mxu0
      %v1746 = vadd.f32 0.0, %v1745
      %v1747 = vpop.f32.mrf.mxu0
      %1748 = vdwg.mxu0
      %v1750 = vunpack.c.l.b16 %v1163
      %v1751 = vpack.c.b16 %v1750, %v1750
      %1752 = vrot.lane.b32.xlu0 %v1751, 96
      %v1753 = vpop.permute.xlu0 %1752
      %v1755 = vsel %vm519, %v1117, 0
      %v1758 = vsel %vm519, %v1753, 0
      %1760 = vmatpush.bf16.xpose.msra.mxu0 0
      %1761 = vmatpush.bf16.xpose.msra.mxu0 0
      %1762 = vmatpush.bf16.xpose.msra.mxu0 0
      %1763 = vmatpush.bf16.xpose.msra.mxu0 0
      %1764 = vmatpush.bf16.xpose.msra.mxu0 0
      %1765 = vmatpush.bf16.xpose.msra.mxu0 0
      %1766 = vmatpush.bf16.xpose.msra.mxu0 0
      %1767 = vmatpush.bf16.xpose.msra.mxu0 %v1758
      %1768 = vmatmul.bf16.gmra.mxu0 %v1755
      %v1769 = vpop.f32.mrf.mxu0
      %v1770 = vadd.f32 0.0, %v1769
      %v1771 = vpop.f32.mrf.mxu0
      %1772 = vdwg.mxu0
      %v1774 = vsel %vm519, %v1118, 0
      %1776 = vmatpush.bf16.xpose.msra.mxu0 0
      %1777 = vmatpush.bf16.xpose.msra.mxu0 0
      %1778 = vmatpush.bf16.xpose.msra.mxu0 0
      %1779 = vmatpush.bf16.xpose.msra.mxu0 0
      %1780 = vmatpush.bf16.xpose.msra.mxu0 0
      %1781 = vmatpush.bf16.xpose.msra.mxu0 0
      %1782 = vmatpush.bf16.xpose.msra.mxu0 0
      %1783 = vmatpush.bf16.xpose.msra.mxu0 %v1758
      %1784 = vmatmul.bf16.gmra.mxu0 %v1774
      %v1785 = vpop.f32.mrf.mxu0
      %v1786 = vadd.f32 0.0, %v1785
      %v1787 = vpop.f32.mrf.mxu0
      %1788 = vdwg.mxu0
      %v1790 = vsel %vm519, %v1119, 0
      %1792 = vmatpush.bf16.xpose.msra.mxu0 0
      %1793 = vmatpush.bf16.xpose.msra.mxu0 0
      %1794 = vmatpush.bf16.xpose.msra.mxu0 0
      %1795 = vmatpush.bf16.xpose.msra.mxu0 0
      %1796 = vmatpush.bf16.xpose.msra.mxu0 0
      %1797 = vmatpush.bf16.xpose.msra.mxu0 0
      %1798 = vmatpush.bf16.xpose.msra.mxu0 0
      %1799 = vmatpush.bf16.xpose.msra.mxu0 %v1758
      %1800 = vmatmul.bf16.gmra.mxu0 %v1790
      %v1801 = vpop.f32.mrf.mxu0
      %v1802 = vadd.f32 0.0, %v1801
      %v1803 = vpop.f32.mrf.mxu0
      %1804 = vdwg.mxu0
      %v1806 = vsel %vm519, %v1120, 0
      %1808 = vmatpush.bf16.xpose.msra.mxu0 0
      %1809 = vmatpush.bf16.xpose.msra.mxu0 0
      %1810 = vmatpush.bf16.xpose.msra.mxu0 0
      %1811 = vmatpush.bf16.xpose.msra.mxu0 0
      %1812 = vmatpush.bf16.xpose.msra.mxu0 0
      %1813 = vmatpush.bf16.xpose.msra.mxu0 0
      %1814 = vmatpush.bf16.xpose.msra.mxu0 0
      %1815 = vmatpush.bf16.xpose.msra.mxu0 %v1758
      %1816 = vmatmul.bf16.gmra.mxu0 %v1806
      %v1817 = vpop.f32.mrf.mxu0
      %v1818 = vadd.f32 0.0, %v1817
      %v1819 = vpop.f32.mrf.mxu0
      %1820 = vdwg.mxu0
      %v1822 = vunpack.c.l.b16 %v1164
      %v1823 = vpack.c.b16 %v1822, %v1822
      %1824 = vrot.lane.b32.xlu0 %v1823, 96
      %v1825 = vpop.permute.xlu0 %1824
      %v1827 = vsel %vm519, %v1121, 0
      %v1830 = vsel %vm519, %v1825, 0
      %1832 = vmatpush.bf16.xpose.msra.mxu0 0
      %1833 = vmatpush.bf16.xpose.msra.mxu0 0
      %1834 = vmatpush.bf16.xpose.msra.mxu0 0
      %1835 = vmatpush.bf16.xpose.msra.mxu0 0
      %1836 = vmatpush.bf16.xpose.msra.mxu0 0
      %1837 = vmatpush.bf16.xpose.msra.mxu0 0
      %1838 = vmatpush.bf16.xpose.msra.mxu0 0
      %1839 = vmatpush.bf16.xpose.msra.mxu0 %v1830
      %1840 = vmatmul.bf16.gmra.mxu0 %v1827
      %v1841 = vpop.f32.mrf.mxu0
      %v1842 = vadd.f32 0.0, %v1841
      %v1843 = vpop.f32.mrf.mxu0
      %1844 = vdwg.mxu0
      %v1846 = vsel %vm519, %v1122, 0
      %1848 = vmatpush.bf16.xpose.msra.mxu0 0
      %1849 = vmatpush.bf16.xpose.msra.mxu0 0
      %1850 = vmatpush.bf16.xpose.msra.mxu0 0
      %1851 = vmatpush.bf16.xpose.msra.mxu0 0
      %1852 = vmatpush.bf16.xpose.msra.mxu0 0
      %1853 = vmatpush.bf16.xpose.msra.mxu0 0
      %1854 = vmatpush.bf16.xpose.msra.mxu0 0
      %1855 = vmatpush.bf16.xpose.msra.mxu0 %v1830
      %1856 = vmatmul.bf16.gmra.mxu0 %v1846
      %v1857 = vpop.f32.mrf.mxu0
      %v1858 = vadd.f32 0.0, %v1857
      %v1859 = vpop.f32.mrf.mxu0
      %1860 = vdwg.mxu0
      %v1862 = vsel %vm519, %v1123, 0
      %1864 = vmatpush.bf16.xpose.msra.mxu0 0
      %1865 = vmatpush.bf16.xpose.msra.mxu0 0
      %1866 = vmatpush.bf16.xpose.msra.mxu0 0
      %1867 = vmatpush.bf16.xpose.msra.mxu0 0
      %1868 = vmatpush.bf16.xpose.msra.mxu0 0
      %1869 = vmatpush.bf16.xpose.msra.mxu0 0
      %1870 = vmatpush.bf16.xpose.msra.mxu0 0
      %1871 = vmatpush.bf16.xpose.msra.mxu0 %v1830
      %1872 = vmatmul.bf16.gmra.mxu0 %v1862
      %v1873 = vpop.f32.mrf.mxu0
      %v1874 = vadd.f32 0.0, %v1873
      %v1875 = vpop.f32.mrf.mxu0
      %1876 = vdwg.mxu0
      %v1878 = vsel %vm519, %v1124, 0
      %1880 = vmatpush.bf16.xpose.msra.mxu0 0
      %1881 = vmatpush.bf16.xpose.msra.mxu0 0
      %1882 = vmatpush.bf16.xpose.msra.mxu0 0
      %1883 = vmatpush.bf16.xpose.msra.mxu0 0
      %1884 = vmatpush.bf16.xpose.msra.mxu0 0
      %1885 = vmatpush.bf16.xpose.msra.mxu0 0
      %1886 = vmatpush.bf16.xpose.msra.mxu0 0
      %1887 = vmatpush.bf16.xpose.msra.mxu0 %v1830
      %1888 = vmatmul.bf16.gmra.mxu0 %v1878
      %v1889 = vpop.f32.mrf.mxu0
      %v1890 = vadd.f32 0.0, %v1889
      %v1891 = vpop.f32.mrf.mxu0
      %1892 = vdwg.mxu0
      %v1894 = vunpack.c.l.b16 %v1165
      %v1895 = vpack.c.b16 %v1894, %v1894
      %1896 = vrot.lane.b32.xlu0 %v1895, 96
      %v1897 = vpop.permute.xlu0 %1896
      %v1899 = vsel %vm519, %v1125, 0
      %v1902 = vsel %vm519, %v1897, 0
      %1904 = vmatpush.bf16.xpose.msra.mxu0 0
      %1905 = vmatpush.bf16.xpose.msra.mxu0 0
      %1906 = vmatpush.bf16.xpose.msra.mxu0 0
      %1907 = vmatpush.bf16.xpose.msra.mxu0 0
      %1908 = vmatpush.bf16.xpose.msra.mxu0 0
      %1909 = vmatpush.bf16.xpose.msra.mxu0 0
      %1910 = vmatpush.bf16.xpose.msra.mxu0 0
      %1911 = vmatpush.bf16.xpose.msra.mxu0 %v1902
      %1912 = vmatmul.bf16.gmra.mxu0 %v1899
      %v1913 = vpop.f32.mrf.mxu0
      %v1914 = vadd.f32 0.0, %v1913
      %v1915 = vpop.f32.mrf.mxu0
      %1916 = vdwg.mxu0
      %v1918 = vsel %vm519, %v1126, 0
      %1920 = vmatpush.bf16.xpose.msra.mxu0 0
      %1921 = vmatpush.bf16.xpose.msra.mxu0 0
      %1922 = vmatpush.bf16.xpose.msra.mxu0 0
      %1923 = vmatpush.bf16.xpose.msra.mxu0 0
      %1924 = vmatpush.bf16.xpose.msra.mxu0 0
      %1925 = vmatpush.bf16.xpose.msra.mxu0 0
      %1926 = vmatpush.bf16.xpose.msra.mxu0 0
      %1927 = vmatpush.bf16.xpose.msra.mxu0 %v1902
      %1928 = vmatmul.bf16.gmra.mxu0 %v1918
      %v1929 = vpop.f32.mrf.mxu0
      %v1930 = vadd.f32 0.0, %v1929
      %v1931 = vpop.f32.mrf.mxu0
      %1932 = vdwg.mxu0
      %v1934 = vsel %vm519, %v1127, 0
      %1936 = vmatpush.bf16.xpose.msra.mxu0 0
      %1937 = vmatpush.bf16.xpose.msra.mxu0 0
      %1938 = vmatpush.bf16.xpose.msra.mxu0 0
      %1939 = vmatpush.bf16.xpose.msra.mxu0 0
      %1940 = vmatpush.bf16.xpose.msra.mxu0 0
      %1941 = vmatpush.bf16.xpose.msra.mxu0 0
      %1942 = vmatpush.bf16.xpose.msra.mxu0 0
      %1943 = vmatpush.bf16.xpose.msra.mxu0 %v1902
      %1944 = vmatmul.bf16.gmra.mxu0 %v1934
      %v1945 = vpop.f32.mrf.mxu0
      %v1946 = vadd.f32 0.0, %v1945
      %v1947 = vpop.f32.mrf.mxu0
      %1948 = vdwg.mxu0
      %v1950 = vsel %vm519, %v1128, 0
      %1952 = vmatpush.bf16.xpose.msra.mxu0 0
      %1953 = vmatpush.bf16.xpose.msra.mxu0 0
      %1954 = vmatpush.bf16.xpose.msra.mxu0 0
      %1955 = vmatpush.bf16.xpose.msra.mxu0 0
      %1956 = vmatpush.bf16.xpose.msra.mxu0 0
      %1957 = vmatpush.bf16.xpose.msra.mxu0 0
      %1958 = vmatpush.bf16.xpose.msra.mxu0 0
      %1959 = vmatpush.bf16.xpose.msra.mxu0 %v1902
      %1960 = vmatmul.bf16.gmra.mxu0 %v1950
      %v1961 = vpop.f32.mrf.mxu0
      %v1962 = vadd.f32 0.0, %v1961
      %v1963 = vpop.f32.mrf.mxu0
      %1964 = vdwg.mxu0
      %v1966 = vunpack.c.l.b16 %v1166
      %v1967 = vpack.c.b16 %v1966, %v1966
      %1968 = vrot.lane.b32.xlu0 %v1967, 96
      %v1969 = vpop.permute.xlu0 %1968
      %v1971 = vsel %vm519, %v1129, 0
      %v1974 = vsel %vm519, %v1969, 0
      %1976 = vmatpush.bf16.xpose.msra.mxu0 0
      %1977 = vmatpush.bf16.xpose.msra.mxu0 0
      %1978 = vmatpush.bf16.xpose.msra.mxu0 0
      %1979 = vmatpush.bf16.xpose.msra.mxu0 0
      %1980 = vmatpush.bf16.xpose.msra.mxu0 0
      %1981 = vmatpush.bf16.xpose.msra.mxu0 0
      %1982 = vmatpush.bf16.xpose.msra.mxu0 0
      %1983 = vmatpush.bf16.xpose.msra.mxu0 %v1974
      %1984 = vmatmul.bf16.gmra.mxu0 %v1971
      %v1985 = vpop.f32.mrf.mxu0
      %v1986 = vadd.f32 0.0, %v1985
      %v1987 = vpop.f32.mrf.mxu0
      %1988 = vdwg.mxu0
      %v1990 = vsel %vm519, %v1130, 0
      %1992 = vmatpush.bf16.xpose.msra.mxu0 0
      %1993 = vmatpush.bf16.xpose.msra.mxu0 0
      %1994 = vmatpush.bf16.xpose.msra.mxu0 0
      %1995 = vmatpush.bf16.xpose.msra.mxu0 0
      %1996 = vmatpush.bf16.xpose.msra.mxu0 0
      %1997 = vmatpush.bf16.xpose.msra.mxu0 0
      %1998 = vmatpush.bf16.xpose.msra.mxu0 0
      %1999 = vmatpush.bf16.xpose.msra.mxu0 %v1974
      %2000 = vmatmul.bf16.gmra.mxu0 %v1990
      %v2001 = vpop.f32.mrf.mxu0
      %v2002 = vadd.f32 0.0, %v2001
      %v2003 = vpop.f32.mrf.mxu0
      %2004 = vdwg.mxu0
      %v2006 = vsel %vm519, %v1131, 0
      %2008 = vmatpush.bf16.xpose.msra.mxu0 0
      %2009 = vmatpush.bf16.xpose.msra.mxu0 0
      %2010 = vmatpush.bf16.xpose.msra.mxu0 0
      %2011 = vmatpush.bf16.xpose.msra.mxu0 0
      %2012 = vmatpush.bf16.xpose.msra.mxu0 0
      %2013 = vmatpush.bf16.xpose.msra.mxu0 0
      %2014 = vmatpush.bf16.xpose.msra.mxu0 0
      %2015 = vmatpush.bf16.xpose.msra.mxu0 %v1974
      %2016 = vmatmul.bf16.gmra.mxu0 %v2006
      %v2017 = vpop.f32.mrf.mxu0
      %v2018 = vadd.f32 0.0, %v2017
      %v2019 = vpop.f32.mrf.mxu0
      %2020 = vdwg.mxu0
      %v2022 = vsel %vm519, %v1132, 0
      %2024 = vmatpush.bf16.xpose.msra.mxu0 0
      %2025 = vmatpush.bf16.xpose.msra.mxu0 0
      %2026 = vmatpush.bf16.xpose.msra.mxu0 0
      %2027 = vmatpush.bf16.xpose.msra.mxu0 0
      %2028 = vmatpush.bf16.xpose.msra.mxu0 0
      %2029 = vmatpush.bf16.xpose.msra.mxu0 0
      %2030 = vmatpush.bf16.xpose.msra.mxu0 0
      %2031 = vmatpush.bf16.xpose.msra.mxu0 %v1974
      %2032 = vmatmul.bf16.gmra.mxu0 %v2022
      %v2033 = vpop.f32.mrf.mxu0
      %v2034 = vadd.f32 0.0, %v2033
      %v2035 = vpop.f32.mrf.mxu0
      %2036 = vdwg.mxu0
      %v2038 = vunpack.c.l.b16 %v1167
      %v2039 = vpack.c.b16 %v2038, %v2038
      %2040 = vrot.lane.b32.xlu0 %v2039, 96
      %v2041 = vpop.permute.xlu0 %2040
      %v2043 = vsel %vm519, %v1133, 0
      %v2046 = vsel %vm519, %v2041, 0
      %2048 = vmatpush.bf16.xpose.msra.mxu0 0
      %2049 = vmatpush.bf16.xpose.msra.mxu0 0
      %2050 = vmatpush.bf16.xpose.msra.mxu0 0
      %2051 = vmatpush.bf16.xpose.msra.mxu0 0
      %2052 = vmatpush.bf16.xpose.msra.mxu0 0
      %2053 = vmatpush.bf16.xpose.msra.mxu0 0
      %2054 = vmatpush.bf16.xpose.msra.mxu0 0
      %2055 = vmatpush.bf16.xpose.msra.mxu0 %v2046
      %2056 = vmatmul.bf16.gmra.mxu0 %v2043
      %v2057 = vpop.f32.mrf.mxu0
      %v2058 = vadd.f32 0.0, %v2057
      %v2059 = vpop.f32.mrf.mxu0
      %2060 = vdwg.mxu0
      %v2062 = vsel %vm519, %v1134, 0
      %2064 = vmatpush.bf16.xpose.msra.mxu0 0
      %2065 = vmatpush.bf16.xpose.msra.mxu0 0
      %2066 = vmatpush.bf16.xpose.msra.mxu0 0
      %2067 = vmatpush.bf16.xpose.msra.mxu0 0
      %2068 = vmatpush.bf16.xpose.msra.mxu0 0
      %2069 = vmatpush.bf16.xpose.msra.mxu0 0
      %2070 = vmatpush.bf16.xpose.msra.mxu0 0
      %2071 = vmatpush.bf16.xpose.msra.mxu0 %v2046
      %2072 = vmatmul.bf16.gmra.mxu0 %v2062
      %v2073 = vpop.f32.mrf.mxu0
      %v2074 = vadd.f32 0.0, %v2073
      %v2075 = vpop.f32.mrf.mxu0
      %2076 = vdwg.mxu0
      %v2078 = vsel %vm519, %v1135, 0
      %2080 = vmatpush.bf16.xpose.msra.mxu0 0
      %2081 = vmatpush.bf16.xpose.msra.mxu0 0
      %2082 = vmatpush.bf16.xpose.msra.mxu0 0
      %2083 = vmatpush.bf16.xpose.msra.mxu0 0
      %2084 = vmatpush.bf16.xpose.msra.mxu0 0
      %2085 = vmatpush.bf16.xpose.msra.mxu0 0
      %2086 = vmatpush.bf16.xpose.msra.mxu0 0
      %2087 = vmatpush.bf16.xpose.msra.mxu0 %v2046
      %2088 = vmatmul.bf16.gmra.mxu0 %v2078
      %v2089 = vpop.f32.mrf.mxu0
      %v2090 = vadd.f32 0.0, %v2089
      %v2091 = vpop.f32.mrf.mxu0
      %2092 = vdwg.mxu0
      %v2094 = vsel %vm519, %v1136, 0
      %2096 = vmatpush.bf16.xpose.msra.mxu0 0
      %2097 = vmatpush.bf16.xpose.msra.mxu0 0
      %2098 = vmatpush.bf16.xpose.msra.mxu0 0
      %2099 = vmatpush.bf16.xpose.msra.mxu0 0
      %2100 = vmatpush.bf16.xpose.msra.mxu0 0
      %2101 = vmatpush.bf16.xpose.msra.mxu0 0
      %2102 = vmatpush.bf16.xpose.msra.mxu0 0
      %2103 = vmatpush.bf16.xpose.msra.mxu0 %v2046
      %2104 = vmatmul.bf16.gmra.mxu0 %v2094
      %v2105 = vpop.f32.mrf.mxu0
      %v2106 = vadd.f32 0.0, %v2105
      %v2107 = vpop.f32.mrf.mxu0
      %2108 = vdwg.mxu0
      %v2110 = vunpack.c.l.b16 %v1168
      %v2111 = vpack.c.b16 %v2110, %v2110
      %2112 = vrot.lane.b32.xlu0 %v2111, 96
      %v2113 = vpop.permute.xlu0 %2112
      %v2115 = vsel %vm519, %v1137, 0
      %v2118 = vsel %vm519, %v2113, 0
      %2120 = vmatpush.bf16.xpose.msra.mxu0 0
      %2121 = vmatpush.bf16.xpose.msra.mxu0 0
      %2122 = vmatpush.bf16.xpose.msra.mxu0 0
      %2123 = vmatpush.bf16.xpose.msra.mxu0 0
      %2124 = vmatpush.bf16.xpose.msra.mxu0 0
      %2125 = vmatpush.bf16.xpose.msra.mxu0 0
      %2126 = vmatpush.bf16.xpose.msra.mxu0 0
      %2127 = vmatpush.bf16.xpose.msra.mxu0 %v2118
      %2128 = vmatmul.bf16.gmra.mxu0 %v2115
      %v2129 = vpop.f32.mrf.mxu0
      %v2130 = vadd.f32 0.0, %v2129
      %v2131 = vpop.f32.mrf.mxu0
      %2132 = vdwg.mxu0
      %v2134 = vsel %vm519, %v1138, 0
      %2136 = vmatpush.bf16.xpose.msra.mxu0 0
      %2137 = vmatpush.bf16.xpose.msra.mxu0 0
      %2138 = vmatpush.bf16.xpose.msra.mxu0 0
      %2139 = vmatpush.bf16.xpose.msra.mxu0 0
      %2140 = vmatpush.bf16.xpose.msra.mxu0 0
      %2141 = vmatpush.bf16.xpose.msra.mxu0 0
      %2142 = vmatpush.bf16.xpose.msra.mxu0 0
      %2143 = vmatpush.bf16.xpose.msra.mxu0 %v2118
      %2144 = vmatmul.bf16.gmra.mxu0 %v2134
      %v2145 = vpop.f32.mrf.mxu0
      %v2146 = vadd.f32 0.0, %v2145
      %v2147 = vpop.f32.mrf.mxu0
      %2148 = vdwg.mxu0
      %v2150 = vsel %vm519, %v1139, 0
      %2152 = vmatpush.bf16.xpose.msra.mxu0 0
      %2153 = vmatpush.bf16.xpose.msra.mxu0 0
      %2154 = vmatpush.bf16.xpose.msra.mxu0 0
      %2155 = vmatpush.bf16.xpose.msra.mxu0 0
      %2156 = vmatpush.bf16.xpose.msra.mxu0 0
      %2157 = vmatpush.bf16.xpose.msra.mxu0 0
      %2158 = vmatpush.bf16.xpose.msra.mxu0 0
      %2159 = vmatpush.bf16.xpose.msra.mxu0 %v2118
      %2160 = vmatmul.bf16.gmra.mxu0 %v2150
      %v2161 = vpop.f32.mrf.mxu0
      %v2162 = vadd.f32 0.0, %v2161
      %v2163 = vpop.f32.mrf.mxu0
      %2164 = vdwg.mxu0
      %v2166 = vsel %vm519, %v1140, 0
      %2168 = vmatpush.bf16.xpose.msra.mxu0 0
      %2169 = vmatpush.bf16.xpose.msra.mxu0 0
      %2170 = vmatpush.bf16.xpose.msra.mxu0 0
      %2171 = vmatpush.bf16.xpose.msra.mxu0 0
      %2172 = vmatpush.bf16.xpose.msra.mxu0 0
      %2173 = vmatpush.bf16.xpose.msra.mxu0 0
      %2174 = vmatpush.bf16.xpose.msra.mxu0 0
      %2175 = vmatpush.bf16.xpose.msra.mxu0 %v2118
      %2176 = vmatmul.bf16.gmra.mxu0 %v2166
      %v2177 = vpop.f32.mrf.mxu0
      %v2178 = vadd.f32 0.0, %v2177
      %v2179 = vpop.f32.mrf.mxu0
      %2180 = vdwg.mxu0
      %v2182 = vunpack.c.l.b16 %v1169
      %v2183 = vpack.c.b16 %v2182, %v2182
      %2184 = vrot.lane.b32.xlu0 %v2183, 96
      %v2185 = vpop.permute.xlu0 %2184
      %v2187 = vsel %vm519, %v1141, 0
      %v2190 = vsel %vm519, %v2185, 0
      %2192 = vmatpush.bf16.xpose.msra.mxu0 0
      %2193 = vmatpush.bf16.xpose.msra.mxu0 0
      %2194 = vmatpush.bf16.xpose.msra.mxu0 0
      %2195 = vmatpush.bf16.xpose.msra.mxu0 0
      %2196 = vmatpush.bf16.xpose.msra.mxu0 0
      %2197 = vmatpush.bf16.xpose.msra.mxu0 0
      %2198 = vmatpush.bf16.xpose.msra.mxu0 0
      %2199 = vmatpush.bf16.xpose.msra.mxu0 %v2190
      %2200 = vmatmul.bf16.gmra.mxu0 %v2187
      %v2201 = vpop.f32.mrf.mxu0
      %v2202 = vadd.f32 0.0, %v2201
      %v2203 = vpop.f32.mrf.mxu0
      %2204 = vdwg.mxu0
      %v2206 = vsel %vm519, %v1142, 0
      %2208 = vmatpush.bf16.xpose.msra.mxu0 0
      %2209 = vmatpush.bf16.xpose.msra.mxu0 0
      %2210 = vmatpush.bf16.xpose.msra.mxu0 0
      %2211 = vmatpush.bf16.xpose.msra.mxu0 0
      %2212 = vmatpush.bf16.xpose.msra.mxu0 0
      %2213 = vmatpush.bf16.xpose.msra.mxu0 0
      %2214 = vmatpush.bf16.xpose.msra.mxu0 0
      %2215 = vmatpush.bf16.xpose.msra.mxu0 %v2190
      %2216 = vmatmul.bf16.gmra.mxu0 %v2206
      %v2217 = vpop.f32.mrf.mxu0
      %v2218 = vadd.f32 0.0, %v2217
      %v2219 = vpop.f32.mrf.mxu0
      %2220 = vdwg.mxu0
      %v2222 = vsel %vm519, %v1143, 0
      %2224 = vmatpush.bf16.xpose.msra.mxu0 0
      %2225 = vmatpush.bf16.xpose.msra.mxu0 0
      %2226 = vmatpush.bf16.xpose.msra.mxu0 0
      %2227 = vmatpush.bf16.xpose.msra.mxu0 0
      %2228 = vmatpush.bf16.xpose.msra.mxu0 0
      %2229 = vmatpush.bf16.xpose.msra.mxu0 0
      %2230 = vmatpush.bf16.xpose.msra.mxu0 0
      %2231 = vmatpush.bf16.xpose.msra.mxu0 %v2190
      %2232 = vmatmul.bf16.gmra.mxu0 %v2222
      %v2233 = vpop.f32.mrf.mxu0
      %v2234 = vadd.f32 0.0, %v2233
      %v2235 = vpop.f32.mrf.mxu0
      %2236 = vdwg.mxu0
      %v2238 = vsel %vm519, %v1144, 0
      %2240 = vmatpush.bf16.xpose.msra.mxu0 0
      %2241 = vmatpush.bf16.xpose.msra.mxu0 0
      %2242 = vmatpush.bf16.xpose.msra.mxu0 0
      %2243 = vmatpush.bf16.xpose.msra.mxu0 0
      %2244 = vmatpush.bf16.xpose.msra.mxu0 0
      %2245 = vmatpush.bf16.xpose.msra.mxu0 0
      %2246 = vmatpush.bf16.xpose.msra.mxu0 0
      %2247 = vmatpush.bf16.xpose.msra.mxu0 %v2190
      %2248 = vmatmul.bf16.gmra.mxu0 %v2238
      %v2249 = vpop.f32.mrf.mxu0
      %v2250 = vadd.f32 0.0, %v2249
      %v2251 = vpop.f32.mrf.mxu0
      %2252 = vdwg.mxu0
      %v2254 = vunpack.c.l.b16 %v1170
      %v2255 = vpack.c.b16 %v2254, %v2254
      %2256 = vrot.lane.b32.xlu0 %v2255, 96
      %v2257 = vpop.permute.xlu0 %2256
      %v2259 = vsel %vm519, %v1145, 0
      %v2262 = vsel %vm519, %v2257, 0
      %2264 = vmatpush.bf16.xpose.msra.mxu0 0
      %2265 = vmatpush.bf16.xpose.msra.mxu0 0
      %2266 = vmatpush.bf16.xpose.msra.mxu0 0
      %2267 = vmatpush.bf16.xpose.msra.mxu0 0
      %2268 = vmatpush.bf16.xpose.msra.mxu0 0
      %2269 = vmatpush.bf16.xpose.msra.mxu0 0
      %2270 = vmatpush.bf16.xpose.msra.mxu0 0
      %2271 = vmatpush.bf16.xpose.msra.mxu0 %v2262
      %2272 = vmatmul.bf16.gmra.mxu0 %v2259
      %v2273 = vpop.f32.mrf.mxu0
      %v2274 = vadd.f32 0.0, %v2273
      %v2275 = vpop.f32.mrf.mxu0
      %2276 = vdwg.mxu0
      %v2278 = vsel %vm519, %v1146, 0
      %2280 = vmatpush.bf16.xpose.msra.mxu0 0
      %2281 = vmatpush.bf16.xpose.msra.mxu0 0
      %2282 = vmatpush.bf16.xpose.msra.mxu0 0
      %2283 = vmatpush.bf16.xpose.msra.mxu0 0
      %2284 = vmatpush.bf16.xpose.msra.mxu0 0
      %2285 = vmatpush.bf16.xpose.msra.mxu0 0
      %2286 = vmatpush.bf16.xpose.msra.mxu0 0
      %2287 = vmatpush.bf16.xpose.msra.mxu0 %v2262
      %2288 = vmatmul.bf16.gmra.mxu0 %v2278
      %v2289 = vpop.f32.mrf.mxu0
      %v2290 = vadd.f32 0.0, %v2289
      %v2291 = vpop.f32.mrf.mxu0
      %2292 = vdwg.mxu0
      %v2294 = vsel %vm519, %v1147, 0
      %2296 = vmatpush.bf16.xpose.msra.mxu0 0
      %2297 = vmatpush.bf16.xpose.msra.mxu0 0
      %2298 = vmatpush.bf16.xpose.msra.mxu0 0
      %2299 = vmatpush.bf16.xpose.msra.mxu0 0
      %2300 = vmatpush.bf16.xpose.msra.mxu0 0
      %2301 = vmatpush.bf16.xpose.msra.mxu0 0
      %2302 = vmatpush.bf16.xpose.msra.mxu0 0
      %2303 = vmatpush.bf16.xpose.msra.mxu0 %v2262
      %2304 = vmatmul.bf16.gmra.mxu0 %v2294
      %v2305 = vpop.f32.mrf.mxu0
      %v2306 = vadd.f32 0.0, %v2305
      %v2307 = vpop.f32.mrf.mxu0
      %2308 = vdwg.mxu0
      %v2310 = vsel %vm519, %v1148, 0
      %2312 = vmatpush.bf16.xpose.msra.mxu0 0
      %2313 = vmatpush.bf16.xpose.msra.mxu0 0
      %2314 = vmatpush.bf16.xpose.msra.mxu0 0
      %2315 = vmatpush.bf16.xpose.msra.mxu0 0
      %2316 = vmatpush.bf16.xpose.msra.mxu0 0
      %2317 = vmatpush.bf16.xpose.msra.mxu0 0
      %2318 = vmatpush.bf16.xpose.msra.mxu0 0
      %2319 = vmatpush.bf16.xpose.msra.mxu0 %v2262
      %2320 = vmatmul.bf16.gmra.mxu0 %v2310
      %v2321 = vpop.f32.mrf.mxu0
      %v2322 = vadd.f32 0.0, %v2321
      %v2323 = vpop.f32.mrf.mxu0
      %2324 = vdwg.mxu0
      %v2326 = vunpack.c.l.b16 %v1171
      %v2327 = vpack.c.b16 %v2326, %v2326
      %2328 = vrot.lane.b32.xlu0 %v2327, 96
      %v2329 = vpop.permute.xlu0 %2328
      %v2331 = vsel %vm519, %v1149, 0
      %v2334 = vsel %vm519, %v2329, 0
      %2336 = vmatpush.bf16.xpose.msra.mxu0 0
      %2337 = vmatpush.bf16.xpose.msra.mxu0 0
      %2338 = vmatpush.bf16.xpose.msra.mxu0 0
      %2339 = vmatpush.bf16.xpose.msra.mxu0 0
      %2340 = vmatpush.bf16.xpose.msra.mxu0 0
      %2341 = vmatpush.bf16.xpose.msra.mxu0 0
      %2342 = vmatpush.bf16.xpose.msra.mxu0 0
      %2343 = vmatpush.bf16.xpose.msra.mxu0 %v2334
      %2344 = vmatmul.bf16.gmra.mxu0 %v2331
      %v2345 = vpop.f32.mrf.mxu0
      %v2346 = vadd.f32 0.0, %v2345
      %v2347 = vpop.f32.mrf.mxu0
      %2348 = vdwg.mxu0
      %v2350 = vsel %vm519, %v1150, 0
      %2352 = vmatpush.bf16.xpose.msra.mxu0 0
      %2353 = vmatpush.bf16.xpose.msra.mxu0 0
      %2354 = vmatpush.bf16.xpose.msra.mxu0 0
      %2355 = vmatpush.bf16.xpose.msra.mxu0 0
      %2356 = vmatpush.bf16.xpose.msra.mxu0 0
      %2357 = vmatpush.bf16.xpose.msra.mxu0 0
      %2358 = vmatpush.bf16.xpose.msra.mxu0 0
      %2359 = vmatpush.bf16.xpose.msra.mxu0 %v2334
      %2360 = vmatmul.bf16.gmra.mxu0 %v2350
      %v2361 = vpop.f32.mrf.mxu0
      %v2362 = vadd.f32 0.0, %v2361
      %v2363 = vpop.f32.mrf.mxu0
      %2364 = vdwg.mxu0
      %v2366 = vsel %vm519, %v1151, 0
      %2368 = vmatpush.bf16.xpose.msra.mxu0 0
      %2369 = vmatpush.bf16.xpose.msra.mxu0 0
      %2370 = vmatpush.bf16.xpose.msra.mxu0 0
      %2371 = vmatpush.bf16.xpose.msra.mxu0 0
      %2372 = vmatpush.bf16.xpose.msra.mxu0 0
      %2373 = vmatpush.bf16.xpose.msra.mxu0 0
      %2374 = vmatpush.bf16.xpose.msra.mxu0 0
      %2375 = vmatpush.bf16.xpose.msra.mxu0 %v2334
      %2376 = vmatmul.bf16.gmra.mxu0 %v2366
      %v2377 = vpop.f32.mrf.mxu0
      %v2378 = vadd.f32 0.0, %v2377
      %v2379 = vpop.f32.mrf.mxu0
      %2380 = vdwg.mxu0
      %v2382 = vsel %vm519, %v1152, 0
      %2384 = vmatpush.bf16.xpose.msra.mxu0 0
      %2385 = vmatpush.bf16.xpose.msra.mxu0 0
      %2386 = vmatpush.bf16.xpose.msra.mxu0 0
      %2387 = vmatpush.bf16.xpose.msra.mxu0 0
      %2388 = vmatpush.bf16.xpose.msra.mxu0 0
      %2389 = vmatpush.bf16.xpose.msra.mxu0 0
      %2390 = vmatpush.bf16.xpose.msra.mxu0 0
      %2391 = vmatpush.bf16.xpose.msra.mxu0 %v2334
      %2392 = vmatmul.bf16.gmra.mxu0 %v2382
      %v2393 = vpop.f32.mrf.mxu0
      %v2394 = vadd.f32 0.0, %v2393
      %v2395 = vpop.f32.mrf.mxu0
      %2396 = vdwg.mxu0
      %v2398 = vunpack.c.l.b16 %v1172
      %v2399 = vpack.c.b16 %v2398, %v2398
      %2400 = vrot.lane.b32.xlu0 %v2399, 96
      %v2401 = vpop.permute.xlu0 %2400
      %v2403 = vsel %vm519, %v1153, 0
      %v2406 = vsel %vm519, %v2401, 0
      %2408 = vmatpush.bf16.xpose.msra.mxu0 0
      %2409 = vmatpush.bf16.xpose.msra.mxu0 0
      %2410 = vmatpush.bf16.xpose.msra.mxu0 0
      %2411 = vmatpush.bf16.xpose.msra.mxu0 0
      %2412 = vmatpush.bf16.xpose.msra.mxu0 0
      %2413 = vmatpush.bf16.xpose.msra.mxu0 0
      %2414 = vmatpush.bf16.xpose.msra.mxu0 0
      %2415 = vmatpush.bf16.xpose.msra.mxu0 %v2406
      %2416 = vmatmul.bf16.gmra.mxu0 %v2403
      %v2417 = vpop.f32.mrf.mxu0
      %v2418 = vadd.f32 0.0, %v2417
      %v2419 = vpop.f32.mrf.mxu0
      %2420 = vdwg.mxu0
      %v2422 = vsel %vm519, %v1154, 0
      %2424 = vmatpush.bf16.xpose.msra.mxu0 0
      %2425 = vmatpush.bf16.xpose.msra.mxu0 0
      %2426 = vmatpush.bf16.xpose.msra.mxu0 0
      %2427 = vmatpush.bf16.xpose.msra.mxu0 0
      %2428 = vmatpush.bf16.xpose.msra.mxu0 0
      %2429 = vmatpush.bf16.xpose.msra.mxu0 0
      %2430 = vmatpush.bf16.xpose.msra.mxu0 0
      %2431 = vmatpush.bf16.xpose.msra.mxu0 %v2406
      %2432 = vmatmul.bf16.gmra.mxu0 %v2422
      %v2433 = vpop.f32.mrf.mxu0
      %v2434 = vadd.f32 0.0, %v2433
      %v2435 = vpop.f32.mrf.mxu0
      %2436 = vdwg.mxu0
      %v2438 = vsel %vm519, %v1155, 0
      %2440 = vmatpush.bf16.xpose.msra.mxu0 0
      %2441 = vmatpush.bf16.xpose.msra.mxu0 0
      %2442 = vmatpush.bf16.xpose.msra.mxu0 0
      %2443 = vmatpush.bf16.xpose.msra.mxu0 0
      %2444 = vmatpush.bf16.xpose.msra.mxu0 0
      %2445 = vmatpush.bf16.xpose.msra.mxu0 0
      %2446 = vmatpush.bf16.xpose.msra.mxu0 0
      %2447 = vmatpush.bf16.xpose.msra.mxu0 %v2406
      %2448 = vmatmul.bf16.gmra.mxu0 %v2438
      %v2449 = vpop.f32.mrf.mxu0
      %v2450 = vadd.f32 0.0, %v2449
      %v2451 = vpop.f32.mrf.mxu0
      %2452 = vdwg.mxu0
      %v2454 = vsel %vm519, %v1156, 0
      %2456 = vmatpush.bf16.xpose.msra.mxu0 0
      %2457 = vmatpush.bf16.xpose.msra.mxu0 0
      %2458 = vmatpush.bf16.xpose.msra.mxu0 0
      %2459 = vmatpush.bf16.xpose.msra.mxu0 0
      %2460 = vmatpush.bf16.xpose.msra.mxu0 0
      %2461 = vmatpush.bf16.xpose.msra.mxu0 0
      %2462 = vmatpush.bf16.xpose.msra.mxu0 0
      %2463 = vmatpush.bf16.xpose.msra.mxu0 %v2406
      %2464 = vmatmul.bf16.gmra.mxu0 %v2454
      %v2465 = vpop.f32.mrf.mxu0
      %v2466 = vadd.f32 0.0, %v2465
      %v2467 = vpop.f32.mrf.mxu0
      %2468 = vdwg.mxu0
      %vm2469 = vcmask 64512
      %v2470 = vsel %vm2469, %v1338, -inf
      %2471 = vmax.xlane.f32.xlu0 %v2470
      %v2472 = vpop.xlane.xlu0 %2471
      %v2473 = vsel %vm2469, %v1354, -inf
      %2474 = vmax.xlane.f32.xlu0 %v2473
      %v2475 = vpop.xlane.xlu0 %2474
      %v2476 = vsel %vm2469, %v1370, -inf
      %2477 = vmax.xlane.f32.xlu0 %v2476
      %v2478 = vpop.xlane.xlu0 %2477
      %v2479 = vsel %vm2469, %v1386, -inf
      %2480 = vmax.xlane.f32.xlu0 %v2479
      %v2481 = vpop.xlane.xlu0 %2480
      %v2482 = vsel %vm2469, %v1410, -inf
      %2483 = vmax.xlane.f32.xlu0 %v2482
      %v2484 = vpop.xlane.xlu0 %2483
      %v2485 = vsel %vm2469, %v1426, -inf
      %2486 = vmax.xlane.f32.xlu0 %v2485
      %v2487 = vpop.xlane.xlu0 %2486
      %v2488 = vsel %vm2469, %v1442, -inf
      %2489 = vmax.xlane.f32.xlu0 %v2488
      %v2490 = vpop.xlane.xlu0 %2489
      %v2491 = vsel %vm2469, %v1458, -inf
      %2492 = vmax.xlane.f32.xlu0 %v2491
      %v2493 = vpop.xlane.xlu0 %2492
      %v2494 = vsel %vm2469, %v1482, -inf
      %2495 = vmax.xlane.f32.xlu0 %v2494
      %v2496 = vpop.xlane.xlu0 %2495
      %v2497 = vsel %vm2469, %v1498, -inf
      %2498 = vmax.xlane.f32.xlu0 %v2497
      %v2499 = vpop.xlane.xlu0 %2498
      %v2500 = vsel %vm2469, %v1514, -inf
      %2501 = vmax.xlane.f32.xlu0 %v2500
      %v2502 = vpop.xlane.xlu0 %2501
      %v2503 = vsel %vm2469, %v1530, -inf
      %2504 = vmax.xlane.f32.xlu0 %v2503
      %v2505 = vpop.xlane.xlu0 %2504
      %v2506 = vsel %vm2469, %v1554, -inf
      %2507 = vmax.xlane.f32.xlu0 %v2506
      %v2508 = vpop.xlane.xlu0 %2507
      %v2509 = vsel %vm2469, %v1570, -inf
      %2510 = vmax.xlane.f32.xlu0 %v2509
      %v2511 = vpop.xlane.xlu0 %2510
      %v2512 = vsel %vm2469, %v1586, -inf
      %2513 = vmax.xlane.f32.xlu0 %v2512
      %v2514 = vpop.xlane.xlu0 %2513
      %v2515 = vsel %vm2469, %v1602, -inf
      %2516 = vmax.xlane.f32.xlu0 %v2515
      %v2517 = vpop.xlane.xlu0 %2516
      %v2518 = vsel %vm2469, %v1626, -inf
      %2519 = vmax.xlane.f32.xlu0 %v2518
      %v2520 = vpop.xlane.xlu0 %2519
      %v2521 = vsel %vm2469, %v1642, -inf
      %2522 = vmax.xlane.f32.xlu0 %v2521
      %v2523 = vpop.xlane.xlu0 %2522
      %v2524 = vsel %vm2469, %v1658, -inf
      %2525 = vmax.xlane.f32.xlu0 %v2524
      %v2526 = vpop.xlane.xlu0 %2525
      %v2527 = vsel %vm2469, %v1674, -inf
      %2528 = vmax.xlane.f32.xlu0 %v2527
      %v2529 = vpop.xlane.xlu0 %2528
      %v2530 = vsel %vm2469, %v1698, -inf
      %2531 = vmax.xlane.f32.xlu0 %v2530
      %v2532 = vpop.xlane.xlu0 %2531
      %v2533 = vsel %vm2469, %v1714, -inf
      %2534 = vmax.xlane.f32.xlu0 %v2533
      %v2535 = vpop.xlane.xlu0 %2534
      %v2536 = vsel %vm2469, %v1730, -inf
      %2537 = vmax.xlane.f32.xlu0 %v2536
      %v2538 = vpop.xlane.xlu0 %2537
      %v2539 = vsel %vm2469, %v1746, -inf
      %2540 = vmax.xlane.f32.xlu0 %v2539
      %v2541 = vpop.xlane.xlu0 %2540
      %v2542 = vsel %vm2469, %v1770, -inf
      %2543 = vmax.xlane.f32.xlu0 %v2542
      %v2544 = vpop.xlane.xlu0 %2543
      %v2545 = vsel %vm2469, %v1786, -inf
      %2546 = vmax.xlane.f32.xlu0 %v2545
      %v2547 = vpop.xlane.xlu0 %2546
      %v2548 = vsel %vm2469, %v1802, -inf
      %2549 = vmax.xlane.f32.xlu0 %v2548
      %v2550 = vpop.xlane.xlu0 %2549
      %v2551 = vsel %vm2469, %v1818, -inf
      %2552 = vmax.xlane.f32.xlu0 %v2551
      %v2553 = vpop.xlane.xlu0 %2552
      %v2554 = vsel %vm2469, %v1842, -inf
      %2555 = vmax.xlane.f32.xlu0 %v2554
      %v2556 = vpop.xlane.xlu0 %2555
      %v2557 = vsel %vm2469, %v1858, -inf
      %2558 = vmax.xlane.f32.xlu0 %v2557
      %v2559 = vpop.xlane.xlu0 %2558
      %v2560 = vsel %vm2469, %v1874, -inf
      %2561 = vmax.xlane.f32.xlu0 %v2560
      %v2562 = vpop.xlane.xlu0 %2561
      %v2563 = vsel %vm2469, %v1890, -inf
      %2564 = vmax.xlane.f32.xlu0 %v2563
      %v2565 = vpop.xlane.xlu0 %2564
      %v2566 = vsel %vm2469, %v1914, -inf
      %2567 = vmax.xlane.f32.xlu0 %v2566
      %v2568 = vpop.xlane.xlu0 %2567
      %v2569 = vsel %vm2469, %v1930, -inf
      %2570 = vmax.xlane.f32.xlu0 %v2569
      %v2571 = vpop.xlane.xlu0 %2570
      %v2572 = vsel %vm2469, %v1946, -inf
      %2573 = vmax.xlane.f32.xlu0 %v2572
      %v2574 = vpop.xlane.xlu0 %2573
      %v2575 = vsel %vm2469, %v1962, -inf
      %2576 = vmax.xlane.f32.xlu0 %v2575
      %v2577 = vpop.xlane.xlu0 %2576
      %v2578 = vsel %vm2469, %v1986, -inf
      %2579 = vmax.xlane.f32.xlu0 %v2578
      %v2580 = vpop.xlane.xlu0 %2579
      %v2581 = vsel %vm2469, %v2002, -inf
      %2582 = vmax.xlane.f32.xlu0 %v2581
      %v2583 = vpop.xlane.xlu0 %2582
      %v2584 = vsel %vm2469, %v2018, -inf
      %2585 = vmax.xlane.f32.xlu0 %v2584
      %v2586 = vpop.xlane.xlu0 %2585
      %v2587 = vsel %vm2469, %v2034, -inf
      %2588 = vmax.xlane.f32.xlu0 %v2587
      %v2589 = vpop.xlane.xlu0 %2588
      %v2590 = vsel %vm2469, %v2058, -inf
      %2591 = vmax.xlane.f32.xlu0 %v2590
      %v2592 = vpop.xlane.xlu0 %2591
      %v2593 = vsel %vm2469, %v2074, -inf
      %2594 = vmax.xlane.f32.xlu0 %v2593
      %v2595 = vpop.xlane.xlu0 %2594
      %v2596 = vsel %vm2469, %v2090, -inf
      %2597 = vmax.xlane.f32.xlu0 %v2596
      %v2598 = vpop.xlane.xlu0 %2597
      %v2599 = vsel %vm2469, %v2106, -inf
      %2600 = vmax.xlane.f32.xlu0 %v2599
      %v2601 = vpop.xlane.xlu0 %2600
      %v2602 = vsel %vm2469, %v2130, -inf
      %2603 = vmax.xlane.f32.xlu0 %v2602
      %v2604 = vpop.xlane.xlu0 %2603
      %v2605 = vsel %vm2469, %v2146, -inf
      %2606 = vmax.xlane.f32.xlu0 %v2605
      %v2607 = vpop.xlane.xlu0 %2606
      %v2608 = vsel %vm2469, %v2162, -inf
      %2609 = vmax.xlane.f32.xlu0 %v2608
      %v2610 = vpop.xlane.xlu0 %2609
      %v2611 = vsel %vm2469, %v2178, -inf
      %2612 = vmax.xlane.f32.xlu0 %v2611
      %v2613 = vpop.xlane.xlu0 %2612
      %v2614 = vsel %vm2469, %v2202, -inf
      %2615 = vmax.xlane.f32.xlu0 %v2614
      %v2616 = vpop.xlane.xlu0 %2615
      %v2617 = vsel %vm2469, %v2218, -inf
      %2618 = vmax.xlane.f32.xlu0 %v2617
      %v2619 = vpop.xlane.xlu0 %2618
      %v2620 = vsel %vm2469, %v2234, -inf
      %2621 = vmax.xlane.f32.xlu0 %v2620
      %v2622 = vpop.xlane.xlu0 %2621
      %v2623 = vsel %vm2469, %v2250, -inf
      %2624 = vmax.xlane.f32.xlu0 %v2623
      %v2625 = vpop.xlane.xlu0 %2624
      %v2626 = vsel %vm2469, %v2274, -inf
      %2627 = vmax.xlane.f32.xlu0 %v2626
      %v2628 = vpop.xlane.xlu0 %2627
      %v2629 = vsel %vm2469, %v2290, -inf
      %2630 = vmax.xlane.f32.xlu0 %v2629
      %v2631 = vpop.xlane.xlu0 %2630
      %v2632 = vsel %vm2469, %v2306, -inf
      %2633 = vmax.xlane.f32.xlu0 %v2632
      %v2634 = vpop.xlane.xlu0 %2633
      %v2635 = vsel %vm2469, %v2322, -inf
      %2636 = vmax.xlane.f32.xlu0 %v2635
      %v2637 = vpop.xlane.xlu0 %2636
      %v2638 = vsel %vm2469, %v2346, -inf
      %2639 = vmax.xlane.f32.xlu0 %v2638
      %v2640 = vpop.xlane.xlu0 %2639
      %v2641 = vsel %vm2469, %v2362, -inf
      %2642 = vmax.xlane.f32.xlu0 %v2641
      %v2643 = vpop.xlane.xlu0 %2642
      %v2644 = vsel %vm2469, %v2378, -inf
      %2645 = vmax.xlane.f32.xlu0 %v2644
      %v2646 = vpop.xlane.xlu0 %2645
      %v2647 = vsel %vm2469, %v2394, -inf
      %2648 = vmax.xlane.f32.xlu0 %v2647
      %v2649 = vpop.xlane.xlu0 %2648
      %v2650 = vsel %vm2469, %v2418, -inf
      %2651 = vmax.xlane.f32.xlu0 %v2650
      %v2652 = vpop.xlane.xlu0 %2651
      %v2653 = vsel %vm2469, %v2434, -inf
      %2654 = vmax.xlane.f32.xlu0 %v2653
      %v2655 = vpop.xlane.xlu0 %2654
      %v2656 = vsel %vm2469, %v2450, -inf
      %2657 = vmax.xlane.f32.xlu0 %v2656
      %v2658 = vpop.xlane.xlu0 %2657
      %v2659 = vsel %vm2469, %v2466, -inf
      %2660 = vmax.xlane.f32.xlu0 %v2659
      %v2661 = vpop.xlane.xlu0 %2660
      %v2662 = vsub.f32 %v1338, %v2472
      %v2663 = vsub.f32 %v1354, %v2475
      %v2664 = vsub.f32 %v1370, %v2478
      %v2665 = vsub.f32 %v1386, %v2481
      %v2666 = vsub.f32 %v1410, %v2484
      %v2667 = vsub.f32 %v1426, %v2487
      %v2668 = vsub.f32 %v1442, %v2490
      %v2669 = vsub.f32 %v1458, %v2493
      %v2670 = vsub.f32 %v1482, %v2496
      %v2671 = vsub.f32 %v1498, %v2499
      %v2672 = vsub.f32 %v1514, %v2502
      %v2673 = vsub.f32 %v1530, %v2505
      %v2674 = vsub.f32 %v1554, %v2508
      %v2675 = vsub.f32 %v1570, %v2511
      %v2676 = vsub.f32 %v1586, %v2514
      %v2677 = vsub.f32 %v1602, %v2517
      %v2678 = vsub.f32 %v1626, %v2520
      %v2679 = vsub.f32 %v1642, %v2523
      %v2680 = vsub.f32 %v1658, %v2526
      %v2681 = vsub.f32 %v1674, %v2529
      %v2682 = vsub.f32 %v1698, %v2532
      %v2683 = vsub.f32 %v1714, %v2535
      %v2684 = vsub.f32 %v1730, %v2538
      %v2685 = vsub.f32 %v1746, %v2541
      %v2686 = vsub.f32 %v1770, %v2544
      %v2687 = vsub.f32 %v1786, %v2547
      %v2688 = vsub.f32 %v1802, %v2550
      %v2689 = vsub.f32 %v1818, %v2553
      %v2690 = vsub.f32 %v1842, %v2556
      %v2691 = vsub.f32 %v1858, %v2559
      %v2692 = vsub.f32 %v1874, %v2562
      %v2693 = vsub.f32 %v1890, %v2565
      %v2694 = vsub.f32 %v1914, %v2568
      %v2695 = vsub.f32 %v1930, %v2571
      %v2696 = vsub.f32 %v1946, %v2574
      %v2697 = vsub.f32 %v1962, %v2577
      %v2698 = vsub.f32 %v1986, %v2580
      %v2699 = vsub.f32 %v2002, %v2583
      %v2700 = vsub.f32 %v2018, %v2586
      %v2701 = vsub.f32 %v2034, %v2589
      %v2702 = vsub.f32 %v2058, %v2592
      %v2703 = vsub.f32 %v2074, %v2595
      %v2704 = vsub.f32 %v2090, %v2598
      %v2705 = vsub.f32 %v2106, %v2601
      %v2706 = vsub.f32 %v2130, %v2604
      %v2707 = vsub.f32 %v2146, %v2607
      %v2708 = vsub.f32 %v2162, %v2610
      %v2709 = vsub.f32 %v2178, %v2613
      %v2710 = vsub.f32 %v2202, %v2616
      %v2711 = vsub.f32 %v2218, %v2619
      %v2712 = vsub.f32 %v2234, %v2622
      %v2713 = vsub.f32 %v2250, %v2625
      %v2714 = vsub.f32 %v2274, %v2628
      %v2715 = vsub.f32 %v2290, %v2631
      %v2716 = vsub.f32 %v2306, %v2634
      %v2717 = vsub.f32 %v2322, %v2637
      %v2718 = vsub.f32 %v2346, %v2640
      %v2719 = vsub.f32 %v2362, %v2643
      %v2720 = vsub.f32 %v2378, %v2646
      %v2721 = vsub.f32 %v2394, %v2649
      %v2722 = vsub.f32 %v2418, %v2652
      %v2723 = vsub.f32 %v2434, %v2655
      %v2724 = vsub.f32 %v2450, %v2658
      %v2725 = vsub.f32 %v2466, %v2661
      %v2726 = vmul.f32 %v2662, 1.442695
      %v2727 = vpow.pop %v2726
      %v2728 = vmul.f32 %v2663, 1.442695
      %v2729 = vpow.pop %v2728
      %v2730 = vmul.f32 %v2664, 1.442695
      %v2731 = vpow.pop %v2730
      %v2732 = vmul.f32 %v2665, 1.442695
      %v2733 = vpow.pop %v2732
      %v2734 = vmul.f32 %v2666, 1.442695
      %v2735 = vpow.pop %v2734
      %v2736 = vmul.f32 %v2667, 1.442695
      %v2737 = vpow.pop %v2736
      %v2738 = vmul.f32 %v2668, 1.442695
      %v2739 = vpow.pop %v2738
      %v2740 = vmul.f32 %v2669, 1.442695
      %v2741 = vpow.pop %v2740
      %v2742 = vmul.f32 %v2670, 1.442695
      %v2743 = vpow.pop %v2742
      %v2744 = vmul.f32 %v2671, 1.442695
      %v2745 = vpow.pop %v2744
      %v2746 = vmul.f32 %v2672, 1.442695
      %v2747 = vpow.pop %v2746
      %v2748 = vmul.f32 %v2673, 1.442695
      %v2749 = vpow.pop %v2748
      %v2750 = vmul.f32 %v2674, 1.442695
      %v2751 = vpow.pop %v2750
      %v2752 = vmul.f32 %v2675, 1.442695
      %v2753 = vpow.pop %v2752
      %v2754 = vmul.f32 %v2676, 1.442695
      %v2755 = vpow.pop %v2754
      %v2756 = vmul.f32 %v2677, 1.442695
      %v2757 = vpow.pop %v2756
      %v2758 = vmul.f32 %v2678, 1.442695
      %v2759 = vpow.pop %v2758
      %v2760 = vmul.f32 %v2679, 1.442695
      %v2761 = vpow.pop %v2760
      %v2762 = vmul.f32 %v2680, 1.442695
      %v2763 = vpow.pop %v2762
      %v2764 = vmul.f32 %v2681, 1.442695
      %v2765 = vpow.pop %v2764
      %v2766 = vmul.f32 %v2682, 1.442695
      %v2767 = vpow.pop %v2766
      %v2768 = vmul.f32 %v2683, 1.442695
      %v2769 = vpow.pop %v2768
      %v2770 = vmul.f32 %v2684, 1.442695
      %v2771 = vpow.pop %v2770
      %v2772 = vmul.f32 %v2685, 1.442695
      %v2773 = vpow.pop %v2772
      %v2774 = vmul.f32 %v2686, 1.442695
      %v2775 = vpow.pop %v2774
      %v2776 = vmul.f32 %v2687, 1.442695
      %v2777 = vpow.pop %v2776
      %v2778 = vmul.f32 %v2688, 1.442695
      %v2779 = vpow.pop %v2778
      %v2780 = vmul.f32 %v2689, 1.442695
      %v2781 = vpow.pop %v2780
      %v2782 = vmul.f32 %v2690, 1.442695
      %v2783 = vpow.pop %v2782
      %v2784 = vmul.f32 %v2691, 1.442695
      %v2785 = vpow.pop %v2784
      %v2786 = vmul.f32 %v2692, 1.442695
      %v2787 = vpow.pop %v2786
      %v2788 = vmul.f32 %v2693, 1.442695
      %v2789 = vpow.pop %v2788
      %v2790 = vmul.f32 %v2694, 1.442695
      %v2791 = vpow.pop %v2790
      %v2792 = vmul.f32 %v2695, 1.442695
      %v2793 = vpow.pop %v2792
      %v2794 = vmul.f32 %v2696, 1.442695
      %v2795 = vpow.pop %v2794
      %v2796 = vmul.f32 %v2697, 1.442695
      %v2797 = vpow.pop %v2796
      %v2798 = vmul.f32 %v2698, 1.442695
      %v2799 = vpow.pop %v2798
      %v2800 = vmul.f32 %v2699, 1.442695
      %v2801 = vpow.pop %v2800
      %v2802 = vmul.f32 %v2700, 1.442695
      %v2803 = vpow.pop %v2802
      %v2804 = vmul.f32 %v2701, 1.442695
      %v2805 = vpow.pop %v2804
      %v2806 = vmul.f32 %v2702, 1.442695
      %v2807 = vpow.pop %v2806
      %v2808 = vmul.f32 %v2703, 1.442695
      %v2809 = vpow.pop %v2808
      %v2810 = vmul.f32 %v2704, 1.442695
      %v2811 = vpow.pop %v2810
      %v2812 = vmul.f32 %v2705, 1.442695
      %v2813 = vpow.pop %v2812
      %v2814 = vmul.f32 %v2706, 1.442695
      %v2815 = vpow.pop %v2814
      %v2816 = vmul.f32 %v2707, 1.442695
      %v2817 = vpow.pop %v2816
      %v2818 = vmul.f32 %v2708, 1.442695
      %v2819 = vpow.pop %v2818
      %v2820 = vmul.f32 %v2709, 1.442695
      %v2821 = vpow.pop %v2820
      %v2822 = vmul.f32 %v2710, 1.442695
      %v2823 = vpow.pop %v2822
      %v2824 = vmul.f32 %v2711, 1.442695
      %v2825 = vpow.pop %v2824
      %v2826 = vmul.f32 %v2712, 1.442695
      %v2827 = vpow.pop %v2826
      %v2828 = vmul.f32 %v2713, 1.442695
      %v2829 = vpow.pop %v2828
      %v2830 = vmul.f32 %v2714, 1.442695
      %v2831 = vpow.pop %v2830
      %v2832 = vmul.f32 %v2715, 1.442695
      %v2833 = vpow.pop %v2832
      %v2834 = vmul.f32 %v2716, 1.442695
      %v2835 = vpow.pop %v2834
      %v2836 = vmul.f32 %v2717, 1.442695
      %v2837 = vpow.pop %v2836
      %v2838 = vmul.f32 %v2718, 1.442695
      %v2839 = vpow.pop %v2838
      %v2840 = vmul.f32 %v2719, 1.442695
      %v2841 = vpow.pop %v2840
      %v2842 = vmul.f32 %v2720, 1.442695
      %v2843 = vpow.pop %v2842
      %v2844 = vmul.f32 %v2721, 1.442695
      %v2845 = vpow.pop %v2844
      %v2846 = vmul.f32 %v2722, 1.442695
      %v2847 = vpow.pop %v2846
      %v2848 = vmul.f32 %v2723, 1.442695
      %v2849 = vpow.pop %v2848
      %v2850 = vmul.f32 %v2724, 1.442695
      %v2851 = vpow.pop %v2850
      %v2852 = vmul.f32 %v2725, 1.442695
      %v2853 = vpow.pop %v2852
      %v2854 = vsel %vm2469, %v2727, 0.0
      %2855 = vadd.xlane.f32.xlu0 %v2854
      %v2856 = vpop.xlane.xlu0 %2855
      %v2857 = vsel %vm2469, %v2729, 0.0
      %2858 = vadd.xlane.f32.xlu0 %v2857
      %v2859 = vpop.xlane.xlu0 %2858
      %v2860 = vsel %vm2469, %v2731, 0.0
      %2861 = vadd.xlane.f32.xlu0 %v2860
      %v2862 = vpop.xlane.xlu0 %2861
      %v2863 = vsel %vm2469, %v2733, 0.0
      %2864 = vadd.xlane.f32.xlu0 %v2863
      %v2865 = vpop.xlane.xlu0 %2864
      %v2866 = vsel %vm2469, %v2735, 0.0
      %2867 = vadd.xlane.f32.xlu0 %v2866
      %v2868 = vpop.xlane.xlu0 %2867
      %v2869 = vsel %vm2469, %v2737, 0.0
      %2870 = vadd.xlane.f32.xlu0 %v2869
      %v2871 = vpop.xlane.xlu0 %2870
      %v2872 = vsel %vm2469, %v2739, 0.0
      %2873 = vadd.xlane.f32.xlu0 %v2872
      %v2874 = vpop.xlane.xlu0 %2873
      %v2875 = vsel %vm2469, %v2741, 0.0
      %2876 = vadd.xlane.f32.xlu0 %v2875
      %v2877 = vpop.xlane.xlu0 %2876
      %v2878 = vsel %vm2469, %v2743, 0.0
      %2879 = vadd.xlane.f32.xlu0 %v2878
      %v2880 = vpop.xlane.xlu0 %2879
      %v2881 = vsel %vm2469, %v2745, 0.0
      %2882 = vadd.xlane.f32.xlu0 %v2881
      %v2883 = vpop.xlane.xlu0 %2882
      %v2884 = vsel %vm2469, %v2747, 0.0
      %2885 = vadd.xlane.f32.xlu0 %v2884
      %v2886 = vpop.xlane.xlu0 %2885
      %v2887 = vsel %vm2469, %v2749, 0.0
      %2888 = vadd.xlane.f32.xlu0 %v2887
      %v2889 = vpop.xlane.xlu0 %2888
      %v2890 = vsel %vm2469, %v2751, 0.0
      %2891 = vadd.xlane.f32.xlu0 %v2890
      %v2892 = vpop.xlane.xlu0 %2891
      %v2893 = vsel %vm2469, %v2753, 0.0
      %2894 = vadd.xlane.f32.xlu0 %v2893
      %v2895 = vpop.xlane.xlu0 %2894
      %v2896 = vsel %vm2469, %v2755, 0.0
      %2897 = vadd.xlane.f32.xlu0 %v2896
      %v2898 = vpop.xlane.xlu0 %2897
      %v2899 = vsel %vm2469, %v2757, 0.0
      %2900 = vadd.xlane.f32.xlu0 %v2899
      %v2901 = vpop.xlane.xlu0 %2900
      %v2902 = vsel %vm2469, %v2759, 0.0
      %2903 = vadd.xlane.f32.xlu0 %v2902
      %v2904 = vpop.xlane.xlu0 %2903
      %v2905 = vsel %vm2469, %v2761, 0.0
      %2906 = vadd.xlane.f32.xlu0 %v2905
      %v2907 = vpop.xlane.xlu0 %2906
      %v2908 = vsel %vm2469, %v2763, 0.0
      %2909 = vadd.xlane.f32.xlu0 %v2908
      %v2910 = vpop.xlane.xlu0 %2909
      %v2911 = vsel %vm2469, %v2765, 0.0
      %2912 = vadd.xlane.f32.xlu0 %v2911
      %v2913 = vpop.xlane.xlu0 %2912
      %v2914 = vsel %vm2469, %v2767, 0.0
      %2915 = vadd.xlane.f32.xlu0 %v2914
      %v2916 = vpop.xlane.xlu0 %2915
      %v2917 = vsel %vm2469, %v2769, 0.0
      %2918 = vadd.xlane.f32.xlu0 %v2917
      %v2919 = vpop.xlane.xlu0 %2918
      %v2920 = vsel %vm2469, %v2771, 0.0
      %2921 = vadd.xlane.f32.xlu0 %v2920
      %v2922 = vpop.xlane.xlu0 %2921
      %v2923 = vsel %vm2469, %v2773, 0.0
      %2924 = vadd.xlane.f32.xlu0 %v2923
      %v2925 = vpop.xlane.xlu0 %2924
      %v2926 = vsel %vm2469, %v2775, 0.0
      %2927 = vadd.xlane.f32.xlu0 %v2926
      %v2928 = vpop.xlane.xlu0 %2927
      %v2929 = vsel %vm2469, %v2777, 0.0
      %2930 = vadd.xlane.f32.xlu0 %v2929
      %v2931 = vpop.xlane.xlu0 %2930
      %v2932 = vsel %vm2469, %v2779, 0.0
      %2933 = vadd.xlane.f32.xlu0 %v2932
      %v2934 = vpop.xlane.xlu0 %2933
      %v2935 = vsel %vm2469, %v2781, 0.0
      %2936 = vadd.xlane.f32.xlu0 %v2935
      %v2937 = vpop.xlane.xlu0 %2936
      %v2938 = vsel %vm2469, %v2783, 0.0
      %2939 = vadd.xlane.f32.xlu0 %v2938
      %v2940 = vpop.xlane.xlu0 %2939
      %v2941 = vsel %vm2469, %v2785, 0.0
      %2942 = vadd.xlane.f32.xlu0 %v2941
      %v2943 = vpop.xlane.xlu0 %2942
      %v2944 = vsel %vm2469, %v2787, 0.0
      %2945 = vadd.xlane.f32.xlu0 %v2944
      %v2946 = vpop.xlane.xlu0 %2945
      %v2947 = vsel %vm2469, %v2789, 0.0
      %2948 = vadd.xlane.f32.xlu0 %v2947
      %v2949 = vpop.xlane.xlu0 %2948
      %v2950 = vsel %vm2469, %v2791, 0.0
      %2951 = vadd.xlane.f32.xlu0 %v2950
      %v2952 = vpop.xlane.xlu0 %2951
      %v2953 = vsel %vm2469, %v2793, 0.0
      %2954 = vadd.xlane.f32.xlu0 %v2953
      %v2955 = vpop.xlane.xlu0 %2954
      %v2956 = vsel %vm2469, %v2795, 0.0
      %2957 = vadd.xlane.f32.xlu0 %v2956
      %v2958 = vpop.xlane.xlu0 %2957
      %v2959 = vsel %vm2469, %v2797, 0.0
      %2960 = vadd.xlane.f32.xlu0 %v2959
      %v2961 = vpop.xlane.xlu0 %2960
      %v2962 = vsel %vm2469, %v2799, 0.0
      %2963 = vadd.xlane.f32.xlu0 %v2962
      %v2964 = vpop.xlane.xlu0 %2963
      %v2965 = vsel %vm2469, %v2801, 0.0
      %2966 = vadd.xlane.f32.xlu0 %v2965
      %v2967 = vpop.xlane.xlu0 %2966
      %v2968 = vsel %vm2469, %v2803, 0.0
      %2969 = vadd.xlane.f32.xlu0 %v2968
      %v2970 = vpop.xlane.xlu0 %2969
      %v2971 = vsel %vm2469, %v2805, 0.0
      %2972 = vadd.xlane.f32.xlu0 %v2971
      %v2973 = vpop.xlane.xlu0 %2972
      %v2974 = vsel %vm2469, %v2807, 0.0
      %2975 = vadd.xlane.f32.xlu0 %v2974
      %v2976 = vpop.xlane.xlu0 %2975
      %v2977 = vsel %vm2469, %v2809, 0.0
      %2978 = vadd.xlane.f32.xlu0 %v2977
      %v2979 = vpop.xlane.xlu0 %2978
      %v2980 = vsel %vm2469, %v2811, 0.0
      %2981 = vadd.xlane.f32.xlu0 %v2980
      %v2982 = vpop.xlane.xlu0 %2981
      %v2983 = vsel %vm2469, %v2813, 0.0
      %2984 = vadd.xlane.f32.xlu0 %v2983
      %v2985 = vpop.xlane.xlu0 %2984
      %v2986 = vsel %vm2469, %v2815, 0.0
      %2987 = vadd.xlane.f32.xlu0 %v2986
      %v2988 = vpop.xlane.xlu0 %2987
      %v2989 = vsel %vm2469, %v2817, 0.0
      %2990 = vadd.xlane.f32.xlu0 %v2989
      %v2991 = vpop.xlane.xlu0 %2990
      %v2992 = vsel %vm2469, %v2819, 0.0
      %2993 = vadd.xlane.f32.xlu0 %v2992
      %v2994 = vpop.xlane.xlu0 %2993
      %v2995 = vsel %vm2469, %v2821, 0.0
      %2996 = vadd.xlane.f32.xlu0 %v2995
      %v2997 = vpop.xlane.xlu0 %2996
      %v2998 = vsel %vm2469, %v2823, 0.0
      %2999 = vadd.xlane.f32.xlu0 %v2998
      %v3000 = vpop.xlane.xlu0 %2999
      %v3001 = vsel %vm2469, %v2825, 0.0
      %3002 = vadd.xlane.f32.xlu0 %v3001
      %v3003 = vpop.xlane.xlu0 %3002
      %v3004 = vsel %vm2469, %v2827, 0.0
      %3005 = vadd.xlane.f32.xlu0 %v3004
      %v3006 = vpop.xlane.xlu0 %3005
      %v3007 = vsel %vm2469, %v2829, 0.0
      %3008 = vadd.xlane.f32.xlu0 %v3007
      %v3009 = vpop.xlane.xlu0 %3008
      %v3010 = vsel %vm2469, %v2831, 0.0
      %3011 = vadd.xlane.f32.xlu0 %v3010
      %v3012 = vpop.xlane.xlu0 %3011
      %v3013 = vsel %vm2469, %v2833, 0.0
      %3014 = vadd.xlane.f32.xlu0 %v3013
      %v3015 = vpop.xlane.xlu0 %3014
      %v3016 = vsel %vm2469, %v2835, 0.0
      %3017 = vadd.xlane.f32.xlu0 %v3016
      %v3018 = vpop.xlane.xlu0 %3017
      %v3019 = vsel %vm2469, %v2837, 0.0
      %3020 = vadd.xlane.f32.xlu0 %v3019
      %v3021 = vpop.xlane.xlu0 %3020
      %v3022 = vsel %vm2469, %v2839, 0.0
      %3023 = vadd.xlane.f32.xlu0 %v3022
      %v3024 = vpop.xlane.xlu0 %3023
      %v3025 = vsel %vm2469, %v2841, 0.0
      %3026 = vadd.xlane.f32.xlu0 %v3025
      %v3027 = vpop.xlane.xlu0 %3026
      %v3028 = vsel %vm2469, %v2843, 0.0
      %3029 = vadd.xlane.f32.xlu0 %v3028
      %v3030 = vpop.xlane.xlu0 %3029
      %v3031 = vsel %vm2469, %v2845, 0.0
      %3032 = vadd.xlane.f32.xlu0 %v3031
      %v3033 = vpop.xlane.xlu0 %3032
      %v3034 = vsel %vm2469, %v2847, 0.0
      %3035 = vadd.xlane.f32.xlu0 %v3034
      %v3036 = vpop.xlane.xlu0 %3035
      %v3037 = vsel %vm2469, %v2849, 0.0
      %3038 = vadd.xlane.f32.xlu0 %v3037
      %v3039 = vpop.xlane.xlu0 %3038
      %v3040 = vsel %vm2469, %v2851, 0.0
      %3041 = vadd.xlane.f32.xlu0 %v3040
      %v3042 = vpop.xlane.xlu0 %3041
      %v3043 = vsel %vm2469, %v2853, 0.0
      %3044 = vadd.xlane.f32.xlu0 %v3043
      %v3045 = vpop.xlane.xlu0 %3044
      %v3046 = vpack.c.bf16 %v2727, %v2727
      %v3047 = vpack.c.bf16 %v2729, %v2729
      %v3048 = vpack.c.bf16 %v2731, %v2731
      %v3049 = vpack.c.bf16 %v2733, %v2733
      %v3050 = vpack.c.bf16 %v2735, %v2735
      %v3051 = vpack.c.bf16 %v2737, %v2737
      %v3052 = vpack.c.bf16 %v2739, %v2739
      %v3053 = vpack.c.bf16 %v2741, %v2741
      %v3054 = vpack.c.bf16 %v2743, %v2743
      %v3055 = vpack.c.bf16 %v2745, %v2745
      %v3056 = vpack.c.bf16 %v2747, %v2747
      %v3057 = vpack.c.bf16 %v2749, %v2749
      %v3058 = vpack.c.bf16 %v2751, %v2751
      %v3059 = vpack.c.bf16 %v2753, %v2753
      %v3060 = vpack.c.bf16 %v2755, %v2755
      %v3061 = vpack.c.bf16 %v2757, %v2757
      %v3062 = vpack.c.bf16 %v2759, %v2759
      %v3063 = vpack.c.bf16 %v2761, %v2761
      %v3064 = vpack.c.bf16 %v2763, %v2763
      %v3065 = vpack.c.bf16 %v2765, %v2765
      %v3066 = vpack.c.bf16 %v2767, %v2767
      %v3067 = vpack.c.bf16 %v2769, %v2769
      %v3068 = vpack.c.bf16 %v2771, %v2771
      %v3069 = vpack.c.bf16 %v2773, %v2773
      %v3070 = vpack.c.bf16 %v2775, %v2775
      %v3071 = vpack.c.bf16 %v2777, %v2777
      %v3072 = vpack.c.bf16 %v2779, %v2779
      %v3073 = vpack.c.bf16 %v2781, %v2781
      %v3074 = vpack.c.bf16 %v2783, %v2783
      %v3075 = vpack.c.bf16 %v2785, %v2785
      %v3076 = vpack.c.bf16 %v2787, %v2787
      %v3077 = vpack.c.bf16 %v2789, %v2789
      %v3078 = vpack.c.bf16 %v2791, %v2791
      %v3079 = vpack.c.bf16 %v2793, %v2793
      %v3080 = vpack.c.bf16 %v2795, %v2795
      %v3081 = vpack.c.bf16 %v2797, %v2797
      %v3082 = vpack.c.bf16 %v2799, %v2799
      %v3083 = vpack.c.bf16 %v2801, %v2801
      %v3084 = vpack.c.bf16 %v2803, %v2803
      %v3085 = vpack.c.bf16 %v2805, %v2805
      %v3086 = vpack.c.bf16 %v2807, %v2807
      %v3087 = vpack.c.bf16 %v2809, %v2809
      %v3088 = vpack.c.bf16 %v2811, %v2811
      %v3089 = vpack.c.bf16 %v2813, %v2813
      %v3090 = vpack.c.bf16 %v2815, %v2815
      %v3091 = vpack.c.bf16 %v2817, %v2817
      %v3092 = vpack.c.bf16 %v2819, %v2819
      %v3093 = vpack.c.bf16 %v2821, %v2821
      %v3094 = vpack.c.bf16 %v2823, %v2823
      %v3095 = vpack.c.bf16 %v2825, %v2825
      %v3096 = vpack.c.bf16 %v2827, %v2827
      %v3097 = vpack.c.bf16 %v2829, %v2829
      %v3098 = vpack.c.bf16 %v2831, %v2831
      %v3099 = vpack.c.bf16 %v2833, %v2833
      %v3100 = vpack.c.bf16 %v2835, %v2835
      %v3101 = vpack.c.bf16 %v2837, %v2837
      %v3102 = vpack.c.bf16 %v2839, %v2839
      %v3103 = vpack.c.bf16 %v2841, %v2841
      %v3104 = vpack.c.bf16 %v2843, %v2843
      %v3105 = vpack.c.bf16 %v2845, %v2845
      %v3106 = vpack.c.bf16 %v2847, %v2847
      %v3107 = vpack.c.bf16 %v2849, %v2849
      %v3108 = vpack.c.bf16 %v2851, %v2851
      %v3109 = vpack.c.bf16 %v2853, %v2853
      %v3111 = vunpack.c.l.b16 %v1253
      %v3112 = vpack.c.b16 %v3111, %v3111
      %3113 = vrot.lane.b32.xlu0 %v3112, 64
      %v3114 = vpop.permute.xlu0 %3113
      %v3116 = vsel %vm2469, %v3046, 0
      %vm3118 = vcmask 1043456
      %v3120 = vsel %vm3118, %v3114, 0
      %3122 = vmatpush.bf16.msra.mxu0 0
      %3123 = vmatpush.bf16.msra.mxu0 0
      %3124 = vmatpush.bf16.msra.mxu0 0
      %3125 = vmatpush.bf16.msra.mxu0 0
      %3126 = vmatpush.bf16.msra.mxu0 0
      %3127 = vmatpush.bf16.msra.mxu0 0
      %3128 = vmatpush.bf16.msra.mxu0 0
      %3129 = vmatpush.bf16.msra.mxu0 %v3120
      %3130 = vmatmul.bf16.gmra.mxu0 %v3116
      %v3131 = vpop.f32.mrf.mxu0
      %v3132 = vadd.f32 0.0, %v3131
      %v3133 = vpop.f32.mrf.mxu0
      %3134 = vdwg.mxu0
      %v3136 = vunpack.c.l.b16 %v1254
      %v3137 = vpack.c.b16 %v3136, %v3136
      %3138 = vrot.lane.b32.xlu0 %v3137, 64
      %v3139 = vpop.permute.xlu0 %3138
      %v3141 = vsel %vm2469, %v3047, 0
      %v3144 = vsel %vm3118, %v3139, 0
      %3146 = vmatpush.bf16.msra.mxu0 0
      %3147 = vmatpush.bf16.msra.mxu0 0
      %3148 = vmatpush.bf16.msra.mxu0 0
      %3149 = vmatpush.bf16.msra.mxu0 0
      %3150 = vmatpush.bf16.msra.mxu0 0
      %3151 = vmatpush.bf16.msra.mxu0 0
      %3152 = vmatpush.bf16.msra.mxu0 0
      %3153 = vmatpush.bf16.msra.mxu0 %v3144
      %3154 = vmatmul.bf16.gmra.mxu0 %v3141
      %v3155 = vpop.f32.mrf.mxu0
      %v3156 = vadd.f32 0.0, %v3155
      %v3157 = vpop.f32.mrf.mxu0
      %3158 = vdwg.mxu0
      %v3160 = vunpack.c.l.b16 %v1255
      %v3161 = vpack.c.b16 %v3160, %v3160
      %3162 = vrot.lane.b32.xlu0 %v3161, 64
      %v3163 = vpop.permute.xlu0 %3162
      %v3165 = vsel %vm2469, %v3048, 0
      %v3168 = vsel %vm3118, %v3163, 0
      %3170 = vmatpush.bf16.msra.mxu0 0
      %3171 = vmatpush.bf16.msra.mxu0 0
      %3172 = vmatpush.bf16.msra.mxu0 0
      %3173 = vmatpush.bf16.msra.mxu0 0
      %3174 = vmatpush.bf16.msra.mxu0 0
      %3175 = vmatpush.bf16.msra.mxu0 0
      %3176 = vmatpush.bf16.msra.mxu0 0
      %3177 = vmatpush.bf16.msra.mxu0 %v3168
      %3178 = vmatmul.bf16.gmra.mxu0 %v3165
      %v3179 = vpop.f32.mrf.mxu0
      %v3180 = vadd.f32 0.0, %v3179
      %v3181 = vpop.f32.mrf.mxu0
      %3182 = vdwg.mxu0
      %v3184 = vunpack.c.l.b16 %v1256
      %v3185 = vpack.c.b16 %v3184, %v3184
      %3186 = vrot.lane.b32.xlu0 %v3185, 64
      %v3187 = vpop.permute.xlu0 %3186
      %v3189 = vsel %vm2469, %v3049, 0
      %v3192 = vsel %vm3118, %v3187, 0
      %3194 = vmatpush.bf16.msra.mxu0 0
      %3195 = vmatpush.bf16.msra.mxu0 0
      %3196 = vmatpush.bf16.msra.mxu0 0
      %3197 = vmatpush.bf16.msra.mxu0 0
      %3198 = vmatpush.bf16.msra.mxu0 0
      %3199 = vmatpush.bf16.msra.mxu0 0
      %3200 = vmatpush.bf16.msra.mxu0 0
      %3201 = vmatpush.bf16.msra.mxu0 %v3192
      %3202 = vmatmul.bf16.gmra.mxu0 %v3189
      %v3203 = vpop.f32.mrf.mxu0
      %v3204 = vadd.f32 0.0, %v3203
      %v3205 = vpop.f32.mrf.mxu0
      %3206 = vdwg.mxu0
      %v3208 = vunpack.c.l.b16 %v1257
      %v3209 = vpack.c.b16 %v3208, %v3208
      %3210 = vrot.lane.b32.xlu0 %v3209, 64
      %v3211 = vpop.permute.xlu0 %3210
      %v3213 = vsel %vm2469, %v3050, 0
      %v3216 = vsel %vm3118, %v3211, 0
      %3218 = vmatpush.bf16.msra.mxu0 0
      %3219 = vmatpush.bf16.msra.mxu0 0
      %3220 = vmatpush.bf16.msra.mxu0 0
      %3221 = vmatpush.bf16.msra.mxu0 0
      %3222 = vmatpush.bf16.msra.mxu0 0
      %3223 = vmatpush.bf16.msra.mxu0 0
      %3224 = vmatpush.bf16.msra.mxu0 0
      %3225 = vmatpush.bf16.msra.mxu0 %v3216
      %3226 = vmatmul.bf16.gmra.mxu0 %v3213
      %v3227 = vpop.f32.mrf.mxu0
      %v3228 = vadd.f32 0.0, %v3227
      %v3229 = vpop.f32.mrf.mxu0
      %3230 = vdwg.mxu0
      %v3232 = vunpack.c.l.b16 %v1258
      %v3233 = vpack.c.b16 %v3232, %v3232
      %3234 = vrot.lane.b32.xlu0 %v3233, 64
      %v3235 = vpop.permute.xlu0 %3234
      %v3237 = vsel %vm2469, %v3051, 0
      %v3240 = vsel %vm3118, %v3235, 0
      %3242 = vmatpush.bf16.msra.mxu0 0
      %3243 = vmatpush.bf16.msra.mxu0 0
      %3244 = vmatpush.bf16.msra.mxu0 0
      %3245 = vmatpush.bf16.msra.mxu0 0
      %3246 = vmatpush.bf16.msra.mxu0 0
      %3247 = vmatpush.bf16.msra.mxu0 0
      %3248 = vmatpush.bf16.msra.mxu0 0
      %3249 = vmatpush.bf16.msra.mxu0 %v3240
      %3250 = vmatmul.bf16.gmra.mxu0 %v3237
      %v3251 = vpop.f32.mrf.mxu0
      %v3252 = vadd.f32 0.0, %v3251
      %v3253 = vpop.f32.mrf.mxu0
      %3254 = vdwg.mxu0
      %v3256 = vunpack.c.l.b16 %v1259
      %v3257 = vpack.c.b16 %v3256, %v3256
      %3258 = vrot.lane.b32.xlu0 %v3257, 64
      %v3259 = vpop.permute.xlu0 %3258
      %v3261 = vsel %vm2469, %v3052, 0
      %v3264 = vsel %vm3118, %v3259, 0
      %3266 = vmatpush.bf16.msra.mxu0 0
      %3267 = vmatpush.bf16.msra.mxu0 0
      %3268 = vmatpush.bf16.msra.mxu0 0
      %3269 = vmatpush.bf16.msra.mxu0 0
      %3270 = vmatpush.bf16.msra.mxu0 0
      %3271 = vmatpush.bf16.msra.mxu0 0
      %3272 = vmatpush.bf16.msra.mxu0 0
      %3273 = vmatpush.bf16.msra.mxu0 %v3264
      %3274 = vmatmul.bf16.gmra.mxu0 %v3261
      %v3275 = vpop.f32.mrf.mxu0
      %v3276 = vadd.f32 0.0, %v3275
      %v3277 = vpop.f32.mrf.mxu0
      %3278 = vdwg.mxu0
      %v3280 = vunpack.c.l.b16 %v1260
      %v3281 = vpack.c.b16 %v3280, %v3280
      %3282 = vrot.lane.b32.xlu0 %v3281, 64
      %v3283 = vpop.permute.xlu0 %3282
      %v3285 = vsel %vm2469, %v3053, 0
      %v3288 = vsel %vm3118, %v3283, 0
      %3290 = vmatpush.bf16.msra.mxu0 0
      %3291 = vmatpush.bf16.msra.mxu0 0
      %3292 = vmatpush.bf16.msra.mxu0 0
      %3293 = vmatpush.bf16.msra.mxu0 0
      %3294 = vmatpush.bf16.msra.mxu0 0
      %3295 = vmatpush.bf16.msra.mxu0 0
      %3296 = vmatpush.bf16.msra.mxu0 0
      %3297 = vmatpush.bf16.msra.mxu0 %v3288
      %3298 = vmatmul.bf16.gmra.mxu0 %v3285
      %v3299 = vpop.f32.mrf.mxu0
      %v3300 = vadd.f32 0.0, %v3299
      %v3301 = vpop.f32.mrf.mxu0
      %3302 = vdwg.mxu0
      %v3304 = vunpack.c.l.b16 %v1261
      %v3305 = vpack.c.b16 %v3304, %v3304
      %3306 = vrot.lane.b32.xlu0 %v3305, 64
      %v3307 = vpop.permute.xlu0 %3306
      %v3309 = vsel %vm2469, %v3054, 0
      %v3312 = vsel %vm3118, %v3307, 0
      %3314 = vmatpush.bf16.msra.mxu0 0
      %3315 = vmatpush.bf16.msra.mxu0 0
      %3316 = vmatpush.bf16.msra.mxu0 0
      %3317 = vmatpush.bf16.msra.mxu0 0
      %3318 = vmatpush.bf16.msra.mxu0 0
      %3319 = vmatpush.bf16.msra.mxu0 0
      %3320 = vmatpush.bf16.msra.mxu0 0
      %3321 = vmatpush.bf16.msra.mxu0 %v3312
      %3322 = vmatmul.bf16.gmra.mxu0 %v3309
      %v3323 = vpop.f32.mrf.mxu0
      %v3324 = vadd.f32 0.0, %v3323
      %v3325 = vpop.f32.mrf.mxu0
      %3326 = vdwg.mxu0
      %v3328 = vunpack.c.l.b16 %v1262
      %v3329 = vpack.c.b16 %v3328, %v3328
      %3330 = vrot.lane.b32.xlu0 %v3329, 64
      %v3331 = vpop.permute.xlu0 %3330
      %v3333 = vsel %vm2469, %v3055, 0
      %v3336 = vsel %vm3118, %v3331, 0
      %3338 = vmatpush.bf16.msra.mxu0 0
      %3339 = vmatpush.bf16.msra.mxu0 0
      %3340 = vmatpush.bf16.msra.mxu0 0
      %3341 = vmatpush.bf16.msra.mxu0 0
      %3342 = vmatpush.bf16.msra.mxu0 0
      %3343 = vmatpush.bf16.msra.mxu0 0
      %3344 = vmatpush.bf16.msra.mxu0 0
      %3345 = vmatpush.bf16.msra.mxu0 %v3336
      %3346 = vmatmul.bf16.gmra.mxu0 %v3333
      %v3347 = vpop.f32.mrf.mxu0
      %v3348 = vadd.f32 0.0, %v3347
      %v3349 = vpop.f32.mrf.mxu0
      %3350 = vdwg.mxu0
      %v3352 = vunpack.c.l.b16 %v1263
      %v3353 = vpack.c.b16 %v3352, %v3352
      %3354 = vrot.lane.b32.xlu0 %v3353, 64
      %v3355 = vpop.permute.xlu0 %3354
      %v3357 = vsel %vm2469, %v3056, 0
      %v3360 = vsel %vm3118, %v3355, 0
      %3362 = vmatpush.bf16.msra.mxu0 0
      %3363 = vmatpush.bf16.msra.mxu0 0
      %3364 = vmatpush.bf16.msra.mxu0 0
      %3365 = vmatpush.bf16.msra.mxu0 0
      %3366 = vmatpush.bf16.msra.mxu0 0
      %3367 = vmatpush.bf16.msra.mxu0 0
      %3368 = vmatpush.bf16.msra.mxu0 0
      %3369 = vmatpush.bf16.msra.mxu0 %v3360
      %3370 = vmatmul.bf16.gmra.mxu0 %v3357
      %v3371 = vpop.f32.mrf.mxu0
      %v3372 = vadd.f32 0.0, %v3371
      %v3373 = vpop.f32.mrf.mxu0
      %3374 = vdwg.mxu0
      %v3376 = vunpack.c.l.b16 %v1264
      %v3377 = vpack.c.b16 %v3376, %v3376
      %3378 = vrot.lane.b32.xlu0 %v3377, 64
      %v3379 = vpop.permute.xlu0 %3378
      %v3381 = vsel %vm2469, %v3057, 0
      %v3384 = vsel %vm3118, %v3379, 0
      %3386 = vmatpush.bf16.msra.mxu0 0
      %3387 = vmatpush.bf16.msra.mxu0 0
      %3388 = vmatpush.bf16.msra.mxu0 0
      %3389 = vmatpush.bf16.msra.mxu0 0
      %3390 = vmatpush.bf16.msra.mxu0 0
      %3391 = vmatpush.bf16.msra.mxu0 0
      %3392 = vmatpush.bf16.msra.mxu0 0
      %3393 = vmatpush.bf16.msra.mxu0 %v3384
      %3394 = vmatmul.bf16.gmra.mxu0 %v3381
      %v3395 = vpop.f32.mrf.mxu0
      %v3396 = vadd.f32 0.0, %v3395
      %v3397 = vpop.f32.mrf.mxu0
      %3398 = vdwg.mxu0
      %v3400 = vunpack.c.l.b16 %v1265
      %v3401 = vpack.c.b16 %v3400, %v3400
      %3402 = vrot.lane.b32.xlu0 %v3401, 64
      %v3403 = vpop.permute.xlu0 %3402
      %v3405 = vsel %vm2469, %v3058, 0
      %v3408 = vsel %vm3118, %v3403, 0
      %3410 = vmatpush.bf16.msra.mxu0 0
      %3411 = vmatpush.bf16.msra.mxu0 0
      %3412 = vmatpush.bf16.msra.mxu0 0
      %3413 = vmatpush.bf16.msra.mxu0 0
      %3414 = vmatpush.bf16.msra.mxu0 0
      %3415 = vmatpush.bf16.msra.mxu0 0
      %3416 = vmatpush.bf16.msra.mxu0 0
      %3417 = vmatpush.bf16.msra.mxu0 %v3408
      %3418 = vmatmul.bf16.gmra.mxu0 %v3405
      %v3419 = vpop.f32.mrf.mxu0
      %v3420 = vadd.f32 0.0, %v3419
      %v3421 = vpop.f32.mrf.mxu0
      %3422 = vdwg.mxu0
      %v3424 = vunpack.c.l.b16 %v1266
      %v3425 = vpack.c.b16 %v3424, %v3424
      %3426 = vrot.lane.b32.xlu0 %v3425, 64
      %v3427 = vpop.permute.xlu0 %3426
      %v3429 = vsel %vm2469, %v3059, 0
      %v3432 = vsel %vm3118, %v3427, 0
      %3434 = vmatpush.bf16.msra.mxu0 0
      %3435 = vmatpush.bf16.msra.mxu0 0
      %3436 = vmatpush.bf16.msra.mxu0 0
      %3437 = vmatpush.bf16.msra.mxu0 0
      %3438 = vmatpush.bf16.msra.mxu0 0
      %3439 = vmatpush.bf16.msra.mxu0 0
      %3440 = vmatpush.bf16.msra.mxu0 0
      %3441 = vmatpush.bf16.msra.mxu0 %v3432
      %3442 = vmatmul.bf16.gmra.mxu0 %v3429
      %v3443 = vpop.f32.mrf.mxu0
      %v3444 = vadd.f32 0.0, %v3443
      %v3445 = vpop.f32.mrf.mxu0
      %3446 = vdwg.mxu0
      %v3448 = vunpack.c.l.b16 %v1267
      %v3449 = vpack.c.b16 %v3448, %v3448
      %3450 = vrot.lane.b32.xlu0 %v3449, 64
      %v3451 = vpop.permute.xlu0 %3450
      %v3453 = vsel %vm2469, %v3060, 0
      %v3456 = vsel %vm3118, %v3451, 0
      %3458 = vmatpush.bf16.msra.mxu0 0
      %3459 = vmatpush.bf16.msra.mxu0 0
      %3460 = vmatpush.bf16.msra.mxu0 0
      %3461 = vmatpush.bf16.msra.mxu0 0
      %3462 = vmatpush.bf16.msra.mxu0 0
      %3463 = vmatpush.bf16.msra.mxu0 0
      %3464 = vmatpush.bf16.msra.mxu0 0
      %3465 = vmatpush.bf16.msra.mxu0 %v3456
      %3466 = vmatmul.bf16.gmra.mxu0 %v3453
      %v3467 = vpop.f32.mrf.mxu0
      %v3468 = vadd.f32 0.0, %v3467
      %v3469 = vpop.f32.mrf.mxu0
      %3470 = vdwg.mxu0
      %v3472 = vunpack.c.l.b16 %v1268
      %v3473 = vpack.c.b16 %v3472, %v3472
      %3474 = vrot.lane.b32.xlu0 %v3473, 64
      %v3475 = vpop.permute.xlu0 %3474
      %v3477 = vsel %vm2469, %v3061, 0
      %v3480 = vsel %vm3118, %v3475, 0
      %3482 = vmatpush.bf16.msra.mxu0 0
      %3483 = vmatpush.bf16.msra.mxu0 0
      %3484 = vmatpush.bf16.msra.mxu0 0
      %3485 = vmatpush.bf16.msra.mxu0 0
      %3486 = vmatpush.bf16.msra.mxu0 0
      %3487 = vmatpush.bf16.msra.mxu0 0
      %3488 = vmatpush.bf16.msra.mxu0 0
      %3489 = vmatpush.bf16.msra.mxu0 %v3480
      %3490 = vmatmul.bf16.gmra.mxu0 %v3477
      %v3491 = vpop.f32.mrf.mxu0
      %v3492 = vadd.f32 0.0, %v3491
      %v3493 = vpop.f32.mrf.mxu0
      %3494 = vdwg.mxu0
      %v3496 = vunpack.c.l.b16 %v1269
      %v3497 = vpack.c.b16 %v3496, %v3496
      %3498 = vrot.lane.b32.xlu0 %v3497, 64
      %v3499 = vpop.permute.xlu0 %3498
      %v3501 = vsel %vm2469, %v3062, 0
      %v3504 = vsel %vm3118, %v3499, 0
      %3506 = vmatpush.bf16.msra.mxu0 0
      %3507 = vmatpush.bf16.msra.mxu0 0
      %3508 = vmatpush.bf16.msra.mxu0 0
      %3509 = vmatpush.bf16.msra.mxu0 0
      %3510 = vmatpush.bf16.msra.mxu0 0
      %3511 = vmatpush.bf16.msra.mxu0 0
      %3512 = vmatpush.bf16.msra.mxu0 0
      %3513 = vmatpush.bf16.msra.mxu0 %v3504
      %3514 = vmatmul.bf16.gmra.mxu0 %v3501
      %v3515 = vpop.f32.mrf.mxu0
      %v3516 = vadd.f32 0.0, %v3515
      %v3517 = vpop.f32.mrf.mxu0
      %3518 = vdwg.mxu0
      %v3520 = vunpack.c.l.b16 %v1270
      %v3521 = vpack.c.b16 %v3520, %v3520
      %3522 = vrot.lane.b32.xlu0 %v3521, 64
      %v3523 = vpop.permute.xlu0 %3522
      %v3525 = vsel %vm2469, %v3063, 0
      %v3528 = vsel %vm3118, %v3523, 0
      %3530 = vmatpush.bf16.msra.mxu0 0
      %3531 = vmatpush.bf16.msra.mxu0 0
      %3532 = vmatpush.bf16.msra.mxu0 0
      %3533 = vmatpush.bf16.msra.mxu0 0
      %3534 = vmatpush.bf16.msra.mxu0 0
      %3535 = vmatpush.bf16.msra.mxu0 0
      %3536 = vmatpush.bf16.msra.mxu0 0
      %3537 = vmatpush.bf16.msra.mxu0 %v3528
      %3538 = vmatmul.bf16.gmra.mxu0 %v3525
      %v3539 = vpop.f32.mrf.mxu0
      %v3540 = vadd.f32 0.0, %v3539
      %v3541 = vpop.f32.mrf.mxu0
      %3542 = vdwg.mxu0
      %v3544 = vunpack.c.l.b16 %v1271
      %v3545 = vpack.c.b16 %v3544, %v3544
      %3546 = vrot.lane.b32.xlu0 %v3545, 64
      %v3547 = vpop.permute.xlu0 %3546
      %v3549 = vsel %vm2469, %v3064, 0
      %v3552 = vsel %vm3118, %v3547, 0
      %3554 = vmatpush.bf16.msra.mxu0 0
      %3555 = vmatpush.bf16.msra.mxu0 0
      %3556 = vmatpush.bf16.msra.mxu0 0
      %3557 = vmatpush.bf16.msra.mxu0 0
      %3558 = vmatpush.bf16.msra.mxu0 0
      %3559 = vmatpush.bf16.msra.mxu0 0
      %3560 = vmatpush.bf16.msra.mxu0 0
      %3561 = vmatpush.bf16.msra.mxu0 %v3552
      %3562 = vmatmul.bf16.gmra.mxu0 %v3549
      %v3563 = vpop.f32.mrf.mxu0
      %v3564 = vadd.f32 0.0, %v3563
      %v3565 = vpop.f32.mrf.mxu0
      %3566 = vdwg.mxu0
      %v3568 = vunpack.c.l.b16 %v1272
      %v3569 = vpack.c.b16 %v3568, %v3568
      %3570 = vrot.lane.b32.xlu0 %v3569, 64
      %v3571 = vpop.permute.xlu0 %3570
      %v3573 = vsel %vm2469, %v3065, 0
      %v3576 = vsel %vm3118, %v3571, 0
      %3578 = vmatpush.bf16.msra.mxu0 0
      %3579 = vmatpush.bf16.msra.mxu0 0
      %3580 = vmatpush.bf16.msra.mxu0 0
      %3581 = vmatpush.bf16.msra.mxu0 0
      %3582 = vmatpush.bf16.msra.mxu0 0
      %3583 = vmatpush.bf16.msra.mxu0 0
      %3584 = vmatpush.bf16.msra.mxu0 0
      %3585 = vmatpush.bf16.msra.mxu0 %v3576
      %3586 = vmatmul.bf16.gmra.mxu0 %v3573
      %v3587 = vpop.f32.mrf.mxu0
      %v3588 = vadd.f32 0.0, %v3587
      %v3589 = vpop.f32.mrf.mxu0
      %3590 = vdwg.mxu0
      %v3592 = vunpack.c.l.b16 %v1273
      %v3593 = vpack.c.b16 %v3592, %v3592
      %3594 = vrot.lane.b32.xlu0 %v3593, 64
      %v3595 = vpop.permute.xlu0 %3594
      %v3597 = vsel %vm2469, %v3066, 0
      %v3600 = vsel %vm3118, %v3595, 0
      %3602 = vmatpush.bf16.msra.mxu0 0
      %3603 = vmatpush.bf16.msra.mxu0 0
      %3604 = vmatpush.bf16.msra.mxu0 0
      %3605 = vmatpush.bf16.msra.mxu0 0
      %3606 = vmatpush.bf16.msra.mxu0 0
      %3607 = vmatpush.bf16.msra.mxu0 0
      %3608 = vmatpush.bf16.msra.mxu0 0
      %3609 = vmatpush.bf16.msra.mxu0 %v3600
      %3610 = vmatmul.bf16.gmra.mxu0 %v3597
      %v3611 = vpop.f32.mrf.mxu0
      %v3612 = vadd.f32 0.0, %v3611
      %v3613 = vpop.f32.mrf.mxu0
      %3614 = vdwg.mxu0
      %v3616 = vunpack.c.l.b16 %v1274
      %v3617 = vpack.c.b16 %v3616, %v3616
      %3618 = vrot.lane.b32.xlu0 %v3617, 64
      %v3619 = vpop.permute.xlu0 %3618
      %v3621 = vsel %vm2469, %v3067, 0
      %v3624 = vsel %vm3118, %v3619, 0
      %3626 = vmatpush.bf16.msra.mxu0 0
      %3627 = vmatpush.bf16.msra.mxu0 0
      %3628 = vmatpush.bf16.msra.mxu0 0
      %3629 = vmatpush.bf16.msra.mxu0 0
      %3630 = vmatpush.bf16.msra.mxu0 0
      %3631 = vmatpush.bf16.msra.mxu0 0
      %3632 = vmatpush.bf16.msra.mxu0 0
      %3633 = vmatpush.bf16.msra.mxu0 %v3624
      %3634 = vmatmul.bf16.gmra.mxu0 %v3621
      %v3635 = vpop.f32.mrf.mxu0
      %v3636 = vadd.f32 0.0, %v3635
      %v3637 = vpop.f32.mrf.mxu0
      %3638 = vdwg.mxu0
      %v3640 = vunpack.c.l.b16 %v1275
      %v3641 = vpack.c.b16 %v3640, %v3640
      %3642 = vrot.lane.b32.xlu0 %v3641, 64
      %v3643 = vpop.permute.xlu0 %3642
      %v3645 = vsel %vm2469, %v3068, 0
      %v3648 = vsel %vm3118, %v3643, 0
      %3650 = vmatpush.bf16.msra.mxu0 0
      %3651 = vmatpush.bf16.msra.mxu0 0
      %3652 = vmatpush.bf16.msra.mxu0 0
      %3653 = vmatpush.bf16.msra.mxu0 0
      %3654 = vmatpush.bf16.msra.mxu0 0
      %3655 = vmatpush.bf16.msra.mxu0 0
      %3656 = vmatpush.bf16.msra.mxu0 0
      %3657 = vmatpush.bf16.msra.mxu0 %v3648
      %3658 = vmatmul.bf16.gmra.mxu0 %v3645
      %v3659 = vpop.f32.mrf.mxu0
      %v3660 = vadd.f32 0.0, %v3659
      %v3661 = vpop.f32.mrf.mxu0
      %3662 = vdwg.mxu0
      %v3664 = vunpack.c.l.b16 %v1276
      %v3665 = vpack.c.b16 %v3664, %v3664
      %3666 = vrot.lane.b32.xlu0 %v3665, 64
      %v3667 = vpop.permute.xlu0 %3666
      %v3669 = vsel %vm2469, %v3069, 0
      %v3672 = vsel %vm3118, %v3667, 0
      %3674 = vmatpush.bf16.msra.mxu0 0
      %3675 = vmatpush.bf16.msra.mxu0 0
      %3676 = vmatpush.bf16.msra.mxu0 0
      %3677 = vmatpush.bf16.msra.mxu0 0
      %3678 = vmatpush.bf16.msra.mxu0 0
      %3679 = vmatpush.bf16.msra.mxu0 0
      %3680 = vmatpush.bf16.msra.mxu0 0
      %3681 = vmatpush.bf16.msra.mxu0 %v3672
      %3682 = vmatmul.bf16.gmra.mxu0 %v3669
      %v3683 = vpop.f32.mrf.mxu0
      %v3684 = vadd.f32 0.0, %v3683
      %v3685 = vpop.f32.mrf.mxu0
      %3686 = vdwg.mxu0
      %v3688 = vunpack.c.l.b16 %v1277
      %v3689 = vpack.c.b16 %v3688, %v3688
      %3690 = vrot.lane.b32.xlu0 %v3689, 64
      %v3691 = vpop.permute.xlu0 %3690
      %v3693 = vsel %vm2469, %v3070, 0
      %v3696 = vsel %vm3118, %v3691, 0
      %3698 = vmatpush.bf16.msra.mxu0 0
      %3699 = vmatpush.bf16.msra.mxu0 0
      %3700 = vmatpush.bf16.msra.mxu0 0
      %3701 = vmatpush.bf16.msra.mxu0 0
      %3702 = vmatpush.bf16.msra.mxu0 0
      %3703 = vmatpush.bf16.msra.mxu0 0
      %3704 = vmatpush.bf16.msra.mxu0 0
      %3705 = vmatpush.bf16.msra.mxu0 %v3696
      %3706 = vmatmul.bf16.gmra.mxu0 %v3693
      %v3707 = vpop.f32.mrf.mxu0
      %v3708 = vadd.f32 0.0, %v3707
      %v3709 = vpop.f32.mrf.mxu0
      %3710 = vdwg.mxu0
      %v3712 = vunpack.c.l.b16 %v1278
      %v3713 = vpack.c.b16 %v3712, %v3712
      %3714 = vrot.lane.b32.xlu0 %v3713, 64
      %v3715 = vpop.permute.xlu0 %3714
      %v3717 = vsel %vm2469, %v3071, 0
      %v3720 = vsel %vm3118, %v3715, 0
      %3722 = vmatpush.bf16.msra.mxu0 0
      %3723 = vmatpush.bf16.msra.mxu0 0
      %3724 = vmatpush.bf16.msra.mxu0 0
      %3725 = vmatpush.bf16.msra.mxu0 0
      %3726 = vmatpush.bf16.msra.mxu0 0
      %3727 = vmatpush.bf16.msra.mxu0 0
      %3728 = vmatpush.bf16.msra.mxu0 0
      %3729 = vmatpush.bf16.msra.mxu0 %v3720
      %3730 = vmatmul.bf16.gmra.mxu0 %v3717
      %v3731 = vpop.f32.mrf.mxu0
      %v3732 = vadd.f32 0.0, %v3731
      %v3733 = vpop.f32.mrf.mxu0
      %3734 = vdwg.mxu0
      %v3736 = vunpack.c.l.b16 %v1279
      %v3737 = vpack.c.b16 %v3736, %v3736
      %3738 = vrot.lane.b32.xlu0 %v3737, 64
      %v3739 = vpop.permute.xlu0 %3738
      %v3741 = vsel %vm2469, %v3072, 0
      %v3744 = vsel %vm3118, %v3739, 0
      %3746 = vmatpush.bf16.msra.mxu0 0
      %3747 = vmatpush.bf16.msra.mxu0 0
      %3748 = vmatpush.bf16.msra.mxu0 0
      %3749 = vmatpush.bf16.msra.mxu0 0
      %3750 = vmatpush.bf16.msra.mxu0 0
      %3751 = vmatpush.bf16.msra.mxu0 0
      %3752 = vmatpush.bf16.msra.mxu0 0
      %3753 = vmatpush.bf16.msra.mxu0 %v3744
      %3754 = vmatmul.bf16.gmra.mxu0 %v3741
      %v3755 = vpop.f32.mrf.mxu0
      %v3756 = vadd.f32 0.0, %v3755
      %v3757 = vpop.f32.mrf.mxu0
      %3758 = vdwg.mxu0
      %v3760 = vunpack.c.l.b16 %v1280
      %v3761 = vpack.c.b16 %v3760, %v3760
      %3762 = vrot.lane.b32.xlu0 %v3761, 64
      %v3763 = vpop.permute.xlu0 %3762
      %v3765 = vsel %vm2469, %v3073, 0
      %v3768 = vsel %vm3118, %v3763, 0
      %3770 = vmatpush.bf16.msra.mxu0 0
      %3771 = vmatpush.bf16.msra.mxu0 0
      %3772 = vmatpush.bf16.msra.mxu0 0
      %3773 = vmatpush.bf16.msra.mxu0 0
      %3774 = vmatpush.bf16.msra.mxu0 0
      %3775 = vmatpush.bf16.msra.mxu0 0
      %3776 = vmatpush.bf16.msra.mxu0 0
      %3777 = vmatpush.bf16.msra.mxu0 %v3768
      %3778 = vmatmul.bf16.gmra.mxu0 %v3765
      %v3779 = vpop.f32.mrf.mxu0
      %v3780 = vadd.f32 0.0, %v3779
      %v3781 = vpop.f32.mrf.mxu0
      %3782 = vdwg.mxu0
      %v3784 = vunpack.c.l.b16 %v1281
      %v3785 = vpack.c.b16 %v3784, %v3784
      %3786 = vrot.lane.b32.xlu0 %v3785, 64
      %v3787 = vpop.permute.xlu0 %3786
      %v3789 = vsel %vm2469, %v3074, 0
      %v3792 = vsel %vm3118, %v3787, 0
      %3794 = vmatpush.bf16.msra.mxu0 0
      %3795 = vmatpush.bf16.msra.mxu0 0
      %3796 = vmatpush.bf16.msra.mxu0 0
      %3797 = vmatpush.bf16.msra.mxu0 0
      %3798 = vmatpush.bf16.msra.mxu0 0
      %3799 = vmatpush.bf16.msra.mxu0 0
      %3800 = vmatpush.bf16.msra.mxu0 0
      %3801 = vmatpush.bf16.msra.mxu0 %v3792
      %3802 = vmatmul.bf16.gmra.mxu0 %v3789
      %v3803 = vpop.f32.mrf.mxu0
      %v3804 = vadd.f32 0.0, %v3803
      %v3805 = vpop.f32.mrf.mxu0
      %3806 = vdwg.mxu0
      %v3808 = vunpack.c.l.b16 %v1282
      %v3809 = vpack.c.b16 %v3808, %v3808
      %3810 = vrot.lane.b32.xlu0 %v3809, 64
      %v3811 = vpop.permute.xlu0 %3810
      %v3813 = vsel %vm2469, %v3075, 0
      %v3816 = vsel %vm3118, %v3811, 0
      %3818 = vmatpush.bf16.msra.mxu0 0
      %3819 = vmatpush.bf16.msra.mxu0 0
      %3820 = vmatpush.bf16.msra.mxu0 0
      %3821 = vmatpush.bf16.msra.mxu0 0
      %3822 = vmatpush.bf16.msra.mxu0 0
      %3823 = vmatpush.bf16.msra.mxu0 0
      %3824 = vmatpush.bf16.msra.mxu0 0
      %3825 = vmatpush.bf16.msra.mxu0 %v3816
      %3826 = vmatmul.bf16.gmra.mxu0 %v3813
      %v3827 = vpop.f32.mrf.mxu0
      %v3828 = vadd.f32 0.0, %v3827
      %v3829 = vpop.f32.mrf.mxu0
      %3830 = vdwg.mxu0
      %v3832 = vunpack.c.l.b16 %v1283
      %v3833 = vpack.c.b16 %v3832, %v3832
      %3834 = vrot.lane.b32.xlu0 %v3833, 64
      %v3835 = vpop.permute.xlu0 %3834
      %v3837 = vsel %vm2469, %v3076, 0
      %v3840 = vsel %vm3118, %v3835, 0
      %3842 = vmatpush.bf16.msra.mxu0 0
      %3843 = vmatpush.bf16.msra.mxu0 0
      %3844 = vmatpush.bf16.msra.mxu0 0
      %3845 = vmatpush.bf16.msra.mxu0 0
      %3846 = vmatpush.bf16.msra.mxu0 0
      %3847 = vmatpush.bf16.msra.mxu0 0
      %3848 = vmatpush.bf16.msra.mxu0 0
      %3849 = vmatpush.bf16.msra.mxu0 %v3840
      %3850 = vmatmul.bf16.gmra.mxu0 %v3837
      %v3851 = vpop.f32.mrf.mxu0
      %v3852 = vadd.f32 0.0, %v3851
      %v3853 = vpop.f32.mrf.mxu0
      %3854 = vdwg.mxu0
      %v3856 = vunpack.c.l.b16 %v1284
      %v3857 = vpack.c.b16 %v3856, %v3856
      %3858 = vrot.lane.b32.xlu0 %v3857, 64
      %v3859 = vpop.permute.xlu0 %3858
      %v3861 = vsel %vm2469, %v3077, 0
      %v3864 = vsel %vm3118, %v3859, 0
      %3866 = vmatpush.bf16.msra.mxu0 0
      %3867 = vmatpush.bf16.msra.mxu0 0
      %3868 = vmatpush.bf16.msra.mxu0 0
      %3869 = vmatpush.bf16.msra.mxu0 0
      %3870 = vmatpush.bf16.msra.mxu0 0
      %3871 = vmatpush.bf16.msra.mxu0 0
      %3872 = vmatpush.bf16.msra.mxu0 0
      %3873 = vmatpush.bf16.msra.mxu0 %v3864
      %3874 = vmatmul.bf16.gmra.mxu0 %v3861
      %v3875 = vpop.f32.mrf.mxu0
      %v3876 = vadd.f32 0.0, %v3875
      %v3877 = vpop.f32.mrf.mxu0
      %3878 = vdwg.mxu0
      %v3880 = vunpack.c.l.b16 %v1285
      %v3881 = vpack.c.b16 %v3880, %v3880
      %3882 = vrot.lane.b32.xlu0 %v3881, 64
      %v3883 = vpop.permute.xlu0 %3882
      %v3885 = vsel %vm2469, %v3078, 0
      %v3888 = vsel %vm3118, %v3883, 0
      %3890 = vmatpush.bf16.msra.mxu0 0
      %3891 = vmatpush.bf16.msra.mxu0 0
      %3892 = vmatpush.bf16.msra.mxu0 0
      %3893 = vmatpush.bf16.msra.mxu0 0
      %3894 = vmatpush.bf16.msra.mxu0 0
      %3895 = vmatpush.bf16.msra.mxu0 0
      %3896 = vmatpush.bf16.msra.mxu0 0
      %3897 = vmatpush.bf16.msra.mxu0 %v3888
      %3898 = vmatmul.bf16.gmra.mxu0 %v3885
      %v3899 = vpop.f32.mrf.mxu0
      %v3900 = vadd.f32 0.0, %v3899
      %v3901 = vpop.f32.mrf.mxu0
      %3902 = vdwg.mxu0
      %v3904 = vunpack.c.l.b16 %v1286
      %v3905 = vpack.c.b16 %v3904, %v3904
      %3906 = vrot.lane.b32.xlu0 %v3905, 64
      %v3907 = vpop.permute.xlu0 %3906
      %v3909 = vsel %vm2469, %v3079, 0
      %v3912 = vsel %vm3118, %v3907, 0
      %3914 = vmatpush.bf16.msra.mxu0 0
      %3915 = vmatpush.bf16.msra.mxu0 0
      %3916 = vmatpush.bf16.msra.mxu0 0
      %3917 = vmatpush.bf16.msra.mxu0 0
      %3918 = vmatpush.bf16.msra.mxu0 0
      %3919 = vmatpush.bf16.msra.mxu0 0
      %3920 = vmatpush.bf16.msra.mxu0 0
      %3921 = vmatpush.bf16.msra.mxu0 %v3912
      %3922 = vmatmul.bf16.gmra.mxu0 %v3909
      %v3923 = vpop.f32.mrf.mxu0
      %v3924 = vadd.f32 0.0, %v3923
      %v3925 = vpop.f32.mrf.mxu0
      %3926 = vdwg.mxu0
      %v3928 = vunpack.c.l.b16 %v1287
      %v3929 = vpack.c.b16 %v3928, %v3928
      %3930 = vrot.lane.b32.xlu0 %v3929, 64
      %v3931 = vpop.permute.xlu0 %3930
      %v3933 = vsel %vm2469, %v3080, 0
      %v3936 = vsel %vm3118, %v3931, 0
      %3938 = vmatpush.bf16.msra.mxu0 0
      %3939 = vmatpush.bf16.msra.mxu0 0
      %3940 = vmatpush.bf16.msra.mxu0 0
      %3941 = vmatpush.bf16.msra.mxu0 0
      %3942 = vmatpush.bf16.msra.mxu0 0
      %3943 = vmatpush.bf16.msra.mxu0 0
      %3944 = vmatpush.bf16.msra.mxu0 0
      %3945 = vmatpush.bf16.msra.mxu0 %v3936
      %3946 = vmatmul.bf16.gmra.mxu0 %v3933
      %v3947 = vpop.f32.mrf.mxu0
      %v3948 = vadd.f32 0.0, %v3947
      %v3949 = vpop.f32.mrf.mxu0
      %3950 = vdwg.mxu0
      %v3952 = vunpack.c.l.b16 %v1288
      %v3953 = vpack.c.b16 %v3952, %v3952
      %3954 = vrot.lane.b32.xlu0 %v3953, 64
      %v3955 = vpop.permute.xlu0 %3954
      %v3957 = vsel %vm2469, %v3081, 0
      %v3960 = vsel %vm3118, %v3955, 0
      %3962 = vmatpush.bf16.msra.mxu0 0
      %3963 = vmatpush.bf16.msra.mxu0 0
      %3964 = vmatpush.bf16.msra.mxu0 0
      %3965 = vmatpush.bf16.msra.mxu0 0
      %3966 = vmatpush.bf16.msra.mxu0 0
      %3967 = vmatpush.bf16.msra.mxu0 0
      %3968 = vmatpush.bf16.msra.mxu0 0
      %3969 = vmatpush.bf16.msra.mxu0 %v3960
      %3970 = vmatmul.bf16.gmra.mxu0 %v3957
      %v3971 = vpop.f32.mrf.mxu0
      %v3972 = vadd.f32 0.0, %v3971
      %v3973 = vpop.f32.mrf.mxu0
      %3974 = vdwg.mxu0
      %v3976 = vunpack.c.l.b16 %v1289
      %v3977 = vpack.c.b16 %v3976, %v3976
      %3978 = vrot.lane.b32.xlu0 %v3977, 64
      %v3979 = vpop.permute.xlu0 %3978
      %v3981 = vsel %vm2469, %v3082, 0
      %v3984 = vsel %vm3118, %v3979, 0
      %3986 = vmatpush.bf16.msra.mxu0 0
      %3987 = vmatpush.bf16.msra.mxu0 0
      %3988 = vmatpush.bf16.msra.mxu0 0
      %3989 = vmatpush.bf16.msra.mxu0 0
      %3990 = vmatpush.bf16.msra.mxu0 0
      %3991 = vmatpush.bf16.msra.mxu0 0
      %3992 = vmatpush.bf16.msra.mxu0 0
      %3993 = vmatpush.bf16.msra.mxu0 %v3984
      %3994 = vmatmul.bf16.gmra.mxu0 %v3981
      %v3995 = vpop.f32.mrf.mxu0
      %v3996 = vadd.f32 0.0, %v3995
      %v3997 = vpop.f32.mrf.mxu0
      %3998 = vdwg.mxu0
      %v4000 = vunpack.c.l.b16 %v1290
      %v4001 = vpack.c.b16 %v4000, %v4000
      %4002 = vrot.lane.b32.xlu0 %v4001, 64
      %v4003 = vpop.permute.xlu0 %4002
      %v4005 = vsel %vm2469, %v3083, 0
      %v4008 = vsel %vm3118, %v4003, 0
      %4010 = vmatpush.bf16.msra.mxu0 0
      %4011 = vmatpush.bf16.msra.mxu0 0
      %4012 = vmatpush.bf16.msra.mxu0 0
      %4013 = vmatpush.bf16.msra.mxu0 0
      %4014 = vmatpush.bf16.msra.mxu0 0
      %4015 = vmatpush.bf16.msra.mxu0 0
      %4016 = vmatpush.bf16.msra.mxu0 0
      %4017 = vmatpush.bf16.msra.mxu0 %v4008
      %4018 = vmatmul.bf16.gmra.mxu0 %v4005
      %v4019 = vpop.f32.mrf.mxu0
      %v4020 = vadd.f32 0.0, %v4019
      %v4021 = vpop.f32.mrf.mxu0
      %4022 = vdwg.mxu0
      %v4024 = vunpack.c.l.b16 %v1291
      %v4025 = vpack.c.b16 %v4024, %v4024
      %4026 = vrot.lane.b32.xlu0 %v4025, 64
      %v4027 = vpop.permute.xlu0 %4026
      %v4029 = vsel %vm2469, %v3084, 0
      %v4032 = vsel %vm3118, %v4027, 0
      %4034 = vmatpush.bf16.msra.mxu0 0
      %4035 = vmatpush.bf16.msra.mxu0 0
      %4036 = vmatpush.bf16.msra.mxu0 0
      %4037 = vmatpush.bf16.msra.mxu0 0
      %4038 = vmatpush.bf16.msra.mxu0 0
      %4039 = vmatpush.bf16.msra.mxu0 0
      %4040 = vmatpush.bf16.msra.mxu0 0
      %4041 = vmatpush.bf16.msra.mxu0 %v4032
      %4042 = vmatmul.bf16.gmra.mxu0 %v4029
      %v4043 = vpop.f32.mrf.mxu0
      %v4044 = vadd.f32 0.0, %v4043
      %v4045 = vpop.f32.mrf.mxu0
      %4046 = vdwg.mxu0
      %v4048 = vunpack.c.l.b16 %v1292
      %v4049 = vpack.c.b16 %v4048, %v4048
      %4050 = vrot.lane.b32.xlu0 %v4049, 64
      %v4051 = vpop.permute.xlu0 %4050
      %v4053 = vsel %vm2469, %v3085, 0
      %v4056 = vsel %vm3118, %v4051, 0
      %4058 = vmatpush.bf16.msra.mxu0 0
      %4059 = vmatpush.bf16.msra.mxu0 0
      %4060 = vmatpush.bf16.msra.mxu0 0
      %4061 = vmatpush.bf16.msra.mxu0 0
      %4062 = vmatpush.bf16.msra.mxu0 0
      %4063 = vmatpush.bf16.msra.mxu0 0
      %4064 = vmatpush.bf16.msra.mxu0 0
      %4065 = vmatpush.bf16.msra.mxu0 %v4056
      %4066 = vmatmul.bf16.gmra.mxu0 %v4053
      %v4067 = vpop.f32.mrf.mxu0
      %v4068 = vadd.f32 0.0, %v4067
      %v4069 = vpop.f32.mrf.mxu0
      %4070 = vdwg.mxu0
      %v4072 = vunpack.c.l.b16 %v1293
      %v4073 = vpack.c.b16 %v4072, %v4072
      %4074 = vrot.lane.b32.xlu0 %v4073, 64
      %v4075 = vpop.permute.xlu0 %4074
      %v4077 = vsel %vm2469, %v3086, 0
      %v4080 = vsel %vm3118, %v4075, 0
      %4082 = vmatpush.bf16.msra.mxu0 0
      %4083 = vmatpush.bf16.msra.mxu0 0
      %4084 = vmatpush.bf16.msra.mxu0 0
      %4085 = vmatpush.bf16.msra.mxu0 0
      %4086 = vmatpush.bf16.msra.mxu0 0
      %4087 = vmatpush.bf16.msra.mxu0 0
      %4088 = vmatpush.bf16.msra.mxu0 0
      %4089 = vmatpush.bf16.msra.mxu0 %v4080
      %4090 = vmatmul.bf16.gmra.mxu0 %v4077
      %v4091 = vpop.f32.mrf.mxu0
      %v4092 = vadd.f32 0.0, %v4091
      %v4093 = vpop.f32.mrf.mxu0
      %4094 = vdwg.mxu0
      %v4096 = vunpack.c.l.b16 %v1294
      %v4097 = vpack.c.b16 %v4096, %v4096
      %4098 = vrot.lane.b32.xlu0 %v4097, 64
      %v4099 = vpop.permute.xlu0 %4098
      %v4101 = vsel %vm2469, %v3087, 0
      %v4104 = vsel %vm3118, %v4099, 0
      %4106 = vmatpush.bf16.msra.mxu0 0
      %4107 = vmatpush.bf16.msra.mxu0 0
      %4108 = vmatpush.bf16.msra.mxu0 0
      %4109 = vmatpush.bf16.msra.mxu0 0
      %4110 = vmatpush.bf16.msra.mxu0 0
      %4111 = vmatpush.bf16.msra.mxu0 0
      %4112 = vmatpush.bf16.msra.mxu0 0
      %4113 = vmatpush.bf16.msra.mxu0 %v4104
      %4114 = vmatmul.bf16.gmra.mxu0 %v4101
      %v4115 = vpop.f32.mrf.mxu0
      %v4116 = vadd.f32 0.0, %v4115
      %v4117 = vpop.f32.mrf.mxu0
      %4118 = vdwg.mxu0
      %v4120 = vunpack.c.l.b16 %v1295
      %v4121 = vpack.c.b16 %v4120, %v4120
      %4122 = vrot.lane.b32.xlu0 %v4121, 64
      %v4123 = vpop.permute.xlu0 %4122
      %v4125 = vsel %vm2469, %v3088, 0
      %v4128 = vsel %vm3118, %v4123, 0
      %4130 = vmatpush.bf16.msra.mxu0 0
      %4131 = vmatpush.bf16.msra.mxu0 0
      %4132 = vmatpush.bf16.msra.mxu0 0
      %4133 = vmatpush.bf16.msra.mxu0 0
      %4134 = vmatpush.bf16.msra.mxu0 0
      %4135 = vmatpush.bf16.msra.mxu0 0
      %4136 = vmatpush.bf16.msra.mxu0 0
      %4137 = vmatpush.bf16.msra.mxu0 %v4128
      %4138 = vmatmul.bf16.gmra.mxu0 %v4125
      %v4139 = vpop.f32.mrf.mxu0
      %v4140 = vadd.f32 0.0, %v4139
      %v4141 = vpop.f32.mrf.mxu0
      %4142 = vdwg.mxu0
      %v4144 = vunpack.c.l.b16 %v1296
      %v4145 = vpack.c.b16 %v4144, %v4144
      %4146 = vrot.lane.b32.xlu0 %v4145, 64
      %v4147 = vpop.permute.xlu0 %4146
      %v4149 = vsel %vm2469, %v3089, 0
      %v4152 = vsel %vm3118, %v4147, 0
      %4154 = vmatpush.bf16.msra.mxu0 0
      %4155 = vmatpush.bf16.msra.mxu0 0
      %4156 = vmatpush.bf16.msra.mxu0 0
      %4157 = vmatpush.bf16.msra.mxu0 0
      %4158 = vmatpush.bf16.msra.mxu0 0
      %4159 = vmatpush.bf16.msra.mxu0 0
      %4160 = vmatpush.bf16.msra.mxu0 0
      %4161 = vmatpush.bf16.msra.mxu0 %v4152
      %4162 = vmatmul.bf16.gmra.mxu0 %v4149
      %v4163 = vpop.f32.mrf.mxu0
      %v4164 = vadd.f32 0.0, %v4163
      %v4165 = vpop.f32.mrf.mxu0
      %4166 = vdwg.mxu0
      %v4168 = vunpack.c.l.b16 %v1297
      %v4169 = vpack.c.b16 %v4168, %v4168
      %4170 = vrot.lane.b32.xlu0 %v4169, 64
      %v4171 = vpop.permute.xlu0 %4170
      %v4173 = vsel %vm2469, %v3090, 0
      %v4176 = vsel %vm3118, %v4171, 0
      %4178 = vmatpush.bf16.msra.mxu0 0
      %4179 = vmatpush.bf16.msra.mxu0 0
      %4180 = vmatpush.bf16.msra.mxu0 0
      %4181 = vmatpush.bf16.msra.mxu0 0
      %4182 = vmatpush.bf16.msra.mxu0 0
      %4183 = vmatpush.bf16.msra.mxu0 0
      %4184 = vmatpush.bf16.msra.mxu0 0
      %4185 = vmatpush.bf16.msra.mxu0 %v4176
      %4186 = vmatmul.bf16.gmra.mxu0 %v4173
      %v4187 = vpop.f32.mrf.mxu0
      %v4188 = vadd.f32 0.0, %v4187
      %v4189 = vpop.f32.mrf.mxu0
      %4190 = vdwg.mxu0
      %v4192 = vunpack.c.l.b16 %v1298
      %v4193 = vpack.c.b16 %v4192, %v4192
      %4194 = vrot.lane.b32.xlu0 %v4193, 64
      %v4195 = vpop.permute.xlu0 %4194
      %v4197 = vsel %vm2469, %v3091, 0
      %v4200 = vsel %vm3118, %v4195, 0
      %4202 = vmatpush.bf16.msra.mxu0 0
      %4203 = vmatpush.bf16.msra.mxu0 0
      %4204 = vmatpush.bf16.msra.mxu0 0
      %4205 = vmatpush.bf16.msra.mxu0 0
      %4206 = vmatpush.bf16.msra.mxu0 0
      %4207 = vmatpush.bf16.msra.mxu0 0
      %4208 = vmatpush.bf16.msra.mxu0 0
      %4209 = vmatpush.bf16.msra.mxu0 %v4200
      %4210 = vmatmul.bf16.gmra.mxu0 %v4197
      %v4211 = vpop.f32.mrf.mxu0
      %v4212 = vadd.f32 0.0, %v4211
      %v4213 = vpop.f32.mrf.mxu0
      %4214 = vdwg.mxu0
      %v4216 = vunpack.c.l.b16 %v1299
      %v4217 = vpack.c.b16 %v4216, %v4216
      %4218 = vrot.lane.b32.xlu0 %v4217, 64
      %v4219 = vpop.permute.xlu0 %4218
      %v4221 = vsel %vm2469, %v3092, 0
      %v4224 = vsel %vm3118, %v4219, 0
      %4226 = vmatpush.bf16.msra.mxu0 0
      %4227 = vmatpush.bf16.msra.mxu0 0
      %4228 = vmatpush.bf16.msra.mxu0 0
      %4229 = vmatpush.bf16.msra.mxu0 0
      %4230 = vmatpush.bf16.msra.mxu0 0
      %4231 = vmatpush.bf16.msra.mxu0 0
      %4232 = vmatpush.bf16.msra.mxu0 0
      %4233 = vmatpush.bf16.msra.mxu0 %v4224
      %4234 = vmatmul.bf16.gmra.mxu0 %v4221
      %v4235 = vpop.f32.mrf.mxu0
      %v4236 = vadd.f32 0.0, %v4235
      %v4237 = vpop.f32.mrf.mxu0
      %4238 = vdwg.mxu0
      %v4240 = vunpack.c.l.b16 %v1300
      %v4241 = vpack.c.b16 %v4240, %v4240
      %4242 = vrot.lane.b32.xlu0 %v4241, 64
      %v4243 = vpop.permute.xlu0 %4242
      %v4245 = vsel %vm2469, %v3093, 0
      %v4248 = vsel %vm3118, %v4243, 0
      %4250 = vmatpush.bf16.msra.mxu0 0
      %4251 = vmatpush.bf16.msra.mxu0 0
      %4252 = vmatpush.bf16.msra.mxu0 0
      %4253 = vmatpush.bf16.msra.mxu0 0
      %4254 = vmatpush.bf16.msra.mxu0 0
      %4255 = vmatpush.bf16.msra.mxu0 0
      %4256 = vmatpush.bf16.msra.mxu0 0
      %4257 = vmatpush.bf16.msra.mxu0 %v4248
      %4258 = vmatmul.bf16.gmra.mxu0 %v4245
      %v4259 = vpop.f32.mrf.mxu0
      %v4260 = vadd.f32 0.0, %v4259
      %v4261 = vpop.f32.mrf.mxu0
      %4262 = vdwg.mxu0
      %v4264 = vunpack.c.l.b16 %v1301
      %v4265 = vpack.c.b16 %v4264, %v4264
      %4266 = vrot.lane.b32.xlu0 %v4265, 64
      %v4267 = vpop.permute.xlu0 %4266
      %v4269 = vsel %vm2469, %v3094, 0
      %v4272 = vsel %vm3118, %v4267, 0
      %4274 = vmatpush.bf16.msra.mxu0 0
      %4275 = vmatpush.bf16.msra.mxu0 0
      %4276 = vmatpush.bf16.msra.mxu0 0
      %4277 = vmatpush.bf16.msra.mxu0 0
      %4278 = vmatpush.bf16.msra.mxu0 0
      %4279 = vmatpush.bf16.msra.mxu0 0
      %4280 = vmatpush.bf16.msra.mxu0 0
      %4281 = vmatpush.bf16.msra.mxu0 %v4272
      %4282 = vmatmul.bf16.gmra.mxu0 %v4269
      %v4283 = vpop.f32.mrf.mxu0
      %v4284 = vadd.f32 0.0, %v4283
      %v4285 = vpop.f32.mrf.mxu0
      %4286 = vdwg.mxu0
      %v4288 = vunpack.c.l.b16 %v1302
      %v4289 = vpack.c.b16 %v4288, %v4288
      %4290 = vrot.lane.b32.xlu0 %v4289, 64
      %v4291 = vpop.permute.xlu0 %4290
      %v4293 = vsel %vm2469, %v3095, 0
      %v4296 = vsel %vm3118, %v4291, 0
      %4298 = vmatpush.bf16.msra.mxu0 0
      %4299 = vmatpush.bf16.msra.mxu0 0
      %4300 = vmatpush.bf16.msra.mxu0 0
      %4301 = vmatpush.bf16.msra.mxu0 0
      %4302 = vmatpush.bf16.msra.mxu0 0
      %4303 = vmatpush.bf16.msra.mxu0 0
      %4304 = vmatpush.bf16.msra.mxu0 0
      %4305 = vmatpush.bf16.msra.mxu0 %v4296
      %4306 = vmatmul.bf16.gmra.mxu0 %v4293
      %v4307 = vpop.f32.mrf.mxu0
      %v4308 = vadd.f32 0.0, %v4307
      %v4309 = vpop.f32.mrf.mxu0
      %4310 = vdwg.mxu0
      %v4312 = vunpack.c.l.b16 %v1303
      %v4313 = vpack.c.b16 %v4312, %v4312
      %4314 = vrot.lane.b32.xlu0 %v4313, 64
      %v4315 = vpop.permute.xlu0 %4314
      %v4317 = vsel %vm2469, %v3096, 0
      %v4320 = vsel %vm3118, %v4315, 0
      %4322 = vmatpush.bf16.msra.mxu0 0
      %4323 = vmatpush.bf16.msra.mxu0 0
      %4324 = vmatpush.bf16.msra.mxu0 0
      %4325 = vmatpush.bf16.msra.mxu0 0
      %4326 = vmatpush.bf16.msra.mxu0 0
      %4327 = vmatpush.bf16.msra.mxu0 0
      %4328 = vmatpush.bf16.msra.mxu0 0
      %4329 = vmatpush.bf16.msra.mxu0 %v4320
      %4330 = vmatmul.bf16.gmra.mxu0 %v4317
      %v4331 = vpop.f32.mrf.mxu0
      %v4332 = vadd.f32 0.0, %v4331
      %v4333 = vpop.f32.mrf.mxu0
      %4334 = vdwg.mxu0
      %v4336 = vunpack.c.l.b16 %v1304
      %v4337 = vpack.c.b16 %v4336, %v4336
      %4338 = vrot.lane.b32.xlu0 %v4337, 64
      %v4339 = vpop.permute.xlu0 %4338
      %v4341 = vsel %vm2469, %v3097, 0
      %v4344 = vsel %vm3118, %v4339, 0
      %4346 = vmatpush.bf16.msra.mxu0 0
      %4347 = vmatpush.bf16.msra.mxu0 0
      %4348 = vmatpush.bf16.msra.mxu0 0
      %4349 = vmatpush.bf16.msra.mxu0 0
      %4350 = vmatpush.bf16.msra.mxu0 0
      %4351 = vmatpush.bf16.msra.mxu0 0
      %4352 = vmatpush.bf16.msra.mxu0 0
      %4353 = vmatpush.bf16.msra.mxu0 %v4344
      %4354 = vmatmul.bf16.gmra.mxu0 %v4341
      %v4355 = vpop.f32.mrf.mxu0
      %v4356 = vadd.f32 0.0, %v4355
      %v4357 = vpop.f32.mrf.mxu0
      %4358 = vdwg.mxu0
      %v4360 = vunpack.c.l.b16 %v1305
      %v4361 = vpack.c.b16 %v4360, %v4360
      %4362 = vrot.lane.b32.xlu0 %v4361, 64
      %v4363 = vpop.permute.xlu0 %4362
      %v4365 = vsel %vm2469, %v3098, 0
      %v4368 = vsel %vm3118, %v4363, 0
      %4370 = vmatpush.bf16.msra.mxu0 0
      %4371 = vmatpush.bf16.msra.mxu0 0
      %4372 = vmatpush.bf16.msra.mxu0 0
      %4373 = vmatpush.bf16.msra.mxu0 0
      %4374 = vmatpush.bf16.msra.mxu0 0
      %4375 = vmatpush.bf16.msra.mxu0 0
      %4376 = vmatpush.bf16.msra.mxu0 0
      %4377 = vmatpush.bf16.msra.mxu0 %v4368
      %4378 = vmatmul.bf16.gmra.mxu0 %v4365
      %v4379 = vpop.f32.mrf.mxu0
      %v4380 = vadd.f32 0.0, %v4379
      %v4381 = vpop.f32.mrf.mxu0
      %4382 = vdwg.mxu0
      %v4384 = vunpack.c.l.b16 %v1306
      %v4385 = vpack.c.b16 %v4384, %v4384
      %4386 = vrot.lane.b32.xlu0 %v4385, 64
      %v4387 = vpop.permute.xlu0 %4386
      %v4389 = vsel %vm2469, %v3099, 0
      %v4392 = vsel %vm3118, %v4387, 0
      %4394 = vmatpush.bf16.msra.mxu0 0
      %4395 = vmatpush.bf16.msra.mxu0 0
      %4396 = vmatpush.bf16.msra.mxu0 0
      %4397 = vmatpush.bf16.msra.mxu0 0
      %4398 = vmatpush.bf16.msra.mxu0 0
      %4399 = vmatpush.bf16.msra.mxu0 0
      %4400 = vmatpush.bf16.msra.mxu0 0
      %4401 = vmatpush.bf16.msra.mxu0 %v4392
      %4402 = vmatmul.bf16.gmra.mxu0 %v4389
      %v4403 = vpop.f32.mrf.mxu0
      %v4404 = vadd.f32 0.0, %v4403
      %v4405 = vpop.f32.mrf.mxu0
      %4406 = vdwg.mxu0
      %v4408 = vunpack.c.l.b16 %v1307
      %v4409 = vpack.c.b16 %v4408, %v4408
      %4410 = vrot.lane.b32.xlu0 %v4409, 64
      %v4411 = vpop.permute.xlu0 %4410
      %v4413 = vsel %vm2469, %v3100, 0
      %v4416 = vsel %vm3118, %v4411, 0
      %4418 = vmatpush.bf16.msra.mxu0 0
      %4419 = vmatpush.bf16.msra.mxu0 0
      %4420 = vmatpush.bf16.msra.mxu0 0
      %4421 = vmatpush.bf16.msra.mxu0 0
      %4422 = vmatpush.bf16.msra.mxu0 0
      %4423 = vmatpush.bf16.msra.mxu0 0
      %4424 = vmatpush.bf16.msra.mxu0 0
      %4425 = vmatpush.bf16.msra.mxu0 %v4416
      %4426 = vmatmul.bf16.gmra.mxu0 %v4413
      %v4427 = vpop.f32.mrf.mxu0
      %v4428 = vadd.f32 0.0, %v4427
      %v4429 = vpop.f32.mrf.mxu0
      %4430 = vdwg.mxu0
      %v4432 = vunpack.c.l.b16 %v1308
      %v4433 = vpack.c.b16 %v4432, %v4432
      %4434 = vrot.lane.b32.xlu0 %v4433, 64
      %v4435 = vpop.permute.xlu0 %4434
      %v4437 = vsel %vm2469, %v3101, 0
      %v4440 = vsel %vm3118, %v4435, 0
      %4442 = vmatpush.bf16.msra.mxu0 0
      %4443 = vmatpush.bf16.msra.mxu0 0
      %4444 = vmatpush.bf16.msra.mxu0 0
      %4445 = vmatpush.bf16.msra.mxu0 0
      %4446 = vmatpush.bf16.msra.mxu0 0
      %4447 = vmatpush.bf16.msra.mxu0 0
      %4448 = vmatpush.bf16.msra.mxu0 0
      %4449 = vmatpush.bf16.msra.mxu0 %v4440
      %4450 = vmatmul.bf16.gmra.mxu0 %v4437
      %v4451 = vpop.f32.mrf.mxu0
      %v4452 = vadd.f32 0.0, %v4451
      %v4453 = vpop.f32.mrf.mxu0
      %4454 = vdwg.mxu0
      %v4456 = vunpack.c.l.b16 %v1309
      %v4457 = vpack.c.b16 %v4456, %v4456
      %4458 = vrot.lane.b32.xlu0 %v4457, 64
      %v4459 = vpop.permute.xlu0 %4458
      %v4461 = vsel %vm2469, %v3102, 0
      %v4464 = vsel %vm3118, %v4459, 0
      %4466 = vmatpush.bf16.msra.mxu0 0
      %4467 = vmatpush.bf16.msra.mxu0 0
      %4468 = vmatpush.bf16.msra.mxu0 0
      %4469 = vmatpush.bf16.msra.mxu0 0
      %4470 = vmatpush.bf16.msra.mxu0 0
      %4471 = vmatpush.bf16.msra.mxu0 0
      %4472 = vmatpush.bf16.msra.mxu0 0
      %4473 = vmatpush.bf16.msra.mxu0 %v4464
      %4474 = vmatmul.bf16.gmra.mxu0 %v4461
      %v4475 = vpop.f32.mrf.mxu0
      %v4476 = vadd.f32 0.0, %v4475
      %v4477 = vpop.f32.mrf.mxu0
      %4478 = vdwg.mxu0
      %v4480 = vunpack.c.l.b16 %v1310
      %v4481 = vpack.c.b16 %v4480, %v4480
      %4482 = vrot.lane.b32.xlu0 %v4481, 64
      %v4483 = vpop.permute.xlu0 %4482
      %v4485 = vsel %vm2469, %v3103, 0
      %v4488 = vsel %vm3118, %v4483, 0
      %4490 = vmatpush.bf16.msra.mxu0 0
      %4491 = vmatpush.bf16.msra.mxu0 0
      %4492 = vmatpush.bf16.msra.mxu0 0
      %4493 = vmatpush.bf16.msra.mxu0 0
      %4494 = vmatpush.bf16.msra.mxu0 0
      %4495 = vmatpush.bf16.msra.mxu0 0
      %4496 = vmatpush.bf16.msra.mxu0 0
      %4497 = vmatpush.bf16.msra.mxu0 %v4488
      %4498 = vmatmul.bf16.gmra.mxu0 %v4485
      %v4499 = vpop.f32.mrf.mxu0
      %v4500 = vadd.f32 0.0, %v4499
      %v4501 = vpop.f32.mrf.mxu0
      %4502 = vdwg.mxu0
      %v4504 = vunpack.c.l.b16 %v1311
      %v4505 = vpack.c.b16 %v4504, %v4504
      %4506 = vrot.lane.b32.xlu0 %v4505, 64
      %v4507 = vpop.permute.xlu0 %4506
      %v4509 = vsel %vm2469, %v3104, 0
      %v4512 = vsel %vm3118, %v4507, 0
      %4514 = vmatpush.bf16.msra.mxu0 0
      %4515 = vmatpush.bf16.msra.mxu0 0
      %4516 = vmatpush.bf16.msra.mxu0 0
      %4517 = vmatpush.bf16.msra.mxu0 0
      %4518 = vmatpush.bf16.msra.mxu0 0
      %4519 = vmatpush.bf16.msra.mxu0 0
      %4520 = vmatpush.bf16.msra.mxu0 0
      %4521 = vmatpush.bf16.msra.mxu0 %v4512
      %4522 = vmatmul.bf16.gmra.mxu0 %v4509
      %v4523 = vpop.f32.mrf.mxu0
      %v4524 = vadd.f32 0.0, %v4523
      %v4525 = vpop.f32.mrf.mxu0
      %4526 = vdwg.mxu0
      %v4528 = vunpack.c.l.b16 %v1312
      %v4529 = vpack.c.b16 %v4528, %v4528
      %4530 = vrot.lane.b32.xlu0 %v4529, 64
      %v4531 = vpop.permute.xlu0 %4530
      %v4533 = vsel %vm2469, %v3105, 0
      %v4536 = vsel %vm3118, %v4531, 0
      %4538 = vmatpush.bf16.msra.mxu0 0
      %4539 = vmatpush.bf16.msra.mxu0 0
      %4540 = vmatpush.bf16.msra.mxu0 0
      %4541 = vmatpush.bf16.msra.mxu0 0
      %4542 = vmatpush.bf16.msra.mxu0 0
      %4543 = vmatpush.bf16.msra.mxu0 0
      %4544 = vmatpush.bf16.msra.mxu0 0
      %4545 = vmatpush.bf16.msra.mxu0 %v4536
      %4546 = vmatmul.bf16.gmra.mxu0 %v4533
      %v4547 = vpop.f32.mrf.mxu0
      %v4548 = vadd.f32 0.0, %v4547
      %v4549 = vpop.f32.mrf.mxu0
      %4550 = vdwg.mxu0
      %v4552 = vunpack.c.l.b16 %v1313
      %v4553 = vpack.c.b16 %v4552, %v4552
      %4554 = vrot.lane.b32.xlu0 %v4553, 64
      %v4555 = vpop.permute.xlu0 %4554
      %v4557 = vsel %vm2469, %v3106, 0
      %v4560 = vsel %vm3118, %v4555, 0
      %4562 = vmatpush.bf16.msra.mxu0 0
      %4563 = vmatpush.bf16.msra.mxu0 0
      %4564 = vmatpush.bf16.msra.mxu0 0
      %4565 = vmatpush.bf16.msra.mxu0 0
      %4566 = vmatpush.bf16.msra.mxu0 0
      %4567 = vmatpush.bf16.msra.mxu0 0
      %4568 = vmatpush.bf16.msra.mxu0 0
      %4569 = vmatpush.bf16.msra.mxu0 %v4560
      %4570 = vmatmul.bf16.gmra.mxu0 %v4557
      %v4571 = vpop.f32.mrf.mxu0
      %v4572 = vadd.f32 0.0, %v4571
      %v4573 = vpop.f32.mrf.mxu0
      %4574 = vdwg.mxu0
      %v4576 = vunpack.c.l.b16 %v1314
      %v4577 = vpack.c.b16 %v4576, %v4576
      %4578 = vrot.lane.b32.xlu0 %v4577, 64
      %v4579 = vpop.permute.xlu0 %4578
      %v4581 = vsel %vm2469, %v3107, 0
      %v4584 = vsel %vm3118, %v4579, 0
      %4586 = vmatpush.bf16.msra.mxu0 0
      %4587 = vmatpush.bf16.msra.mxu0 0
      %4588 = vmatpush.bf16.msra.mxu0 0
      %4589 = vmatpush.bf16.msra.mxu0 0
      %4590 = vmatpush.bf16.msra.mxu0 0
      %4591 = vmatpush.bf16.msra.mxu0 0
      %4592 = vmatpush.bf16.msra.mxu0 0
      %4593 = vmatpush.bf16.msra.mxu0 %v4584
      %4594 = vmatmul.bf16.gmra.mxu0 %v4581
      %v4595 = vpop.f32.mrf.mxu0
      %v4596 = vadd.f32 0.0, %v4595
      %v4597 = vpop.f32.mrf.mxu0
      %4598 = vdwg.mxu0
      %v4600 = vunpack.c.l.b16 %v1315
      %v4601 = vpack.c.b16 %v4600, %v4600
      %4602 = vrot.lane.b32.xlu0 %v4601, 64
      %v4603 = vpop.permute.xlu0 %4602
      %v4605 = vsel %vm2469, %v3108, 0
      %v4608 = vsel %vm3118, %v4603, 0
      %4610 = vmatpush.bf16.msra.mxu0 0
      %4611 = vmatpush.bf16.msra.mxu0 0
      %4612 = vmatpush.bf16.msra.mxu0 0
      %4613 = vmatpush.bf16.msra.mxu0 0
      %4614 = vmatpush.bf16.msra.mxu0 0
      %4615 = vmatpush.bf16.msra.mxu0 0
      %4616 = vmatpush.bf16.msra.mxu0 0
      %4617 = vmatpush.bf16.msra.mxu0 %v4608
      %4618 = vmatmul.bf16.gmra.mxu0 %v4605
      %v4619 = vpop.f32.mrf.mxu0
      %v4620 = vadd.f32 0.0, %v4619
      %v4621 = vpop.f32.mrf.mxu0
      %4622 = vdwg.mxu0
      %v4624 = vunpack.c.l.b16 %v1316
      %v4625 = vpack.c.b16 %v4624, %v4624
      %4626 = vrot.lane.b32.xlu0 %v4625, 64
      %v4627 = vpop.permute.xlu0 %4626
      %v4629 = vsel %vm2469, %v3109, 0
      %v4632 = vsel %vm3118, %v4627, 0
      %4634 = vmatpush.bf16.msra.mxu0 0
      %4635 = vmatpush.bf16.msra.mxu0 0
      %4636 = vmatpush.bf16.msra.mxu0 0
      %4637 = vmatpush.bf16.msra.mxu0 0
      %4638 = vmatpush.bf16.msra.mxu0 0
      %4639 = vmatpush.bf16.msra.mxu0 0
      %4640 = vmatpush.bf16.msra.mxu0 0
      %4641 = vmatpush.bf16.msra.mxu0 %v4632
      %4642 = vmatmul.bf16.gmra.mxu0 %v4629
      %v4643 = vpop.f32.mrf.mxu0
      %v4644 = vadd.f32 0.0, %v4643
      %v4645 = vpop.f32.mrf.mxu0
      %4646 = vdwg.mxu0
      %v4647 = vrcp.pop %v2856
      %v4648 = vrcp.pop %v2859
      %v4649 = vrcp.pop %v2862
      %v4650 = vrcp.pop %v2865
      %v4651 = vrcp.pop %v2868
      %v4652 = vrcp.pop %v2871
      %v4653 = vrcp.pop %v2874
      %v4654 = vrcp.pop %v2877
      %v4655 = vrcp.pop %v2880
      %v4656 = vrcp.pop %v2883
      %v4657 = vrcp.pop %v2886
      %v4658 = vrcp.pop %v2889
      %v4659 = vrcp.pop %v2892
      %v4660 = vrcp.pop %v2895
      %v4661 = vrcp.pop %v2898
      %v4662 = vrcp.pop %v2901
      %v4663 = vrcp.pop %v2904
      %v4664 = vrcp.pop %v2907
      %v4665 = vrcp.pop %v2910
      %v4666 = vrcp.pop %v2913
      %v4667 = vrcp.pop %v2916
      %v4668 = vrcp.pop %v2919
      %v4669 = vrcp.pop %v2922
      %v4670 = vrcp.pop %v2925
      %v4671 = vrcp.pop %v2928
      %v4672 = vrcp.pop %v2931
      %v4673 = vrcp.pop %v2934
      %v4674 = vrcp.pop %v2937
      %v4675 = vrcp.pop %v2940
      %v4676 = vrcp.pop %v2943
      %v4677 = vrcp.pop %v2946
      %v4678 = vrcp.pop %v2949
      %v4679 = vrcp.pop %v2952
      %v4680 = vrcp.pop %v2955
      %v4681 = vrcp.pop %v2958
      %v4682 = vrcp.pop %v2961
      %v4683 = vrcp.pop %v2964
      %v4684 = vrcp.pop %v2967
      %v4685 = vrcp.pop %v2970
      %v4686 = vrcp.pop %v2973
      %v4687 = vrcp.pop %v2976
      %v4688 = vrcp.pop %v2979
      %v4689 = vrcp.pop %v2982
      %v4690 = vrcp.pop %v2985
      %v4691 = vrcp.pop %v2988
      %v4692 = vrcp.pop %v2991
      %v4693 = vrcp.pop %v2994
      %v4694 = vrcp.pop %v2997
      %v4695 = vrcp.pop %v3000
      %v4696 = vrcp.pop %v3003
      %v4697 = vrcp.pop %v3006
      %v4698 = vrcp.pop %v3009
      %v4699 = vrcp.pop %v3012
      %v4700 = vrcp.pop %v3015
      %v4701 = vrcp.pop %v3018
      %v4702 = vrcp.pop %v3021
      %v4703 = vrcp.pop %v3024
      %v4704 = vrcp.pop %v3027
      %v4705 = vrcp.pop %v3030
      %v4706 = vrcp.pop %v3033
      %v4707 = vrcp.pop %v3036
      %v4708 = vrcp.pop %v3039
      %v4709 = vrcp.pop %v3042
      %v4710 = vrcp.pop %v3045
      %v4711 = vmul.f32 %v3132, %v4647
      %v4712 = vmul.f32 %v3156, %v4648
      %v4713 = vmul.f32 %v3180, %v4649
      %v4714 = vmul.f32 %v3204, %v4650
      %v4715 = vmul.f32 %v3228, %v4651
      %v4716 = vmul.f32 %v3252, %v4652
      %v4717 = vmul.f32 %v3276, %v4653
      %v4718 = vmul.f32 %v3300, %v4654
      %v4719 = vmul.f32 %v3324, %v4655
      %v4720 = vmul.f32 %v3348, %v4656
      %v4721 = vmul.f32 %v3372, %v4657
      %v4722 = vmul.f32 %v3396, %v4658
      %v4723 = vmul.f32 %v3420, %v4659
      %v4724 = vmul.f32 %v3444, %v4660
      %v4725 = vmul.f32 %v3468, %v4661
      %v4726 = vmul.f32 %v3492, %v4662
      %v4727 = vmul.f32 %v3516, %v4663
      %v4728 = vmul.f32 %v3540, %v4664
      %v4729 = vmul.f32 %v3564, %v4665
      %v4730 = vmul.f32 %v3588, %v4666
      %v4731 = vmul.f32 %v3612, %v4667
      %v4732 = vmul.f32 %v3636, %v4668
      %v4733 = vmul.f32 %v3660, %v4669
      %v4734 = vmul.f32 %v3684, %v4670
      %v4735 = vmul.f32 %v3708, %v4671
      %v4736 = vmul.f32 %v3732, %v4672
      %v4737 = vmul.f32 %v3756, %v4673
      %v4738 = vmul.f32 %v3780, %v4674
      %v4739 = vmul.f32 %v3804, %v4675
      %v4740 = vmul.f32 %v3828, %v4676
      %v4741 = vmul.f32 %v3852, %v4677
      %v4742 = vmul.f32 %v3876, %v4678
      %v4743 = vmul.f32 %v3900, %v4679
      %v4744 = vmul.f32 %v3924, %v4680
      %v4745 = vmul.f32 %v3948, %v4681
      %v4746 = vmul.f32 %v3972, %v4682
      %v4747 = vmul.f32 %v3996, %v4683
      %v4748 = vmul.f32 %v4020, %v4684
      %v4749 = vmul.f32 %v4044, %v4685
      %v4750 = vmul.f32 %v4068, %v4686
      %v4751 = vmul.f32 %v4092, %v4687
      %v4752 = vmul.f32 %v4116, %v4688
      %v4753 = vmul.f32 %v4140, %v4689
      %v4754 = vmul.f32 %v4164, %v4690
      %v4755 = vmul.f32 %v4188, %v4691
      %v4756 = vmul.f32 %v4212, %v4692
      %v4757 = vmul.f32 %v4236, %v4693
      %v4758 = vmul.f32 %v4260, %v4694
      %v4759 = vmul.f32 %v4284, %v4695
      %v4760 = vmul.f32 %v4308, %v4696
      %v4761 = vmul.f32 %v4332, %v4697
      %v4762 = vmul.f32 %v4356, %v4698
      %v4763 = vmul.f32 %v4380, %v4699
      %v4764 = vmul.f32 %v4404, %v4700
      %v4765 = vmul.f32 %v4428, %v4701
      %v4766 = vmul.f32 %v4452, %v4702
      %v4767 = vmul.f32 %v4476, %v4703
      %v4768 = vmul.f32 %v4500, %v4704
      %v4769 = vmul.f32 %v4524, %v4705
      %v4770 = vmul.f32 %v4548, %v4706
      %v4771 = vmul.f32 %v4572, %v4707
      %v4772 = vmul.f32 %v4596, %v4708
      %v4773 = vmul.f32 %v4620, %v4709
      %v4774 = vmul.f32 %v4644, %v4710
      %v4775 = vsel %vm519, %v4711, 0.0
      %v4776 = vsel %vm519, %v4712, 0.0
      %v4777 = vadd.f32 %v4775, %v4776
      %v4778 = vsel %vm519, %v4713, 0.0
      %v4779 = vadd.f32 %v4777, %v4778
      %v4780 = vsel %vm519, %v4714, 0.0
      %v4781 = vadd.f32 %v4779, %v4780
      %v4782 = vsel %vm519, %v4715, 0.0
      %v4783 = vsel %vm519, %v4716, 0.0
      %v4784 = vadd.f32 %v4782, %v4783
      %v4785 = vsel %vm519, %v4717, 0.0
      %v4786 = vadd.f32 %v4784, %v4785
      %v4787 = vsel %vm519, %v4718, 0.0
      %v4788 = vadd.f32 %v4786, %v4787
      %v4789 = vsel %vm519, %v4719, 0.0
      %v4790 = vsel %vm519, %v4720, 0.0
      %v4791 = vadd.f32 %v4789, %v4790
      %v4792 = vsel %vm519, %v4721, 0.0
      %v4793 = vadd.f32 %v4791, %v4792
      %v4794 = vsel %vm519, %v4722, 0.0
      %v4795 = vadd.f32 %v4793, %v4794
      %v4796 = vsel %vm519, %v4723, 0.0
      %v4797 = vsel %vm519, %v4724, 0.0
      %v4798 = vadd.f32 %v4796, %v4797
      %v4799 = vsel %vm519, %v4725, 0.0
      %v4800 = vadd.f32 %v4798, %v4799
      %v4801 = vsel %vm519, %v4726, 0.0
      %v4802 = vadd.f32 %v4800, %v4801
      %v4803 = vsel %vm519, %v4727, 0.0
      %v4804 = vsel %vm519, %v4728, 0.0
      %v4805 = vadd.f32 %v4803, %v4804
      %v4806 = vsel %vm519, %v4729, 0.0
      %v4807 = vadd.f32 %v4805, %v4806
      %v4808 = vsel %vm519, %v4730, 0.0
      %v4809 = vadd.f32 %v4807, %v4808
      %v4810 = vsel %vm519, %v4731, 0.0
      %v4811 = vsel %vm519, %v4732, 0.0
      %v4812 = vadd.f32 %v4810, %v4811
      %v4813 = vsel %vm519, %v4733, 0.0
      %v4814 = vadd.f32 %v4812, %v4813
      %v4815 = vsel %vm519, %v4734, 0.0
      %v4816 = vadd.f32 %v4814, %v4815
      %v4817 = vsel %vm519, %v4735, 0.0
      %v4818 = vsel %vm519, %v4736, 0.0
      %v4819 = vadd.f32 %v4817, %v4818
      %v4820 = vsel %vm519, %v4737, 0.0
      %v4821 = vadd.f32 %v4819, %v4820
      %v4822 = vsel %vm519, %v4738, 0.0
      %v4823 = vadd.f32 %v4821, %v4822
      %v4824 = vsel %vm519, %v4739, 0.0
      %v4825 = vsel %vm519, %v4740, 0.0
      %v4826 = vadd.f32 %v4824, %v4825
      %v4827 = vsel %vm519, %v4741, 0.0
      %v4828 = vadd.f32 %v4826, %v4827
      %v4829 = vsel %vm519, %v4742, 0.0
      %v4830 = vadd.f32 %v4828, %v4829
      %v4831 = vsel %vm519, %v4743, 0.0
      %v4832 = vsel %vm519, %v4744, 0.0
      %v4833 = vadd.f32 %v4831, %v4832
      %v4834 = vsel %vm519, %v4745, 0.0
      %v4835 = vadd.f32 %v4833, %v4834
      %v4836 = vsel %vm519, %v4746, 0.0
      %v4837 = vadd.f32 %v4835, %v4836
      %v4838 = vsel %vm519, %v4747, 0.0
      %v4839 = vsel %vm519, %v4748, 0.0
      %v4840 = vadd.f32 %v4838, %v4839
      %v4841 = vsel %vm519, %v4749, 0.0
      %v4842 = vadd.f32 %v4840, %v4841
      %v4843 = vsel %vm519, %v4750, 0.0
      %v4844 = vadd.f32 %v4842, %v4843
      %v4845 = vsel %vm519, %v4751, 0.0
      %v4846 = vsel %vm519, %v4752, 0.0
      %v4847 = vadd.f32 %v4845, %v4846
      %v4848 = vsel %vm519, %v4753, 0.0
      %v4849 = vadd.f32 %v4847, %v4848
      %v4850 = vsel %vm519, %v4754, 0.0
      %v4851 = vadd.f32 %v4849, %v4850
      %v4852 = vsel %vm519, %v4755, 0.0
      %v4853 = vsel %vm519, %v4756, 0.0
      %v4854 = vadd.f32 %v4852, %v4853
      %v4855 = vsel %vm519, %v4757, 0.0
      %v4856 = vadd.f32 %v4854, %v4855
      %v4857 = vsel %vm519, %v4758, 0.0
      %v4858 = vadd.f32 %v4856, %v4857
      %v4859 = vsel %vm519, %v4759, 0.0
      %v4860 = vsel %vm519, %v4760, 0.0
      %v4861 = vadd.f32 %v4859, %v4860
      %v4862 = vsel %vm519, %v4761, 0.0
      %v4863 = vadd.f32 %v4861, %v4862
      %v4864 = vsel %vm519, %v4762, 0.0
      %v4865 = vadd.f32 %v4863, %v4864
      %v4866 = vsel %vm519, %v4763, 0.0
      %v4867 = vsel %vm519, %v4764, 0.0
      %v4868 = vadd.f32 %v4866, %v4867
      %v4869 = vsel %vm519, %v4765, 0.0
      %v4870 = vadd.f32 %v4868, %v4869
      %v4871 = vsel %vm519, %v4766, 0.0
      %v4872 = vadd.f32 %v4870, %v4871
      %v4873 = vsel %vm519, %v4767, 0.0
      %v4874 = vsel %vm519, %v4768, 0.0
      %v4875 = vadd.f32 %v4873, %v4874
      %v4876 = vsel %vm519, %v4769, 0.0
      %v4877 = vadd.f32 %v4875, %v4876
      %v4878 = vsel %vm519, %v4770, 0.0
      %v4879 = vadd.f32 %v4877, %v4878
      %v4880 = vsel %vm519, %v4771, 0.0
      %v4881 = vsel %vm519, %v4772, 0.0
      %v4882 = vadd.f32 %v4880, %v4881
      %v4883 = vsel %vm519, %v4773, 0.0
      %v4884 = vadd.f32 %v4882, %v4883
      %v4885 = vsel %vm519, %v4774, 0.0
      %v4886 = vadd.f32 %v4884, %v4885
      %v4887 = vpack.c.bf16 %v4788, %v4781
      %v4888 = vpack.c.bf16 %v4802, %v4795
      %v4889 = vpack.c.bf16 %v4816, %v4809
      %v4890 = vpack.c.bf16 %v4830, %v4823
      %v4891 = vpack.c.bf16 %v4844, %v4837
      %v4892 = vpack.c.bf16 %v4858, %v4851
      %v4893 = vpack.c.bf16 %v4872, %v4865
      %v4894 = vpack.c.bf16 %v4886, %v4879
      %v4896 = vperm.slane %v494, 0
      %v4902 = vunpack.c.l.b16 %v490
      %v4903 = vunpack.c.l.b16 %v491
      %v4904 = vunpack.c.l.b16 %v492
      %v4905 = vunpack.c.l.b16 %v493
      %v4906 = vpack.c.b16 %v4903, %v4902
      %v4907 = vpack.c.b16 %v4905, %v4904
      %v4911 = vsel %vm519, %v4887, 0
      %v4914 = vsel %vm519, %v4888, 0
      %v4917 = vsel %vm519, %v4889, 0
      %v4920 = vsel %vm519, %v4890, 0
      %v4923 = vsel %vm519, %v4891, 0
      %v4926 = vsel %vm519, %v4892, 0
      %v4929 = vsel %vm519, %v4893, 0
      %v4932 = vsel %vm519, %v4894, 0
      %4934 = vmatpush.bf16.msra.mxu0 0
      %4935 = vmatpush.bf16.msra.mxu0 0
      %4936 = vmatpush.bf16.msra.mxu0 0
      %4937 = vmatpush.bf16.msra.mxu0 0
      %4938 = vmatpush.bf16.msra.mxu0 0
      %4939 = vmatpush.bf16.msra.mxu0 0
      %4940 = vmatpush.bf16.msra.mxu0 %v4907
      %4941 = vmatpush.bf16.msra.mxu0 %v4906
      %4942 = vmatmul.bf16.gmra.mxu0 %v4911
      %v4943 = vpop.f32.mrf.mxu0
      %v4944 = vadd.f32 %v4896, %v4943
      %v4945 = vpop.f32.mrf.mxu0
      %v4946 = vadd.f32 %v4896, %v4945
      %4947 = vmatmul.bf16.gmra.mxu0 %v4914
      %v4948 = vpop.f32.mrf.mxu0
      %v4949 = vadd.f32 %v4896, %v4948
      %v4950 = vpop.f32.mrf.mxu0
      %v4951 = vadd.f32 %v4896, %v4950
      %4952 = vmatmul.bf16.gmra.mxu0 %v4917
      %v4953 = vpop.f32.mrf.mxu0
      %v4954 = vadd.f32 %v4896, %v4953
      %v4955 = vpop.f32.mrf.mxu0
      %v4956 = vadd.f32 %v4896, %v4955
      %4957 = vmatmul.bf16.gmra.mxu0 %v4920
      %v4958 = vpop.f32.mrf.mxu0
      %v4959 = vadd.f32 %v4896, %v4958
      %v4960 = vpop.f32.mrf.mxu0
      %v4961 = vadd.f32 %v4896, %v4960
      %4962 = vmatmul.bf16.gmra.mxu0 %v4923
      %v4963 = vpop.f32.mrf.mxu0
      %v4964 = vadd.f32 %v4896, %v4963
      %v4965 = vpop.f32.mrf.mxu0
      %v4966 = vadd.f32 %v4896, %v4965
      %4967 = vmatmul.bf16.gmra.mxu0 %v4926
      %v4968 = vpop.f32.mrf.mxu0
      %v4969 = vadd.f32 %v4896, %v4968
      %v4970 = vpop.f32.mrf.mxu0
      %v4971 = vadd.f32 %v4896, %v4970
      %4972 = vmatmul.bf16.gmra.mxu0 %v4929
      %v4973 = vpop.f32.mrf.mxu0
      %v4974 = vadd.f32 %v4896, %v4973
      %v4975 = vpop.f32.mrf.mxu0
      %v4976 = vadd.f32 %v4896, %v4975
      %4977 = vmatmul.bf16.gmra.mxu0 %v4932
      %v4978 = vpop.f32.mrf.mxu0
      %v4979 = vadd.f32 %v4896, %v4978
      %v4980 = vpop.f32.mrf.mxu0
      %v4981 = vadd.f32 %v4896, %v4980
      %4982 = vdwg.mxu0
      %v4983 = vadd.f32 %v467, %v4944
      %v4984 = vadd.f32 %v468, %v4946
      %v4985 = vadd.f32 %v469, %v4949
      %v4986 = vadd.f32 %v470, %v4951
      %v4987 = vadd.f32 %v471, %v4954
      %v4988 = vadd.f32 %v472, %v4956
      %v4989 = vadd.f32 %v473, %v4959
      %v4990 = vadd.f32 %v474, %v4961
      %v4991 = vadd.f32 %v475, %v4964
      %v4992 = vadd.f32 %v476, %v4966
      %v4993 = vadd.f32 %v477, %v4969
      %v4994 = vadd.f32 %v478, %v4971
      %v4995 = vadd.f32 %v479, %v4974
      %v4996 = vadd.f32 %v480, %v4976
      %v4997 = vadd.f32 %v481, %v4979
      %v4998 = vadd.f32 %v482, %v4981
      %v4999 = vsel %vm519, %v4983, 0.0
      %5000 = vadd.xlane.f32.xlu0 %v4999
      %v5001 = vpop.xlane.xlu0 %5000
      %v5002 = vsel %vm519, %v4984, 0.0
      %5003 = vadd.xlane.f32.xlu0 %v5002
      %v5004 = vpop.xlane.xlu0 %5003
      %v5005 = vsel %vm519, %v4985, 0.0
      %5006 = vadd.xlane.f32.xlu0 %v5005
      %v5007 = vpop.xlane.xlu0 %5006
      %v5008 = vsel %vm519, %v4986, 0.0
      %5009 = vadd.xlane.f32.xlu0 %v5008
      %v5010 = vpop.xlane.xlu0 %5009
      %v5011 = vsel %vm519, %v4987, 0.0
      %5012 = vadd.xlane.f32.xlu0 %v5011
      %v5013 = vpop.xlane.xlu0 %5012
      %v5014 = vsel %vm519, %v4988, 0.0
      %5015 = vadd.xlane.f32.xlu0 %v5014
      %v5016 = vpop.xlane.xlu0 %5015
      %v5017 = vsel %vm519, %v4989, 0.0
      %5018 = vadd.xlane.f32.xlu0 %v5017
      %v5019 = vpop.xlane.xlu0 %5018
      %v5020 = vsel %vm519, %v4990, 0.0
      %5021 = vadd.xlane.f32.xlu0 %v5020
      %v5022 = vpop.xlane.xlu0 %5021
      %v5023 = vsel %vm519, %v4991, 0.0
      %5024 = vadd.xlane.f32.xlu0 %v5023
      %v5025 = vpop.xlane.xlu0 %5024
      %v5026 = vsel %vm519, %v4992, 0.0
      %5027 = vadd.xlane.f32.xlu0 %v5026
      %v5028 = vpop.xlane.xlu0 %5027
      %v5029 = vsel %vm519, %v4993, 0.0
      %5030 = vadd.xlane.f32.xlu0 %v5029
      %v5031 = vpop.xlane.xlu0 %5030
      %v5032 = vsel %vm519, %v4994, 0.0
      %5033 = vadd.xlane.f32.xlu0 %v5032
      %v5034 = vpop.xlane.xlu0 %5033
      %v5035 = vsel %vm519, %v4995, 0.0
      %5036 = vadd.xlane.f32.xlu0 %v5035
      %v5037 = vpop.xlane.xlu0 %5036
      %v5038 = vsel %vm519, %v4996, 0.0
      %5039 = vadd.xlane.f32.xlu0 %v5038
      %v5040 = vpop.xlane.xlu0 %5039
      %v5041 = vsel %vm519, %v4997, 0.0
      %5042 = vadd.xlane.f32.xlu0 %v5041
      %v5043 = vpop.xlane.xlu0 %5042
      %v5044 = vsel %vm519, %v4998, 0.0
      %5045 = vadd.xlane.f32.xlu0 %v5044
      %v5046 = vpop.xlane.xlu0 %5045
      %v5047 = vmul.f32 %v5001, %v574
      %v5048 = vmul.f32 %v5004, %v574
      %v5049 = vmul.f32 %v5007, %v574
      %v5050 = vmul.f32 %v5010, %v574
      %v5051 = vmul.f32 %v5013, %v574
      %v5052 = vmul.f32 %v5016, %v574
      %v5053 = vmul.f32 %v5019, %v574
      %v5054 = vmul.f32 %v5022, %v574
      %v5055 = vmul.f32 %v5025, %v574
      %v5056 = vmul.f32 %v5028, %v574
      %v5057 = vmul.f32 %v5031, %v574
      %v5058 = vmul.f32 %v5034, %v574
      %v5059 = vmul.f32 %v5037, %v574
      %v5060 = vmul.f32 %v5040, %v574
      %v5061 = vmul.f32 %v5043, %v574
      %v5062 = vmul.f32 %v5046, %v574
      %v5063 = vsub.f32 %v4983, %v5047
      %v5064 = vsub.f32 %v4984, %v5048
      %v5065 = vsub.f32 %v4985, %v5049
      %v5066 = vsub.f32 %v4986, %v5050
      %v5067 = vsub.f32 %v4987, %v5051
      %v5068 = vsub.f32 %v4988, %v5052
      %v5069 = vsub.f32 %v4989, %v5053
      %v5070 = vsub.f32 %v4990, %v5054
      %v5071 = vsub.f32 %v4991, %v5055
      %v5072 = vsub.f32 %v4992, %v5056
      %v5073 = vsub.f32 %v4993, %v5057
      %v5074 = vsub.f32 %v4994, %v5058
      %v5075 = vsub.f32 %v4995, %v5059
      %v5076 = vsub.f32 %v4996, %v5060
      %v5077 = vsub.f32 %v4997, %v5061
      %v5078 = vsub.f32 %v4998, %v5062
      %v5079 = vmul.f32 %v5063, %v5063
      %v5080 = vmul.f32 %v5064, %v5064
      %v5081 = vmul.f32 %v5065, %v5065
      %v5082 = vmul.f32 %v5066, %v5066
      %v5083 = vmul.f32 %v5067, %v5067
      %v5084 = vmul.f32 %v5068, %v5068
      %v5085 = vmul.f32 %v5069, %v5069
      %v5086 = vmul.f32 %v5070, %v5070
      %v5087 = vmul.f32 %v5071, %v5071
      %v5088 = vmul.f32 %v5072, %v5072
      %v5089 = vmul.f32 %v5073, %v5073
      %v5090 = vmul.f32 %v5074, %v5074
      %v5091 = vmul.f32 %v5075, %v5075
      %v5092 = vmul.f32 %v5076, %v5076
      %v5093 = vmul.f32 %v5077, %v5077
      %v5094 = vmul.f32 %v5078, %v5078
      %v5095 = vsel %vm519, %v5079, 0.0
      %5096 = vadd.xlane.f32.xlu0 %v5095
      %v5097 = vpop.xlane.xlu0 %5096
      %v5098 = vsel %vm519, %v5080, 0.0
      %5099 = vadd.xlane.f32.xlu0 %v5098
      %v5100 = vpop.xlane.xlu0 %5099
      %v5101 = vsel %vm519, %v5081, 0.0
      %5102 = vadd.xlane.f32.xlu0 %v5101
      %v5103 = vpop.xlane.xlu0 %5102
      %v5104 = vsel %vm519, %v5082, 0.0
      %5105 = vadd.xlane.f32.xlu0 %v5104
      %v5106 = vpop.xlane.xlu0 %5105
      %v5107 = vsel %vm519, %v5083, 0.0
      %5108 = vadd.xlane.f32.xlu0 %v5107
      %v5109 = vpop.xlane.xlu0 %5108
      %v5110 = vsel %vm519, %v5084, 0.0
      %5111 = vadd.xlane.f32.xlu0 %v5110
      %v5112 = vpop.xlane.xlu0 %5111
      %v5113 = vsel %vm519, %v5085, 0.0
      %5114 = vadd.xlane.f32.xlu0 %v5113
      %v5115 = vpop.xlane.xlu0 %5114
      %v5116 = vsel %vm519, %v5086, 0.0
      %5117 = vadd.xlane.f32.xlu0 %v5116
      %v5118 = vpop.xlane.xlu0 %5117
      %v5119 = vsel %vm519, %v5087, 0.0
      %5120 = vadd.xlane.f32.xlu0 %v5119
      %v5121 = vpop.xlane.xlu0 %5120
      %v5122 = vsel %vm519, %v5088, 0.0
      %5123 = vadd.xlane.f32.xlu0 %v5122
      %v5124 = vpop.xlane.xlu0 %5123
      %v5125 = vsel %vm519, %v5089, 0.0
      %5126 = vadd.xlane.f32.xlu0 %v5125
      %v5127 = vpop.xlane.xlu0 %5126
      %v5128 = vsel %vm519, %v5090, 0.0
      %5129 = vadd.xlane.f32.xlu0 %v5128
      %v5130 = vpop.xlane.xlu0 %5129
      %v5131 = vsel %vm519, %v5091, 0.0
      %5132 = vadd.xlane.f32.xlu0 %v5131
      %v5133 = vpop.xlane.xlu0 %5132
      %v5134 = vsel %vm519, %v5092, 0.0
      %5135 = vadd.xlane.f32.xlu0 %v5134
      %v5136 = vpop.xlane.xlu0 %5135
      %v5137 = vsel %vm519, %v5093, 0.0
      %5138 = vadd.xlane.f32.xlu0 %v5137
      %v5139 = vpop.xlane.xlu0 %5138
      %v5140 = vsel %vm519, %v5094, 0.0
      %5141 = vadd.xlane.f32.xlu0 %v5140
      %v5142 = vpop.xlane.xlu0 %5141
      %v5143 = vmul.f32 %v5097, %v574
      %v5144 = vmul.f32 %v5100, %v574
      %v5145 = vmul.f32 %v5103, %v574
      %v5146 = vmul.f32 %v5106, %v574
      %v5147 = vmul.f32 %v5109, %v574
      %v5148 = vmul.f32 %v5112, %v574
      %v5149 = vmul.f32 %v5115, %v574
      %v5150 = vmul.f32 %v5118, %v574
      %v5151 = vmul.f32 %v5121, %v574
      %v5152 = vmul.f32 %v5124, %v574
      %v5153 = vmul.f32 %v5127, %v574
      %v5154 = vmul.f32 %v5130, %v574
      %v5155 = vmul.f32 %v5133, %v574
      %v5156 = vmul.f32 %v5136, %v574
      %v5157 = vmul.f32 %v5139, %v574
      %v5158 = vmul.f32 %v5142, %v574
      %v5159 = vadd.f32 %v5143, 1e-05
      %v5160 = vadd.f32 %v5144, 1e-05
      %v5161 = vadd.f32 %v5145, 1e-05
      %v5162 = vadd.f32 %v5146, 1e-05
      %v5163 = vadd.f32 %v5147, 1e-05
      %v5164 = vadd.f32 %v5148, 1e-05
      %v5165 = vadd.f32 %v5149, 1e-05
      %v5166 = vadd.f32 %v5150, 1e-05
      %v5167 = vadd.f32 %v5151, 1e-05
      %v5168 = vadd.f32 %v5152, 1e-05
      %v5169 = vadd.f32 %v5153, 1e-05
      %v5170 = vadd.f32 %v5154, 1e-05
      %v5171 = vadd.f32 %v5155, 1e-05
      %v5172 = vadd.f32 %v5156, 1e-05
      %v5173 = vadd.f32 %v5157, 1e-05
      %v5174 = vadd.f32 %v5158, 1e-05
      %v5175 = vrsqrt.pop %v5159
      %v5176 = vmul.f32 %v5175, %v5159
      %v5177 = vmul.f32 %v5176, %v5175
      %v5178 = vmul.f32 0.5, %v5177
      %v5179 = vsub.f32 1.5, %v5178
      %v5180 = vmul.f32 %v5175, %v5179
      %vm5181 = vweird.f32 %v5159
      %vm5182 = vweird.f32 %v5175
      %vm5183 = vmor %vm5181, %vm5182
      %v5184 = vsel %vm5183, %v5175, %v5180
      %v5185 = vrsqrt.pop %v5160
      %v5186 = vmul.f32 %v5185, %v5160
      %v5187 = vmul.f32 %v5186, %v5185
      %v5188 = vmul.f32 0.5, %v5187
      %v5189 = vsub.f32 1.5, %v5188
      %v5190 = vmul.f32 %v5185, %v5189
      %vm5191 = vweird.f32 %v5160
      %vm5192 = vweird.f32 %v5185
      %vm5193 = vmor %vm5191, %vm5192
      %v5194 = vsel %vm5193, %v5185, %v5190
      %v5195 = vrsqrt.pop %v5161
      %v5196 = vmul.f32 %v5195, %v5161
      %v5197 = vmul.f32 %v5196, %v5195
      %v5198 = vmul.f32 0.5, %v5197
      %v5199 = vsub.f32 1.5, %v5198
      %v5200 = vmul.f32 %v5195, %v5199
      %vm5201 = vweird.f32 %v5161
      %vm5202 = vweird.f32 %v5195
      %vm5203 = vmor %vm5201, %vm5202
      %v5204 = vsel %vm5203, %v5195, %v5200
      %v5205 = vrsqrt.pop %v5162
      %v5206 = vmul.f32 %v5205, %v5162
      %v5207 = vmul.f32 %v5206, %v5205
      %v5208 = vmul.f32 0.5, %v5207
      %v5209 = vsub.f32 1.5, %v5208
      %v5210 = vmul.f32 %v5205, %v5209
      %vm5211 = vweird.f32 %v5162
      %vm5212 = vweird.f32 %v5205
      %vm5213 = vmor %vm5211, %vm5212
      %v5214 = vsel %vm5213, %v5205, %v5210
      %v5215 = vrsqrt.pop %v5163
      %v5216 = vmul.f32 %v5215, %v5163
      %v5217 = vmul.f32 %v5216, %v5215
      %v5218 = vmul.f32 0.5, %v5217
      %v5219 = vsub.f32 1.5, %v5218
      %v5220 = vmul.f32 %v5215, %v5219
      %vm5221 = vweird.f32 %v5163
      %vm5222 = vweird.f32 %v5215
      %vm5223 = vmor %vm5221, %vm5222
      %v5224 = vsel %vm5223, %v5215, %v5220
      %v5225 = vrsqrt.pop %v5164
      %v5226 = vmul.f32 %v5225, %v5164
      %v5227 = vmul.f32 %v5226, %v5225
      %v5228 = vmul.f32 0.5, %v5227
      %v5229 = vsub.f32 1.5, %v5228
      %v5230 = vmul.f32 %v5225, %v5229
      %vm5231 = vweird.f32 %v5164
      %vm5232 = vweird.f32 %v5225
      %vm5233 = vmor %vm5231, %vm5232
      %v5234 = vsel %vm5233, %v5225, %v5230
      %v5235 = vrsqrt.pop %v5165
      %v5236 = vmul.f32 %v5235, %v5165
      %v5237 = vmul.f32 %v5236, %v5235
      %v5238 = vmul.f32 0.5, %v5237
      %v5239 = vsub.f32 1.5, %v5238
      %v5240 = vmul.f32 %v5235, %v5239
      %vm5241 = vweird.f32 %v5165
      %vm5242 = vweird.f32 %v5235
      %vm5243 = vmor %vm5241, %vm5242
      %v5244 = vsel %vm5243, %v5235, %v5240
      %v5245 = vrsqrt.pop %v5166
      %v5246 = vmul.f32 %v5245, %v5166
      %v5247 = vmul.f32 %v5246, %v5245
      %v5248 = vmul.f32 0.5, %v5247
      %v5249 = vsub.f32 1.5, %v5248
      %v5250 = vmul.f32 %v5245, %v5249
      %vm5251 = vweird.f32 %v5166
      %vm5252 = vweird.f32 %v5245
      %vm5253 = vmor %vm5251, %vm5252
      %v5254 = vsel %vm5253, %v5245, %v5250
      %v5255 = vrsqrt.pop %v5167
      %v5256 = vmul.f32 %v5255, %v5167
      %v5257 = vmul.f32 %v5256, %v5255
      %v5258 = vmul.f32 0.5, %v5257
      %v5259 = vsub.f32 1.5, %v5258
      %v5260 = vmul.f32 %v5255, %v5259
      %vm5261 = vweird.f32 %v5167
      %vm5262 = vweird.f32 %v5255
      %vm5263 = vmor %vm5261, %vm5262
      %v5264 = vsel %vm5263, %v5255, %v5260
      %v5265 = vrsqrt.pop %v5168
      %v5266 = vmul.f32 %v5265, %v5168
      %v5267 = vmul.f32 %v5266, %v5265
      %v5268 = vmul.f32 0.5, %v5267
      %v5269 = vsub.f32 1.5, %v5268
      %v5270 = vmul.f32 %v5265, %v5269
      %vm5271 = vweird.f32 %v5168
      %vm5272 = vweird.f32 %v5265
      %vm5273 = vmor %vm5271, %vm5272
      %v5274 = vsel %vm5273, %v5265, %v5270
      %v5275 = vrsqrt.pop %v5169
      %v5276 = vmul.f32 %v5275, %v5169
      %v5277 = vmul.f32 %v5276, %v5275
      %v5278 = vmul.f32 0.5, %v5277
      %v5279 = vsub.f32 1.5, %v5278
      %v5280 = vmul.f32 %v5275, %v5279
      %vm5281 = vweird.f32 %v5169
      %vm5282 = vweird.f32 %v5275
      %vm5283 = vmor %vm5281, %vm5282
      %v5284 = vsel %vm5283, %v5275, %v5280
      %v5285 = vrsqrt.pop %v5170
      %v5286 = vmul.f32 %v5285, %v5170
      %v5287 = vmul.f32 %v5286, %v5285
      %v5288 = vmul.f32 0.5, %v5287
      %v5289 = vsub.f32 1.5, %v5288
      %v5290 = vmul.f32 %v5285, %v5289
      %vm5291 = vweird.f32 %v5170
      %vm5292 = vweird.f32 %v5285
      %vm5293 = vmor %vm5291, %vm5292
      %v5294 = vsel %vm5293, %v5285, %v5290
      %v5295 = vrsqrt.pop %v5171
      %v5296 = vmul.f32 %v5295, %v5171
      %v5297 = vmul.f32 %v5296, %v5295
      %v5298 = vmul.f32 0.5, %v5297
      %v5299 = vsub.f32 1.5, %v5298
      %v5300 = vmul.f32 %v5295, %v5299
      %vm5301 = vweird.f32 %v5171
      %vm5302 = vweird.f32 %v5295
      %vm5303 = vmor %vm5301, %vm5302
      %v5304 = vsel %vm5303, %v5295, %v5300
      %v5305 = vrsqrt.pop %v5172
      %v5306 = vmul.f32 %v5305, %v5172
      %v5307 = vmul.f32 %v5306, %v5305
      %v5308 = vmul.f32 0.5, %v5307
      %v5309 = vsub.f32 1.5, %v5308
      %v5310 = vmul.f32 %v5305, %v5309
      %vm5311 = vweird.f32 %v5172
      %vm5312 = vweird.f32 %v5305
      %vm5313 = vmor %vm5311, %vm5312
      %v5314 = vsel %vm5313, %v5305, %v5310
      %v5315 = vrsqrt.pop %v5173
      %v5316 = vmul.f32 %v5315, %v5173
      %v5317 = vmul.f32 %v5316, %v5315
      %v5318 = vmul.f32 0.5, %v5317
      %v5319 = vsub.f32 1.5, %v5318
      %v5320 = vmul.f32 %v5315, %v5319
      %vm5321 = vweird.f32 %v5173
      %vm5322 = vweird.f32 %v5315
      %vm5323 = vmor %vm5321, %vm5322
      %v5324 = vsel %vm5323, %v5315, %v5320
      %v5325 = vrsqrt.pop %v5174
      %v5326 = vmul.f32 %v5325, %v5174
      %v5327 = vmul.f32 %v5326, %v5325
      %v5328 = vmul.f32 0.5, %v5327
      %v5329 = vsub.f32 1.5, %v5328
      %v5330 = vmul.f32 %v5325, %v5329
      %vm5331 = vweird.f32 %v5174
      %vm5332 = vweird.f32 %v5325
      %vm5333 = vmor %vm5331, %vm5332
      %v5334 = vsel %vm5333, %v5325, %v5330
      %v5335 = vmul.f32 %v5063, %v5184
      %v5336 = vmul.f32 %v5064, %v5194
      %v5337 = vmul.f32 %v5065, %v5204
      %v5338 = vmul.f32 %v5066, %v5214
      %v5339 = vmul.f32 %v5067, %v5224
      %v5340 = vmul.f32 %v5068, %v5234
      %v5341 = vmul.f32 %v5069, %v5244
      %v5342 = vmul.f32 %v5070, %v5254
      %v5343 = vmul.f32 %v5071, %v5264
      %v5344 = vmul.f32 %v5072, %v5274
      %v5345 = vmul.f32 %v5073, %v5284
      %v5346 = vmul.f32 %v5074, %v5294
      %v5347 = vmul.f32 %v5075, %v5304
      %v5348 = vmul.f32 %v5076, %v5314
      %v5349 = vmul.f32 %v5077, %v5324
      %v5350 = vmul.f32 %v5078, %v5334
      %v5352 = vperm.slane %v495, 0
      %v5354 = vmul.f32 %v5335, %v5352
      %v5355 = vmul.f32 %v5336, %v5352
      %v5356 = vmul.f32 %v5337, %v5352
      %v5357 = vmul.f32 %v5338, %v5352
      %v5358 = vmul.f32 %v5339, %v5352
      %v5359 = vmul.f32 %v5340, %v5352
      %v5360 = vmul.f32 %v5341, %v5352
      %v5361 = vmul.f32 %v5342, %v5352
      %v5362 = vmul.f32 %v5343, %v5352
      %v5363 = vmul.f32 %v5344, %v5352
      %v5364 = vmul.f32 %v5345, %v5352
      %v5365 = vmul.f32 %v5346, %v5352
      %v5366 = vmul.f32 %v5347, %v5352
      %v5367 = vmul.f32 %v5348, %v5352
      %v5368 = vmul.f32 %v5349, %v5352
      %v5369 = vmul.f32 %v5350, %v5352
      %v5371 = vperm.slane %v496, 0
      %v5373 = vadd.f32 %v5354, %v5371
      %v5374 = vadd.f32 %v5355, %v5371
      %v5375 = vadd.f32 %v5356, %v5371
      %v5376 = vadd.f32 %v5357, %v5371
      %v5377 = vadd.f32 %v5358, %v5371
      %v5378 = vadd.f32 %v5359, %v5371
      %v5379 = vadd.f32 %v5360, %v5371
      %v5380 = vadd.f32 %v5361, %v5371
      %v5381 = vadd.f32 %v5362, %v5371
      %v5382 = vadd.f32 %v5363, %v5371
      %v5383 = vadd.f32 %v5364, %v5371
      %v5384 = vadd.f32 %v5365, %v5371
      %v5385 = vadd.f32 %v5366, %v5371
      %v5386 = vadd.f32 %v5367, %v5371
      %v5387 = vadd.f32 %v5368, %v5371
      %v5388 = vadd.f32 %v5369, %v5371
      %v5389 = vpack.c.bf16 %v5374, %v5373
      %v5390 = vpack.c.bf16 %v5376, %v5375
      %v5391 = vpack.c.bf16 %v5378, %v5377
      %v5392 = vpack.c.bf16 %v5380, %v5379
      %v5393 = vpack.c.bf16 %v5382, %v5381
      %v5394 = vpack.c.bf16 %v5384, %v5383
      %v5395 = vpack.c.bf16 %v5386, %v5385
      %v5396 = vpack.c.bf16 %v5388, %v5387
      %v5398 = vperm.slane %v501, 0
      %v5404 = vunpack.c.l.b16 %v497
      %v5405 = vunpack.c.l.b16 %v498
      %v5406 = vunpack.c.l.b16 %v499
      %v5407 = vunpack.c.l.b16 %v500
      %v5408 = vpack.c.b16 %v5405, %v5404
      %v5409 = vpack.c.b16 %v5407, %v5406
      %v5413 = vsel %vm519, %v5389, 0
      %v5416 = vsel %vm519, %v5390, 0
      %v5419 = vsel %vm519, %v5391, 0
      %v5422 = vsel %vm519, %v5392, 0
      %v5425 = vsel %vm519, %v5393, 0
      %v5428 = vsel %vm519, %v5394, 0
      %v5431 = vsel %vm519, %v5395, 0
      %v5434 = vsel %vm519, %v5396, 0
      %5436 = vmatpush.bf16.msra.mxu0 0
      %5437 = vmatpush.bf16.msra.mxu0 0
      %5438 = vmatpush.bf16.msra.mxu0 0
      %5439 = vmatpush.bf16.msra.mxu0 0
      %5440 = vmatpush.bf16.msra.mxu0 0
      %5441 = vmatpush.bf16.msra.mxu0 0
      %5442 = vmatpush.bf16.msra.mxu0 %v5409
      %5443 = vmatpush.bf16.msra.mxu0 %v5408
      %5444 = vmatmul.bf16.gmra.mxu0 %v5413
      %v5445 = vpop.f32.mrf.mxu0
      %v5446 = vadd.f32 %v5398, %v5445
      %v5447 = vpop.f32.mrf.mxu0
      %v5448 = vadd.f32 %v5398, %v5447
      %5449 = vmatmul.bf16.gmra.mxu0 %v5416
      %v5450 = vpop.f32.mrf.mxu0
      %v5451 = vadd.f32 %v5398, %v5450
      %v5452 = vpop.f32.mrf.mxu0
      %v5453 = vadd.f32 %v5398, %v5452
      %5454 = vmatmul.bf16.gmra.mxu0 %v5419
      %v5455 = vpop.f32.mrf.mxu0
      %v5456 = vadd.f32 %v5398, %v5455
      %v5457 = vpop.f32.mrf.mxu0
      %v5458 = vadd.f32 %v5398, %v5457
      %5459 = vmatmul.bf16.gmra.mxu0 %v5422
      %v5460 = vpop.f32.mrf.mxu0
      %v5461 = vadd.f32 %v5398, %v5460
      %v5462 = vpop.f32.mrf.mxu0
      %v5463 = vadd.f32 %v5398, %v5462
      %5464 = vmatmul.bf16.gmra.mxu0 %v5425
      %v5465 = vpop.f32.mrf.mxu0
      %v5466 = vadd.f32 %v5398, %v5465
      %v5467 = vpop.f32.mrf.mxu0
      %v5468 = vadd.f32 %v5398, %v5467
      %5469 = vmatmul.bf16.gmra.mxu0 %v5428
      %v5470 = vpop.f32.mrf.mxu0
      %v5471 = vadd.f32 %v5398, %v5470
      %v5472 = vpop.f32.mrf.mxu0
      %v5473 = vadd.f32 %v5398, %v5472
      %5474 = vmatmul.bf16.gmra.mxu0 %v5431
      %v5475 = vpop.f32.mrf.mxu0
      %v5476 = vadd.f32 %v5398, %v5475
      %v5477 = vpop.f32.mrf.mxu0
      %v5478 = vadd.f32 %v5398, %v5477
      %5479 = vmatmul.bf16.gmra.mxu0 %v5434
      %v5480 = vpop.f32.mrf.mxu0
      %v5481 = vadd.f32 %v5398, %v5480
      %v5482 = vpop.f32.mrf.mxu0
      %v5483 = vadd.f32 %v5398, %v5482
      %5484 = vdwg.mxu0
      %v5485 = vmax.f32 %v5446, 0.0
      %v5486 = vmax.f32 %v5448, 0.0
      %v5487 = vmax.f32 %v5451, 0.0
      %v5488 = vmax.f32 %v5453, 0.0
      %v5489 = vmax.f32 %v5456, 0.0
      %v5490 = vmax.f32 %v5458, 0.0
      %v5491 = vmax.f32 %v5461, 0.0
      %v5492 = vmax.f32 %v5463, 0.0
      %v5493 = vmax.f32 %v5466, 0.0
      %v5494 = vmax.f32 %v5468, 0.0
      %v5495 = vmax.f32 %v5471, 0.0
      %v5496 = vmax.f32 %v5473, 0.0
      %v5497 = vmax.f32 %v5476, 0.0
      %v5498 = vmax.f32 %v5478, 0.0
      %v5499 = vmax.f32 %v5481, 0.0
      %v5500 = vmax.f32 %v5483, 0.0
      %v5501 = vpack.c.bf16 %v5486, %v5485
      %v5502 = vpack.c.bf16 %v5488, %v5487
      %v5503 = vpack.c.bf16 %v5490, %v5489
      %v5504 = vpack.c.bf16 %v5492, %v5491
      %v5505 = vpack.c.bf16 %v5494, %v5493
      %v5506 = vpack.c.bf16 %v5496, %v5495
      %v5507 = vpack.c.bf16 %v5498, %v5497
      %v5508 = vpack.c.bf16 %v5500, %v5499
      %v5510 = vperm.slane %v518, 0
      %v5528 = vunpack.c.l.b16 %v502
      %v5529 = vunpack.c.l.b16 %v503
      %v5530 = vunpack.c.l.b16 %v504
      %v5531 = vunpack.c.l.b16 %v505
      %v5532 = vunpack.c.l.b16 %v506
      %v5533 = vunpack.c.l.b16 %v507
      %v5534 = vunpack.c.l.b16 %v508
      %v5535 = vunpack.c.l.b16 %v509
      %v5536 = vunpack.c.l.b16 %v510
      %v5537 = vunpack.c.l.b16 %v511
      %v5538 = vunpack.c.l.b16 %v512
      %v5539 = vunpack.c.l.b16 %v513
      %v5540 = vunpack.c.l.b16 %v514
      %v5541 = vunpack.c.l.b16 %v515
      %v5542 = vunpack.c.l.b16 %v516
      %v5543 = vunpack.c.l.b16 %v517
      %v5544 = vpack.c.b16 %v5529, %v5528
      %v5545 = vpack.c.b16 %v5531, %v5530
      %v5546 = vpack.c.b16 %v5533, %v5532
      %v5547 = vpack.c.b16 %v5535, %v5534
      %v5548 = vpack.c.b16 %v5537, %v5536
      %v5549 = vpack.c.b16 %v5539, %v5538
      %v5550 = vpack.c.b16 %v5541, %v5540
      %v5551 = vpack.c.b16 %v5543, %v5542
      %5560 = vmatpush.bf16.msra.mxu0 %v5551
      %5561 = vmatpush.bf16.msra.mxu0 %v5550
      %5562 = vmatpush.bf16.msra.mxu0 %v5549
      %5563 = vmatpush.bf16.msra.mxu0 %v5548
      %5564 = vmatpush.bf16.msra.mxu0 %v5547
      %5565 = vmatpush.bf16.msra.mxu0 %v5546
      %5566 = vmatpush.bf16.msra.mxu0 %v5545
      %5567 = vmatpush.bf16.msra.mxu0 %v5544
      %5568 = vmatmul.bf16.gmra.mxu0 %v5501
      %v5569 = vpop.f32.mrf.mxu0
      %v5570 = vadd.f32 %v5510, %v5569
      %v5571 = vpop.f32.mrf.mxu0
      %v5572 = vadd.f32 %v5510, %v5571
      %5573 = vmatmul.bf16.gmra.mxu0 %v5502
      %v5574 = vpop.f32.mrf.mxu0
      %v5575 = vadd.f32 %v5510, %v5574
      %v5576 = vpop.f32.mrf.mxu0
      %v5577 = vadd.f32 %v5510, %v5576
      %5578 = vmatmul.bf16.gmra.mxu0 %v5503
      %v5579 = vpop.f32.mrf.mxu0
      %v5580 = vadd.f32 %v5510, %v5579
      %v5581 = vpop.f32.mrf.mxu0
      %v5582 = vadd.f32 %v5510, %v5581
      %5583 = vmatmul.bf16.gmra.mxu0 %v5504
      %v5584 = vpop.f32.mrf.mxu0
      %v5585 = vadd.f32 %v5510, %v5584
      %v5586 = vpop.f32.mrf.mxu0
      %v5587 = vadd.f32 %v5510, %v5586
      %5588 = vmatmul.bf16.gmra.mxu0 %v5505
      %v5589 = vpop.f32.mrf.mxu0
      %v5590 = vadd.f32 %v5510, %v5589
      %v5591 = vpop.f32.mrf.mxu0
      %v5592 = vadd.f32 %v5510, %v5591
      %5593 = vmatmul.bf16.gmra.mxu0 %v5506
      %v5594 = vpop.f32.mrf.mxu0
      %v5595 = vadd.f32 %v5510, %v5594
      %v5596 = vpop.f32.mrf.mxu0
      %v5597 = vadd.f32 %v5510, %v5596
      %5598 = vmatmul.bf16.gmra.mxu0 %v5507
      %v5599 = vpop.f32.mrf.mxu0
      %v5600 = vadd.f32 %v5510, %v5599
      %v5601 = vpop.f32.mrf.mxu0
      %v5602 = vadd.f32 %v5510, %v5601
      %5603 = vmatmul.bf16.gmra.mxu0 %v5508
      %v5604 = vpop.f32.mrf.mxu0
      %v5605 = vadd.f32 %v5510, %v5604
      %v5606 = vpop.f32.mrf.mxu0
      %v5607 = vadd.f32 %v5510, %v5606
      %5608 = vdwg.mxu0
      %v5609 = vadd.f32 %v4983, %v5570
      %v5610 = vadd.f32 %v4984, %v5572
      %v5611 = vadd.f32 %v4985, %v5575
      %v5612 = vadd.f32 %v4986, %v5577
      %v5613 = vadd.f32 %v4987, %v5580
      %v5614 = vadd.f32 %v4988, %v5582
      %v5615 = vadd.f32 %v4989, %v5585
      %v5616 = vadd.f32 %v4990, %v5587
      %v5617 = vadd.f32 %v4991, %v5590
      %v5618 = vadd.f32 %v4992, %v5592
      %v5619 = vadd.f32 %v4993, %v5595
      %v5620 = vadd.f32 %v4994, %v5597
      %v5621 = vadd.f32 %v4995, %v5600
      %v5622 = vadd.f32 %v4996, %v5602
      %v5623 = vadd.f32 %v4997, %v5605
      %v5624 = vadd.f32 %v4998, %v5607
      %5625 = vst.msk [vmem:[%s442] sm:$0xff] %vm519, %v5609
      %5626 = vst.msk [vmem:[%s442 + $0x8] sm:$0xff] %vm519, %v5610
      %5627 = vst.msk [vmem:[%s442 + $0x10] sm:$0xff] %vm519, %v5611
      %5628 = vst.msk [vmem:[%s442 + $0x18] sm:$0xff] %vm519, %v5612
      %5629 = vst.msk [vmem:[%s442 + $0x20] sm:$0xff] %vm519, %v5613
      %5630 = vst.msk [vmem:[%s442 + $0x28] sm:$0xff] %vm519, %v5614
      %5631 = vst.msk [vmem:[%s442 + $0x30] sm:$0xff] %vm519, %v5615
      %5632 = vst.msk [vmem:[%s442 + $0x38] sm:$0xff] %vm519, %v5616
      %5633 = vst.msk [vmem:[%s442 + $0x40] sm:$0xff] %vm519, %v5617
      %5634 = vst.msk [vmem:[%s442 + $0x48] sm:$0xff] %vm519, %v5618
      %5635 = vst.msk [vmem:[%s442 + $0x50] sm:$0xff] %vm519, %v5619
      %5636 = vst.msk [vmem:[%s442 + $0x58] sm:$0xff] %vm519, %v5620
      %5637 = vst.msk [vmem:[%s442 + $0x60] sm:$0xff] %vm519, %v5621
      %5638 = vst.msk [vmem:[%s442 + $0x68] sm:$0xff] %vm519, %v5622
      %5639 = vst.msk [vmem:[%s442 + $0x70] sm:$0xff] %vm519, %v5623
      %5640 = vst.msk [vmem:[%s442 + $0x78] sm:$0xff] %vm519, %v5624
      %s5641 = smul.u32 16, %s24
      %p5642 = scmp.lt.s32.totalorder %s5641, 31
      %s5643 = scalar_select %p5642, %s5641, 31
      %s5644 = smul.addr %s5643, 8
      %s5645 = scalar_lea.vmem %s13, %s5644
      // Predicated region
      $region73: #{msa2msa_forward.2} parent=71 // pred_check
        %p5646 = pneg %p320
      $region74: #{msa2msa_forward.2} parent=71 // pred_check_branch
        %5648 = sbr.rel (%p5646) target = $region76
      $region75: #{msa2msa_forward.2} parent=71 // pred_region
        %s5649 = smul.u32 16, %s24
      $region76: #{msa2msa_forward.2} parent=71 // pred_fallthru
        _
    $region72: #{msa2msa_forward.2} parent=5 // pred_fallthru
      _
    %p5650 = scmp.le.s32.totalorder 2, %s19
    // Predicated region
    $region77: #{msa2msa_forward.2} parent=5 // pred_check
      %p5651 = pneg %p5650
    $region78: #{msa2msa_forward.2} parent=5 // pred_check_branch
      %5653 = sbr.rel (%p5651) target = $region80
    $region79: #{msa2msa_forward.2} parent=5 // pred_region
      %s5654 = ssub.s32 %s19, 2
      // Predicated region
      $region81: #{msa2msa_forward.2} parent=79 // pred_check
        %p5655 = pneg %p326
      $region82: #{msa2msa_forward.2} parent=79 // pred_check_branch
        %5657 = sbr.rel (%p5655) target = $region84
      $region83: #{msa2msa_forward.2} parent=79 // pred_region
        %s5658 = smul.u32 16, %s25
        %p5659 = scmp.lt.s32.totalorder %s5658, 31
        %s5660 = scalar_select %p5659, %s5658, 31
        %s5661 = smul.addr %s5660, 8
        %s5662 = scalar_lea.vmem %s13, %s5661
      $region84: #{msa2msa_forward.2} parent=79 // pred_fallthru
        _
    $region80: #{msa2msa_forward.2} parent=5 // pred_fallthru
      _
  $region6: #{msa2msa_forward.2} parent=0 // loop_footer
    %s23 = sadd.s32 1, %s19
  $region7: #{msa2msa_forward.2} parent=0 // loop_footer_branch
    %18 = sbr.rel target = $region3
  $region8: #{msa2msa_forward.2} parent=0 // loop_exit
    _

</llo_original>
